<compile_context>
chip_gen: v7x
topology: tpu7x:2x2x1
jax: 0.10.0
libtpu: 0.0.40
codegen_flags: <defaults>
</compile_context>

<pallas_src>
import math

import jax
import jax.numpy as jnp
from jax.experimental import pallas as pl
from jax.experimental.pallas import tpu as pltpu

DIM = 2048 // 2          # 1024
REDUCTION = 4
DIMZ = DIM // REDUCTION  # 256


def _round_up(x, m):
    return ((x + m - 1) // m) * m


def _fused_mlp_kernel(x_ref,
                      w1_ref, b1_ref, w2_ref, b2_ref,
                      w3_ref, b3_ref, w4_ref, b4_ref,
                      z_ref, xhat_ref):
    """One (branch, batch-tile) grid step of the 4-layer MLP.

    Weights are bf16 (in, out); biases are f32 (1, out).  Matmuls accumulate
    in f32 on the MXU; ReLU intermediates are re-cast to bf16 before the next
    matmul.  Outputs z (TM, DIMZ) and xhat (TM, DIM) are f32.
    """
    x = x_ref[...]                                                    # (TM, DIM) bf16

    h1 = jnp.dot(x, w1_ref[...], preferred_element_type=jnp.float32) + b1_ref[...]
    h1 = jnp.maximum(h1, 0.0).astype(jnp.bfloat16)

    z = jnp.dot(h1, w2_ref[...], preferred_element_type=jnp.float32) + b2_ref[...]
    z_ref[...] = z.astype(z_ref.dtype)

    h2 = jnp.dot(z.astype(jnp.bfloat16), w3_ref[...],
                 preferred_element_type=jnp.float32) + b3_ref[...]
    h2 = jnp.maximum(h2, 0.0).astype(jnp.bfloat16)

    xhat = jnp.dot(h2, w4_ref[...], preferred_element_type=jnp.float32) + b4_ref[...]
    xhat_ref[...] = xhat.astype(xhat_ref.dtype)


def _fused_mlp_pallas(x_padded, params, tm):
    """Run both branches (X and Y) of the MLP in one batch-tiled pallas_call.

    x_padded: (2, n_pad, DIM) bf16, n_pad a multiple of tm.
    params  : stacked weights/biases, leading dim 2 = (X, Y).
    Returns z (2, n_pad, DIMZ) f32 and xhat (2, n_pad, DIM) f32.
    """
    w1, b1, w2, b2, w3, b3, w4, b4 = params
    n_pad = x_padded.shape[1]
    nt = n_pad // tm

    # Weight / bias blocks: same block for every batch tile of a branch
    # (VMEM-resident across the inner grid axis).
    def w_spec(in_f, out_f):
        return pl.BlockSpec((None, in_f, out_f), lambda b, i: (b, 0, 0))

    def b_spec(out_f):
        return pl.BlockSpec((None, 1, out_f), lambda b, i: (b, 0, 0))

    in_specs = [
        pl.BlockSpec((None, tm, DIM), lambda b, i: (b, i, 0)),   # x tile
        w_spec(DIM, DIM), b_spec(DIM),                           # layer 1
        w_spec(DIM, DIMZ), b_spec(DIMZ),                         # layer 2
        w_spec(DIMZ, DIM), b_spec(DIM),                          # layer 3
        w_spec(DIM, DIM), b_spec(DIM),                           # layer 4
    ]
    out_specs = (
        pl.BlockSpec((None, tm, DIMZ), lambda b, i: (b, i, 0)),  # z tile
        pl.BlockSpec((None, tm, DIM), lambda b, i: (b, i, 0)),   # xhat tile
    )

    # Advisory cost estimate for the XLA scheduler.
    per_row_macs = DIM * DIM + DIM * DIMZ + DIMZ * DIM + DIM * DIM
    flops = 2 * 2 * n_pad * per_row_macs                         # 2 branches, 2*MAC
    weight_bytes = 2 * (2 * DIM * DIM + 2 * DIM * DIMZ) * 2      # bf16 weights
    bias_bytes = 2 * (3 * DIM + DIMZ) * 4
    act_bytes = 2 * n_pad * (DIM * 2 + DIMZ * 4 + DIM * 4)       # x in, z/xhat out
    cost = pl.CostEstimate(flops=flops, transcendentals=0,
                           bytes_accessed=weight_bytes + bias_bytes + act_bytes)

    return pl.pallas_call(
        _fused_mlp_kernel,
        out_shape=(
            jax.ShapeDtypeStruct((2, n_pad, DIMZ), jnp.float32),
            jax.ShapeDtypeStruct((2, n_pad, DIM), jnp.float32),
        ),
        grid_spec=pltpu.PrefetchScalarGridSpec(
            num_scalar_prefetch=0,
            grid=(2, nt),            # (branch, batch tile); batch varies fastest
            in_specs=in_specs,
            out_specs=out_specs,
        ),
        compiler_params=pltpu.CompilerParams(
            # Both axes are independent -> parallel (megacore split on v7x).
            dimension_semantics=("parallel", "parallel"),
            # <= 48 MiB: fits v7x's 64 MiB physical VMEM; working set ~12 MiB.
            vmem_limit_bytes=48 << 20,
        ),
        cost_estimate=cost,
    )(x_padded, w1, b1, w2, b2, w3, b3, w4, b4)


def _init_linear_stacked(key, in_f, out_f):
    """Two branches' worth of torch.nn.Linear-style init, stacked on axis 0.

    Weights are stored (branch, in, out) in bf16; biases (branch, 1, out) f32.
    """
    bound = 1.0 / math.sqrt(in_f)
    kw, kb = jax.random.split(key)
    w = jax.random.uniform(kw, (2, in_f, out_f), jnp.float32, -bound, bound)
    b = jax.random.uniform(kb, (2, 1, out_f), jnp.float32, -bound, bound)
    return w.astype(jnp.bfloat16), b


def init_netfc00_params(key):
    k1, k2, k3, k4 = jax.random.split(key, 4)
    w1, b1 = _init_linear_stacked(k1, DIM, DIM)    # encoder layer 1
    w2, b2 = _init_linear_stacked(k2, DIM, DIMZ)   # encoder layer 2
    w3, b3 = _init_linear_stacked(k3, DIMZ, DIM)   # decoder layer 1
    w4, b4 = _init_linear_stacked(k4, DIM, DIM)    # decoder layer 2
    return (w1, b1, w2, b2, w3, b3, w4, b4)


def netfc00_forward(data, params):
    """Pallas implementation of netFC00.forward.

    data: (n, c, 32, w) float32 with c*16*w == 1024.
    Returns (Zx, Zy, dataX_hat, dataY_hat) matching the PyTorch module.
    """
    n, c, _, w = data.shape
    h = 16
    assert c * h * w == DIM, f"c*16*w must equal {DIM}, got {c * h * w}"

    dataX = data[:, :, 0:16, :].reshape(n, -1)
    dataY = data[:, :, 16:32, :].reshape(n, -1)
    x = jnp.stack([dataX, dataY], axis=0).astype(jnp.bfloat16)    # (2, n, DIM)

    # Pad the batch to a multiple of the row tile (>= 8 for the (8,128) rule).
    n_pad8 = _round_up(max(n, 8), 8)
    tm = min(128, n_pad8)
    n_pad = _round_up(n_pad8, tm)
    if n_pad != n:
        x = jnp.pad(x, ((0, 0), (0, n_pad - n), (0, 0)))

    z, xhat = _fused_mlp_pallas(x, params, tm)

    Zx = z[0, :n]
    Zy = z[1, :n]
    dataX_hat = xhat[0, :n].reshape(n, c, h, w)
    dataY_hat = xhat[1, :n].reshape(n, c, h, w)
    return Zx, Zy, dataX_hat, dataY_hat


def _reference_forward(data, params):
    """Pure-JAX reference using the same bf16/f32 dtype strategy."""
    w1, b1, w2, b2, w3, b3, w4, b4 = params
    n, c, _, w = data.shape
    h = 16

    def mlp(x, bi):
        x = x.astype(jnp.bfloat16)
        h1 = jnp.dot(x, w1[bi], preferred_element_type=jnp.float32) + b1[bi]
        h1 = jnp.maximum(h1, 0.0).astype(jnp.bfloat16)
        z = jnp.dot(h1, w2[bi], preferred_element_type=jnp.float32) + b2[bi]
        h2 = jnp.dot(z.astype(jnp.bfloat16), w3[bi],
                     preferred_element_type=jnp.float32) + b3[bi]
        h2 = jnp.maximum(h2, 0.0).astype(jnp.bfloat16)
        xhat = jnp.dot(h2, w4[bi], preferred_element_type=jnp.float32) + b4[bi]
        return z, xhat

    dataX = data[:, :, 0:16, :].reshape(n, -1)
    dataY = data[:, :, 16:32, :].reshape(n, -1)
    Zx, Xh = mlp(dataX, 0)
    Zy, Yh = mlp(dataY, 1)
    return Zx, Zy, Xh.reshape(n, c, h, w), Yh.reshape(n, c, h, w)


if __name__ == "__main__":
    key = jax.random.PRNGKey(0)
    kdata, kparams = jax.random.split(key)

    # Small input consistent with the module: n=2, c=2, H=32, W=32 -> c*16*W = 1024.
    n, c, H, W = 2, 2, 32, 32
    data = jax.random.normal(kdata, (n, c, H, W), jnp.float32)

    params = init_netfc00_params(kparams)

    outs = jax.jit(netfc00_forward)(data, params)
    outs = jax.block_until_ready(outs)

    refs = jax.jit(_reference_forward)(data, params)
    refs = jax.block_until_ready(refs)

    for o, r in zip(outs, refs):
        assert o.shape == r.shape and o.dtype == r.dtype
        assert jnp.allclose(o, r, atol=2e-2, rtol=2e-2), float(jnp.max(jnp.abs(o - r)))

    print("KERNEL_OK")
</pallas_src>

<mosaic_0001>
module attributes {stable_mosaic.version = 11 : i64} {
  func.func @_fused_mlp_kernel(%arg0: i32, %arg1: i32, %arg2: memref<1x8x1024xbf16, #tpu.memory_space<vmem>>, %arg3: memref<1x1024x1024xbf16, #tpu.memory_space<vmem>>, %arg4: memref<1x1x1024xf32, #tpu.memory_space<vmem>>, %arg5: memref<1x1024x256xbf16, #tpu.memory_space<vmem>>, %arg6: memref<1x1x256xf32, #tpu.memory_space<vmem>>, %arg7: memref<1x256x1024xbf16, #tpu.memory_space<vmem>>, %arg8: memref<1x1x1024xf32, #tpu.memory_space<vmem>>, %arg9: memref<1x1024x1024xbf16, #tpu.memory_space<vmem>>, %arg10: memref<1x1x1024xf32, #tpu.memory_space<vmem>>, %arg11: memref<1x8x256xf32, #tpu.memory_space<vmem>>, %arg12: memref<1x8x1024xf32, #tpu.memory_space<vmem>>) attributes {dimension_semantics = [#tpu.dimension_semantics<parallel>, #tpu.dimension_semantics<parallel>], iteration_bounds = array<i64: 2, 1>, scalar_prefetch = 0 : i64, scratch_operands = 0 : i64, tpu.core_type = #tpu.core_type<tc>, window_params = [{transform_indices = @transform_0, window_bounds = array<i64: 1, 8, 1024>}, {transform_indices = @transform_1, window_bounds = array<i64: 1, 1024, 1024>}, {transform_indices = @transform_2, window_bounds = array<i64: 1, 1, 1024>}, {transform_indices = @transform_3, window_bounds = array<i64: 1, 1024, 256>}, {transform_indices = @transform_4, window_bounds = array<i64: 1, 1, 256>}, {transform_indices = @transform_5, window_bounds = array<i64: 1, 256, 1024>}, {transform_indices = @transform_6, window_bounds = array<i64: 1, 1, 1024>}, {transform_indices = @transform_7, window_bounds = array<i64: 1, 1024, 1024>}, {transform_indices = @transform_8, window_bounds = array<i64: 1, 1, 1024>}, {transform_indices = @transform_9, window_bounds = array<i64: 1, 8, 256>}, {transform_indices = @transform_10, window_bounds = array<i64: 1, 8, 1024>}]} {
    %c0 = arith.constant 0 : index
    %c0_0 = arith.constant 0 : index
    %c0_1 = arith.constant 0 : index
    %0 = vector.load %arg2[%c0, %c0_0, %c0_1] : memref<1x8x1024xbf16, #tpu.memory_space<vmem>>, vector<1x8x1024xbf16>
    %1 = vector.shape_cast %0 : vector<1x8x1024xbf16> to vector<8x1024xbf16>
    %c0_2 = arith.constant 0 : index
    %c0_3 = arith.constant 0 : index
    %c0_4 = arith.constant 0 : index
    %2 = vector.load %arg3[%c0_2, %c0_3, %c0_4] : memref<1x1024x1024xbf16, #tpu.memory_space<vmem>>, vector<1x1024x1024xbf16>
    %3 = vector.shape_cast %2 : vector<1x1024x1024xbf16> to vector<1024x1024xbf16>
    %cst = arith.constant dense<0.000000e+00> : vector<8x1024xf32>
    %4 = tpu.matmul %1, %3, %cst {dimension_numbers = #tpu.dot_dimension_numbers<[1], [0], [0], [1], [0, 0, 1, 1], [], []>} : vector<8x1024xbf16>, vector<1024x1024xbf16>, vector<8x1024xf32> -> vector<8x1024xf32>
    %c0_5 = arith.constant 0 : index
    %c0_6 = arith.constant 0 : index
    %c0_7 = arith.constant 0 : index
    %5 = vector.load %arg4[%c0_5, %c0_6, %c0_7] : memref<1x1x1024xf32, #tpu.memory_space<vmem>>, vector<1x1x1024xf32>
    %6 = vector.shape_cast %5 : vector<1x1x1024xf32> to vector<1x1024xf32>
    %7 = vector.broadcast %6 : vector<1x1024xf32> to vector<8x1024xf32>
    %8 = arith.addf %4, %7 : vector<8x1024xf32>
    %cst_8 = arith.constant 0.000000e+00 : f32
    %9 = vector.broadcast %cst_8 : f32 to vector<8x1024xf32>
    %10 = arith.maximumf %8, %9 : vector<8x1024xf32>
    %11 = arith.truncf %10 : vector<8x1024xf32> to vector<8x1024xbf16>
    %c0_9 = arith.constant 0 : index
    %c0_10 = arith.constant 0 : index
    %c0_11 = arith.constant 0 : index
    %12 = vector.load %arg5[%c0_9, %c0_10, %c0_11] : memref<1x1024x256xbf16, #tpu.memory_space<vmem>>, vector<1x1024x256xbf16>
    %13 = vector.shape_cast %12 : vector<1x1024x256xbf16> to vector<1024x256xbf16>
    %cst_12 = arith.constant dense<0.000000e+00> : vector<8x256xf32>
    %14 = tpu.matmul %11, %13, %cst_12 {dimension_numbers = #tpu.dot_dimension_numbers<[1], [0], [0], [1], [0, 0, 1, 1], [], []>} : vector<8x1024xbf16>, vector<1024x256xbf16>, vector<8x256xf32> -> vector<8x256xf32>
    %c0_13 = arith.constant 0 : index
    %c0_14 = arith.constant 0 : index
    %c0_15 = arith.constant 0 : index
    %15 = vector.load %arg6[%c0_13, %c0_14, %c0_15] : memref<1x1x256xf32, #tpu.memory_space<vmem>>, vector<1x1x256xf32>
    %16 = vector.shape_cast %15 : vector<1x1x256xf32> to vector<1x256xf32>
    %17 = vector.broadcast %16 : vector<1x256xf32> to vector<8x256xf32>
    %18 = arith.addf %14, %17 : vector<8x256xf32>
    %c0_16 = arith.constant 0 : index
    %c0_17 = arith.constant 0 : index
    %c0_18 = arith.constant 0 : index
    %19 = vector.load %arg11[%c0_16, %c0_17, %c0_18] : memref<1x8x256xf32, #tpu.memory_space<vmem>>, vector<1x8x256xf32>
    %20 = vector.shape_cast %19 : vector<1x8x256xf32> to vector<8x256xf32>
    %21 = vector.shape_cast %18 : vector<8x256xf32> to vector<1x8x256xf32>
    tpu.vector_store %arg11[%c0_16, %c0_17, %c0_18], %21 {strides = array<i32>} : memref<1x8x256xf32, #tpu.memory_space<vmem>>, vector<1x8x256xf32>,
    %22 = arith.truncf %18 : vector<8x256xf32> to vector<8x256xbf16>
    %c0_19 = arith.constant 0 : index
    %c0_20 = arith.constant 0 : index
    %c0_21 = arith.constant 0 : index
    %23 = vector.load %arg7[%c0_19, %c0_20, %c0_21] : memref<1x256x1024xbf16, #tpu.memory_space<vmem>>, vector<1x256x1024xbf16>
    %24 = vector.shape_cast %23 : vector<1x256x1024xbf16> to vector<256x1024xbf16>
    %cst_22 = arith.constant dense<0.000000e+00> : vector<8x1024xf32>
    %25 = tpu.matmul %22, %24, %cst_22 {dimension_numbers = #tpu.dot_dimension_numbers<[1], [0], [0], [1], [0, 0, 1, 1], [], []>} : vector<8x256xbf16>, vector<256x1024xbf16>, vector<8x1024xf32> -> vector<8x1024xf32>
    %c0_23 = arith.constant 0 : index
    %c0_24 = arith.constant 0 : index
    %c0_25 = arith.constant 0 : index
    %26 = vector.load %arg8[%c0_23, %c0_24, %c0_25] : memref<1x1x1024xf32, #tpu.memory_space<vmem>>, vector<1x1x1024xf32>
    %27 = vector.shape_cast %26 : vector<1x1x1024xf32> to vector<1x1024xf32>
    %28 = vector.broadcast %27 : vector<1x1024xf32> to vector<8x1024xf32>
    %29 = arith.addf %25, %28 : vector<8x1024xf32>
    %cst_26 = arith.constant 0.000000e+00 : f32
    %30 = vector.broadcast %cst_26 : f32 to vector<8x1024xf32>
    %31 = arith.maximumf %29, %30 : vector<8x1024xf32>
    %32 = arith.truncf %31 : vector<8x1024xf32> to vector<8x1024xbf16>
    %c0_27 = arith.constant 0 : index
    %c0_28 = arith.constant 0 : index
    %c0_29 = arith.constant 0 : index
    %33 = vector.load %arg9[%c0_27, %c0_28, %c0_29] : memref<1x1024x1024xbf16, #tpu.memory_space<vmem>>, vector<1x1024x1024xbf16>
    %34 = vector.shape_cast %33 : vector<1x1024x1024xbf16> to vector<1024x1024xbf16>
    %cst_30 = arith.constant dense<0.000000e+00> : vector<8x1024xf32>
    %35 = tpu.matmul %32, %34, %cst_30 {dimension_numbers = #tpu.dot_dimension_numbers<[1], [0], [0], [1], [0, 0, 1, 1], [], []>} : vector<8x1024xbf16>, vector<1024x1024xbf16>, vector<8x1024xf32> -> vector<8x1024xf32>
    %c0_31 = arith.constant 0 : index
    %c0_32 = arith.constant 0 : index
    %c0_33 = arith.constant 0 : index
    %36 = vector.load %arg10[%c0_31, %c0_32, %c0_33] : memref<1x1x1024xf32, #tpu.memory_space<vmem>>, vector<1x1x1024xf32>
    %37 = vector.shape_cast %36 : vector<1x1x1024xf32> to vector<1x1024xf32>
    %38 = vector.broadcast %37 : vector<1x1024xf32> to vector<8x1024xf32>
    %39 = arith.addf %35, %38 : vector<8x1024xf32>
    %c0_34 = arith.constant 0 : index
    %c0_35 = arith.constant 0 : index
    %c0_36 = arith.constant 0 : index
    %40 = vector.load %arg12[%c0_34, %c0_35, %c0_36] : memref<1x8x1024xf32, #tpu.memory_space<vmem>>, vector<1x8x1024xf32>
    %41 = vector.shape_cast %40 : vector<1x8x1024xf32> to vector<8x1024xf32>
    %42 = vector.shape_cast %39 : vector<8x1024xf32> to vector<1x8x1024xf32>
    tpu.vector_store %arg12[%c0_34, %c0_35, %c0_36], %42 {strides = array<i32>} : memref<1x8x1024xf32, #tpu.memory_space<vmem>>, vector<1x8x1024xf32>,
    return
  }
  func.func @transform_0(%arg0: i32, %arg1: i32) -> (i32, i32, i32) {
    %c0_i32 = arith.constant 0 : i32
    %c0_i32_0 = arith.constant 0 : i32
    return %arg0, %arg1, %c0_i32 : i32, i32, i32
  }
  func.func @transform_1(%arg0: i32, %arg1: i32) -> (i32, i32, i32) {
    %c0_i32 = arith.constant 0 : i32
    %c0_i32_0 = arith.constant 0 : i32
    %c0_i32_1 = arith.constant 0 : i32
    return %arg0, %c0_i32, %c0_i32_0 : i32, i32, i32
  }
  func.func @transform_2(%arg0: i32, %arg1: i32) -> (i32, i32, i32) {
    %c0_i32 = arith.constant 0 : i32
    %c0_i32_0 = arith.constant 0 : i32
    %c0_i32_1 = arith.constant 0 : i32
    return %arg0, %c0_i32, %c0_i32_0 : i32, i32, i32
  }
  func.func @transform_3(%arg0: i32, %arg1: i32) -> (i32, i32, i32) {
    %c0_i32 = arith.constant 0 : i32
    %c0_i32_0 = arith.constant 0 : i32
    %c0_i32_1 = arith.constant 0 : i32
    return %arg0, %c0_i32, %c0_i32_0 : i32, i32, i32
  }
  func.func @transform_4(%arg0: i32, %arg1: i32) -> (i32, i32, i32) {
    %c0_i32 = arith.constant 0 : i32
    %c0_i32_0 = arith.constant 0 : i32
    %c0_i32_1 = arith.constant 0 : i32
    return %arg0, %c0_i32, %c0_i32_0 : i32, i32, i32
  }
  func.func @transform_5(%arg0: i32, %arg1: i32) -> (i32, i32, i32) {
    %c0_i32 = arith.constant 0 : i32
    %c0_i32_0 = arith.constant 0 : i32
    %c0_i32_1 = arith.constant 0 : i32
    return %arg0, %c0_i32, %c0_i32_0 : i32, i32, i32
  }
  func.func @transform_6(%arg0: i32, %arg1: i32) -> (i32, i32, i32) {
    %c0_i32 = arith.constant 0 : i32
    %c0_i32_0 = arith.constant 0 : i32
    %c0_i32_1 = arith.constant 0 : i32
    return %arg0, %c0_i32, %c0_i32_0 : i32, i32, i32
  }
  func.func @transform_7(%arg0: i32, %arg1: i32) -> (i32, i32, i32) {
    %c0_i32 = arith.constant 0 : i32
    %c0_i32_0 = arith.constant 0 : i32
    %c0_i32_1 = arith.constant 0 : i32
    return %arg0, %c0_i32, %c0_i32_0 : i32, i32, i32
  }
  func.func @transform_8(%arg0: i32, %arg1: i32) -> (i32, i32, i32) {
    %c0_i32 = arith.constant 0 : i32
    %c0_i32_0 = arith.constant 0 : i32
    %c0_i32_1 = arith.constant 0 : i32
    return %arg0, %c0_i32, %c0_i32_0 : i32, i32, i32
  }
  func.func @transform_9(%arg0: i32, %arg1: i32) -> (i32, i32, i32) {
    %c0_i32 = arith.constant 0 : i32
    %c0_i32_0 = arith.constant 0 : i32
    return %arg0, %arg1, %c0_i32 : i32, i32, i32
  }
  func.func @transform_10(%arg0: i32, %arg1: i32) -> (i32, i32, i32) {
    %c0_i32 = arith.constant 0 : i32
    %c0_i32_0 = arith.constant 0 : i32
    return %arg0, %arg1, %c0_i32 : i32, i32, i32
  }
}

</mosaic_0001>

<llo_original>
// kernel: squeeze.7
$region0: #{squeeze.7}
  %s0 = inlined_call_operand.vmem [shape: f32[1,2,1024], index: 0, kind: input, shape index: {}]
  %s1 = inlined_call_operand.hbm [shape: f32[2,2,16,32], index: 1, kind: output, shape index: {}]
  $region1: #{squeeze.7} parent=0
    #allocation0 [shape = 'u8[32768]{0}', space=vmem, size = 0x8000, scoped, tag = 'operand span for operand 1']
    #allocation1 [shape = 's32[1]{0}', space=sflag, size = 0x4, scoped, tag = 'scoped memory for squeeze.7']
    #allocation2 [shape = 'u8[32768]{0}', space=vmem, size = 0x8000, scoped, tag = 'scoped mem for input reshape']
    %2 = vsyncpa [#allocation1], 0
    %s4 = sshllo.u32 0, 2
    %s5 = smul.addr 2, 7
    %s6 = scalar_lea.vmem %s0, %s5
    %v7 = vld [vmem:[%s6] sm:%s4]
    %s8 = scalar_lea.vmem [#allocation2], 56
    %9 = vst [vmem:[%s8] sm:%s4] %v7
    %s10 = smul.addr 2, 6
    %s11 = scalar_lea.vmem %s0, %s10
    %v12 = vld [vmem:[%s11] sm:%s4]
    %s13 = scalar_lea.vmem [#allocation2], 48
    %14 = vst [vmem:[%s13] sm:%s4] %v12
    %s15 = smul.addr 2, 5
    %s16 = scalar_lea.vmem %s0, %s15
    %v17 = vld [vmem:[%s16] sm:%s4]
    %s18 = scalar_lea.vmem [#allocation2], 40
    %19 = vst [vmem:[%s18] sm:%s4] %v17
    %s20 = smul.addr 2, 4
    %s21 = scalar_lea.vmem %s0, %s20
    %v22 = vld [vmem:[%s21] sm:%s4]
    %s23 = scalar_lea.vmem [#allocation2], 32
    %24 = vst [vmem:[%s23] sm:%s4] %v22
    %s25 = smul.addr 2, 3
    %s26 = scalar_lea.vmem %s0, %s25
    %v27 = vld [vmem:[%s26] sm:%s4]
    %s28 = scalar_lea.vmem [#allocation2], 24
    %29 = vst [vmem:[%s28] sm:%s4] %v27
    %s30 = smul.addr 2, 2
    %s31 = scalar_lea.vmem %s0, %s30
    %v32 = vld [vmem:[%s31] sm:%s4]
    %s33 = scalar_lea.vmem [#allocation2], 16
    %34 = vst [vmem:[%s33] sm:%s4] %v32
    %s35 = scalar_lea.vmem %s0, 2
    %v36 = vld [vmem:[%s35] sm:%s4]
    %s37 = scalar_lea.vmem [#allocation2], 8
    %38 = vst [vmem:[%s37] sm:%s4] %v36
    %v39 = vld [vmem:[%s0] sm:%s4]
    %40 = vst [vmem:[#allocation2] sm:%s4] %v39
    %v41 = vld [vmem:[#allocation2] sm:$0x3]
    %vm42 = vcmask 261120
    %43 = vst.msk [vmem:[#allocation0] sm:$0x1] %vm42, %v41
    %s44 = scalar_lea.vmem [#allocation0], 31
    %45 = vst.msk [vmem:[%s44] sm:$0x2] %vm42, %v41
    %s46 = scalar_lea.vmem [#allocation2], 8
    %v47 = vld [vmem:[%s46] sm:$0x3]
    %vm48 = vcmask 261120
    %s49 = scalar_lea.vmem [#allocation0], 4
    %50 = vst.msk [vmem:[%s49] sm:$0x1] %vm48, %v47
    %s51 = scalar_lea.vmem [#allocation0], 35
    %52 = vst.msk [vmem:[%s51] sm:$0x2] %vm48, %v47
    %s53 = scalar_lea.vmem [#allocation2], 16
    %v54 = vld [vmem:[%s53] sm:$0x3]
    %vm55 = vcmask 261120
    %s56 = scalar_lea.vmem [#allocation0], 8
    %57 = vst.msk [vmem:[%s56] sm:$0x1] %vm55, %v54
    %s58 = scalar_lea.vmem [#allocation0], 39
    %59 = vst.msk [vmem:[%s58] sm:$0x2] %vm55, %v54
    %s60 = scalar_lea.vmem [#allocation2], 24
    %v61 = vld [vmem:[%s60] sm:$0x3]
    %vm62 = vcmask 261120
    %s63 = scalar_lea.vmem [#allocation0], 12
    %64 = vst.msk [vmem:[%s63] sm:$0x1] %vm62, %v61
    %s65 = scalar_lea.vmem [#allocation0], 43
    %66 = vst.msk [vmem:[%s65] sm:$0x2] %vm62, %v61
    %s67 = scalar_lea.vmem [#allocation2], 32
    %v68 = vld [vmem:[%s67] sm:$0x3]
    %vm69 = vcmask 261120
    %s70 = scalar_lea.vmem [#allocation0], 16
    %71 = vst.msk [vmem:[%s70] sm:$0x1] %vm69, %v68
    %s72 = scalar_lea.vmem [#allocation0], 47
    %73 = vst.msk [vmem:[%s72] sm:$0x2] %vm69, %v68
    %s74 = scalar_lea.vmem [#allocation2], 40
    %v75 = vld [vmem:[%s74] sm:$0x3]
    %vm76 = vcmask 261120
    %s77 = scalar_lea.vmem [#allocation0], 20
    %78 = vst.msk [vmem:[%s77] sm:$0x1] %vm76, %v75
    %s79 = scalar_lea.vmem [#allocation0], 51
    %80 = vst.msk [vmem:[%s79] sm:$0x2] %vm76, %v75
    %s81 = scalar_lea.vmem [#allocation2], 48
    %v82 = vld [vmem:[%s81] sm:$0x3]
    %vm83 = vcmask 261120
    %s84 = scalar_lea.vmem [#allocation0], 24
    %85 = vst.msk [vmem:[%s84] sm:$0x1] %vm83, %v82
    %s86 = scalar_lea.vmem [#allocation0], 55
    %87 = vst.msk [vmem:[%s86] sm:$0x2] %vm83, %v82
    %s88 = scalar_lea.vmem [#allocation2], 56
    %v89 = vld [vmem:[%s88] sm:$0x3]
    %vm90 = vcmask 261120
    %s91 = scalar_lea.vmem [#allocation0], 28
    %92 = vst.msk [vmem:[%s91] sm:$0x1] %vm90, %v89
    %s93 = scalar_lea.vmem [#allocation0], 59
    %94 = vst.msk [vmem:[%s93] sm:$0x2] %vm90, %v89
    %v95 = vld [vmem:[#allocation2] ss:$8 sm:$0xf]
    %v96 = vld [vmem:[#allocation2] ss:$8 sm:$0xf0]
    %vm97 = vcmask 1047556
    %v98 = vsel %vm97, %v96, %v95
    %99 = vrot.lane.b32.xlu0 %v98, 96
    %v100 = vpop.permute.xlu0 %99
    %vm101 = vcmask 261120
    %s102 = scalar_lea.vmem [#allocation0], 1
    %103 = vst.msk [vmem:[%s102] ss:$4 sm:$0xff] %vm101, %v100
    %s104 = scalar_lea.vmem [#allocation2], 1
    %v105 = vld [vmem:[%s104] ss:$8 sm:$0xf]
    %s106 = scalar_lea.vmem [#allocation2], 1
    %v107 = vld [vmem:[%s106] ss:$8 sm:$0xf0]
    %vm108 = vcmask 1047556
    %v109 = vsel %vm108, %v107, %v105
    %110 = vrot.lane.b32.xlu0 %v109, 96
    %v111 = vpop.permute.xlu0 %110
    %vm112 = vcmask 261120
    %s113 = scalar_lea.vmem [#allocation0], 33
    %114 = vst.msk [vmem:[%s113] ss:$4 sm:$0xff] %vm112, %v111
    %v115 = vld [vmem:[#allocation2] ss:$8 sm:$0xf]
    %v116 = vld [vmem:[#allocation2] ss:$8 sm:$0xf0]
    %vm117 = vcmask 1047556
    %v118 = vsel %vm117, %v116, %v115
    %119 = vrot.lane.b32.xlu0 %v118, 64
    %v120 = vpop.permute.xlu0 %119
    %vm121 = vcmask 261120
    %s122 = scalar_lea.vmem [#allocation0], 2
    %123 = vst.msk [vmem:[%s122] ss:$4 sm:$0xff] %vm121, %v120
    %s124 = scalar_lea.vmem [#allocation2], 1
    %v125 = vld [vmem:[%s124] ss:$8 sm:$0xf]
    %s126 = scalar_lea.vmem [#allocation2], 1
    %v127 = vld [vmem:[%s126] ss:$8 sm:$0xf0]
    %vm128 = vcmask 1047556
    %v129 = vsel %vm128, %v127, %v125
    %130 = vrot.lane.b32.xlu0 %v129, 64
    %v131 = vpop.permute.xlu0 %130
    %vm132 = vcmask 261120
    %s133 = scalar_lea.vmem [#allocation0], 34
    %134 = vst.msk [vmem:[%s133] ss:$4 sm:$0xff] %vm132, %v131
    %v135 = vld [vmem:[#allocation2] ss:$8 sm:$0xf]
    %v136 = vld [vmem:[#allocation2] ss:$8 sm:$0xf0]
    %vm137 = vcmask 1047556
    %v138 = vsel %vm137, %v136, %v135
    %139 = vrot.lane.b32.xlu0 %v138, 32
    %v140 = vpop.permute.xlu0 %139
    %vm141 = vcmask 261120
    %s142 = scalar_lea.vmem [#allocation0], 3
    %143 = vst.msk [vmem:[%s142] ss:$4 sm:$0xff] %vm141, %v140
    %s144 = scalar_lea.vmem [#allocation2], 1
    %v145 = vld [vmem:[%s144] ss:$8 sm:$0xf]
    %s146 = scalar_lea.vmem [#allocation2], 1
    %v147 = vld [vmem:[%s146] ss:$8 sm:$0xf0]
    %vm148 = vcmask 1047556
    %v149 = vsel %vm148, %v147, %v145
    %150 = vrot.lane.b32.xlu0 %v149, 32
    %v151 = vpop.permute.xlu0 %150
    %vm152 = vcmask 261120
    %s153 = scalar_lea.vmem [#allocation0], 35
    %154 = vst.msk [vmem:[%s153] ss:$4 sm:$0xff] %vm152, %v151
    %s156 = ssub.s32 1024, 1024
    %157 = vsyncadd [#allocation1], %s156
    %s159 = sshll.u32 [#allocation0], 4
    %s160 = int_to_ptr.vmem [resolvable:$true] %s159
    %162 = dma.vmem_to_hbm [thread:$0]  %s160, 1024, %s1, [#allocation1]
    %163 = dma.done [#allocation1], 1024
    %164 = vsyncpa [#allocation1], 1

// kernel: netfc00_forward.1
$region0: #{netfc00_forward.1}
  #allocation0 [shape = 'u32[]', space=smem, size = 0x4, offset = 0x4, fixed_abs, tag = 'smem constant byte address 0x4 - core index']
  #allocation1 [shape = 'u32[144,128]{1,0:T(1,128)}', space=vmem, size = 0x12000, scoped, tag = 'internal scratch']
  %s0 = inlined_call_operand.vmem [shape: bf16[2,8,1024], index: 0, kind: input, shape index: {}]
  %s1 = inlined_call_operand.hbm [shape: bf16[2,1024,1024], index: 1, kind: input, shape index: {}]
  %s2 = inlined_call_operand.hbm [shape: f32[2,1,1024], index: 2, kind: input, shape index: {}]
  %s3 = inlined_call_operand.hbm [shape: bf16[2,1024,256], index: 3, kind: input, shape index: {}]
  %s4 = inlined_call_operand.hbm [shape: f32[2,1,256], index: 4, kind: input, shape index: {}]
  %s5 = inlined_call_operand.hbm [shape: bf16[2,256,1024], index: 5, kind: input, shape index: {}]
  %s6 = inlined_call_operand.hbm [shape: f32[2,1,1024], index: 6, kind: input, shape index: {}]
  %s7 = inlined_call_operand.hbm [shape: bf16[2,1024,1024], index: 7, kind: input, shape index: {}]
  %s8 = inlined_call_operand.hbm [shape: f32[2,1,1024], index: 8, kind: input, shape index: {}]
  %s9 = inlined_call_operand.vmem [shape: f32[2,8,256], index: 9, kind: output, shape index: {0}]
  %s10 = inlined_call_operand.vmem [shape: f32[2,8,1024], index: 10, kind: output, shape index: {1}]
  %11 = xla_tuple %s9, %s10
  %s12 = sld [smem:[#allocation0]]
  $region109: #{netfc00_forward.1} parent=0
    _
  %s14 = ssub.s32 1, %s12
  %s15 = scalar_select 0, %s14, %s12
  $region1: #{netfc00_forward.1} parent=0
    #allocation2 [shape = 'u8[4194304]{0}', space=vmem, size = 0x400000, scoped, tag = 'input window, operand 1']
    #allocation3 [shape = 's32[2]{0}', space=sflag, size = 0x8, scoped, tag = 'scoped memory for netfc00_forward.1']
    #allocation4 [shape = 'u8[8192]{0}', space=vmem, size = 0x2000, scoped, tag = 'input window, operand 2']
    #allocation5 [shape = 's32[2]{0}', space=sflag, size = 0x8, scoped, tag = 'scoped memory for netfc00_forward.1']
    #allocation6 [shape = 'u8[1048576]{0}', space=vmem, size = 0x100000, scoped, tag = 'input window, operand 3']
    #allocation7 [shape = 'u8[2048]{0}', space=vmem, size = 0x800, scoped, tag = 'input window, operand 4']
    #allocation8 [shape = 's32[2]{0}', space=sflag, size = 0x8, scoped, tag = 'scoped memory for netfc00_forward.1']
    #allocation9 [shape = 'u8[1048576]{0}', space=vmem, size = 0x100000, scoped, tag = 'input window, operand 5']
    #allocation10 [shape = 'u8[8192]{0}', space=vmem, size = 0x2000, scoped, tag = 'input window, operand 6']
    #allocation11 [shape = 's32[2]{0}', space=sflag, size = 0x8, scoped, tag = 'scoped memory for netfc00_forward.1']
    #allocation12 [shape = 'u8[4194304]{0}', space=vmem, size = 0x400000, scoped, tag = 'input window, operand 7']
    #allocation13 [shape = 'u8[8192]{0}', space=vmem, size = 0x2000, scoped, tag = 'input window, operand 8']
    #allocation14 [shape = 's32[2]{0}', space=sflag, size = 0x8, scoped, tag = 'scoped memory for netfc00_forward.1']
    %16 = vsyncpa [#allocation3], 0
    %s17 = scalar_lea.sflag [#allocation3], 1
    %18 = vsyncpa %s17, 0
    %19 = vsyncpa [#allocation5], 0
    %s20 = scalar_lea.sflag [#allocation5], 1
    %21 = vsyncpa %s20, 0
    %22 = vsyncpa [#allocation8], 0
    %s23 = scalar_lea.sflag [#allocation8], 1
    %24 = vsyncpa %s23, 0
    %25 = vsyncpa [#allocation11], 0
    %s26 = scalar_lea.sflag [#allocation11], 1
    %27 = vsyncpa %s26, 0
    %28 = vsyncpa [#allocation14], 0
    %s29 = scalar_lea.sflag [#allocation14], 1
    %30 = vsyncpa %s29, 0
    loop: start=0, step=1, limit=4
    $region2: #{netfc00_forward.1} parent=1 // loop_pre_header
      _
    $region3: #{netfc00_forward.1} parent=1 // loop_header
      %s32 = sphi 0, %s36
      %p33 = scmp.ge.s32.totalorder %s32, 4
      %s39 = sphi 0, %s51
      %s40 = sphi 0, %s47
      %s41 = sphi 0, %s39
      %s42 = sphi 0, %s40
      %s43 = sphi 0, %s41
      %s44 = sphi 0, %s42
      %s56 = sphi 0, %s58
      %s59 = sphi 0, %s56
      %s60 = sphi 0, %s59
      %s76 = sphi 0, %s60
      %s82 = sphi 0, %s84
      %s85 = sphi 0, %s82
      %s86 = sphi 0, %s85
      %s102 = sphi 0, %s86
      %s108 = sphi 0, %s110
      %s111 = sphi 0, %s108
      %s112 = sphi 0, %s111
      %s128 = sphi 0, %s112
      %s134 = sphi 0, %s136
      %s137 = sphi 0, %s134
      %s138 = sphi 0, %s137
      %s154 = sphi 0, %s138
      %s160 = sphi 0, %s162
      %s163 = sphi 0, %s160
      %s164 = sphi 0, %s163
      %s180 = sphi 0, %s164
      %s186 = sphi 0, %s188
      %s189 = sphi 0, %s186
      %s190 = sphi 0, %s189
      %s206 = sphi 0, %s190
      %s212 = sphi 0, %s214
      %s215 = sphi 0, %s212
      %s216 = sphi 0, %s215
      %s232 = sphi 0, %s216
      %s238 = sphi 0, %s240
      %s241 = sphi 0, %s238
      %s242 = sphi 0, %s241
      %s258 = sphi 0, %s242
      %s264 = sphi 0, %s266
      %s267 = sphi 0, %s264
      %s268 = sphi 0, %s267
      %s284 = sphi 0, %s268
      %s292 = sphi 0, %s294
      %s295 = sphi 0, %s292
      %s296 = sphi 0, %s295
      %s312 = sphi 0, %s296
      %s320 = sphi 0, %s322
      %s323 = sphi 0, %s320
      %s324 = sphi 0, %s323
      %s340 = sphi 0, %s324
    $region4: #{netfc00_forward.1} parent=1 // loop_header_branch
      %35 = sbr.rel (%p33) target = $region8
    $region5: #{netfc00_forward.1} parent=1 // loop_body
      %s37 = ssub.s32 %s32, 1
      %s38 = ssub.s32 %s32, 2
      %s45 = sadd.s32 1, %s40
      %p46 = scmp.ge.s32.totalorder %s45, 1
      %s47 = scalar_select %p46, 0, %s45
      %s48 = sadd.s32 1, %s39
      %s49 = scalar_select %p46, %s48, %s39
      %p50 = scmp.ge.s32.totalorder %s49, 2
      %s51 = scalar_select %p50, 0, %s49
      %s52 = ssub.s32 %s39, %s51
      %s53 = ssub.s32 %s40, %s47
      %s54 = sor.u32 %s52, %s53
      %p55 = scmp.eq.s32.totalorder %s54, 0
      %s57 = sadd.s32 %s56, 1
      %s58 = scalar_select %p55, %s56, %s57
      %p61 = pneg %p55
      %p62 = scmp.eq.s32.totalorder %s32, 1
      %p63 = por %p61, %p62
      %p64 = scmp.ne.s32.totalorder %s56, %s59
      %p65 = scmp.eq.s32.totalorder %s32, 0
      %p66 = por %p64, %p65
      %p67 = scmp.ne.s32.totalorder %s56, %s59
      %p68 = scmp.eq.s32.totalorder %s37, 1
      %p69 = por %p67, %p68
      %p70 = scmp.ne.s32.totalorder %s59, %s60
      %p71 = scmp.eq.s32.totalorder %s37, 0
      %p72 = por %p70, %p71
      %p73 = scmp.ne.s32.totalorder %s59, %s60
      %p74 = scmp.eq.s32.totalorder %s38, 1
      %p75 = por %p73, %p74
      %p77 = scmp.ne.s32.totalorder %s60, %s76
      %p78 = scmp.eq.s32.totalorder %s38, 0
      %p79 = por %p77, %p78
      %s80 = ssub.s32 %s39, %s51
      %p81 = scmp.eq.s32.totalorder %s80, 0
      %s83 = sadd.s32 %s82, 1
      %s84 = scalar_select %p81, %s82, %s83
      %p87 = pneg %p81
      %p88 = scmp.eq.s32.totalorder %s32, 1
      %p89 = por %p87, %p88
      %p90 = scmp.ne.s32.totalorder %s82, %s85
      %p91 = scmp.eq.s32.totalorder %s32, 0
      %p92 = por %p90, %p91
      %p93 = scmp.ne.s32.totalorder %s82, %s85
      %p94 = scmp.eq.s32.totalorder %s37, 1
      %p95 = por %p93, %p94
      %p96 = scmp.ne.s32.totalorder %s85, %s86
      %p97 = scmp.eq.s32.totalorder %s37, 0
      %p98 = por %p96, %p97
      %p99 = scmp.ne.s32.totalorder %s85, %s86
      %p100 = scmp.eq.s32.totalorder %s38, 1
      %p101 = por %p99, %p100
      %p103 = scmp.ne.s32.totalorder %s86, %s102
      %p104 = scmp.eq.s32.totalorder %s38, 0
      %p105 = por %p103, %p104
      %s106 = ssub.s32 %s39, %s51
      %p107 = scmp.eq.s32.totalorder %s106, 0
      %s109 = sadd.s32 %s108, 1
      %s110 = scalar_select %p107, %s108, %s109
      %p113 = pneg %p107
      %p114 = scmp.eq.s32.totalorder %s32, 1
      %p115 = por %p113, %p114
      %p116 = scmp.ne.s32.totalorder %s108, %s111
      %p117 = scmp.eq.s32.totalorder %s32, 0
      %p118 = por %p116, %p117
      %p119 = scmp.ne.s32.totalorder %s108, %s111
      %p120 = scmp.eq.s32.totalorder %s37, 1
      %p121 = por %p119, %p120
      %p122 = scmp.ne.s32.totalorder %s111, %s112
      %p123 = scmp.eq.s32.totalorder %s37, 0
      %p124 = por %p122, %p123
      %p125 = scmp.ne.s32.totalorder %s111, %s112
      %p126 = scmp.eq.s32.totalorder %s38, 1
      %p127 = por %p125, %p126
      %p129 = scmp.ne.s32.totalorder %s112, %s128
      %p130 = scmp.eq.s32.totalorder %s38, 0
      %p131 = por %p129, %p130
      %s132 = ssub.s32 %s39, %s51
      %p133 = scmp.eq.s32.totalorder %s132, 0
      %s135 = sadd.s32 %s134, 1
      %s136 = scalar_select %p133, %s134, %s135
      %p139 = pneg %p133
      %p140 = scmp.eq.s32.totalorder %s32, 1
      %p141 = por %p139, %p140
      %p142 = scmp.ne.s32.totalorder %s134, %s137
      %p143 = scmp.eq.s32.totalorder %s32, 0
      %p144 = por %p142, %p143
      %p145 = scmp.ne.s32.totalorder %s134, %s137
      %p146 = scmp.eq.s32.totalorder %s37, 1
      %p147 = por %p145, %p146
      %p148 = scmp.ne.s32.totalorder %s137, %s138
      %p149 = scmp.eq.s32.totalorder %s37, 0
      %p150 = por %p148, %p149
      %p151 = scmp.ne.s32.totalorder %s137, %s138
      %p152 = scmp.eq.s32.totalorder %s38, 1
      %p153 = por %p151, %p152
      %p155 = scmp.ne.s32.totalorder %s138, %s154
      %p156 = scmp.eq.s32.totalorder %s38, 0
      %p157 = por %p155, %p156
      %s158 = ssub.s32 %s39, %s51
      %p159 = scmp.eq.s32.totalorder %s158, 0
      %s161 = sadd.s32 %s160, 1
      %s162 = scalar_select %p159, %s160, %s161
      %p165 = pneg %p159
      %p166 = scmp.eq.s32.totalorder %s32, 1
      %p167 = por %p165, %p166
      %p168 = scmp.ne.s32.totalorder %s160, %s163
      %p169 = scmp.eq.s32.totalorder %s32, 0
      %p170 = por %p168, %p169
      %p171 = scmp.ne.s32.totalorder %s160, %s163
      %p172 = scmp.eq.s32.totalorder %s37, 1
      %p173 = por %p171, %p172
      %p174 = scmp.ne.s32.totalorder %s163, %s164
      %p175 = scmp.eq.s32.totalorder %s37, 0
      %p176 = por %p174, %p175
      %p177 = scmp.ne.s32.totalorder %s163, %s164
      %p178 = scmp.eq.s32.totalorder %s38, 1
      %p179 = por %p177, %p178
      %p181 = scmp.ne.s32.totalorder %s164, %s180
      %p182 = scmp.eq.s32.totalorder %s38, 0
      %p183 = por %p181, %p182
      %s184 = ssub.s32 %s39, %s51
      %p185 = scmp.eq.s32.totalorder %s184, 0
      %s187 = sadd.s32 %s186, 1
      %s188 = scalar_select %p185, %s186, %s187
      %p191 = pneg %p185
      %p192 = scmp.eq.s32.totalorder %s32, 1
      %p193 = por %p191, %p192
      %p194 = scmp.ne.s32.totalorder %s186, %s189
      %p195 = scmp.eq.s32.totalorder %s32, 0
      %p196 = por %p194, %p195
      %p197 = scmp.ne.s32.totalorder %s186, %s189
      %p198 = scmp.eq.s32.totalorder %s37, 1
      %p199 = por %p197, %p198
      %p200 = scmp.ne.s32.totalorder %s189, %s190
      %p201 = scmp.eq.s32.totalorder %s37, 0
      %p202 = por %p200, %p201
      %p203 = scmp.ne.s32.totalorder %s189, %s190
      %p204 = scmp.eq.s32.totalorder %s38, 1
      %p205 = por %p203, %p204
      %p207 = scmp.ne.s32.totalorder %s190, %s206
      %p208 = scmp.eq.s32.totalorder %s38, 0
      %p209 = por %p207, %p208
      %s210 = ssub.s32 %s39, %s51
      %p211 = scmp.eq.s32.totalorder %s210, 0
      %s213 = sadd.s32 %s212, 1
      %s214 = scalar_select %p211, %s212, %s213
      %p217 = pneg %p211
      %p218 = scmp.eq.s32.totalorder %s32, 1
      %p219 = por %p217, %p218
      %p220 = scmp.ne.s32.totalorder %s212, %s215
      %p221 = scmp.eq.s32.totalorder %s32, 0
      %p222 = por %p220, %p221
      %p223 = scmp.ne.s32.totalorder %s212, %s215
      %p224 = scmp.eq.s32.totalorder %s37, 1
      %p225 = por %p223, %p224
      %p226 = scmp.ne.s32.totalorder %s215, %s216
      %p227 = scmp.eq.s32.totalorder %s37, 0
      %p228 = por %p226, %p227
      %p229 = scmp.ne.s32.totalorder %s215, %s216
      %p230 = scmp.eq.s32.totalorder %s38, 1
      %p231 = por %p229, %p230
      %p233 = scmp.ne.s32.totalorder %s216, %s232
      %p234 = scmp.eq.s32.totalorder %s38, 0
      %p235 = por %p233, %p234
      %s236 = ssub.s32 %s39, %s51
      %p237 = scmp.eq.s32.totalorder %s236, 0
      %s239 = sadd.s32 %s238, 1
      %s240 = scalar_select %p237, %s238, %s239
      %p243 = pneg %p237
      %p244 = scmp.eq.s32.totalorder %s32, 1
      %p245 = por %p243, %p244
      %p246 = scmp.ne.s32.totalorder %s238, %s241
      %p247 = scmp.eq.s32.totalorder %s32, 0
      %p248 = por %p246, %p247
      %p249 = scmp.ne.s32.totalorder %s238, %s241
      %p250 = scmp.eq.s32.totalorder %s37, 1
      %p251 = por %p249, %p250
      %p252 = scmp.ne.s32.totalorder %s241, %s242
      %p253 = scmp.eq.s32.totalorder %s37, 0
      %p254 = por %p252, %p253
      %p255 = scmp.ne.s32.totalorder %s241, %s242
      %p256 = scmp.eq.s32.totalorder %s38, 1
      %p257 = por %p255, %p256
      %p259 = scmp.ne.s32.totalorder %s242, %s258
      %p260 = scmp.eq.s32.totalorder %s38, 0
      %p261 = por %p259, %p260
      %s262 = ssub.s32 %s39, %s51
      %p263 = scmp.eq.s32.totalorder %s262, 0
      %s265 = sadd.s32 %s264, 1
      %s266 = scalar_select %p263, %s264, %s265
      %p269 = pneg %p263
      %p270 = scmp.eq.s32.totalorder %s32, 1
      %p271 = por %p269, %p270
      %p272 = scmp.ne.s32.totalorder %s264, %s267
      %p273 = scmp.eq.s32.totalorder %s32, 0
      %p274 = por %p272, %p273
      %p275 = scmp.ne.s32.totalorder %s264, %s267
      %p276 = scmp.eq.s32.totalorder %s37, 1
      %p277 = por %p275, %p276
      %p278 = scmp.ne.s32.totalorder %s267, %s268
      %p279 = scmp.eq.s32.totalorder %s37, 0
      %p280 = por %p278, %p279
      %p281 = scmp.ne.s32.totalorder %s267, %s268
      %p282 = scmp.eq.s32.totalorder %s38, 1
      %p283 = por %p281, %p282
      %p285 = scmp.ne.s32.totalorder %s268, %s284
      %p286 = scmp.eq.s32.totalorder %s38, 0
      %p287 = por %p285, %p286
      %s288 = ssub.s32 %s39, %s51
      %s289 = ssub.s32 %s40, %s47
      %s290 = sor.u32 %s288, %s289
      %p291 = scmp.eq.s32.totalorder %s290, 0
      %s293 = sadd.s32 %s292, 1
      %s294 = scalar_select %p291, %s292, %s293
      %p297 = pneg %p291
      %p298 = scmp.eq.s32.totalorder %s32, 1
      %p299 = por %p297, %p298
      %p300 = scmp.ne.s32.totalorder %s292, %s295
      %p301 = scmp.eq.s32.totalorder %s32, 0
      %p302 = por %p300, %p301
      %p303 = scmp.ne.s32.totalorder %s292, %s295
      %p304 = scmp.eq.s32.totalorder %s37, 1
      %p305 = por %p303, %p304
      %p306 = scmp.ne.s32.totalorder %s295, %s296
      %p307 = scmp.eq.s32.totalorder %s37, 0
      %p308 = por %p306, %p307
      %p309 = scmp.ne.s32.totalorder %s295, %s296
      %p310 = scmp.eq.s32.totalorder %s38, 1
      %p311 = por %p309, %p310
      %p313 = scmp.ne.s32.totalorder %s296, %s312
      %p314 = scmp.eq.s32.totalorder %s38, 0
      %p315 = por %p313, %p314
      %s316 = ssub.s32 %s39, %s51
      %s317 = ssub.s32 %s40, %s47
      %s318 = sor.u32 %s316, %s317
      %p319 = scmp.eq.s32.totalorder %s318, 0
      %s321 = sadd.s32 %s320, 1
      %s322 = scalar_select %p319, %s320, %s321
      %p325 = pneg %p319
      %p326 = scmp.eq.s32.totalorder %s32, 1
      %p327 = por %p325, %p326
      %p328 = scmp.ne.s32.totalorder %s320, %s323
      %p329 = scmp.eq.s32.totalorder %s32, 0
      %p330 = por %p328, %p329
      %p331 = scmp.ne.s32.totalorder %s320, %s323
      %p332 = scmp.eq.s32.totalorder %s37, 1
      %p333 = por %p331, %p332
      %p334 = scmp.ne.s32.totalorder %s323, %s324
      %p335 = scmp.eq.s32.totalorder %s37, 0
      %p336 = por %p334, %p335
      %p337 = scmp.ne.s32.totalorder %s323, %s324
      %p338 = scmp.eq.s32.totalorder %s38, 1
      %p339 = por %p337, %p338
      %p341 = scmp.ne.s32.totalorder %s324, %s340
      %p342 = scmp.eq.s32.totalorder %s38, 0
      %p343 = por %p341, %p342
      %p344 = scmp.le.s32.totalorder 1, %s32
      %p345 = scmp.lt.s32.totalorder %s32, 3
      %p346 = pnand %p344, %p345
      %p347 = pneg %p346
      // Predicated region
      $region9: #{netfc00_forward.1} parent=5 // pred_check
        _
      $region10: #{netfc00_forward.1} parent=5 // pred_check_branch
        %349 = sbr.rel (%p346) target = $region12
      $region11: #{netfc00_forward.1} parent=5 // pred_region
        %s350 = ssub.s32 %s32, 1
      $region12: #{netfc00_forward.1} parent=5 // pred_fallthru
        _
      %p351 = scmp.lt.s32.totalorder %s32, 2
      // Predicated region
      $region13: #{netfc00_forward.1} parent=5 // pred_check
        %p352 = pneg %p351
      $region14: #{netfc00_forward.1} parent=5 // pred_check_branch
        %354 = sbr.rel (%p352) target = $region16
      $region15: #{netfc00_forward.1} parent=5 // pred_region
        // Predicated region
        $region17: #{netfc00_forward.1} parent=15 // pred_check
          %p355 = pneg %p66
        $region18: #{netfc00_forward.1} parent=15 // pred_check_branch
          %357 = sbr.rel (%p355) target = $region20
        $region19: #{netfc00_forward.1} parent=15 // pred_region
          %p358 = scmp.lt.s32.totalorder %s39, 1
          %s359 = scalar_select %p358, %s39, 1
          %p360 = scmp.lt.s32.totalorder %s40, 0
          %s361 = scalar_select %p360, %s40, 0
          %s362 = smul.addr %s361, 8
          %s363 = smul.addr %s359, 8
          %s364 = sadd.s32 %s362, %s363
          %s365 = smul.addr %s364, 4
          %s366 = scalar_lea.vmem %s0, %s365
        $region20: #{netfc00_forward.1} parent=15 // pred_fallthru
          _
        // Predicated region
        $region21: #{netfc00_forward.1} parent=15 // pred_check
          %p367 = pneg %p92
        $region22: #{netfc00_forward.1} parent=15 // pred_check_branch
          %369 = sbr.rel (%p367) target = $region24
        $region23: #{netfc00_forward.1} parent=15 // pred_region
          %s370 = sand.u32 %s82, 1
          %s371 = scalar_lea.sflag [#allocation3], %s370
          %s372 = sand.u32 %s82, 1
          %s373 = smul.addr %s372, 4096
          %s374 = scalar_lea.vmem [#allocation2], %s373
          %s376 = ssub.s32 65536, 65536
          %377 = vsyncadd %s371, %s376
          %s378 = smul.addr %s39, 1024
          %s379 = smul.addr %s378, 64
          %s380 = scalar_lea.hbm %s1, %s379
          %s381 = sshll.u32 %s374, 4
          %s382 = int_to_ptr.vmem [resolvable:$true] %s381
          %387 = dma.hbm_to_vmem [thread:$0]  %s380, 65536, %s382, %s371, 512, 512, 32
        $region24: #{netfc00_forward.1} parent=15 // pred_fallthru
          _
        // Predicated region
        $region25: #{netfc00_forward.1} parent=15 // pred_check
          %p388 = pneg %p118
        $region26: #{netfc00_forward.1} parent=15 // pred_check_branch
          %390 = sbr.rel (%p388) target = $region28
        $region27: #{netfc00_forward.1} parent=15 // pred_region
          %s391 = sand.u32 %s32, 1
          %s392 = scalar_lea.sflag [#allocation5], %s391
          %s393 = sand.u32 %s108, 1
          %s394 = smul.addr %s393, 8
          %s395 = scalar_lea.vmem [#allocation4], %s394
          %s397 = ssub.s32 128, 128
          %398 = vsyncadd %s392, %s397
          %s399 = smul.addr %s39, 8
          %s400 = smul.addr %s399, 16
          %s401 = scalar_lea.hbm %s2, %s400
          %s403 = sshll.u32 %s395, 4
          %s404 = int_to_ptr.vmem [resolvable:$true] %s403
          %406 = dma.hbm_to_vmem [thread:$0]  %s401, 128, %s404, %s392
        $region28: #{netfc00_forward.1} parent=15 // pred_fallthru
          _
        // Predicated region
        $region29: #{netfc00_forward.1} parent=15 // pred_check
          %p407 = pneg %p144
        $region30: #{netfc00_forward.1} parent=15 // pred_check_branch
          %409 = sbr.rel (%p407) target = $region32
        $region31: #{netfc00_forward.1} parent=15 // pred_region
          %s410 = sand.u32 %s32, 1
          %s411 = scalar_lea.sflag [#allocation5], %s410
          %s412 = sand.u32 %s134, 1
          %s413 = smul.addr %s412, 1024
          %s414 = scalar_lea.vmem [#allocation6], %s413
          %s416 = ssub.s32 16384, 16384
          %417 = vsyncadd %s411, %s416
          %s418 = smul.addr %s39, 256
          %s419 = smul.addr %s418, 64
          %s420 = scalar_lea.hbm %s3, %s419
          %s421 = sshll.u32 %s414, 4
          %s422 = int_to_ptr.vmem [resolvable:$true] %s421
          %427 = dma.hbm_to_vmem [thread:$0]  %s420, 16384, %s422, %s411, 128, 128, 8
        $region32: #{netfc00_forward.1} parent=15 // pred_fallthru
          _
        // Predicated region
        $region33: #{netfc00_forward.1} parent=15 // pred_check
          %p428 = pneg %p170
        $region34: #{netfc00_forward.1} parent=15 // pred_check_branch
          %430 = sbr.rel (%p428) target = $region36
        $region35: #{netfc00_forward.1} parent=15 // pred_region
          %s431 = sand.u32 %s32, 1
          %s432 = scalar_lea.sflag [#allocation8], %s431
          %s433 = sand.u32 %s160, 1
          %s434 = smul.addr %s433, 2
          %s435 = scalar_lea.vmem [#allocation7], %s434
          %s437 = ssub.s32 32, 32
          %438 = vsyncadd %s432, %s437
          %s439 = smul.addr %s39, 2
          %s440 = smul.addr %s439, 16
          %s441 = scalar_lea.hbm %s4, %s440
          %s443 = sshll.u32 %s435, 4
          %s444 = int_to_ptr.vmem [resolvable:$true] %s443
          %446 = dma.hbm_to_vmem [thread:$0]  %s441, 32, %s444, %s432
        $region36: #{netfc00_forward.1} parent=15 // pred_fallthru
          _
        // Predicated region
        $region37: #{netfc00_forward.1} parent=15 // pred_check
          %p447 = pneg %p196
        $region38: #{netfc00_forward.1} parent=15 // pred_check_branch
          %449 = sbr.rel (%p447) target = $region40
        $region39: #{netfc00_forward.1} parent=15 // pred_region
          %s450 = sand.u32 %s32, 1
          %s451 = scalar_lea.sflag [#allocation8], %s450
          %s452 = sand.u32 %s186, 1
          %s453 = smul.addr %s452, 1024
          %s454 = scalar_lea.vmem [#allocation9], %s453
          %s456 = ssub.s32 16384, 16384
          %457 = vsyncadd %s451, %s456
          %s458 = smul.addr %s39, 256
          %s459 = smul.addr %s458, 64
          %s460 = scalar_lea.hbm %s5, %s459
          %s461 = sshll.u32 %s454, 4
          %s462 = int_to_ptr.vmem [resolvable:$true] %s461
          %467 = dma.hbm_to_vmem [thread:$0]  %s460, 16384, %s462, %s451, 512, 512, 32
        $region40: #{netfc00_forward.1} parent=15 // pred_fallthru
          _
        // Predicated region
        $region41: #{netfc00_forward.1} parent=15 // pred_check
          %p468 = pneg %p222
        $region42: #{netfc00_forward.1} parent=15 // pred_check_branch
          %470 = sbr.rel (%p468) target = $region44
        $region43: #{netfc00_forward.1} parent=15 // pred_region
          %s471 = sand.u32 %s32, 1
          %s472 = scalar_lea.sflag [#allocation11], %s471
          %s473 = sand.u32 %s212, 1
          %s474 = smul.addr %s473, 8
          %s475 = scalar_lea.vmem [#allocation10], %s474
          %s477 = ssub.s32 128, 128
          %478 = vsyncadd %s472, %s477
          %s479 = smul.addr %s39, 8
          %s480 = smul.addr %s479, 16
          %s481 = scalar_lea.hbm %s6, %s480
          %s483 = sshll.u32 %s475, 4
          %s484 = int_to_ptr.vmem [resolvable:$true] %s483
          %486 = dma.hbm_to_vmem [thread:$0]  %s481, 128, %s484, %s472
        $region44: #{netfc00_forward.1} parent=15 // pred_fallthru
          _
        // Predicated region
        $region45: #{netfc00_forward.1} parent=15 // pred_check
          %p487 = pneg %p248
        $region46: #{netfc00_forward.1} parent=15 // pred_check_branch
          %489 = sbr.rel (%p487) target = $region48
        $region47: #{netfc00_forward.1} parent=15 // pred_region
          %s490 = sand.u32 %s32, 1
          %s491 = scalar_lea.sflag [#allocation11], %s490
          %s492 = sand.u32 %s238, 1
          %s493 = smul.addr %s492, 4096
          %s494 = scalar_lea.vmem [#allocation12], %s493
          %s496 = ssub.s32 65536, 65536
          %497 = vsyncadd %s491, %s496
          %s498 = smul.addr %s39, 1024
          %s499 = smul.addr %s498, 64
          %s500 = scalar_lea.hbm %s7, %s499
          %s501 = sshll.u32 %s494, 4
          %s502 = int_to_ptr.vmem [resolvable:$true] %s501
          %507 = dma.hbm_to_vmem [thread:$0]  %s500, 65536, %s502, %s491, 512, 512, 32
        $region48: #{netfc00_forward.1} parent=15 // pred_fallthru
          _
        // Predicated region
        $region49: #{netfc00_forward.1} parent=15 // pred_check
          %p508 = pneg %p274
        $region50: #{netfc00_forward.1} parent=15 // pred_check_branch
          %510 = sbr.rel (%p508) target = $region52
        $region51: #{netfc00_forward.1} parent=15 // pred_region
          %s511 = sand.u32 %s264, 1
          %s512 = scalar_lea.sflag [#allocation14], %s511
          %s513 = sand.u32 %s264, 1
          %s514 = smul.addr %s513, 8
          %s515 = scalar_lea.vmem [#allocation13], %s514
          %s517 = ssub.s32 128, 128
          %518 = vsyncadd %s512, %s517
          %s519 = smul.addr %s39, 8
          %s520 = smul.addr %s519, 16
          %s521 = scalar_lea.hbm %s8, %s520
          %s523 = sshll.u32 %s515, 4
          %s524 = int_to_ptr.vmem [resolvable:$true] %s523
          %526 = dma.hbm_to_vmem [thread:$0]  %s521, 128, %s524, %s512
        $region52: #{netfc00_forward.1} parent=15 // pred_fallthru
          _
      $region16: #{netfc00_forward.1} parent=5 // pred_fallthru
        _
      %p527 = scmp.le.s32.totalorder 1, %s32
      %p528 = scmp.lt.s32.totalorder %s32, 3
      %p529 = pnand %p527, %p528
      %p530 = pneg %p529
      // Predicated region
      $region53: #{netfc00_forward.1} parent=5 // pred_check
        _
      $region54: #{netfc00_forward.1} parent=5 // pred_check_branch
        %532 = sbr.rel (%p529) target = $region56
      $region55: #{netfc00_forward.1} parent=5 // pred_region
        %s533 = ssub.s32 %s32, 1
        %s534 = sand.u32 %s85, 1
        %s535 = scalar_lea.sflag [#allocation3], %s534
        %s536 = sand.u32 %s85, 1
        %s537 = smul.addr %s536, 4096
        %s538 = scalar_lea.vmem [#allocation2], %s537
        // Predicated region
        $region57: #{netfc00_forward.1} parent=55 // pred_check
          %p539 = pneg %p98
        $region58: #{netfc00_forward.1} parent=55 // pred_check_branch
          %541 = sbr.rel (%p539) target = $region60
        $region59: #{netfc00_forward.1} parent=55 // pred_region
          %542 = dma.done %s535, 65536
        $region60: #{netfc00_forward.1} parent=55 // pred_fallthru
          _
        %s543 = sand.u32 %s37, 1
        %s544 = scalar_lea.sflag [#allocation5], %s543
        %s545 = sand.u32 %s111, 1
        %s546 = smul.addr %s545, 8
        %s547 = scalar_lea.vmem [#allocation4], %s546
        // Predicated region
        $region61: #{netfc00_forward.1} parent=55 // pred_check
          %p548 = pneg %p124
        $region62: #{netfc00_forward.1} parent=55 // pred_check_branch
          %550 = sbr.rel (%p548) target = $region64
        $region63: #{netfc00_forward.1} parent=55 // pred_region
          %551 = dma.done %s544, 128
        $region64: #{netfc00_forward.1} parent=55 // pred_fallthru
          _
        %s552 = sand.u32 %s37, 1
        %s553 = scalar_lea.sflag [#allocation5], %s552
        %s554 = sand.u32 %s137, 1
        %s555 = smul.addr %s554, 1024
        %s556 = scalar_lea.vmem [#allocation6], %s555
        // Predicated region
        $region65: #{netfc00_forward.1} parent=55 // pred_check
          %p557 = pneg %p150
        $region66: #{netfc00_forward.1} parent=55 // pred_check_branch
          %559 = sbr.rel (%p557) target = $region68
        $region67: #{netfc00_forward.1} parent=55 // pred_region
          %560 = dma.done %s553, 16384
        $region68: #{netfc00_forward.1} parent=55 // pred_fallthru
          _
        %s561 = sand.u32 %s37, 1
        %s562 = scalar_lea.sflag [#allocation8], %s561
        %s563 = sand.u32 %s163, 1
        %s564 = smul.addr %s563, 2
        %s565 = scalar_lea.vmem [#allocation7], %s564
        // Predicated region
        $region69: #{netfc00_forward.1} parent=55 // pred_check
          %p566 = pneg %p176
        $region70: #{netfc00_forward.1} parent=55 // pred_check_branch
          %568 = sbr.rel (%p566) target = $region72
        $region71: #{netfc00_forward.1} parent=55 // pred_region
          %569 = dma.done %s562, 32
        $region72: #{netfc00_forward.1} parent=55 // pred_fallthru
          _
        %s570 = sand.u32 %s37, 1
        %s571 = scalar_lea.sflag [#allocation8], %s570
        %s572 = sand.u32 %s189, 1
        %s573 = smul.addr %s572, 1024
        %s574 = scalar_lea.vmem [#allocation9], %s573
        // Predicated region
        $region73: #{netfc00_forward.1} parent=55 // pred_check
          %p575 = pneg %p202
        $region74: #{netfc00_forward.1} parent=55 // pred_check_branch
          %577 = sbr.rel (%p575) target = $region76
        $region75: #{netfc00_forward.1} parent=55 // pred_region
          %578 = dma.done %s571, 16384
        $region76: #{netfc00_forward.1} parent=55 // pred_fallthru
          _
        %s579 = sand.u32 %s37, 1
        %s580 = scalar_lea.sflag [#allocation11], %s579
        %s581 = sand.u32 %s215, 1
        %s582 = smul.addr %s581, 8
        %s583 = scalar_lea.vmem [#allocation10], %s582
        // Predicated region
        $region77: #{netfc00_forward.1} parent=55 // pred_check
          %p584 = pneg %p228
        $region78: #{netfc00_forward.1} parent=55 // pred_check_branch
          %586 = sbr.rel (%p584) target = $region80
        $region79: #{netfc00_forward.1} parent=55 // pred_region
          %587 = dma.done %s580, 128
        $region80: #{netfc00_forward.1} parent=55 // pred_fallthru
          _
        %s588 = sand.u32 %s37, 1
        %s589 = scalar_lea.sflag [#allocation11], %s588
        %s590 = sand.u32 %s241, 1
        %s591 = smul.addr %s590, 4096
        %s592 = scalar_lea.vmem [#allocation12], %s591
        // Predicated region
        $region81: #{netfc00_forward.1} parent=55 // pred_check
          %p593 = pneg %p254
        $region82: #{netfc00_forward.1} parent=55 // pred_check_branch
          %595 = sbr.rel (%p593) target = $region84
        $region83: #{netfc00_forward.1} parent=55 // pred_region
          %596 = dma.done %s589, 65536
        $region84: #{netfc00_forward.1} parent=55 // pred_fallthru
          _
        %s597 = sand.u32 %s267, 1
        %s598 = scalar_lea.sflag [#allocation14], %s597
        %s599 = sand.u32 %s267, 1
        %s600 = smul.addr %s599, 8
        %s601 = scalar_lea.vmem [#allocation13], %s600
        // Predicated region
        $region85: #{netfc00_forward.1} parent=55 // pred_check
          %p602 = pneg %p280
        $region86: #{netfc00_forward.1} parent=55 // pred_check_branch
          %604 = sbr.rel (%p602) target = $region88
        $region87: #{netfc00_forward.1} parent=55 // pred_region
          %605 = dma.done %s598, 128
        $region88: #{netfc00_forward.1} parent=55 // pred_fallthru
          _
        %p606 = scmp.lt.s32.totalorder %s41, 1
        %s607 = scalar_select %p606, %s41, 1
        %p608 = scmp.lt.s32.totalorder %s42, 0
        %s609 = scalar_select %p608, %s42, 0
        %s610 = smul.addr %s609, 8
        %s611 = smul.addr %s607, 8
        %s612 = sadd.s32 %s610, %s611
        %s613 = smul.addr %s612, 4
        %s614 = scalar_lea.vmem %s0, %s613
        %p615 = pneg %p72
        %p616 = pneg %p69
        %s617 = sand.u32 %s85, 1
        %s618 = scalar_lea.sflag [#allocation3], %s617
        %s619 = sand.u32 %s85, 1
        %s620 = smul.addr %s619, 4096
        %s621 = scalar_lea.vmem [#allocation2], %s620
        %p622 = pneg %p98
        %p623 = pneg %p95
        %s624 = sand.u32 %s37, 1
        %s625 = scalar_lea.sflag [#allocation5], %s624
        %s626 = sand.u32 %s111, 1
        %s627 = smul.addr %s626, 8
        %s628 = scalar_lea.vmem [#allocation4], %s627
        %p629 = pneg %p124
        %p630 = pneg %p121
        %s631 = sand.u32 %s37, 1
        %s632 = scalar_lea.sflag [#allocation5], %s631
        %s633 = sand.u32 %s137, 1
        %s634 = smul.addr %s633, 1024
        %s635 = scalar_lea.vmem [#allocation6], %s634
        %p636 = pneg %p150
        %p637 = pneg %p147
        %s638 = sand.u32 %s37, 1
        %s639 = scalar_lea.sflag [#allocation8], %s638
        %s640 = sand.u32 %s163, 1
        %s641 = smul.addr %s640, 2
        %s642 = scalar_lea.vmem [#allocation7], %s641
        %p643 = pneg %p176
        %p644 = pneg %p173
        %s645 = sand.u32 %s37, 1
        %s646 = scalar_lea.sflag [#allocation8], %s645
        %s647 = sand.u32 %s189, 1
        %s648 = smul.addr %s647, 1024
        %s649 = scalar_lea.vmem [#allocation9], %s648
        %p650 = pneg %p202
        %p651 = pneg %p199
        %s652 = sand.u32 %s37, 1
        %s653 = scalar_lea.sflag [#allocation11], %s652
        %s654 = sand.u32 %s215, 1
        %s655 = smul.addr %s654, 8
        %s656 = scalar_lea.vmem [#allocation10], %s655
        %p657 = pneg %p228
        %p658 = pneg %p225
        %s659 = sand.u32 %s37, 1
        %s660 = scalar_lea.sflag [#allocation11], %s659
        %s661 = sand.u32 %s241, 1
        %s662 = smul.addr %s661, 4096
        %s663 = scalar_lea.vmem [#allocation12], %s662
        %p664 = pneg %p254
        %p665 = pneg %p251
        %s666 = sand.u32 %s267, 1
        %s667 = scalar_lea.sflag [#allocation14], %s666
        %s668 = sand.u32 %s267, 1
        %s669 = smul.addr %s668, 8
        %s670 = scalar_lea.vmem [#allocation13], %s669
        %p671 = pneg %p280
        %p672 = pneg %p277
        %p673 = pneg %p308
        %p674 = pneg %p305
        %p675 = scmp.lt.s32.totalorder %s41, 1
        %s676 = scalar_select %p675, %s41, 1
        %p677 = scmp.lt.s32.totalorder %s42, 0
        %s678 = scalar_select %p677, %s42, 0
        %s679 = smul.addr %s678, 2
        %s680 = smul.addr %s676, 2
        %s681 = sadd.s32 %s679, %s680
        %s682 = smul.addr %s681, 8
        %s683 = scalar_lea.vmem %s9, %s682
        %p684 = pneg %p336
        %p685 = pneg %p333
        %p686 = scmp.lt.s32.totalorder %s41, 1
        %s687 = scalar_select %p686, %s41, 1
        %p688 = scmp.lt.s32.totalorder %s42, 0
        %s689 = scalar_select %p688, %s42, 0
        %s690 = smul.addr %s689, 8
        %s691 = smul.addr %s687, 8
        %s692 = sadd.s32 %s690, %s691
        %s693 = smul.addr %s692, 8
        %s694 = scalar_lea.vmem %s10, %s693
        %p695 = scmp.lt.s32.totalorder %s41, 1
        %s696 = scalar_select %p695, %s41, 1
        %p697 = scmp.lt.s32.totalorder %s42, 0
        %s698 = scalar_select %p697, %s42, 0
        %s699 = smul.addr %s698, 8
        %s700 = smul.addr %s696, 8
        %s701 = sadd.s32 %s699, %s700
        %s702 = smul.addr %s701, 4
        %s703 = scalar_lea.vmem %s0, %s702
        %p704 = scmp.lt.s32.totalorder %s41, 1
        %s705 = scalar_select %p704, %s41, 1
        %p706 = scmp.lt.s32.totalorder %s42, 0
        %s707 = scalar_select %p706, %s42, 0
        %s708 = smul.addr %s707, 2
        %s709 = smul.addr %s705, 2
        %s710 = sadd.s32 %s708, %s709
        %s711 = smul.addr %s710, 8
        %s712 = scalar_lea.vmem %s9, %s711
        %p713 = scmp.lt.s32.totalorder %s41, 1
        %s714 = scalar_select %p713, %s41, 1
        %p715 = scmp.lt.s32.totalorder %s42, 0
        %s716 = scalar_select %p715, %s42, 0
        %s717 = smul.addr %s716, 8
        %s718 = smul.addr %s714, 8
        %s719 = sadd.s32 %s717, %s718
        %s720 = smul.addr %s719, 8
        %s721 = scalar_lea.vmem %s10, %s720
        %v722 = vld [vmem:[%s703] sm:$0xff]
        %v723 = vld [vmem:[%s703 + $0x8] sm:$0xff]
        %v724 = vld [vmem:[%s703 + $0x10] sm:$0xff]
        %v725 = vld [vmem:[%s703 + $0x18] sm:$0xff]
        %v726 = vld [vmem:[%s538] sm:$0xff]
        %v727 = vld [vmem:[%s538 + $0x8] sm:$0xff]
        %v728 = vld [vmem:[%s538 + $0x10] sm:$0xff]
        %v729 = vld [vmem:[%s538 + $0x18] sm:$0xff]
        %v730 = vld [vmem:[%s538 + $0x20] sm:$0xff]
        %v731 = vld [vmem:[%s538 + $0x28] sm:$0xff]
        %v732 = vld [vmem:[%s538 + $0x30] sm:$0xff]
        %v733 = vld [vmem:[%s538 + $0x38] sm:$0xff]
        %v734 = vld [vmem:[%s538 + $0x40] sm:$0xff]
        %v735 = vld [vmem:[%s538 + $0x48] sm:$0xff]
        %v736 = vld [vmem:[%s538 + $0x50] sm:$0xff]
        %v737 = vld [vmem:[%s538 + $0x58] sm:$0xff]
        %v738 = vld [vmem:[%s538 + $0x60] sm:$0xff]
        %v739 = vld [vmem:[%s538 + $0x68] sm:$0xff]
        %v740 = vld [vmem:[%s538 + $0x70] sm:$0xff]
        %v741 = vld [vmem:[%s538 + $0x78] sm:$0xff]
        %v742 = vld [vmem:[%s538 + $0x80] sm:$0xff]
        %v743 = vld [vmem:[%s538 + $0x88] sm:$0xff]
        %v744 = vld [vmem:[%s538 + $0x90] sm:$0xff]
        %v745 = vld [vmem:[%s538 + $0x98] sm:$0xff]
        %v746 = vld [vmem:[%s538 + $0xa0] sm:$0xff]
        %v747 = vld [vmem:[%s538 + $0xa8] sm:$0xff]
        %v748 = vld [vmem:[%s538 + $0xb0] sm:$0xff]
        %v749 = vld [vmem:[%s538 + $0xb8] sm:$0xff]
        %v750 = vld [vmem:[%s538 + $0xc0] sm:$0xff]
        %v751 = vld [vmem:[%s538 + $0xc8] sm:$0xff]
        %v752 = vld [vmem:[%s538 + $0xd0] sm:$0xff]
        %v753 = vld [vmem:[%s538 + $0xd8] sm:$0xff]
        %v754 = vld [vmem:[%s538 + $0xe0] sm:$0xff]
        %v755 = vld [vmem:[%s538 + $0xe8] sm:$0xff]
        %v756 = vld [vmem:[%s538 + $0xf0] sm:$0xff]
        %v757 = vld [vmem:[%s538 + $0xf8] sm:$0xff]
        %v758 = vld [vmem:[%s538 + $0x100] sm:$0xff]
        %v759 = vld [vmem:[%s538 + $0x108] sm:$0xff]
        %v760 = vld [vmem:[%s538 + $0x110] sm:$0xff]
        %v761 = vld [vmem:[%s538 + $0x118] sm:$0xff]
        %v762 = vld [vmem:[%s538 + $0x120] sm:$0xff]
        %v763 = vld [vmem:[%s538 + $0x128] sm:$0xff]
        %v764 = vld [vmem:[%s538 + $0x130] sm:$0xff]
        %v765 = vld [vmem:[%s538 + $0x138] sm:$0xff]
        %v766 = vld [vmem:[%s538 + $0x140] sm:$0xff]
        %v767 = vld [vmem:[%s538 + $0x148] sm:$0xff]
        %v768 = vld [vmem:[%s538 + $0x150] sm:$0xff]
        %v769 = vld [vmem:[%s538 + $0x158] sm:$0xff]
        %v770 = vld [vmem:[%s538 + $0x160] sm:$0xff]
        %v771 = vld [vmem:[%s538 + $0x168] sm:$0xff]
        %v772 = vld [vmem:[%s538 + $0x170] sm:$0xff]
        %v773 = vld [vmem:[%s538 + $0x178] sm:$0xff]
        %v774 = vld [vmem:[%s538 + $0x180] sm:$0xff]
        %v775 = vld [vmem:[%s538 + $0x188] sm:$0xff]
        %v776 = vld [vmem:[%s538 + $0x190] sm:$0xff]
        %v777 = vld [vmem:[%s538 + $0x198] sm:$0xff]
        %v778 = vld [vmem:[%s538 + $0x1a0] sm:$0xff]
        %v779 = vld [vmem:[%s538 + $0x1a8] sm:$0xff]
        %v780 = vld [vmem:[%s538 + $0x1b0] sm:$0xff]
        %v781 = vld [vmem:[%s538 + $0x1b8] sm:$0xff]
        %v782 = vld [vmem:[%s538 + $0x1c0] sm:$0xff]
        %v783 = vld [vmem:[%s538 + $0x1c8] sm:$0xff]
        %v784 = vld [vmem:[%s538 + $0x1d0] sm:$0xff]
        %v785 = vld [vmem:[%s538 + $0x1d8] sm:$0xff]
        %v786 = vld [vmem:[%s538 + $0x1e0] sm:$0xff]
        %v787 = vld [vmem:[%s538 + $0x1e8] sm:$0xff]
        %v788 = vld [vmem:[%s538 + $0x1f0] sm:$0xff]
        %v789 = vld [vmem:[%s538 + $0x1f8] sm:$0xff]
        %v790 = vld [vmem:[%s538 + $0x200] sm:$0xff]
        %v791 = vld [vmem:[%s538 + $0x208] sm:$0xff]
        %v792 = vld [vmem:[%s538 + $0x210] sm:$0xff]
        %v793 = vld [vmem:[%s538 + $0x218] sm:$0xff]
        %v794 = vld [vmem:[%s538 + $0x220] sm:$0xff]
        %v795 = vld [vmem:[%s538 + $0x228] sm:$0xff]
        %v796 = vld [vmem:[%s538 + $0x230] sm:$0xff]
        %v797 = vld [vmem:[%s538 + $0x238] sm:$0xff]
        %v798 = vld [vmem:[%s538 + $0x240] sm:$0xff]
        %v799 = vld [vmem:[%s538 + $0x248] sm:$0xff]
        %v800 = vld [vmem:[%s538 + $0x250] sm:$0xff]
        %v801 = vld [vmem:[%s538 + $0x258] sm:$0xff]
        %v802 = vld [vmem:[%s538 + $0x260] sm:$0xff]
        %v803 = vld [vmem:[%s538 + $0x268] sm:$0xff]
        %v804 = vld [vmem:[%s538 + $0x270] sm:$0xff]
        %v805 = vld [vmem:[%s538 + $0x278] sm:$0xff]
        %v806 = vld [vmem:[%s538 + $0x280] sm:$0xff]
        %v807 = vld [vmem:[%s538 + $0x288] sm:$0xff]
        %v808 = vld [vmem:[%s538 + $0x290] sm:$0xff]
        %v809 = vld [vmem:[%s538 + $0x298] sm:$0xff]
        %v810 = vld [vmem:[%s538 + $0x2a0] sm:$0xff]
        %v811 = vld [vmem:[%s538 + $0x2a8] sm:$0xff]
        %v812 = vld [vmem:[%s538 + $0x2b0] sm:$0xff]
        %v813 = vld [vmem:[%s538 + $0x2b8] sm:$0xff]
        %v814 = vld [vmem:[%s538 + $0x2c0] sm:$0xff]
        %v815 = vld [vmem:[%s538 + $0x2c8] sm:$0xff]
        %v816 = vld [vmem:[%s538 + $0x2d0] sm:$0xff]
        %v817 = vld [vmem:[%s538 + $0x2d8] sm:$0xff]
        %v818 = vld [vmem:[%s538 + $0x2e0] sm:$0xff]
        %v819 = vld [vmem:[%s538 + $0x2e8] sm:$0xff]
        %v820 = vld [vmem:[%s538 + $0x2f0] sm:$0xff]
        %v821 = vld [vmem:[%s538 + $0x2f8] sm:$0xff]
        %v822 = vld [vmem:[%s538 + $0x300] sm:$0xff]
        %v823 = vld [vmem:[%s538 + $0x308] sm:$0xff]
        %v824 = vld [vmem:[%s538 + $0x310] sm:$0xff]
        %v825 = vld [vmem:[%s538 + $0x318] sm:$0xff]
        %v826 = vld [vmem:[%s538 + $0x320] sm:$0xff]
        %v827 = vld [vmem:[%s538 + $0x328] sm:$0xff]
        %v828 = vld [vmem:[%s538 + $0x330] sm:$0xff]
        %v829 = vld [vmem:[%s538 + $0x338] sm:$0xff]
        %v830 = vld [vmem:[%s538 + $0x340] sm:$0xff]
        %v831 = vld [vmem:[%s538 + $0x348] sm:$0xff]
        %v832 = vld [vmem:[%s538 + $0x350] sm:$0xff]
        %v833 = vld [vmem:[%s538 + $0x358] sm:$0xff]
        %v834 = vld [vmem:[%s538 + $0x360] sm:$0xff]
        %v835 = vld [vmem:[%s538 + $0x368] sm:$0xff]
        %v836 = vld [vmem:[%s538 + $0x370] sm:$0xff]
        %v837 = vld [vmem:[%s538 + $0x378] sm:$0xff]
        %v838 = vld [vmem:[%s538 + $0x380] sm:$0xff]
        %v839 = vld [vmem:[%s538 + $0x388] sm:$0xff]
        %v840 = vld [vmem:[%s538 + $0x390] sm:$0xff]
        %v841 = vld [vmem:[%s538 + $0x398] sm:$0xff]
        %v842 = vld [vmem:[%s538 + $0x3a0] sm:$0xff]
        %v843 = vld [vmem:[%s538 + $0x3a8] sm:$0xff]
        %v844 = vld [vmem:[%s538 + $0x3b0] sm:$0xff]
        %v845 = vld [vmem:[%s538 + $0x3b8] sm:$0xff]
        %v846 = vld [vmem:[%s538 + $0x3c0] sm:$0xff]
        %v847 = vld [vmem:[%s538 + $0x3c8] sm:$0xff]
        %v848 = vld [vmem:[%s538 + $0x3d0] sm:$0xff]
        %v849 = vld [vmem:[%s538 + $0x3d8] sm:$0xff]
        %v850 = vld [vmem:[%s538 + $0x3e0] sm:$0xff]
        %v851 = vld [vmem:[%s538 + $0x3e8] sm:$0xff]
        %v852 = vld [vmem:[%s538 + $0x3f0] sm:$0xff]
        %v853 = vld [vmem:[%s538 + $0x3f8] sm:$0xff]
        %v854 = vld [vmem:[%s538 + $0x400] sm:$0xff]
        %v855 = vld [vmem:[%s538 + $0x408] sm:$0xff]
        %v856 = vld [vmem:[%s538 + $0x410] sm:$0xff]
        %v857 = vld [vmem:[%s538 + $0x418] sm:$0xff]
        %v858 = vld [vmem:[%s538 + $0x420] sm:$0xff]
        %v859 = vld [vmem:[%s538 + $0x428] sm:$0xff]
        %v860 = vld [vmem:[%s538 + $0x430] sm:$0xff]
        %v861 = vld [vmem:[%s538 + $0x438] sm:$0xff]
        %v862 = vld [vmem:[%s538 + $0x440] sm:$0xff]
        %v863 = vld [vmem:[%s538 + $0x448] sm:$0xff]
        %v864 = vld [vmem:[%s538 + $0x450] sm:$0xff]
        %v865 = vld [vmem:[%s538 + $0x458] sm:$0xff]
        %v866 = vld [vmem:[%s538 + $0x460] sm:$0xff]
        %v867 = vld [vmem:[%s538 + $0x468] sm:$0xff]
        %v868 = vld [vmem:[%s538 + $0x470] sm:$0xff]
        %v869 = vld [vmem:[%s538 + $0x478] sm:$0xff]
        %v870 = vld [vmem:[%s538 + $0x480] sm:$0xff]
        %v871 = vld [vmem:[%s538 + $0x488] sm:$0xff]
        %v872 = vld [vmem:[%s538 + $0x490] sm:$0xff]
        %v873 = vld [vmem:[%s538 + $0x498] sm:$0xff]
        %v874 = vld [vmem:[%s538 + $0x4a0] sm:$0xff]
        %v875 = vld [vmem:[%s538 + $0x4a8] sm:$0xff]
        %v876 = vld [vmem:[%s538 + $0x4b0] sm:$0xff]
        %v877 = vld [vmem:[%s538 + $0x4b8] sm:$0xff]
        %v878 = vld [vmem:[%s538 + $0x4c0] sm:$0xff]
        %v879 = vld [vmem:[%s538 + $0x4c8] sm:$0xff]
        %v880 = vld [vmem:[%s538 + $0x4d0] sm:$0xff]
        %v881 = vld [vmem:[%s538 + $0x4d8] sm:$0xff]
        %v882 = vld [vmem:[%s538 + $0x4e0] sm:$0xff]
        %v883 = vld [vmem:[%s538 + $0x4e8] sm:$0xff]
        %v884 = vld [vmem:[%s538 + $0x4f0] sm:$0xff]
        %v885 = vld [vmem:[%s538 + $0x4f8] sm:$0xff]
        %v886 = vld [vmem:[%s538 + $0x500] sm:$0xff]
        %v887 = vld [vmem:[%s538 + $0x508] sm:$0xff]
        %v888 = vld [vmem:[%s538 + $0x510] sm:$0xff]
        %v889 = vld [vmem:[%s538 + $0x518] sm:$0xff]
        %v890 = vld [vmem:[%s538 + $0x520] sm:$0xff]
        %v891 = vld [vmem:[%s538 + $0x528] sm:$0xff]
        %v892 = vld [vmem:[%s538 + $0x530] sm:$0xff]
        %v893 = vld [vmem:[%s538 + $0x538] sm:$0xff]
        %v894 = vld [vmem:[%s538 + $0x540] sm:$0xff]
        %v895 = vld [vmem:[%s538 + $0x548] sm:$0xff]
        %v896 = vld [vmem:[%s538 + $0x550] sm:$0xff]
        %v897 = vld [vmem:[%s538 + $0x558] sm:$0xff]
        %v898 = vld [vmem:[%s538 + $0x560] sm:$0xff]
        %v899 = vld [vmem:[%s538 + $0x568] sm:$0xff]
        %v900 = vld [vmem:[%s538 + $0x570] sm:$0xff]
        %v901 = vld [vmem:[%s538 + $0x578] sm:$0xff]
        %v902 = vld [vmem:[%s538 + $0x580] sm:$0xff]
        %v903 = vld [vmem:[%s538 + $0x588] sm:$0xff]
        %v904 = vld [vmem:[%s538 + $0x590] sm:$0xff]
        %v905 = vld [vmem:[%s538 + $0x598] sm:$0xff]
        %v906 = vld [vmem:[%s538 + $0x5a0] sm:$0xff]
        %v907 = vld [vmem:[%s538 + $0x5a8] sm:$0xff]
        %v908 = vld [vmem:[%s538 + $0x5b0] sm:$0xff]
        %v909 = vld [vmem:[%s538 + $0x5b8] sm:$0xff]
        %v910 = vld [vmem:[%s538 + $0x5c0] sm:$0xff]
        %v911 = vld [vmem:[%s538 + $0x5c8] sm:$0xff]
        %v912 = vld [vmem:[%s538 + $0x5d0] sm:$0xff]
        %v913 = vld [vmem:[%s538 + $0x5d8] sm:$0xff]
        %v914 = vld [vmem:[%s538 + $0x5e0] sm:$0xff]
        %v915 = vld [vmem:[%s538 + $0x5e8] sm:$0xff]
        %v916 = vld [vmem:[%s538 + $0x5f0] sm:$0xff]
        %v917 = vld [vmem:[%s538 + $0x5f8] sm:$0xff]
        %v918 = vld [vmem:[%s538 + $0x600] sm:$0xff]
        %v919 = vld [vmem:[%s538 + $0x608] sm:$0xff]
        %v920 = vld [vmem:[%s538 + $0x610] sm:$0xff]
        %v921 = vld [vmem:[%s538 + $0x618] sm:$0xff]
        %v922 = vld [vmem:[%s538 + $0x620] sm:$0xff]
        %v923 = vld [vmem:[%s538 + $0x628] sm:$0xff]
        %v924 = vld [vmem:[%s538 + $0x630] sm:$0xff]
        %v925 = vld [vmem:[%s538 + $0x638] sm:$0xff]
        %v926 = vld [vmem:[%s538 + $0x640] sm:$0xff]
        %v927 = vld [vmem:[%s538 + $0x648] sm:$0xff]
        %v928 = vld [vmem:[%s538 + $0x650] sm:$0xff]
        %v929 = vld [vmem:[%s538 + $0x658] sm:$0xff]
        %v930 = vld [vmem:[%s538 + $0x660] sm:$0xff]
        %v931 = vld [vmem:[%s538 + $0x668] sm:$0xff]
        %v932 = vld [vmem:[%s538 + $0x670] sm:$0xff]
        %v933 = vld [vmem:[%s538 + $0x678] sm:$0xff]
        %v934 = vld [vmem:[%s538 + $0x680] sm:$0xff]
        %v935 = vld [vmem:[%s538 + $0x688] sm:$0xff]
        %v936 = vld [vmem:[%s538 + $0x690] sm:$0xff]
        %v937 = vld [vmem:[%s538 + $0x698] sm:$0xff]
        %v938 = vld [vmem:[%s538 + $0x6a0] sm:$0xff]
        %v939 = vld [vmem:[%s538 + $0x6a8] sm:$0xff]
        %v940 = vld [vmem:[%s538 + $0x6b0] sm:$0xff]
        %v941 = vld [vmem:[%s538 + $0x6b8] sm:$0xff]
        %v942 = vld [vmem:[%s538 + $0x6c0] sm:$0xff]
        %v943 = vld [vmem:[%s538 + $0x6c8] sm:$0xff]
        %v944 = vld [vmem:[%s538 + $0x6d0] sm:$0xff]
        %v945 = vld [vmem:[%s538 + $0x6d8] sm:$0xff]
        %v946 = vld [vmem:[%s538 + $0x6e0] sm:$0xff]
        %v947 = vld [vmem:[%s538 + $0x6e8] sm:$0xff]
        %v948 = vld [vmem:[%s538 + $0x6f0] sm:$0xff]
        %v949 = vld [vmem:[%s538 + $0x6f8] sm:$0xff]
        %v950 = vld [vmem:[%s538 + $0x700] sm:$0xff]
        %v951 = vld [vmem:[%s538 + $0x708] sm:$0xff]
        %v952 = vld [vmem:[%s538 + $0x710] sm:$0xff]
        %v953 = vld [vmem:[%s538 + $0x718] sm:$0xff]
        %v954 = vld [vmem:[%s538 + $0x720] sm:$0xff]
        %v955 = vld [vmem:[%s538 + $0x728] sm:$0xff]
        %v956 = vld [vmem:[%s538 + $0x730] sm:$0xff]
        %v957 = vld [vmem:[%s538 + $0x738] sm:$0xff]
        %v958 = vld [vmem:[%s538 + $0x740] sm:$0xff]
        %v959 = vld [vmem:[%s538 + $0x748] sm:$0xff]
        %v960 = vld [vmem:[%s538 + $0x750] sm:$0xff]
        %v961 = vld [vmem:[%s538 + $0x758] sm:$0xff]
        %v962 = vld [vmem:[%s538 + $0x760] sm:$0xff]
        %v963 = vld [vmem:[%s538 + $0x768] sm:$0xff]
        %v964 = vld [vmem:[%s538 + $0x770] sm:$0xff]
        %v965 = vld [vmem:[%s538 + $0x778] sm:$0xff]
        %v966 = vld [vmem:[%s538 + $0x780] sm:$0xff]
        %v967 = vld [vmem:[%s538 + $0x788] sm:$0xff]
        %v968 = vld [vmem:[%s538 + $0x790] sm:$0xff]
        %v969 = vld [vmem:[%s538 + $0x798] sm:$0xff]
        %v970 = vld [vmem:[%s538 + $0x7a0] sm:$0xff]
        %v971 = vld [vmem:[%s538 + $0x7a8] sm:$0xff]
        %v972 = vld [vmem:[%s538 + $0x7b0] sm:$0xff]
        %v973 = vld [vmem:[%s538 + $0x7b8] sm:$0xff]
        %v974 = vld [vmem:[%s538 + $0x7c0] sm:$0xff]
        %v975 = vld [vmem:[%s538 + $0x7c8] sm:$0xff]
        %v976 = vld [vmem:[%s538 + $0x7d0] sm:$0xff]
        %v977 = vld [vmem:[%s538 + $0x7d8] sm:$0xff]
        %v978 = vld [vmem:[%s538 + $0x7e0] sm:$0xff]
        %v979 = vld [vmem:[%s538 + $0x7e8] sm:$0xff]
        %v980 = vld [vmem:[%s538 + $0x7f0] sm:$0xff]
        %v981 = vld [vmem:[%s538 + $0x7f8] sm:$0xff]
        %v982 = vld [vmem:[%s538 + $0x800] sm:$0xff]
        %v983 = vld [vmem:[%s538 + $0x808] sm:$0xff]
        %v984 = vld [vmem:[%s538 + $0x810] sm:$0xff]
        %v985 = vld [vmem:[%s538 + $0x818] sm:$0xff]
        %v986 = vld [vmem:[%s538 + $0x820] sm:$0xff]
        %v987 = vld [vmem:[%s538 + $0x828] sm:$0xff]
        %v988 = vld [vmem:[%s538 + $0x830] sm:$0xff]
        %v989 = vld [vmem:[%s538 + $0x838] sm:$0xff]
        %v990 = vld [vmem:[%s538 + $0x840] sm:$0xff]
        %v991 = vld [vmem:[%s538 + $0x848] sm:$0xff]
        %v992 = vld [vmem:[%s538 + $0x850] sm:$0xff]
        %v993 = vld [vmem:[%s538 + $0x858] sm:$0xff]
        %v994 = vld [vmem:[%s538 + $0x860] sm:$0xff]
        %v995 = vld [vmem:[%s538 + $0x868] sm:$0xff]
        %v996 = vld [vmem:[%s538 + $0x870] sm:$0xff]
        %v997 = vld [vmem:[%s538 + $0x878] sm:$0xff]
        %v998 = vld [vmem:[%s538 + $0x880] sm:$0xff]
        %v999 = vld [vmem:[%s538 + $0x888] sm:$0xff]
        %v1000 = vld [vmem:[%s538 + $0x890] sm:$0xff]
        %v1001 = vld [vmem:[%s538 + $0x898] sm:$0xff]
        %v1002 = vld [vmem:[%s538 + $0x8a0] sm:$0xff]
        %v1003 = vld [vmem:[%s538 + $0x8a8] sm:$0xff]
        %v1004 = vld [vmem:[%s538 + $0x8b0] sm:$0xff]
        %v1005 = vld [vmem:[%s538 + $0x8b8] sm:$0xff]
        %v1006 = vld [vmem:[%s538 + $0x8c0] sm:$0xff]
        %v1007 = vld [vmem:[%s538 + $0x8c8] sm:$0xff]
        %v1008 = vld [vmem:[%s538 + $0x8d0] sm:$0xff]
        %v1009 = vld [vmem:[%s538 + $0x8d8] sm:$0xff]
        %v1010 = vld [vmem:[%s538 + $0x8e0] sm:$0xff]
        %v1011 = vld [vmem:[%s538 + $0x8e8] sm:$0xff]
        %v1012 = vld [vmem:[%s538 + $0x8f0] sm:$0xff]
        %v1013 = vld [vmem:[%s538 + $0x8f8] sm:$0xff]
        %v1014 = vld [vmem:[%s538 + $0x900] sm:$0xff]
        %v1015 = vld [vmem:[%s538 + $0x908] sm:$0xff]
        %v1016 = vld [vmem:[%s538 + $0x910] sm:$0xff]
        %v1017 = vld [vmem:[%s538 + $0x918] sm:$0xff]
        %v1018 = vld [vmem:[%s538 + $0x920] sm:$0xff]
        %v1019 = vld [vmem:[%s538 + $0x928] sm:$0xff]
        %v1020 = vld [vmem:[%s538 + $0x930] sm:$0xff]
        %v1021 = vld [vmem:[%s538 + $0x938] sm:$0xff]
        %v1022 = vld [vmem:[%s538 + $0x940] sm:$0xff]
        %v1023 = vld [vmem:[%s538 + $0x948] sm:$0xff]
        %v1024 = vld [vmem:[%s538 + $0x950] sm:$0xff]
        %v1025 = vld [vmem:[%s538 + $0x958] sm:$0xff]
        %v1026 = vld [vmem:[%s538 + $0x960] sm:$0xff]
        %v1027 = vld [vmem:[%s538 + $0x968] sm:$0xff]
        %v1028 = vld [vmem:[%s538 + $0x970] sm:$0xff]
        %v1029 = vld [vmem:[%s538 + $0x978] sm:$0xff]
        %v1030 = vld [vmem:[%s538 + $0x980] sm:$0xff]
        %v1031 = vld [vmem:[%s538 + $0x988] sm:$0xff]
        %v1032 = vld [vmem:[%s538 + $0x990] sm:$0xff]
        %v1033 = vld [vmem:[%s538 + $0x998] sm:$0xff]
        %v1034 = vld [vmem:[%s538 + $0x9a0] sm:$0xff]
        %v1035 = vld [vmem:[%s538 + $0x9a8] sm:$0xff]
        %v1036 = vld [vmem:[%s538 + $0x9b0] sm:$0xff]
        %v1037 = vld [vmem:[%s538 + $0x9b8] sm:$0xff]
        %v1038 = vld [vmem:[%s538 + $0x9c0] sm:$0xff]
        %v1039 = vld [vmem:[%s538 + $0x9c8] sm:$0xff]
        %v1040 = vld [vmem:[%s538 + $0x9d0] sm:$0xff]
        %v1041 = vld [vmem:[%s538 + $0x9d8] sm:$0xff]
        %v1042 = vld [vmem:[%s538 + $0x9e0] sm:$0xff]
        %v1043 = vld [vmem:[%s538 + $0x9e8] sm:$0xff]
        %v1044 = vld [vmem:[%s538 + $0x9f0] sm:$0xff]
        %v1045 = vld [vmem:[%s538 + $0x9f8] sm:$0xff]
        %v1046 = vld [vmem:[%s538 + $0xa00] sm:$0xff]
        %v1047 = vld [vmem:[%s538 + $0xa08] sm:$0xff]
        %v1048 = vld [vmem:[%s538 + $0xa10] sm:$0xff]
        %v1049 = vld [vmem:[%s538 + $0xa18] sm:$0xff]
        %v1050 = vld [vmem:[%s538 + $0xa20] sm:$0xff]
        %v1051 = vld [vmem:[%s538 + $0xa28] sm:$0xff]
        %v1052 = vld [vmem:[%s538 + $0xa30] sm:$0xff]
        %v1053 = vld [vmem:[%s538 + $0xa38] sm:$0xff]
        %v1054 = vld [vmem:[%s538 + $0xa40] sm:$0xff]
        %v1055 = vld [vmem:[%s538 + $0xa48] sm:$0xff]
        %v1056 = vld [vmem:[%s538 + $0xa50] sm:$0xff]
        %v1057 = vld [vmem:[%s538 + $0xa58] sm:$0xff]
        %v1058 = vld [vmem:[%s538 + $0xa60] sm:$0xff]
        %v1059 = vld [vmem:[%s538 + $0xa68] sm:$0xff]
        %v1060 = vld [vmem:[%s538 + $0xa70] sm:$0xff]
        %v1061 = vld [vmem:[%s538 + $0xa78] sm:$0xff]
        %v1062 = vld [vmem:[%s538 + $0xa80] sm:$0xff]
        %v1063 = vld [vmem:[%s538 + $0xa88] sm:$0xff]
        %v1064 = vld [vmem:[%s538 + $0xa90] sm:$0xff]
        %v1065 = vld [vmem:[%s538 + $0xa98] sm:$0xff]
        %v1066 = vld [vmem:[%s538 + $0xaa0] sm:$0xff]
        %v1067 = vld [vmem:[%s538 + $0xaa8] sm:$0xff]
        %v1068 = vld [vmem:[%s538 + $0xab0] sm:$0xff]
        %v1069 = vld [vmem:[%s538 + $0xab8] sm:$0xff]
        %v1070 = vld [vmem:[%s538 + $0xac0] sm:$0xff]
        %v1071 = vld [vmem:[%s538 + $0xac8] sm:$0xff]
        %v1072 = vld [vmem:[%s538 + $0xad0] sm:$0xff]
        %v1073 = vld [vmem:[%s538 + $0xad8] sm:$0xff]
        %v1074 = vld [vmem:[%s538 + $0xae0] sm:$0xff]
        %v1075 = vld [vmem:[%s538 + $0xae8] sm:$0xff]
        %v1076 = vld [vmem:[%s538 + $0xaf0] sm:$0xff]
        %v1077 = vld [vmem:[%s538 + $0xaf8] sm:$0xff]
        %v1078 = vld [vmem:[%s538 + $0xb00] sm:$0xff]
        %v1079 = vld [vmem:[%s538 + $0xb08] sm:$0xff]
        %v1080 = vld [vmem:[%s538 + $0xb10] sm:$0xff]
        %v1081 = vld [vmem:[%s538 + $0xb18] sm:$0xff]
        %v1082 = vld [vmem:[%s538 + $0xb20] sm:$0xff]
        %v1083 = vld [vmem:[%s538 + $0xb28] sm:$0xff]
        %v1084 = vld [vmem:[%s538 + $0xb30] sm:$0xff]
        %v1085 = vld [vmem:[%s538 + $0xb38] sm:$0xff]
        %v1086 = vld [vmem:[%s538 + $0xb40] sm:$0xff]
        %v1087 = vld [vmem:[%s538 + $0xb48] sm:$0xff]
        %v1088 = vld [vmem:[%s538 + $0xb50] sm:$0xff]
        %v1089 = vld [vmem:[%s538 + $0xb58] sm:$0xff]
        %v1090 = vld [vmem:[%s538 + $0xb60] sm:$0xff]
        %v1091 = vld [vmem:[%s538 + $0xb68] sm:$0xff]
        %v1092 = vld [vmem:[%s538 + $0xb70] sm:$0xff]
        %v1093 = vld [vmem:[%s538 + $0xb78] sm:$0xff]
        %v1094 = vld [vmem:[%s538 + $0xb80] sm:$0xff]
        %v1095 = vld [vmem:[%s538 + $0xb88] sm:$0xff]
        %v1096 = vld [vmem:[%s538 + $0xb90] sm:$0xff]
        %v1097 = vld [vmem:[%s538 + $0xb98] sm:$0xff]
        %v1098 = vld [vmem:[%s538 + $0xba0] sm:$0xff]
        %v1099 = vld [vmem:[%s538 + $0xba8] sm:$0xff]
        %v1100 = vld [vmem:[%s538 + $0xbb0] sm:$0xff]
        %v1101 = vld [vmem:[%s538 + $0xbb8] sm:$0xff]
        %v1102 = vld [vmem:[%s538 + $0xbc0] sm:$0xff]
        %v1103 = vld [vmem:[%s538 + $0xbc8] sm:$0xff]
        %v1104 = vld [vmem:[%s538 + $0xbd0] sm:$0xff]
        %v1105 = vld [vmem:[%s538 + $0xbd8] sm:$0xff]
        %v1106 = vld [vmem:[%s538 + $0xbe0] sm:$0xff]
        %v1107 = vld [vmem:[%s538 + $0xbe8] sm:$0xff]
        %v1108 = vld [vmem:[%s538 + $0xbf0] sm:$0xff]
        %v1109 = vld [vmem:[%s538 + $0xbf8] sm:$0xff]
        %v1110 = vld [vmem:[%s538 + $0xc00] sm:$0xff]
        %v1111 = vld [vmem:[%s538 + $0xc08] sm:$0xff]
        %v1112 = vld [vmem:[%s538 + $0xc10] sm:$0xff]
        %v1113 = vld [vmem:[%s538 + $0xc18] sm:$0xff]
        %v1114 = vld [vmem:[%s538 + $0xc20] sm:$0xff]
        %v1115 = vld [vmem:[%s538 + $0xc28] sm:$0xff]
        %v1116 = vld [vmem:[%s538 + $0xc30] sm:$0xff]
        %v1117 = vld [vmem:[%s538 + $0xc38] sm:$0xff]
        %v1118 = vld [vmem:[%s538 + $0xc40] sm:$0xff]
        %v1119 = vld [vmem:[%s538 + $0xc48] sm:$0xff]
        %v1120 = vld [vmem:[%s538 + $0xc50] sm:$0xff]
        %v1121 = vld [vmem:[%s538 + $0xc58] sm:$0xff]
        %v1122 = vld [vmem:[%s538 + $0xc60] sm:$0xff]
        %v1123 = vld [vmem:[%s538 + $0xc68] sm:$0xff]
        %v1124 = vld [vmem:[%s538 + $0xc70] sm:$0xff]
        %v1125 = vld [vmem:[%s538 + $0xc78] sm:$0xff]
        %v1126 = vld [vmem:[%s538 + $0xc80] sm:$0xff]
        %v1127 = vld [vmem:[%s538 + $0xc88] sm:$0xff]
        %v1128 = vld [vmem:[%s538 + $0xc90] sm:$0xff]
        %v1129 = vld [vmem:[%s538 + $0xc98] sm:$0xff]
        %v1130 = vld [vmem:[%s538 + $0xca0] sm:$0xff]
        %v1131 = vld [vmem:[%s538 + $0xca8] sm:$0xff]
        %v1132 = vld [vmem:[%s538 + $0xcb0] sm:$0xff]
        %v1133 = vld [vmem:[%s538 + $0xcb8] sm:$0xff]
        %v1134 = vld [vmem:[%s538 + $0xcc0] sm:$0xff]
        %v1135 = vld [vmem:[%s538 + $0xcc8] sm:$0xff]
        %v1136 = vld [vmem:[%s538 + $0xcd0] sm:$0xff]
        %v1137 = vld [vmem:[%s538 + $0xcd8] sm:$0xff]
        %v1138 = vld [vmem:[%s538 + $0xce0] sm:$0xff]
        %v1139 = vld [vmem:[%s538 + $0xce8] sm:$0xff]
        %v1140 = vld [vmem:[%s538 + $0xcf0] sm:$0xff]
        %v1141 = vld [vmem:[%s538 + $0xcf8] sm:$0xff]
        %v1142 = vld [vmem:[%s538 + $0xd00] sm:$0xff]
        %v1143 = vld [vmem:[%s538 + $0xd08] sm:$0xff]
        %v1144 = vld [vmem:[%s538 + $0xd10] sm:$0xff]
        %v1145 = vld [vmem:[%s538 + $0xd18] sm:$0xff]
        %v1146 = vld [vmem:[%s538 + $0xd20] sm:$0xff]
        %v1147 = vld [vmem:[%s538 + $0xd28] sm:$0xff]
        %v1148 = vld [vmem:[%s538 + $0xd30] sm:$0xff]
        %v1149 = vld [vmem:[%s538 + $0xd38] sm:$0xff]
        %v1150 = vld [vmem:[%s538 + $0xd40] sm:$0xff]
        %v1151 = vld [vmem:[%s538 + $0xd48] sm:$0xff]
        %v1152 = vld [vmem:[%s538 + $0xd50] sm:$0xff]
        %v1153 = vld [vmem:[%s538 + $0xd58] sm:$0xff]
        %v1154 = vld [vmem:[%s538 + $0xd60] sm:$0xff]
        %v1155 = vld [vmem:[%s538 + $0xd68] sm:$0xff]
        %v1156 = vld [vmem:[%s538 + $0xd70] sm:$0xff]
        %v1157 = vld [vmem:[%s538 + $0xd78] sm:$0xff]
        %v1158 = vld [vmem:[%s538 + $0xd80] sm:$0xff]
        %v1159 = vld [vmem:[%s538 + $0xd88] sm:$0xff]
        %v1160 = vld [vmem:[%s538 + $0xd90] sm:$0xff]
        %v1161 = vld [vmem:[%s538 + $0xd98] sm:$0xff]
        %v1162 = vld [vmem:[%s538 + $0xda0] sm:$0xff]
        %v1163 = vld [vmem:[%s538 + $0xda8] sm:$0xff]
        %v1164 = vld [vmem:[%s538 + $0xdb0] sm:$0xff]
        %v1165 = vld [vmem:[%s538 + $0xdb8] sm:$0xff]
        %v1166 = vld [vmem:[%s538 + $0xdc0] sm:$0xff]
        %v1167 = vld [vmem:[%s538 + $0xdc8] sm:$0xff]
        %v1168 = vld [vmem:[%s538 + $0xdd0] sm:$0xff]
        %v1169 = vld [vmem:[%s538 + $0xdd8] sm:$0xff]
        %v1170 = vld [vmem:[%s538 + $0xde0] sm:$0xff]
        %v1171 = vld [vmem:[%s538 + $0xde8] sm:$0xff]
        %v1172 = vld [vmem:[%s538 + $0xdf0] sm:$0xff]
        %v1173 = vld [vmem:[%s538 + $0xdf8] sm:$0xff]
        %v1174 = vld [vmem:[%s538 + $0xe00] sm:$0xff]
        %v1175 = vld [vmem:[%s538 + $0xe08] sm:$0xff]
        %v1176 = vld [vmem:[%s538 + $0xe10] sm:$0xff]
        %v1177 = vld [vmem:[%s538 + $0xe18] sm:$0xff]
        %v1178 = vld [vmem:[%s538 + $0xe20] sm:$0xff]
        %v1179 = vld [vmem:[%s538 + $0xe28] sm:$0xff]
        %v1180 = vld [vmem:[%s538 + $0xe30] sm:$0xff]
        %v1181 = vld [vmem:[%s538 + $0xe38] sm:$0xff]
        %v1182 = vld [vmem:[%s538 + $0xe40] sm:$0xff]
        %v1183 = vld [vmem:[%s538 + $0xe48] sm:$0xff]
        %v1184 = vld [vmem:[%s538 + $0xe50] sm:$0xff]
        %v1185 = vld [vmem:[%s538 + $0xe58] sm:$0xff]
        %v1186 = vld [vmem:[%s538 + $0xe60] sm:$0xff]
        %v1187 = vld [vmem:[%s538 + $0xe68] sm:$0xff]
        %v1188 = vld [vmem:[%s538 + $0xe70] sm:$0xff]
        %v1189 = vld [vmem:[%s538 + $0xe78] sm:$0xff]
        %v1190 = vld [vmem:[%s538 + $0xe80] sm:$0xff]
        %v1191 = vld [vmem:[%s538 + $0xe88] sm:$0xff]
        %v1192 = vld [vmem:[%s538 + $0xe90] sm:$0xff]
        %v1193 = vld [vmem:[%s538 + $0xe98] sm:$0xff]
        %v1194 = vld [vmem:[%s538 + $0xea0] sm:$0xff]
        %v1195 = vld [vmem:[%s538 + $0xea8] sm:$0xff]
        %v1196 = vld [vmem:[%s538 + $0xeb0] sm:$0xff]
        %v1197 = vld [vmem:[%s538 + $0xeb8] sm:$0xff]
        %v1198 = vld [vmem:[%s538 + $0xec0] sm:$0xff]
        %v1199 = vld [vmem:[%s538 + $0xec8] sm:$0xff]
        %v1200 = vld [vmem:[%s538 + $0xed0] sm:$0xff]
        %v1201 = vld [vmem:[%s538 + $0xed8] sm:$0xff]
        %v1202 = vld [vmem:[%s538 + $0xee0] sm:$0xff]
        %v1203 = vld [vmem:[%s538 + $0xee8] sm:$0xff]
        %v1204 = vld [vmem:[%s538 + $0xef0] sm:$0xff]
        %v1205 = vld [vmem:[%s538 + $0xef8] sm:$0xff]
        %v1206 = vld [vmem:[%s538 + $0xf00] sm:$0xff]
        %v1207 = vld [vmem:[%s538 + $0xf08] sm:$0xff]
        %v1208 = vld [vmem:[%s538 + $0xf10] sm:$0xff]
        %v1209 = vld [vmem:[%s538 + $0xf18] sm:$0xff]
        %v1210 = vld [vmem:[%s538 + $0xf20] sm:$0xff]
        %v1211 = vld [vmem:[%s538 + $0xf28] sm:$0xff]
        %v1212 = vld [vmem:[%s538 + $0xf30] sm:$0xff]
        %v1213 = vld [vmem:[%s538 + $0xf38] sm:$0xff]
        %v1214 = vld [vmem:[%s538 + $0xf40] sm:$0xff]
        %v1215 = vld [vmem:[%s538 + $0xf48] sm:$0xff]
        %v1216 = vld [vmem:[%s538 + $0xf50] sm:$0xff]
        %v1217 = vld [vmem:[%s538 + $0xf58] sm:$0xff]
        %v1218 = vld [vmem:[%s538 + $0xf60] sm:$0xff]
        %v1219 = vld [vmem:[%s538 + $0xf68] sm:$0xff]
        %v1220 = vld [vmem:[%s538 + $0xf70] sm:$0xff]
        %v1221 = vld [vmem:[%s538 + $0xf78] sm:$0xff]
        %v1222 = vld [vmem:[%s538 + $0xf80] sm:$0xff]
        %v1223 = vld [vmem:[%s538 + $0xf88] sm:$0xff]
        %v1224 = vld [vmem:[%s538 + $0xf90] sm:$0xff]
        %v1225 = vld [vmem:[%s538 + $0xf98] sm:$0xff]
        %v1226 = vld [vmem:[%s538 + $0xfa0] sm:$0xff]
        %v1227 = vld [vmem:[%s538 + $0xfa8] sm:$0xff]
        %v1228 = vld [vmem:[%s538 + $0xfb0] sm:$0xff]
        %v1229 = vld [vmem:[%s538 + $0xfb8] sm:$0xff]
        %v1230 = vld [vmem:[%s538 + $0xfc0] sm:$0xff]
        %v1231 = vld [vmem:[%s538 + $0xfc8] sm:$0xff]
        %v1232 = vld [vmem:[%s538 + $0xfd0] sm:$0xff]
        %v1233 = vld [vmem:[%s538 + $0xfd8] sm:$0xff]
        %v1234 = vld [vmem:[%s538 + $0xfe0] sm:$0xff]
        %v1235 = vld [vmem:[%s538 + $0xfe8] sm:$0xff]
        %v1236 = vld [vmem:[%s538 + $0xff0] sm:$0xff]
        %v1237 = vld [vmem:[%s538 + $0xff8] sm:$0xff]
        %v1238 = vld [vmem:[%s547] sm:$0xff]
        %v1240 = vlaneseq
        %v1241 = vshrl.u32 %v1240, 7
        %v1242 = vsub.s32 0, %v1241
        %v1243 = vrot.slane %v1238, %v1242
        %v1244 = vlaneseq
        %v1245 = vshrl.u32 %v1244, 7
        %v1246 = vsub.s32 1, %v1245
        %v1247 = vrot.slane %v1238, %v1246
        %v1248 = vlaneseq
        %v1249 = vshrl.u32 %v1248, 7
        %v1250 = vsub.s32 2, %v1249
        %v1251 = vrot.slane %v1238, %v1250
        %v1252 = vlaneseq
        %v1253 = vshrl.u32 %v1252, 7
        %v1254 = vsub.s32 3, %v1253
        %v1255 = vrot.slane %v1238, %v1254
        %v1256 = vlaneseq
        %v1257 = vshrl.u32 %v1256, 7
        %v1258 = vsub.s32 4, %v1257
        %v1259 = vrot.slane %v1238, %v1258
        %v1260 = vlaneseq
        %v1261 = vshrl.u32 %v1260, 7
        %v1262 = vsub.s32 5, %v1261
        %v1263 = vrot.slane %v1238, %v1262
        %v1264 = vlaneseq
        %v1265 = vshrl.u32 %v1264, 7
        %v1266 = vsub.s32 6, %v1265
        %v1267 = vrot.slane %v1238, %v1266
        %v1268 = vlaneseq
        %v1269 = vshrl.u32 %v1268, 7
        %v1270 = vsub.s32 7, %v1269
        %v1271 = vrot.slane %v1238, %v1270
        %v1284 = vunpack.c.l.b16 %v722
        %v1285 = vunpack.c.h.b16 %v722
        %v1286 = vunpack.c.l.b16 %v723
        %v1287 = vunpack.c.h.b16 %v723
        %v1288 = vunpack.c.l.b16 %v724
        %v1289 = vunpack.c.h.b16 %v724
        %v1290 = vunpack.c.l.b16 %v725
        %v1291 = vunpack.c.h.b16 %v725
        %v1292 = vpack.c.b16 %v1284, %v1284
        %v1293 = vpack.c.b16 %v1285, %v1285
        %v1294 = vpack.c.b16 %v1286, %v1286
        %v1295 = vpack.c.b16 %v1287, %v1287
        %v1296 = vpack.c.b16 %v1288, %v1288
        %v1297 = vpack.c.b16 %v1289, %v1289
        %v1298 = vpack.c.b16 %v1290, %v1290
        %v1299 = vpack.c.b16 %v1291, %v1291
        %v1820 = vunpack.c.l.b16 %v726
        %v1821 = vunpack.c.h.b16 %v726
        %v1822 = vunpack.c.l.b16 %v727
        %v1823 = vunpack.c.h.b16 %v727
        %v1824 = vunpack.c.l.b16 %v728
        %v1825 = vunpack.c.h.b16 %v728
        %v1826 = vunpack.c.l.b16 %v729
        %v1827 = vunpack.c.h.b16 %v729
        %v1828 = vunpack.c.l.b16 %v730
        %v1829 = vunpack.c.h.b16 %v730
        %v1830 = vunpack.c.l.b16 %v731
        %v1831 = vunpack.c.h.b16 %v731
        %v1832 = vunpack.c.l.b16 %v732
        %v1833 = vunpack.c.h.b16 %v732
        %v1834 = vunpack.c.l.b16 %v733
        %v1835 = vunpack.c.h.b16 %v733
        %v1836 = vunpack.c.l.b16 %v734
        %v1837 = vunpack.c.h.b16 %v734
        %v1838 = vunpack.c.l.b16 %v735
        %v1839 = vunpack.c.h.b16 %v735
        %v1840 = vunpack.c.l.b16 %v736
        %v1841 = vunpack.c.h.b16 %v736
        %v1842 = vunpack.c.l.b16 %v737
        %v1843 = vunpack.c.h.b16 %v737
        %v1844 = vunpack.c.l.b16 %v738
        %v1845 = vunpack.c.h.b16 %v738
        %v1846 = vunpack.c.l.b16 %v739
        %v1847 = vunpack.c.h.b16 %v739
        %v1848 = vunpack.c.l.b16 %v740
        %v1849 = vunpack.c.h.b16 %v740
        %v1850 = vunpack.c.l.b16 %v741
        %v1851 = vunpack.c.h.b16 %v741
        %v1852 = vunpack.c.l.b16 %v742
        %v1853 = vunpack.c.h.b16 %v742
        %v1854 = vunpack.c.l.b16 %v743
        %v1855 = vunpack.c.h.b16 %v743
        %v1856 = vunpack.c.l.b16 %v744
        %v1857 = vunpack.c.h.b16 %v744
        %v1858 = vunpack.c.l.b16 %v745
        %v1859 = vunpack.c.h.b16 %v745
        %v1860 = vunpack.c.l.b16 %v746
        %v1861 = vunpack.c.h.b16 %v746
        %v1862 = vunpack.c.l.b16 %v747
        %v1863 = vunpack.c.h.b16 %v747
        %v1864 = vunpack.c.l.b16 %v748
        %v1865 = vunpack.c.h.b16 %v748
        %v1866 = vunpack.c.l.b16 %v749
        %v1867 = vunpack.c.h.b16 %v749
        %v1868 = vunpack.c.l.b16 %v750
        %v1869 = vunpack.c.h.b16 %v750
        %v1870 = vunpack.c.l.b16 %v751
        %v1871 = vunpack.c.h.b16 %v751
        %v1872 = vunpack.c.l.b16 %v752
        %v1873 = vunpack.c.h.b16 %v752
        %v1874 = vunpack.c.l.b16 %v753
        %v1875 = vunpack.c.h.b16 %v753
        %v1876 = vunpack.c.l.b16 %v754
        %v1877 = vunpack.c.h.b16 %v754
        %v1878 = vunpack.c.l.b16 %v755
        %v1879 = vunpack.c.h.b16 %v755
        %v1880 = vunpack.c.l.b16 %v756
        %v1881 = vunpack.c.h.b16 %v756
        %v1882 = vunpack.c.l.b16 %v757
        %v1883 = vunpack.c.h.b16 %v757
        %v1884 = vunpack.c.l.b16 %v758
        %v1885 = vunpack.c.h.b16 %v758
        %v1886 = vunpack.c.l.b16 %v759
        %v1887 = vunpack.c.h.b16 %v759
        %v1888 = vunpack.c.l.b16 %v760
        %v1889 = vunpack.c.h.b16 %v760
        %v1890 = vunpack.c.l.b16 %v761
        %v1891 = vunpack.c.h.b16 %v761
        %v1892 = vunpack.c.l.b16 %v762
        %v1893 = vunpack.c.h.b16 %v762
        %v1894 = vunpack.c.l.b16 %v763
        %v1895 = vunpack.c.h.b16 %v763
        %v1896 = vunpack.c.l.b16 %v764
        %v1897 = vunpack.c.h.b16 %v764
        %v1898 = vunpack.c.l.b16 %v765
        %v1899 = vunpack.c.h.b16 %v765
        %v1900 = vunpack.c.l.b16 %v766
        %v1901 = vunpack.c.h.b16 %v766
        %v1902 = vunpack.c.l.b16 %v767
        %v1903 = vunpack.c.h.b16 %v767
        %v1904 = vunpack.c.l.b16 %v768
        %v1905 = vunpack.c.h.b16 %v768
        %v1906 = vunpack.c.l.b16 %v769
        %v1907 = vunpack.c.h.b16 %v769
        %v1908 = vunpack.c.l.b16 %v770
        %v1909 = vunpack.c.h.b16 %v770
        %v1910 = vunpack.c.l.b16 %v771
        %v1911 = vunpack.c.h.b16 %v771
        %v1912 = vunpack.c.l.b16 %v772
        %v1913 = vunpack.c.h.b16 %v772
        %v1914 = vunpack.c.l.b16 %v773
        %v1915 = vunpack.c.h.b16 %v773
        %v1916 = vunpack.c.l.b16 %v774
        %v1917 = vunpack.c.h.b16 %v774
        %v1918 = vunpack.c.l.b16 %v775
        %v1919 = vunpack.c.h.b16 %v775
        %v1920 = vunpack.c.l.b16 %v776
        %v1921 = vunpack.c.h.b16 %v776
        %v1922 = vunpack.c.l.b16 %v777
        %v1923 = vunpack.c.h.b16 %v777
        %v1924 = vunpack.c.l.b16 %v778
        %v1925 = vunpack.c.h.b16 %v778
        %v1926 = vunpack.c.l.b16 %v779
        %v1927 = vunpack.c.h.b16 %v779
        %v1928 = vunpack.c.l.b16 %v780
        %v1929 = vunpack.c.h.b16 %v780
        %v1930 = vunpack.c.l.b16 %v781
        %v1931 = vunpack.c.h.b16 %v781
        %v1932 = vunpack.c.l.b16 %v782
        %v1933 = vunpack.c.h.b16 %v782
        %v1934 = vunpack.c.l.b16 %v783
        %v1935 = vunpack.c.h.b16 %v783
        %v1936 = vunpack.c.l.b16 %v784
        %v1937 = vunpack.c.h.b16 %v784
        %v1938 = vunpack.c.l.b16 %v785
        %v1939 = vunpack.c.h.b16 %v785
        %v1940 = vunpack.c.l.b16 %v786
        %v1941 = vunpack.c.h.b16 %v786
        %v1942 = vunpack.c.l.b16 %v787
        %v1943 = vunpack.c.h.b16 %v787
        %v1944 = vunpack.c.l.b16 %v788
        %v1945 = vunpack.c.h.b16 %v788
        %v1946 = vunpack.c.l.b16 %v789
        %v1947 = vunpack.c.h.b16 %v789
        %v1948 = vunpack.c.l.b16 %v790
        %v1949 = vunpack.c.h.b16 %v790
        %v1950 = vunpack.c.l.b16 %v791
        %v1951 = vunpack.c.h.b16 %v791
        %v1952 = vunpack.c.l.b16 %v792
        %v1953 = vunpack.c.h.b16 %v792
        %v1954 = vunpack.c.l.b16 %v793
        %v1955 = vunpack.c.h.b16 %v793
        %v1956 = vunpack.c.l.b16 %v794
        %v1957 = vunpack.c.h.b16 %v794
        %v1958 = vunpack.c.l.b16 %v795
        %v1959 = vunpack.c.h.b16 %v795
        %v1960 = vunpack.c.l.b16 %v796
        %v1961 = vunpack.c.h.b16 %v796
        %v1962 = vunpack.c.l.b16 %v797
        %v1963 = vunpack.c.h.b16 %v797
        %v1964 = vunpack.c.l.b16 %v798
        %v1965 = vunpack.c.h.b16 %v798
        %v1966 = vunpack.c.l.b16 %v799
        %v1967 = vunpack.c.h.b16 %v799
        %v1968 = vunpack.c.l.b16 %v800
        %v1969 = vunpack.c.h.b16 %v800
        %v1970 = vunpack.c.l.b16 %v801
        %v1971 = vunpack.c.h.b16 %v801
        %v1972 = vunpack.c.l.b16 %v802
        %v1973 = vunpack.c.h.b16 %v802
        %v1974 = vunpack.c.l.b16 %v803
        %v1975 = vunpack.c.h.b16 %v803
        %v1976 = vunpack.c.l.b16 %v804
        %v1977 = vunpack.c.h.b16 %v804
        %v1978 = vunpack.c.l.b16 %v805
        %v1979 = vunpack.c.h.b16 %v805
        %v1980 = vunpack.c.l.b16 %v806
        %v1981 = vunpack.c.h.b16 %v806
        %v1982 = vunpack.c.l.b16 %v807
        %v1983 = vunpack.c.h.b16 %v807
        %v1984 = vunpack.c.l.b16 %v808
        %v1985 = vunpack.c.h.b16 %v808
        %v1986 = vunpack.c.l.b16 %v809
        %v1987 = vunpack.c.h.b16 %v809
        %v1988 = vunpack.c.l.b16 %v810
        %v1989 = vunpack.c.h.b16 %v810
        %v1990 = vunpack.c.l.b16 %v811
        %v1991 = vunpack.c.h.b16 %v811
        %v1992 = vunpack.c.l.b16 %v812
        %v1993 = vunpack.c.h.b16 %v812
        %v1994 = vunpack.c.l.b16 %v813
        %v1995 = vunpack.c.h.b16 %v813
        %v1996 = vunpack.c.l.b16 %v814
        %v1997 = vunpack.c.h.b16 %v814
        %v1998 = vunpack.c.l.b16 %v815
        %v1999 = vunpack.c.h.b16 %v815
        %v2000 = vunpack.c.l.b16 %v816
        %v2001 = vunpack.c.h.b16 %v816
        %v2002 = vunpack.c.l.b16 %v817
        %v2003 = vunpack.c.h.b16 %v817
        %v2004 = vunpack.c.l.b16 %v818
        %v2005 = vunpack.c.h.b16 %v818
        %v2006 = vunpack.c.l.b16 %v819
        %v2007 = vunpack.c.h.b16 %v819
        %v2008 = vunpack.c.l.b16 %v820
        %v2009 = vunpack.c.h.b16 %v820
        %v2010 = vunpack.c.l.b16 %v821
        %v2011 = vunpack.c.h.b16 %v821
        %v2012 = vunpack.c.l.b16 %v822
        %v2013 = vunpack.c.h.b16 %v822
        %v2014 = vunpack.c.l.b16 %v823
        %v2015 = vunpack.c.h.b16 %v823
        %v2016 = vunpack.c.l.b16 %v824
        %v2017 = vunpack.c.h.b16 %v824
        %v2018 = vunpack.c.l.b16 %v825
        %v2019 = vunpack.c.h.b16 %v825
        %v2020 = vunpack.c.l.b16 %v826
        %v2021 = vunpack.c.h.b16 %v826
        %v2022 = vunpack.c.l.b16 %v827
        %v2023 = vunpack.c.h.b16 %v827
        %v2024 = vunpack.c.l.b16 %v828
        %v2025 = vunpack.c.h.b16 %v828
        %v2026 = vunpack.c.l.b16 %v829
        %v2027 = vunpack.c.h.b16 %v829
        %v2028 = vunpack.c.l.b16 %v830
        %v2029 = vunpack.c.h.b16 %v830
        %v2030 = vunpack.c.l.b16 %v831
        %v2031 = vunpack.c.h.b16 %v831
        %v2032 = vunpack.c.l.b16 %v832
        %v2033 = vunpack.c.h.b16 %v832
        %v2034 = vunpack.c.l.b16 %v833
        %v2035 = vunpack.c.h.b16 %v833
        %v2036 = vunpack.c.l.b16 %v834
        %v2037 = vunpack.c.h.b16 %v834
        %v2038 = vunpack.c.l.b16 %v835
        %v2039 = vunpack.c.h.b16 %v835
        %v2040 = vunpack.c.l.b16 %v836
        %v2041 = vunpack.c.h.b16 %v836
        %v2042 = vunpack.c.l.b16 %v837
        %v2043 = vunpack.c.h.b16 %v837
        %v2044 = vunpack.c.l.b16 %v838
        %v2045 = vunpack.c.h.b16 %v838
        %v2046 = vunpack.c.l.b16 %v839
        %v2047 = vunpack.c.h.b16 %v839
        %v2048 = vunpack.c.l.b16 %v840
        %v2049 = vunpack.c.h.b16 %v840
        %v2050 = vunpack.c.l.b16 %v841
        %v2051 = vunpack.c.h.b16 %v841
        %v2052 = vunpack.c.l.b16 %v842
        %v2053 = vunpack.c.h.b16 %v842
        %v2054 = vunpack.c.l.b16 %v843
        %v2055 = vunpack.c.h.b16 %v843
        %v2056 = vunpack.c.l.b16 %v844
        %v2057 = vunpack.c.h.b16 %v844
        %v2058 = vunpack.c.l.b16 %v845
        %v2059 = vunpack.c.h.b16 %v845
        %v2060 = vunpack.c.l.b16 %v846
        %v2061 = vunpack.c.h.b16 %v846
        %v2062 = vunpack.c.l.b16 %v847
        %v2063 = vunpack.c.h.b16 %v847
        %v2064 = vunpack.c.l.b16 %v848
        %v2065 = vunpack.c.h.b16 %v848
        %v2066 = vunpack.c.l.b16 %v849
        %v2067 = vunpack.c.h.b16 %v849
        %v2068 = vunpack.c.l.b16 %v850
        %v2069 = vunpack.c.h.b16 %v850
        %v2070 = vunpack.c.l.b16 %v851
        %v2071 = vunpack.c.h.b16 %v851
        %v2072 = vunpack.c.l.b16 %v852
        %v2073 = vunpack.c.h.b16 %v852
        %v2074 = vunpack.c.l.b16 %v853
        %v2075 = vunpack.c.h.b16 %v853
        %v2076 = vunpack.c.l.b16 %v854
        %v2077 = vunpack.c.h.b16 %v854
        %v2078 = vunpack.c.l.b16 %v855
        %v2079 = vunpack.c.h.b16 %v855
        %v2080 = vunpack.c.l.b16 %v856
        %v2081 = vunpack.c.h.b16 %v856
        %v2082 = vunpack.c.l.b16 %v857
        %v2083 = vunpack.c.h.b16 %v857
        %v2084 = vunpack.c.l.b16 %v858
        %v2085 = vunpack.c.h.b16 %v858
        %v2086 = vunpack.c.l.b16 %v859
        %v2087 = vunpack.c.h.b16 %v859
        %v2088 = vunpack.c.l.b16 %v860
        %v2089 = vunpack.c.h.b16 %v860
        %v2090 = vunpack.c.l.b16 %v861
        %v2091 = vunpack.c.h.b16 %v861
        %v2092 = vunpack.c.l.b16 %v862
        %v2093 = vunpack.c.h.b16 %v862
        %v2094 = vunpack.c.l.b16 %v863
        %v2095 = vunpack.c.h.b16 %v863
        %v2096 = vunpack.c.l.b16 %v864
        %v2097 = vunpack.c.h.b16 %v864
        %v2098 = vunpack.c.l.b16 %v865
        %v2099 = vunpack.c.h.b16 %v865
        %v2100 = vunpack.c.l.b16 %v866
        %v2101 = vunpack.c.h.b16 %v866
        %v2102 = vunpack.c.l.b16 %v867
        %v2103 = vunpack.c.h.b16 %v867
        %v2104 = vunpack.c.l.b16 %v868
        %v2105 = vunpack.c.h.b16 %v868
        %v2106 = vunpack.c.l.b16 %v869
        %v2107 = vunpack.c.h.b16 %v869
        %v2108 = vunpack.c.l.b16 %v870
        %v2109 = vunpack.c.h.b16 %v870
        %v2110 = vunpack.c.l.b16 %v871
        %v2111 = vunpack.c.h.b16 %v871
        %v2112 = vunpack.c.l.b16 %v872
        %v2113 = vunpack.c.h.b16 %v872
        %v2114 = vunpack.c.l.b16 %v873
        %v2115 = vunpack.c.h.b16 %v873
        %v2116 = vunpack.c.l.b16 %v874
        %v2117 = vunpack.c.h.b16 %v874
        %v2118 = vunpack.c.l.b16 %v875
        %v2119 = vunpack.c.h.b16 %v875
        %v2120 = vunpack.c.l.b16 %v876
        %v2121 = vunpack.c.h.b16 %v876
        %v2122 = vunpack.c.l.b16 %v877
        %v2123 = vunpack.c.h.b16 %v877
        %v2124 = vunpack.c.l.b16 %v878
        %v2125 = vunpack.c.h.b16 %v878
        %v2126 = vunpack.c.l.b16 %v879
        %v2127 = vunpack.c.h.b16 %v879
        %v2128 = vunpack.c.l.b16 %v880
        %v2129 = vunpack.c.h.b16 %v880
        %v2130 = vunpack.c.l.b16 %v881
        %v2131 = vunpack.c.h.b16 %v881
        %v2132 = vunpack.c.l.b16 %v882
        %v2133 = vunpack.c.h.b16 %v882
        %v2134 = vunpack.c.l.b16 %v883
        %v2135 = vunpack.c.h.b16 %v883
        %v2136 = vunpack.c.l.b16 %v884
        %v2137 = vunpack.c.h.b16 %v884
        %v2138 = vunpack.c.l.b16 %v885
        %v2139 = vunpack.c.h.b16 %v885
        %v2140 = vunpack.c.l.b16 %v886
        %v2141 = vunpack.c.h.b16 %v886
        %v2142 = vunpack.c.l.b16 %v887
        %v2143 = vunpack.c.h.b16 %v887
        %v2144 = vunpack.c.l.b16 %v888
        %v2145 = vunpack.c.h.b16 %v888
        %v2146 = vunpack.c.l.b16 %v889
        %v2147 = vunpack.c.h.b16 %v889
        %v2148 = vunpack.c.l.b16 %v890
        %v2149 = vunpack.c.h.b16 %v890
        %v2150 = vunpack.c.l.b16 %v891
        %v2151 = vunpack.c.h.b16 %v891
        %v2152 = vunpack.c.l.b16 %v892
        %v2153 = vunpack.c.h.b16 %v892
        %v2154 = vunpack.c.l.b16 %v893
        %v2155 = vunpack.c.h.b16 %v893
        %v2156 = vunpack.c.l.b16 %v894
        %v2157 = vunpack.c.h.b16 %v894
        %v2158 = vunpack.c.l.b16 %v895
        %v2159 = vunpack.c.h.b16 %v895
        %v2160 = vunpack.c.l.b16 %v896
        %v2161 = vunpack.c.h.b16 %v896
        %v2162 = vunpack.c.l.b16 %v897
        %v2163 = vunpack.c.h.b16 %v897
        %v2164 = vunpack.c.l.b16 %v898
        %v2165 = vunpack.c.h.b16 %v898
        %v2166 = vunpack.c.l.b16 %v899
        %v2167 = vunpack.c.h.b16 %v899
        %v2168 = vunpack.c.l.b16 %v900
        %v2169 = vunpack.c.h.b16 %v900
        %v2170 = vunpack.c.l.b16 %v901
        %v2171 = vunpack.c.h.b16 %v901
        %v2172 = vunpack.c.l.b16 %v902
        %v2173 = vunpack.c.h.b16 %v902
        %v2174 = vunpack.c.l.b16 %v903
        %v2175 = vunpack.c.h.b16 %v903
        %v2176 = vunpack.c.l.b16 %v904
        %v2177 = vunpack.c.h.b16 %v904
        %v2178 = vunpack.c.l.b16 %v905
        %v2179 = vunpack.c.h.b16 %v905
        %v2180 = vunpack.c.l.b16 %v906
        %v2181 = vunpack.c.h.b16 %v906
        %v2182 = vunpack.c.l.b16 %v907
        %v2183 = vunpack.c.h.b16 %v907
        %v2184 = vunpack.c.l.b16 %v908
        %v2185 = vunpack.c.h.b16 %v908
        %v2186 = vunpack.c.l.b16 %v909
        %v2187 = vunpack.c.h.b16 %v909
        %v2188 = vunpack.c.l.b16 %v910
        %v2189 = vunpack.c.h.b16 %v910
        %v2190 = vunpack.c.l.b16 %v911
        %v2191 = vunpack.c.h.b16 %v911
        %v2192 = vunpack.c.l.b16 %v912
        %v2193 = vunpack.c.h.b16 %v912
        %v2194 = vunpack.c.l.b16 %v913
        %v2195 = vunpack.c.h.b16 %v913
        %v2196 = vunpack.c.l.b16 %v914
        %v2197 = vunpack.c.h.b16 %v914
        %v2198 = vunpack.c.l.b16 %v915
        %v2199 = vunpack.c.h.b16 %v915
        %v2200 = vunpack.c.l.b16 %v916
        %v2201 = vunpack.c.h.b16 %v916
        %v2202 = vunpack.c.l.b16 %v917
        %v2203 = vunpack.c.h.b16 %v917
        %v2204 = vunpack.c.l.b16 %v918
        %v2205 = vunpack.c.h.b16 %v918
        %v2206 = vunpack.c.l.b16 %v919
        %v2207 = vunpack.c.h.b16 %v919
        %v2208 = vunpack.c.l.b16 %v920
        %v2209 = vunpack.c.h.b16 %v920
        %v2210 = vunpack.c.l.b16 %v921
        %v2211 = vunpack.c.h.b16 %v921
        %v2212 = vunpack.c.l.b16 %v922
        %v2213 = vunpack.c.h.b16 %v922
        %v2214 = vunpack.c.l.b16 %v923
        %v2215 = vunpack.c.h.b16 %v923
        %v2216 = vunpack.c.l.b16 %v924
        %v2217 = vunpack.c.h.b16 %v924
        %v2218 = vunpack.c.l.b16 %v925
        %v2219 = vunpack.c.h.b16 %v925
        %v2220 = vunpack.c.l.b16 %v926
        %v2221 = vunpack.c.h.b16 %v926
        %v2222 = vunpack.c.l.b16 %v927
        %v2223 = vunpack.c.h.b16 %v927
        %v2224 = vunpack.c.l.b16 %v928
        %v2225 = vunpack.c.h.b16 %v928
        %v2226 = vunpack.c.l.b16 %v929
        %v2227 = vunpack.c.h.b16 %v929
        %v2228 = vunpack.c.l.b16 %v930
        %v2229 = vunpack.c.h.b16 %v930
        %v2230 = vunpack.c.l.b16 %v931
        %v2231 = vunpack.c.h.b16 %v931
        %v2232 = vunpack.c.l.b16 %v932
        %v2233 = vunpack.c.h.b16 %v932
        %v2234 = vunpack.c.l.b16 %v933
        %v2235 = vunpack.c.h.b16 %v933
        %v2236 = vunpack.c.l.b16 %v934
        %v2237 = vunpack.c.h.b16 %v934
        %v2238 = vunpack.c.l.b16 %v935
        %v2239 = vunpack.c.h.b16 %v935
        %v2240 = vunpack.c.l.b16 %v936
        %v2241 = vunpack.c.h.b16 %v936
        %v2242 = vunpack.c.l.b16 %v937
        %v2243 = vunpack.c.h.b16 %v937
        %v2244 = vunpack.c.l.b16 %v938
        %v2245 = vunpack.c.h.b16 %v938
        %v2246 = vunpack.c.l.b16 %v939
        %v2247 = vunpack.c.h.b16 %v939
        %v2248 = vunpack.c.l.b16 %v940
        %v2249 = vunpack.c.h.b16 %v940
        %v2250 = vunpack.c.l.b16 %v941
        %v2251 = vunpack.c.h.b16 %v941
        %v2252 = vunpack.c.l.b16 %v942
        %v2253 = vunpack.c.h.b16 %v942
        %v2254 = vunpack.c.l.b16 %v943
        %v2255 = vunpack.c.h.b16 %v943
        %v2256 = vunpack.c.l.b16 %v944
        %v2257 = vunpack.c.h.b16 %v944
        %v2258 = vunpack.c.l.b16 %v945
        %v2259 = vunpack.c.h.b16 %v945
        %v2260 = vunpack.c.l.b16 %v946
        %v2261 = vunpack.c.h.b16 %v946
        %v2262 = vunpack.c.l.b16 %v947
        %v2263 = vunpack.c.h.b16 %v947
        %v2264 = vunpack.c.l.b16 %v948
        %v2265 = vunpack.c.h.b16 %v948
        %v2266 = vunpack.c.l.b16 %v949
        %v2267 = vunpack.c.h.b16 %v949
        %v2268 = vunpack.c.l.b16 %v950
        %v2269 = vunpack.c.h.b16 %v950
        %v2270 = vunpack.c.l.b16 %v951
        %v2271 = vunpack.c.h.b16 %v951
        %v2272 = vunpack.c.l.b16 %v952
        %v2273 = vunpack.c.h.b16 %v952
        %v2274 = vunpack.c.l.b16 %v953
        %v2275 = vunpack.c.h.b16 %v953
        %v2276 = vunpack.c.l.b16 %v954
        %v2277 = vunpack.c.h.b16 %v954
        %v2278 = vunpack.c.l.b16 %v955
        %v2279 = vunpack.c.h.b16 %v955
        %v2280 = vunpack.c.l.b16 %v956
        %v2281 = vunpack.c.h.b16 %v956
        %v2282 = vunpack.c.l.b16 %v957
        %v2283 = vunpack.c.h.b16 %v957
        %v2284 = vunpack.c.l.b16 %v958
        %v2285 = vunpack.c.h.b16 %v958
        %v2286 = vunpack.c.l.b16 %v959
        %v2287 = vunpack.c.h.b16 %v959
        %v2288 = vunpack.c.l.b16 %v960
        %v2289 = vunpack.c.h.b16 %v960
        %v2290 = vunpack.c.l.b16 %v961
        %v2291 = vunpack.c.h.b16 %v961
        %v2292 = vunpack.c.l.b16 %v962
        %v2293 = vunpack.c.h.b16 %v962
        %v2294 = vunpack.c.l.b16 %v963
        %v2295 = vunpack.c.h.b16 %v963
        %v2296 = vunpack.c.l.b16 %v964
        %v2297 = vunpack.c.h.b16 %v964
        %v2298 = vunpack.c.l.b16 %v965
        %v2299 = vunpack.c.h.b16 %v965
        %v2300 = vunpack.c.l.b16 %v966
        %v2301 = vunpack.c.h.b16 %v966
        %v2302 = vunpack.c.l.b16 %v967
        %v2303 = vunpack.c.h.b16 %v967
        %v2304 = vunpack.c.l.b16 %v968
        %v2305 = vunpack.c.h.b16 %v968
        %v2306 = vunpack.c.l.b16 %v969
        %v2307 = vunpack.c.h.b16 %v969
        %v2308 = vunpack.c.l.b16 %v970
        %v2309 = vunpack.c.h.b16 %v970
        %v2310 = vunpack.c.l.b16 %v971
        %v2311 = vunpack.c.h.b16 %v971
        %v2312 = vunpack.c.l.b16 %v972
        %v2313 = vunpack.c.h.b16 %v972
        %v2314 = vunpack.c.l.b16 %v973
        %v2315 = vunpack.c.h.b16 %v973
        %v2316 = vunpack.c.l.b16 %v974
        %v2317 = vunpack.c.h.b16 %v974
        %v2318 = vunpack.c.l.b16 %v975
        %v2319 = vunpack.c.h.b16 %v975
        %v2320 = vunpack.c.l.b16 %v976
        %v2321 = vunpack.c.h.b16 %v976
        %v2322 = vunpack.c.l.b16 %v977
        %v2323 = vunpack.c.h.b16 %v977
        %v2324 = vunpack.c.l.b16 %v978
        %v2325 = vunpack.c.h.b16 %v978
        %v2326 = vunpack.c.l.b16 %v979
        %v2327 = vunpack.c.h.b16 %v979
        %v2328 = vunpack.c.l.b16 %v980
        %v2329 = vunpack.c.h.b16 %v980
        %v2330 = vunpack.c.l.b16 %v981
        %v2331 = vunpack.c.h.b16 %v981
        %v2332 = vunpack.c.l.b16 %v982
        %v2333 = vunpack.c.h.b16 %v982
        %v2334 = vunpack.c.l.b16 %v983
        %v2335 = vunpack.c.h.b16 %v983
        %v2336 = vunpack.c.l.b16 %v984
        %v2337 = vunpack.c.h.b16 %v984
        %v2338 = vunpack.c.l.b16 %v985
        %v2339 = vunpack.c.h.b16 %v985
        %v2340 = vunpack.c.l.b16 %v986
        %v2341 = vunpack.c.h.b16 %v986
        %v2342 = vunpack.c.l.b16 %v987
        %v2343 = vunpack.c.h.b16 %v987
        %v2344 = vunpack.c.l.b16 %v988
        %v2345 = vunpack.c.h.b16 %v988
        %v2346 = vunpack.c.l.b16 %v989
        %v2347 = vunpack.c.h.b16 %v989
        %v2348 = vunpack.c.l.b16 %v990
        %v2349 = vunpack.c.h.b16 %v990
        %v2350 = vunpack.c.l.b16 %v991
        %v2351 = vunpack.c.h.b16 %v991
        %v2352 = vunpack.c.l.b16 %v992
        %v2353 = vunpack.c.h.b16 %v992
        %v2354 = vunpack.c.l.b16 %v993
        %v2355 = vunpack.c.h.b16 %v993
        %v2356 = vunpack.c.l.b16 %v994
        %v2357 = vunpack.c.h.b16 %v994
        %v2358 = vunpack.c.l.b16 %v995
        %v2359 = vunpack.c.h.b16 %v995
        %v2360 = vunpack.c.l.b16 %v996
        %v2361 = vunpack.c.h.b16 %v996
        %v2362 = vunpack.c.l.b16 %v997
        %v2363 = vunpack.c.h.b16 %v997
        %v2364 = vunpack.c.l.b16 %v998
        %v2365 = vunpack.c.h.b16 %v998
        %v2366 = vunpack.c.l.b16 %v999
        %v2367 = vunpack.c.h.b16 %v999
        %v2368 = vunpack.c.l.b16 %v1000
        %v2369 = vunpack.c.h.b16 %v1000
        %v2370 = vunpack.c.l.b16 %v1001
        %v2371 = vunpack.c.h.b16 %v1001
        %v2372 = vunpack.c.l.b16 %v1002
        %v2373 = vunpack.c.h.b16 %v1002
        %v2374 = vunpack.c.l.b16 %v1003
        %v2375 = vunpack.c.h.b16 %v1003
        %v2376 = vunpack.c.l.b16 %v1004
        %v2377 = vunpack.c.h.b16 %v1004
        %v2378 = vunpack.c.l.b16 %v1005
        %v2379 = vunpack.c.h.b16 %v1005
        %v2380 = vunpack.c.l.b16 %v1006
        %v2381 = vunpack.c.h.b16 %v1006
        %v2382 = vunpack.c.l.b16 %v1007
        %v2383 = vunpack.c.h.b16 %v1007
        %v2384 = vunpack.c.l.b16 %v1008
        %v2385 = vunpack.c.h.b16 %v1008
        %v2386 = vunpack.c.l.b16 %v1009
        %v2387 = vunpack.c.h.b16 %v1009
        %v2388 = vunpack.c.l.b16 %v1010
        %v2389 = vunpack.c.h.b16 %v1010
        %v2390 = vunpack.c.l.b16 %v1011
        %v2391 = vunpack.c.h.b16 %v1011
        %v2392 = vunpack.c.l.b16 %v1012
        %v2393 = vunpack.c.h.b16 %v1012
        %v2394 = vunpack.c.l.b16 %v1013
        %v2395 = vunpack.c.h.b16 %v1013
        %v2396 = vunpack.c.l.b16 %v1014
        %v2397 = vunpack.c.h.b16 %v1014
        %v2398 = vunpack.c.l.b16 %v1015
        %v2399 = vunpack.c.h.b16 %v1015
        %v2400 = vunpack.c.l.b16 %v1016
        %v2401 = vunpack.c.h.b16 %v1016
        %v2402 = vunpack.c.l.b16 %v1017
        %v2403 = vunpack.c.h.b16 %v1017
        %v2404 = vunpack.c.l.b16 %v1018
        %v2405 = vunpack.c.h.b16 %v1018
        %v2406 = vunpack.c.l.b16 %v1019
        %v2407 = vunpack.c.h.b16 %v1019
        %v2408 = vunpack.c.l.b16 %v1020
        %v2409 = vunpack.c.h.b16 %v1020
        %v2410 = vunpack.c.l.b16 %v1021
        %v2411 = vunpack.c.h.b16 %v1021
        %v2412 = vunpack.c.l.b16 %v1022
        %v2413 = vunpack.c.h.b16 %v1022
        %v2414 = vunpack.c.l.b16 %v1023
        %v2415 = vunpack.c.h.b16 %v1023
        %v2416 = vunpack.c.l.b16 %v1024
        %v2417 = vunpack.c.h.b16 %v1024
        %v2418 = vunpack.c.l.b16 %v1025
        %v2419 = vunpack.c.h.b16 %v1025
        %v2420 = vunpack.c.l.b16 %v1026
        %v2421 = vunpack.c.h.b16 %v1026
        %v2422 = vunpack.c.l.b16 %v1027
        %v2423 = vunpack.c.h.b16 %v1027
        %v2424 = vunpack.c.l.b16 %v1028
        %v2425 = vunpack.c.h.b16 %v1028
        %v2426 = vunpack.c.l.b16 %v1029
        %v2427 = vunpack.c.h.b16 %v1029
        %v2428 = vunpack.c.l.b16 %v1030
        %v2429 = vunpack.c.h.b16 %v1030
        %v2430 = vunpack.c.l.b16 %v1031
        %v2431 = vunpack.c.h.b16 %v1031
        %v2432 = vunpack.c.l.b16 %v1032
        %v2433 = vunpack.c.h.b16 %v1032
        %v2434 = vunpack.c.l.b16 %v1033
        %v2435 = vunpack.c.h.b16 %v1033
        %v2436 = vunpack.c.l.b16 %v1034
        %v2437 = vunpack.c.h.b16 %v1034
        %v2438 = vunpack.c.l.b16 %v1035
        %v2439 = vunpack.c.h.b16 %v1035
        %v2440 = vunpack.c.l.b16 %v1036
        %v2441 = vunpack.c.h.b16 %v1036
        %v2442 = vunpack.c.l.b16 %v1037
        %v2443 = vunpack.c.h.b16 %v1037
        %v2444 = vunpack.c.l.b16 %v1038
        %v2445 = vunpack.c.h.b16 %v1038
        %v2446 = vunpack.c.l.b16 %v1039
        %v2447 = vunpack.c.h.b16 %v1039
        %v2448 = vunpack.c.l.b16 %v1040
        %v2449 = vunpack.c.h.b16 %v1040
        %v2450 = vunpack.c.l.b16 %v1041
        %v2451 = vunpack.c.h.b16 %v1041
        %v2452 = vunpack.c.l.b16 %v1042
        %v2453 = vunpack.c.h.b16 %v1042
        %v2454 = vunpack.c.l.b16 %v1043
        %v2455 = vunpack.c.h.b16 %v1043
        %v2456 = vunpack.c.l.b16 %v1044
        %v2457 = vunpack.c.h.b16 %v1044
        %v2458 = vunpack.c.l.b16 %v1045
        %v2459 = vunpack.c.h.b16 %v1045
        %v2460 = vunpack.c.l.b16 %v1046
        %v2461 = vunpack.c.h.b16 %v1046
        %v2462 = vunpack.c.l.b16 %v1047
        %v2463 = vunpack.c.h.b16 %v1047
        %v2464 = vunpack.c.l.b16 %v1048
        %v2465 = vunpack.c.h.b16 %v1048
        %v2466 = vunpack.c.l.b16 %v1049
        %v2467 = vunpack.c.h.b16 %v1049
        %v2468 = vunpack.c.l.b16 %v1050
        %v2469 = vunpack.c.h.b16 %v1050
        %v2470 = vunpack.c.l.b16 %v1051
        %v2471 = vunpack.c.h.b16 %v1051
        %v2472 = vunpack.c.l.b16 %v1052
        %v2473 = vunpack.c.h.b16 %v1052
        %v2474 = vunpack.c.l.b16 %v1053
        %v2475 = vunpack.c.h.b16 %v1053
        %v2476 = vunpack.c.l.b16 %v1054
        %v2477 = vunpack.c.h.b16 %v1054
        %v2478 = vunpack.c.l.b16 %v1055
        %v2479 = vunpack.c.h.b16 %v1055
        %v2480 = vunpack.c.l.b16 %v1056
        %v2481 = vunpack.c.h.b16 %v1056
        %v2482 = vunpack.c.l.b16 %v1057
        %v2483 = vunpack.c.h.b16 %v1057
        %v2484 = vunpack.c.l.b16 %v1058
        %v2485 = vunpack.c.h.b16 %v1058
        %v2486 = vunpack.c.l.b16 %v1059
        %v2487 = vunpack.c.h.b16 %v1059
        %v2488 = vunpack.c.l.b16 %v1060
        %v2489 = vunpack.c.h.b16 %v1060
        %v2490 = vunpack.c.l.b16 %v1061
        %v2491 = vunpack.c.h.b16 %v1061
        %v2492 = vunpack.c.l.b16 %v1062
        %v2493 = vunpack.c.h.b16 %v1062
        %v2494 = vunpack.c.l.b16 %v1063
        %v2495 = vunpack.c.h.b16 %v1063
        %v2496 = vunpack.c.l.b16 %v1064
        %v2497 = vunpack.c.h.b16 %v1064
        %v2498 = vunpack.c.l.b16 %v1065
        %v2499 = vunpack.c.h.b16 %v1065
        %v2500 = vunpack.c.l.b16 %v1066
        %v2501 = vunpack.c.h.b16 %v1066
        %v2502 = vunpack.c.l.b16 %v1067
        %v2503 = vunpack.c.h.b16 %v1067
        %v2504 = vunpack.c.l.b16 %v1068
        %v2505 = vunpack.c.h.b16 %v1068
        %v2506 = vunpack.c.l.b16 %v1069
        %v2507 = vunpack.c.h.b16 %v1069
        %v2508 = vunpack.c.l.b16 %v1070
        %v2509 = vunpack.c.h.b16 %v1070
        %v2510 = vunpack.c.l.b16 %v1071
        %v2511 = vunpack.c.h.b16 %v1071
        %v2512 = vunpack.c.l.b16 %v1072
        %v2513 = vunpack.c.h.b16 %v1072
        %v2514 = vunpack.c.l.b16 %v1073
        %v2515 = vunpack.c.h.b16 %v1073
        %v2516 = vunpack.c.l.b16 %v1074
        %v2517 = vunpack.c.h.b16 %v1074
        %v2518 = vunpack.c.l.b16 %v1075
        %v2519 = vunpack.c.h.b16 %v1075
        %v2520 = vunpack.c.l.b16 %v1076
        %v2521 = vunpack.c.h.b16 %v1076
        %v2522 = vunpack.c.l.b16 %v1077
        %v2523 = vunpack.c.h.b16 %v1077
        %v2524 = vunpack.c.l.b16 %v1078
        %v2525 = vunpack.c.h.b16 %v1078
        %v2526 = vunpack.c.l.b16 %v1079
        %v2527 = vunpack.c.h.b16 %v1079
        %v2528 = vunpack.c.l.b16 %v1080
        %v2529 = vunpack.c.h.b16 %v1080
        %v2530 = vunpack.c.l.b16 %v1081
        %v2531 = vunpack.c.h.b16 %v1081
        %v2532 = vunpack.c.l.b16 %v1082
        %v2533 = vunpack.c.h.b16 %v1082
        %v2534 = vunpack.c.l.b16 %v1083
        %v2535 = vunpack.c.h.b16 %v1083
        %v2536 = vunpack.c.l.b16 %v1084
        %v2537 = vunpack.c.h.b16 %v1084
        %v2538 = vunpack.c.l.b16 %v1085
        %v2539 = vunpack.c.h.b16 %v1085
        %v2540 = vunpack.c.l.b16 %v1086
        %v2541 = vunpack.c.h.b16 %v1086
        %v2542 = vunpack.c.l.b16 %v1087
        %v2543 = vunpack.c.h.b16 %v1087
        %v2544 = vunpack.c.l.b16 %v1088
        %v2545 = vunpack.c.h.b16 %v1088
        %v2546 = vunpack.c.l.b16 %v1089
        %v2547 = vunpack.c.h.b16 %v1089
        %v2548 = vunpack.c.l.b16 %v1090
        %v2549 = vunpack.c.h.b16 %v1090
        %v2550 = vunpack.c.l.b16 %v1091
        %v2551 = vunpack.c.h.b16 %v1091
        %v2552 = vunpack.c.l.b16 %v1092
        %v2553 = vunpack.c.h.b16 %v1092
        %v2554 = vunpack.c.l.b16 %v1093
        %v2555 = vunpack.c.h.b16 %v1093
        %v2556 = vunpack.c.l.b16 %v1094
        %v2557 = vunpack.c.h.b16 %v1094
        %v2558 = vunpack.c.l.b16 %v1095
        %v2559 = vunpack.c.h.b16 %v1095
        %v2560 = vunpack.c.l.b16 %v1096
        %v2561 = vunpack.c.h.b16 %v1096
        %v2562 = vunpack.c.l.b16 %v1097
        %v2563 = vunpack.c.h.b16 %v1097
        %v2564 = vunpack.c.l.b16 %v1098
        %v2565 = vunpack.c.h.b16 %v1098
        %v2566 = vunpack.c.l.b16 %v1099
        %v2567 = vunpack.c.h.b16 %v1099
        %v2568 = vunpack.c.l.b16 %v1100
        %v2569 = vunpack.c.h.b16 %v1100
        %v2570 = vunpack.c.l.b16 %v1101
        %v2571 = vunpack.c.h.b16 %v1101
        %v2572 = vunpack.c.l.b16 %v1102
        %v2573 = vunpack.c.h.b16 %v1102
        %v2574 = vunpack.c.l.b16 %v1103
        %v2575 = vunpack.c.h.b16 %v1103
        %v2576 = vunpack.c.l.b16 %v1104
        %v2577 = vunpack.c.h.b16 %v1104
        %v2578 = vunpack.c.l.b16 %v1105
        %v2579 = vunpack.c.h.b16 %v1105
        %v2580 = vunpack.c.l.b16 %v1106
        %v2581 = vunpack.c.h.b16 %v1106
        %v2582 = vunpack.c.l.b16 %v1107
        %v2583 = vunpack.c.h.b16 %v1107
        %v2584 = vunpack.c.l.b16 %v1108
        %v2585 = vunpack.c.h.b16 %v1108
        %v2586 = vunpack.c.l.b16 %v1109
        %v2587 = vunpack.c.h.b16 %v1109
        %v2588 = vunpack.c.l.b16 %v1110
        %v2589 = vunpack.c.h.b16 %v1110
        %v2590 = vunpack.c.l.b16 %v1111
        %v2591 = vunpack.c.h.b16 %v1111
        %v2592 = vunpack.c.l.b16 %v1112
        %v2593 = vunpack.c.h.b16 %v1112
        %v2594 = vunpack.c.l.b16 %v1113
        %v2595 = vunpack.c.h.b16 %v1113
        %v2596 = vunpack.c.l.b16 %v1114
        %v2597 = vunpack.c.h.b16 %v1114
        %v2598 = vunpack.c.l.b16 %v1115
        %v2599 = vunpack.c.h.b16 %v1115
        %v2600 = vunpack.c.l.b16 %v1116
        %v2601 = vunpack.c.h.b16 %v1116
        %v2602 = vunpack.c.l.b16 %v1117
        %v2603 = vunpack.c.h.b16 %v1117
        %v2604 = vunpack.c.l.b16 %v1118
        %v2605 = vunpack.c.h.b16 %v1118
        %v2606 = vunpack.c.l.b16 %v1119
        %v2607 = vunpack.c.h.b16 %v1119
        %v2608 = vunpack.c.l.b16 %v1120
        %v2609 = vunpack.c.h.b16 %v1120
        %v2610 = vunpack.c.l.b16 %v1121
        %v2611 = vunpack.c.h.b16 %v1121
        %v2612 = vunpack.c.l.b16 %v1122
        %v2613 = vunpack.c.h.b16 %v1122
        %v2614 = vunpack.c.l.b16 %v1123
        %v2615 = vunpack.c.h.b16 %v1123
        %v2616 = vunpack.c.l.b16 %v1124
        %v2617 = vunpack.c.h.b16 %v1124
        %v2618 = vunpack.c.l.b16 %v1125
        %v2619 = vunpack.c.h.b16 %v1125
        %v2620 = vunpack.c.l.b16 %v1126
        %v2621 = vunpack.c.h.b16 %v1126
        %v2622 = vunpack.c.l.b16 %v1127
        %v2623 = vunpack.c.h.b16 %v1127
        %v2624 = vunpack.c.l.b16 %v1128
        %v2625 = vunpack.c.h.b16 %v1128
        %v2626 = vunpack.c.l.b16 %v1129
        %v2627 = vunpack.c.h.b16 %v1129
        %v2628 = vunpack.c.l.b16 %v1130
        %v2629 = vunpack.c.h.b16 %v1130
        %v2630 = vunpack.c.l.b16 %v1131
        %v2631 = vunpack.c.h.b16 %v1131
        %v2632 = vunpack.c.l.b16 %v1132
        %v2633 = vunpack.c.h.b16 %v1132
        %v2634 = vunpack.c.l.b16 %v1133
        %v2635 = vunpack.c.h.b16 %v1133
        %v2636 = vunpack.c.l.b16 %v1134
        %v2637 = vunpack.c.h.b16 %v1134
        %v2638 = vunpack.c.l.b16 %v1135
        %v2639 = vunpack.c.h.b16 %v1135
        %v2640 = vunpack.c.l.b16 %v1136
        %v2641 = vunpack.c.h.b16 %v1136
        %v2642 = vunpack.c.l.b16 %v1137
        %v2643 = vunpack.c.h.b16 %v1137
        %v2644 = vunpack.c.l.b16 %v1138
        %v2645 = vunpack.c.h.b16 %v1138
        %v2646 = vunpack.c.l.b16 %v1139
        %v2647 = vunpack.c.h.b16 %v1139
        %v2648 = vunpack.c.l.b16 %v1140
        %v2649 = vunpack.c.h.b16 %v1140
        %v2650 = vunpack.c.l.b16 %v1141
        %v2651 = vunpack.c.h.b16 %v1141
        %v2652 = vunpack.c.l.b16 %v1142
        %v2653 = vunpack.c.h.b16 %v1142
        %v2654 = vunpack.c.l.b16 %v1143
        %v2655 = vunpack.c.h.b16 %v1143
        %v2656 = vunpack.c.l.b16 %v1144
        %v2657 = vunpack.c.h.b16 %v1144
        %v2658 = vunpack.c.l.b16 %v1145
        %v2659 = vunpack.c.h.b16 %v1145
        %v2660 = vunpack.c.l.b16 %v1146
        %v2661 = vunpack.c.h.b16 %v1146
        %v2662 = vunpack.c.l.b16 %v1147
        %v2663 = vunpack.c.h.b16 %v1147
        %v2664 = vunpack.c.l.b16 %v1148
        %v2665 = vunpack.c.h.b16 %v1148
        %v2666 = vunpack.c.l.b16 %v1149
        %v2667 = vunpack.c.h.b16 %v1149
        %v2668 = vunpack.c.l.b16 %v1150
        %v2669 = vunpack.c.h.b16 %v1150
        %v2670 = vunpack.c.l.b16 %v1151
        %v2671 = vunpack.c.h.b16 %v1151
        %v2672 = vunpack.c.l.b16 %v1152
        %v2673 = vunpack.c.h.b16 %v1152
        %v2674 = vunpack.c.l.b16 %v1153
        %v2675 = vunpack.c.h.b16 %v1153
        %v2676 = vunpack.c.l.b16 %v1154
        %v2677 = vunpack.c.h.b16 %v1154
        %v2678 = vunpack.c.l.b16 %v1155
        %v2679 = vunpack.c.h.b16 %v1155
        %v2680 = vunpack.c.l.b16 %v1156
        %v2681 = vunpack.c.h.b16 %v1156
        %v2682 = vunpack.c.l.b16 %v1157
        %v2683 = vunpack.c.h.b16 %v1157
        %v2684 = vunpack.c.l.b16 %v1158
        %v2685 = vunpack.c.h.b16 %v1158
        %v2686 = vunpack.c.l.b16 %v1159
        %v2687 = vunpack.c.h.b16 %v1159
        %v2688 = vunpack.c.l.b16 %v1160
        %v2689 = vunpack.c.h.b16 %v1160
        %v2690 = vunpack.c.l.b16 %v1161
        %v2691 = vunpack.c.h.b16 %v1161
        %v2692 = vunpack.c.l.b16 %v1162
        %v2693 = vunpack.c.h.b16 %v1162
        %v2694 = vunpack.c.l.b16 %v1163
        %v2695 = vunpack.c.h.b16 %v1163
        %v2696 = vunpack.c.l.b16 %v1164
        %v2697 = vunpack.c.h.b16 %v1164
        %v2698 = vunpack.c.l.b16 %v1165
        %v2699 = vunpack.c.h.b16 %v1165
        %v2700 = vunpack.c.l.b16 %v1166
        %v2701 = vunpack.c.h.b16 %v1166
        %v2702 = vunpack.c.l.b16 %v1167
        %v2703 = vunpack.c.h.b16 %v1167
        %v2704 = vunpack.c.l.b16 %v1168
        %v2705 = vunpack.c.h.b16 %v1168
        %v2706 = vunpack.c.l.b16 %v1169
        %v2707 = vunpack.c.h.b16 %v1169
        %v2708 = vunpack.c.l.b16 %v1170
        %v2709 = vunpack.c.h.b16 %v1170
        %v2710 = vunpack.c.l.b16 %v1171
        %v2711 = vunpack.c.h.b16 %v1171
        %v2712 = vunpack.c.l.b16 %v1172
        %v2713 = vunpack.c.h.b16 %v1172
        %v2714 = vunpack.c.l.b16 %v1173
        %v2715 = vunpack.c.h.b16 %v1173
        %v2716 = vunpack.c.l.b16 %v1174
        %v2717 = vunpack.c.h.b16 %v1174
        %v2718 = vunpack.c.l.b16 %v1175
        %v2719 = vunpack.c.h.b16 %v1175
        %v2720 = vunpack.c.l.b16 %v1176
        %v2721 = vunpack.c.h.b16 %v1176
        %v2722 = vunpack.c.l.b16 %v1177
        %v2723 = vunpack.c.h.b16 %v1177
        %v2724 = vunpack.c.l.b16 %v1178
        %v2725 = vunpack.c.h.b16 %v1178
        %v2726 = vunpack.c.l.b16 %v1179
        %v2727 = vunpack.c.h.b16 %v1179
        %v2728 = vunpack.c.l.b16 %v1180
        %v2729 = vunpack.c.h.b16 %v1180
        %v2730 = vunpack.c.l.b16 %v1181
        %v2731 = vunpack.c.h.b16 %v1181
        %v2732 = vunpack.c.l.b16 %v1182
        %v2733 = vunpack.c.h.b16 %v1182
        %v2734 = vunpack.c.l.b16 %v1183
        %v2735 = vunpack.c.h.b16 %v1183
        %v2736 = vunpack.c.l.b16 %v1184
        %v2737 = vunpack.c.h.b16 %v1184
        %v2738 = vunpack.c.l.b16 %v1185
        %v2739 = vunpack.c.h.b16 %v1185
        %v2740 = vunpack.c.l.b16 %v1186
        %v2741 = vunpack.c.h.b16 %v1186
        %v2742 = vunpack.c.l.b16 %v1187
        %v2743 = vunpack.c.h.b16 %v1187
        %v2744 = vunpack.c.l.b16 %v1188
        %v2745 = vunpack.c.h.b16 %v1188
        %v2746 = vunpack.c.l.b16 %v1189
        %v2747 = vunpack.c.h.b16 %v1189
        %v2748 = vunpack.c.l.b16 %v1190
        %v2749 = vunpack.c.h.b16 %v1190
        %v2750 = vunpack.c.l.b16 %v1191
        %v2751 = vunpack.c.h.b16 %v1191
        %v2752 = vunpack.c.l.b16 %v1192
        %v2753 = vunpack.c.h.b16 %v1192
        %v2754 = vunpack.c.l.b16 %v1193
        %v2755 = vunpack.c.h.b16 %v1193
        %v2756 = vunpack.c.l.b16 %v1194
        %v2757 = vunpack.c.h.b16 %v1194
        %v2758 = vunpack.c.l.b16 %v1195
        %v2759 = vunpack.c.h.b16 %v1195
        %v2760 = vunpack.c.l.b16 %v1196
        %v2761 = vunpack.c.h.b16 %v1196
        %v2762 = vunpack.c.l.b16 %v1197
        %v2763 = vunpack.c.h.b16 %v1197
        %v2764 = vunpack.c.l.b16 %v1198
        %v2765 = vunpack.c.h.b16 %v1198
        %v2766 = vunpack.c.l.b16 %v1199
        %v2767 = vunpack.c.h.b16 %v1199
        %v2768 = vunpack.c.l.b16 %v1200
        %v2769 = vunpack.c.h.b16 %v1200
        %v2770 = vunpack.c.l.b16 %v1201
        %v2771 = vunpack.c.h.b16 %v1201
        %v2772 = vunpack.c.l.b16 %v1202
        %v2773 = vunpack.c.h.b16 %v1202
        %v2774 = vunpack.c.l.b16 %v1203
        %v2775 = vunpack.c.h.b16 %v1203
        %v2776 = vunpack.c.l.b16 %v1204
        %v2777 = vunpack.c.h.b16 %v1204
        %v2778 = vunpack.c.l.b16 %v1205
        %v2779 = vunpack.c.h.b16 %v1205
        %v2780 = vunpack.c.l.b16 %v1206
        %v2781 = vunpack.c.h.b16 %v1206
        %v2782 = vunpack.c.l.b16 %v1207
        %v2783 = vunpack.c.h.b16 %v1207
        %v2784 = vunpack.c.l.b16 %v1208
        %v2785 = vunpack.c.h.b16 %v1208
        %v2786 = vunpack.c.l.b16 %v1209
        %v2787 = vunpack.c.h.b16 %v1209
        %v2788 = vunpack.c.l.b16 %v1210
        %v2789 = vunpack.c.h.b16 %v1210
        %v2790 = vunpack.c.l.b16 %v1211
        %v2791 = vunpack.c.h.b16 %v1211
        %v2792 = vunpack.c.l.b16 %v1212
        %v2793 = vunpack.c.h.b16 %v1212
        %v2794 = vunpack.c.l.b16 %v1213
        %v2795 = vunpack.c.h.b16 %v1213
        %v2796 = vunpack.c.l.b16 %v1214
        %v2797 = vunpack.c.h.b16 %v1214
        %v2798 = vunpack.c.l.b16 %v1215
        %v2799 = vunpack.c.h.b16 %v1215
        %v2800 = vunpack.c.l.b16 %v1216
        %v2801 = vunpack.c.h.b16 %v1216
        %v2802 = vunpack.c.l.b16 %v1217
        %v2803 = vunpack.c.h.b16 %v1217
        %v2804 = vunpack.c.l.b16 %v1218
        %v2805 = vunpack.c.h.b16 %v1218
        %v2806 = vunpack.c.l.b16 %v1219
        %v2807 = vunpack.c.h.b16 %v1219
        %v2808 = vunpack.c.l.b16 %v1220
        %v2809 = vunpack.c.h.b16 %v1220
        %v2810 = vunpack.c.l.b16 %v1221
        %v2811 = vunpack.c.h.b16 %v1221
        %v2812 = vunpack.c.l.b16 %v1222
        %v2813 = vunpack.c.h.b16 %v1222
        %v2814 = vunpack.c.l.b16 %v1223
        %v2815 = vunpack.c.h.b16 %v1223
        %v2816 = vunpack.c.l.b16 %v1224
        %v2817 = vunpack.c.h.b16 %v1224
        %v2818 = vunpack.c.l.b16 %v1225
        %v2819 = vunpack.c.h.b16 %v1225
        %v2820 = vunpack.c.l.b16 %v1226
        %v2821 = vunpack.c.h.b16 %v1226
        %v2822 = vunpack.c.l.b16 %v1227
        %v2823 = vunpack.c.h.b16 %v1227
        %v2824 = vunpack.c.l.b16 %v1228
        %v2825 = vunpack.c.h.b16 %v1228
        %v2826 = vunpack.c.l.b16 %v1229
        %v2827 = vunpack.c.h.b16 %v1229
        %v2828 = vunpack.c.l.b16 %v1230
        %v2829 = vunpack.c.h.b16 %v1230
        %v2830 = vunpack.c.l.b16 %v1231
        %v2831 = vunpack.c.h.b16 %v1231
        %v2832 = vunpack.c.l.b16 %v1232
        %v2833 = vunpack.c.h.b16 %v1232
        %v2834 = vunpack.c.l.b16 %v1233
        %v2835 = vunpack.c.h.b16 %v1233
        %v2836 = vunpack.c.l.b16 %v1234
        %v2837 = vunpack.c.h.b16 %v1234
        %v2838 = vunpack.c.l.b16 %v1235
        %v2839 = vunpack.c.h.b16 %v1235
        %v2840 = vunpack.c.l.b16 %v1236
        %v2841 = vunpack.c.h.b16 %v1236
        %v2842 = vunpack.c.l.b16 %v1237
        %v2843 = vunpack.c.h.b16 %v1237
        %v2844 = vpack.c.b16 %v1828, %v1820
        %v2845 = vpack.c.b16 %v1829, %v1821
        %v2846 = vpack.c.b16 %v1830, %v1822
        %v2847 = vpack.c.b16 %v1831, %v1823
        %v2848 = vpack.c.b16 %v1832, %v1824
        %v2849 = vpack.c.b16 %v1833, %v1825
        %v2850 = vpack.c.b16 %v1834, %v1826
        %v2851 = vpack.c.b16 %v1835, %v1827
        %v2852 = vpack.c.b16 %v1844, %v1836
        %v2853 = vpack.c.b16 %v1845, %v1837
        %v2854 = vpack.c.b16 %v1846, %v1838
        %v2855 = vpack.c.b16 %v1847, %v1839
        %v2856 = vpack.c.b16 %v1848, %v1840
        %v2857 = vpack.c.b16 %v1849, %v1841
        %v2858 = vpack.c.b16 %v1850, %v1842
        %v2859 = vpack.c.b16 %v1851, %v1843
        %v2860 = vpack.c.b16 %v1860, %v1852
        %v2861 = vpack.c.b16 %v1861, %v1853
        %v2862 = vpack.c.b16 %v1862, %v1854
        %v2863 = vpack.c.b16 %v1863, %v1855
        %v2864 = vpack.c.b16 %v1864, %v1856
        %v2865 = vpack.c.b16 %v1865, %v1857
        %v2866 = vpack.c.b16 %v1866, %v1858
        %v2867 = vpack.c.b16 %v1867, %v1859
        %v2868 = vpack.c.b16 %v1876, %v1868
        %v2869 = vpack.c.b16 %v1877, %v1869
        %v2870 = vpack.c.b16 %v1878, %v1870
        %v2871 = vpack.c.b16 %v1879, %v1871
        %v2872 = vpack.c.b16 %v1880, %v1872
        %v2873 = vpack.c.b16 %v1881, %v1873
        %v2874 = vpack.c.b16 %v1882, %v1874
        %v2875 = vpack.c.b16 %v1883, %v1875
        %v2876 = vpack.c.b16 %v1892, %v1884
        %v2877 = vpack.c.b16 %v1893, %v1885
        %v2878 = vpack.c.b16 %v1894, %v1886
        %v2879 = vpack.c.b16 %v1895, %v1887
        %v2880 = vpack.c.b16 %v1896, %v1888
        %v2881 = vpack.c.b16 %v1897, %v1889
        %v2882 = vpack.c.b16 %v1898, %v1890
        %v2883 = vpack.c.b16 %v1899, %v1891
        %v2884 = vpack.c.b16 %v1908, %v1900
        %v2885 = vpack.c.b16 %v1909, %v1901
        %v2886 = vpack.c.b16 %v1910, %v1902
        %v2887 = vpack.c.b16 %v1911, %v1903
        %v2888 = vpack.c.b16 %v1912, %v1904
        %v2889 = vpack.c.b16 %v1913, %v1905
        %v2890 = vpack.c.b16 %v1914, %v1906
        %v2891 = vpack.c.b16 %v1915, %v1907
        %v2892 = vpack.c.b16 %v1924, %v1916
        %v2893 = vpack.c.b16 %v1925, %v1917
        %v2894 = vpack.c.b16 %v1926, %v1918
        %v2895 = vpack.c.b16 %v1927, %v1919
        %v2896 = vpack.c.b16 %v1928, %v1920
        %v2897 = vpack.c.b16 %v1929, %v1921
        %v2898 = vpack.c.b16 %v1930, %v1922
        %v2899 = vpack.c.b16 %v1931, %v1923
        %v2900 = vpack.c.b16 %v1940, %v1932
        %v2901 = vpack.c.b16 %v1941, %v1933
        %v2902 = vpack.c.b16 %v1942, %v1934
        %v2903 = vpack.c.b16 %v1943, %v1935
        %v2904 = vpack.c.b16 %v1944, %v1936
        %v2905 = vpack.c.b16 %v1945, %v1937
        %v2906 = vpack.c.b16 %v1946, %v1938
        %v2907 = vpack.c.b16 %v1947, %v1939
        %v2908 = vpack.c.b16 %v1956, %v1948
        %v2909 = vpack.c.b16 %v1957, %v1949
        %v2910 = vpack.c.b16 %v1958, %v1950
        %v2911 = vpack.c.b16 %v1959, %v1951
        %v2912 = vpack.c.b16 %v1960, %v1952
        %v2913 = vpack.c.b16 %v1961, %v1953
        %v2914 = vpack.c.b16 %v1962, %v1954
        %v2915 = vpack.c.b16 %v1963, %v1955
        %v2916 = vpack.c.b16 %v1972, %v1964
        %v2917 = vpack.c.b16 %v1973, %v1965
        %v2918 = vpack.c.b16 %v1974, %v1966
        %v2919 = vpack.c.b16 %v1975, %v1967
        %v2920 = vpack.c.b16 %v1976, %v1968
        %v2921 = vpack.c.b16 %v1977, %v1969
        %v2922 = vpack.c.b16 %v1978, %v1970
        %v2923 = vpack.c.b16 %v1979, %v1971
        %v2924 = vpack.c.b16 %v1988, %v1980
        %v2925 = vpack.c.b16 %v1989, %v1981
        %v2926 = vpack.c.b16 %v1990, %v1982
        %v2927 = vpack.c.b16 %v1991, %v1983
        %v2928 = vpack.c.b16 %v1992, %v1984
        %v2929 = vpack.c.b16 %v1993, %v1985
        %v2930 = vpack.c.b16 %v1994, %v1986
        %v2931 = vpack.c.b16 %v1995, %v1987
        %v2932 = vpack.c.b16 %v2004, %v1996
        %v2933 = vpack.c.b16 %v2005, %v1997
        %v2934 = vpack.c.b16 %v2006, %v1998
        %v2935 = vpack.c.b16 %v2007, %v1999
        %v2936 = vpack.c.b16 %v2008, %v2000
        %v2937 = vpack.c.b16 %v2009, %v2001
        %v2938 = vpack.c.b16 %v2010, %v2002
        %v2939 = vpack.c.b16 %v2011, %v2003
        %v2940 = vpack.c.b16 %v2020, %v2012
        %v2941 = vpack.c.b16 %v2021, %v2013
        %v2942 = vpack.c.b16 %v2022, %v2014
        %v2943 = vpack.c.b16 %v2023, %v2015
        %v2944 = vpack.c.b16 %v2024, %v2016
        %v2945 = vpack.c.b16 %v2025, %v2017
        %v2946 = vpack.c.b16 %v2026, %v2018
        %v2947 = vpack.c.b16 %v2027, %v2019
        %v2948 = vpack.c.b16 %v2036, %v2028
        %v2949 = vpack.c.b16 %v2037, %v2029
        %v2950 = vpack.c.b16 %v2038, %v2030
        %v2951 = vpack.c.b16 %v2039, %v2031
        %v2952 = vpack.c.b16 %v2040, %v2032
        %v2953 = vpack.c.b16 %v2041, %v2033
        %v2954 = vpack.c.b16 %v2042, %v2034
        %v2955 = vpack.c.b16 %v2043, %v2035
        %v2956 = vpack.c.b16 %v2052, %v2044
        %v2957 = vpack.c.b16 %v2053, %v2045
        %v2958 = vpack.c.b16 %v2054, %v2046
        %v2959 = vpack.c.b16 %v2055, %v2047
        %v2960 = vpack.c.b16 %v2056, %v2048
        %v2961 = vpack.c.b16 %v2057, %v2049
        %v2962 = vpack.c.b16 %v2058, %v2050
        %v2963 = vpack.c.b16 %v2059, %v2051
        %v2964 = vpack.c.b16 %v2068, %v2060
        %v2965 = vpack.c.b16 %v2069, %v2061
        %v2966 = vpack.c.b16 %v2070, %v2062
        %v2967 = vpack.c.b16 %v2071, %v2063
        %v2968 = vpack.c.b16 %v2072, %v2064
        %v2969 = vpack.c.b16 %v2073, %v2065
        %v2970 = vpack.c.b16 %v2074, %v2066
        %v2971 = vpack.c.b16 %v2075, %v2067
        %v2972 = vpack.c.b16 %v2084, %v2076
        %v2973 = vpack.c.b16 %v2085, %v2077
        %v2974 = vpack.c.b16 %v2086, %v2078
        %v2975 = vpack.c.b16 %v2087, %v2079
        %v2976 = vpack.c.b16 %v2088, %v2080
        %v2977 = vpack.c.b16 %v2089, %v2081
        %v2978 = vpack.c.b16 %v2090, %v2082
        %v2979 = vpack.c.b16 %v2091, %v2083
        %v2980 = vpack.c.b16 %v2100, %v2092
        %v2981 = vpack.c.b16 %v2101, %v2093
        %v2982 = vpack.c.b16 %v2102, %v2094
        %v2983 = vpack.c.b16 %v2103, %v2095
        %v2984 = vpack.c.b16 %v2104, %v2096
        %v2985 = vpack.c.b16 %v2105, %v2097
        %v2986 = vpack.c.b16 %v2106, %v2098
        %v2987 = vpack.c.b16 %v2107, %v2099
        %v2988 = vpack.c.b16 %v2116, %v2108
        %v2989 = vpack.c.b16 %v2117, %v2109
        %v2990 = vpack.c.b16 %v2118, %v2110
        %v2991 = vpack.c.b16 %v2119, %v2111
        %v2992 = vpack.c.b16 %v2120, %v2112
        %v2993 = vpack.c.b16 %v2121, %v2113
        %v2994 = vpack.c.b16 %v2122, %v2114
        %v2995 = vpack.c.b16 %v2123, %v2115
        %v2996 = vpack.c.b16 %v2132, %v2124
        %v2997 = vpack.c.b16 %v2133, %v2125
        %v2998 = vpack.c.b16 %v2134, %v2126
        %v2999 = vpack.c.b16 %v2135, %v2127
        %v3000 = vpack.c.b16 %v2136, %v2128
        %v3001 = vpack.c.b16 %v2137, %v2129
        %v3002 = vpack.c.b16 %v2138, %v2130
        %v3003 = vpack.c.b16 %v2139, %v2131
        %v3004 = vpack.c.b16 %v2148, %v2140
        %v3005 = vpack.c.b16 %v2149, %v2141
        %v3006 = vpack.c.b16 %v2150, %v2142
        %v3007 = vpack.c.b16 %v2151, %v2143
        %v3008 = vpack.c.b16 %v2152, %v2144
        %v3009 = vpack.c.b16 %v2153, %v2145
        %v3010 = vpack.c.b16 %v2154, %v2146
        %v3011 = vpack.c.b16 %v2155, %v2147
        %v3012 = vpack.c.b16 %v2164, %v2156
        %v3013 = vpack.c.b16 %v2165, %v2157
        %v3014 = vpack.c.b16 %v2166, %v2158
        %v3015 = vpack.c.b16 %v2167, %v2159
        %v3016 = vpack.c.b16 %v2168, %v2160
        %v3017 = vpack.c.b16 %v2169, %v2161
        %v3018 = vpack.c.b16 %v2170, %v2162
        %v3019 = vpack.c.b16 %v2171, %v2163
        %v3020 = vpack.c.b16 %v2180, %v2172
        %v3021 = vpack.c.b16 %v2181, %v2173
        %v3022 = vpack.c.b16 %v2182, %v2174
        %v3023 = vpack.c.b16 %v2183, %v2175
        %v3024 = vpack.c.b16 %v2184, %v2176
        %v3025 = vpack.c.b16 %v2185, %v2177
        %v3026 = vpack.c.b16 %v2186, %v2178
        %v3027 = vpack.c.b16 %v2187, %v2179
        %v3028 = vpack.c.b16 %v2196, %v2188
        %v3029 = vpack.c.b16 %v2197, %v2189
        %v3030 = vpack.c.b16 %v2198, %v2190
        %v3031 = vpack.c.b16 %v2199, %v2191
        %v3032 = vpack.c.b16 %v2200, %v2192
        %v3033 = vpack.c.b16 %v2201, %v2193
        %v3034 = vpack.c.b16 %v2202, %v2194
        %v3035 = vpack.c.b16 %v2203, %v2195
        %v3036 = vpack.c.b16 %v2212, %v2204
        %v3037 = vpack.c.b16 %v2213, %v2205
        %v3038 = vpack.c.b16 %v2214, %v2206
        %v3039 = vpack.c.b16 %v2215, %v2207
        %v3040 = vpack.c.b16 %v2216, %v2208
        %v3041 = vpack.c.b16 %v2217, %v2209
        %v3042 = vpack.c.b16 %v2218, %v2210
        %v3043 = vpack.c.b16 %v2219, %v2211
        %v3044 = vpack.c.b16 %v2228, %v2220
        %v3045 = vpack.c.b16 %v2229, %v2221
        %v3046 = vpack.c.b16 %v2230, %v2222
        %v3047 = vpack.c.b16 %v2231, %v2223
        %v3048 = vpack.c.b16 %v2232, %v2224
        %v3049 = vpack.c.b16 %v2233, %v2225
        %v3050 = vpack.c.b16 %v2234, %v2226
        %v3051 = vpack.c.b16 %v2235, %v2227
        %v3052 = vpack.c.b16 %v2244, %v2236
        %v3053 = vpack.c.b16 %v2245, %v2237
        %v3054 = vpack.c.b16 %v2246, %v2238
        %v3055 = vpack.c.b16 %v2247, %v2239
        %v3056 = vpack.c.b16 %v2248, %v2240
        %v3057 = vpack.c.b16 %v2249, %v2241
        %v3058 = vpack.c.b16 %v2250, %v2242
        %v3059 = vpack.c.b16 %v2251, %v2243
        %v3060 = vpack.c.b16 %v2260, %v2252
        %v3061 = vpack.c.b16 %v2261, %v2253
        %v3062 = vpack.c.b16 %v2262, %v2254
        %v3063 = vpack.c.b16 %v2263, %v2255
        %v3064 = vpack.c.b16 %v2264, %v2256
        %v3065 = vpack.c.b16 %v2265, %v2257
        %v3066 = vpack.c.b16 %v2266, %v2258
        %v3067 = vpack.c.b16 %v2267, %v2259
        %v3068 = vpack.c.b16 %v2276, %v2268
        %v3069 = vpack.c.b16 %v2277, %v2269
        %v3070 = vpack.c.b16 %v2278, %v2270
        %v3071 = vpack.c.b16 %v2279, %v2271
        %v3072 = vpack.c.b16 %v2280, %v2272
        %v3073 = vpack.c.b16 %v2281, %v2273
        %v3074 = vpack.c.b16 %v2282, %v2274
        %v3075 = vpack.c.b16 %v2283, %v2275
        %v3076 = vpack.c.b16 %v2292, %v2284
        %v3077 = vpack.c.b16 %v2293, %v2285
        %v3078 = vpack.c.b16 %v2294, %v2286
        %v3079 = vpack.c.b16 %v2295, %v2287
        %v3080 = vpack.c.b16 %v2296, %v2288
        %v3081 = vpack.c.b16 %v2297, %v2289
        %v3082 = vpack.c.b16 %v2298, %v2290
        %v3083 = vpack.c.b16 %v2299, %v2291
        %v3084 = vpack.c.b16 %v2308, %v2300
        %v3085 = vpack.c.b16 %v2309, %v2301
        %v3086 = vpack.c.b16 %v2310, %v2302
        %v3087 = vpack.c.b16 %v2311, %v2303
        %v3088 = vpack.c.b16 %v2312, %v2304
        %v3089 = vpack.c.b16 %v2313, %v2305
        %v3090 = vpack.c.b16 %v2314, %v2306
        %v3091 = vpack.c.b16 %v2315, %v2307
        %v3092 = vpack.c.b16 %v2324, %v2316
        %v3093 = vpack.c.b16 %v2325, %v2317
        %v3094 = vpack.c.b16 %v2326, %v2318
        %v3095 = vpack.c.b16 %v2327, %v2319
        %v3096 = vpack.c.b16 %v2328, %v2320
        %v3097 = vpack.c.b16 %v2329, %v2321
        %v3098 = vpack.c.b16 %v2330, %v2322
        %v3099 = vpack.c.b16 %v2331, %v2323
        %v3100 = vpack.c.b16 %v2340, %v2332
        %v3101 = vpack.c.b16 %v2341, %v2333
        %v3102 = vpack.c.b16 %v2342, %v2334
        %v3103 = vpack.c.b16 %v2343, %v2335
        %v3104 = vpack.c.b16 %v2344, %v2336
        %v3105 = vpack.c.b16 %v2345, %v2337
        %v3106 = vpack.c.b16 %v2346, %v2338
        %v3107 = vpack.c.b16 %v2347, %v2339
        %v3108 = vpack.c.b16 %v2356, %v2348
        %v3109 = vpack.c.b16 %v2357, %v2349
        %v3110 = vpack.c.b16 %v2358, %v2350
        %v3111 = vpack.c.b16 %v2359, %v2351
        %v3112 = vpack.c.b16 %v2360, %v2352
        %v3113 = vpack.c.b16 %v2361, %v2353
        %v3114 = vpack.c.b16 %v2362, %v2354
        %v3115 = vpack.c.b16 %v2363, %v2355
        %v3116 = vpack.c.b16 %v2372, %v2364
        %v3117 = vpack.c.b16 %v2373, %v2365
        %v3118 = vpack.c.b16 %v2374, %v2366
        %v3119 = vpack.c.b16 %v2375, %v2367
        %v3120 = vpack.c.b16 %v2376, %v2368
        %v3121 = vpack.c.b16 %v2377, %v2369
        %v3122 = vpack.c.b16 %v2378, %v2370
        %v3123 = vpack.c.b16 %v2379, %v2371
        %v3124 = vpack.c.b16 %v2388, %v2380
        %v3125 = vpack.c.b16 %v2389, %v2381
        %v3126 = vpack.c.b16 %v2390, %v2382
        %v3127 = vpack.c.b16 %v2391, %v2383
        %v3128 = vpack.c.b16 %v2392, %v2384
        %v3129 = vpack.c.b16 %v2393, %v2385
        %v3130 = vpack.c.b16 %v2394, %v2386
        %v3131 = vpack.c.b16 %v2395, %v2387
        %v3132 = vpack.c.b16 %v2404, %v2396
        %v3133 = vpack.c.b16 %v2405, %v2397
        %v3134 = vpack.c.b16 %v2406, %v2398
        %v3135 = vpack.c.b16 %v2407, %v2399
        %v3136 = vpack.c.b16 %v2408, %v2400
        %v3137 = vpack.c.b16 %v2409, %v2401
        %v3138 = vpack.c.b16 %v2410, %v2402
        %v3139 = vpack.c.b16 %v2411, %v2403
        %v3140 = vpack.c.b16 %v2420, %v2412
        %v3141 = vpack.c.b16 %v2421, %v2413
        %v3142 = vpack.c.b16 %v2422, %v2414
        %v3143 = vpack.c.b16 %v2423, %v2415
        %v3144 = vpack.c.b16 %v2424, %v2416
        %v3145 = vpack.c.b16 %v2425, %v2417
        %v3146 = vpack.c.b16 %v2426, %v2418
        %v3147 = vpack.c.b16 %v2427, %v2419
        %v3148 = vpack.c.b16 %v2436, %v2428
        %v3149 = vpack.c.b16 %v2437, %v2429
        %v3150 = vpack.c.b16 %v2438, %v2430
        %v3151 = vpack.c.b16 %v2439, %v2431
        %v3152 = vpack.c.b16 %v2440, %v2432
        %v3153 = vpack.c.b16 %v2441, %v2433
        %v3154 = vpack.c.b16 %v2442, %v2434
        %v3155 = vpack.c.b16 %v2443, %v2435
        %v3156 = vpack.c.b16 %v2452, %v2444
        %v3157 = vpack.c.b16 %v2453, %v2445
        %v3158 = vpack.c.b16 %v2454, %v2446
        %v3159 = vpack.c.b16 %v2455, %v2447
        %v3160 = vpack.c.b16 %v2456, %v2448
        %v3161 = vpack.c.b16 %v2457, %v2449
        %v3162 = vpack.c.b16 %v2458, %v2450
        %v3163 = vpack.c.b16 %v2459, %v2451
        %v3164 = vpack.c.b16 %v2468, %v2460
        %v3165 = vpack.c.b16 %v2469, %v2461
        %v3166 = vpack.c.b16 %v2470, %v2462
        %v3167 = vpack.c.b16 %v2471, %v2463
        %v3168 = vpack.c.b16 %v2472, %v2464
        %v3169 = vpack.c.b16 %v2473, %v2465
        %v3170 = vpack.c.b16 %v2474, %v2466
        %v3171 = vpack.c.b16 %v2475, %v2467
        %v3172 = vpack.c.b16 %v2484, %v2476
        %v3173 = vpack.c.b16 %v2485, %v2477
        %v3174 = vpack.c.b16 %v2486, %v2478
        %v3175 = vpack.c.b16 %v2487, %v2479
        %v3176 = vpack.c.b16 %v2488, %v2480
        %v3177 = vpack.c.b16 %v2489, %v2481
        %v3178 = vpack.c.b16 %v2490, %v2482
        %v3179 = vpack.c.b16 %v2491, %v2483
        %v3180 = vpack.c.b16 %v2500, %v2492
        %v3181 = vpack.c.b16 %v2501, %v2493
        %v3182 = vpack.c.b16 %v2502, %v2494
        %v3183 = vpack.c.b16 %v2503, %v2495
        %v3184 = vpack.c.b16 %v2504, %v2496
        %v3185 = vpack.c.b16 %v2505, %v2497
        %v3186 = vpack.c.b16 %v2506, %v2498
        %v3187 = vpack.c.b16 %v2507, %v2499
        %v3188 = vpack.c.b16 %v2516, %v2508
        %v3189 = vpack.c.b16 %v2517, %v2509
        %v3190 = vpack.c.b16 %v2518, %v2510
        %v3191 = vpack.c.b16 %v2519, %v2511
        %v3192 = vpack.c.b16 %v2520, %v2512
        %v3193 = vpack.c.b16 %v2521, %v2513
        %v3194 = vpack.c.b16 %v2522, %v2514
        %v3195 = vpack.c.b16 %v2523, %v2515
        %v3196 = vpack.c.b16 %v2532, %v2524
        %v3197 = vpack.c.b16 %v2533, %v2525
        %v3198 = vpack.c.b16 %v2534, %v2526
        %v3199 = vpack.c.b16 %v2535, %v2527
        %v3200 = vpack.c.b16 %v2536, %v2528
        %v3201 = vpack.c.b16 %v2537, %v2529
        %v3202 = vpack.c.b16 %v2538, %v2530
        %v3203 = vpack.c.b16 %v2539, %v2531
        %v3204 = vpack.c.b16 %v2548, %v2540
        %v3205 = vpack.c.b16 %v2549, %v2541
        %v3206 = vpack.c.b16 %v2550, %v2542
        %v3207 = vpack.c.b16 %v2551, %v2543
        %v3208 = vpack.c.b16 %v2552, %v2544
        %v3209 = vpack.c.b16 %v2553, %v2545
        %v3210 = vpack.c.b16 %v2554, %v2546
        %v3211 = vpack.c.b16 %v2555, %v2547
        %v3212 = vpack.c.b16 %v2564, %v2556
        %v3213 = vpack.c.b16 %v2565, %v2557
        %v3214 = vpack.c.b16 %v2566, %v2558
        %v3215 = vpack.c.b16 %v2567, %v2559
        %v3216 = vpack.c.b16 %v2568, %v2560
        %v3217 = vpack.c.b16 %v2569, %v2561
        %v3218 = vpack.c.b16 %v2570, %v2562
        %v3219 = vpack.c.b16 %v2571, %v2563
        %v3220 = vpack.c.b16 %v2580, %v2572
        %v3221 = vpack.c.b16 %v2581, %v2573
        %v3222 = vpack.c.b16 %v2582, %v2574
        %v3223 = vpack.c.b16 %v2583, %v2575
        %v3224 = vpack.c.b16 %v2584, %v2576
        %v3225 = vpack.c.b16 %v2585, %v2577
        %v3226 = vpack.c.b16 %v2586, %v2578
        %v3227 = vpack.c.b16 %v2587, %v2579
        %v3228 = vpack.c.b16 %v2596, %v2588
        %v3229 = vpack.c.b16 %v2597, %v2589
        %v3230 = vpack.c.b16 %v2598, %v2590
        %v3231 = vpack.c.b16 %v2599, %v2591
        %v3232 = vpack.c.b16 %v2600, %v2592
        %v3233 = vpack.c.b16 %v2601, %v2593
        %v3234 = vpack.c.b16 %v2602, %v2594
        %v3235 = vpack.c.b16 %v2603, %v2595
        %v3236 = vpack.c.b16 %v2612, %v2604
        %v3237 = vpack.c.b16 %v2613, %v2605
        %v3238 = vpack.c.b16 %v2614, %v2606
        %v3239 = vpack.c.b16 %v2615, %v2607
        %v3240 = vpack.c.b16 %v2616, %v2608
        %v3241 = vpack.c.b16 %v2617, %v2609
        %v3242 = vpack.c.b16 %v2618, %v2610
        %v3243 = vpack.c.b16 %v2619, %v2611
        %v3244 = vpack.c.b16 %v2628, %v2620
        %v3245 = vpack.c.b16 %v2629, %v2621
        %v3246 = vpack.c.b16 %v2630, %v2622
        %v3247 = vpack.c.b16 %v2631, %v2623
        %v3248 = vpack.c.b16 %v2632, %v2624
        %v3249 = vpack.c.b16 %v2633, %v2625
        %v3250 = vpack.c.b16 %v2634, %v2626
        %v3251 = vpack.c.b16 %v2635, %v2627
        %v3252 = vpack.c.b16 %v2644, %v2636
        %v3253 = vpack.c.b16 %v2645, %v2637
        %v3254 = vpack.c.b16 %v2646, %v2638
        %v3255 = vpack.c.b16 %v2647, %v2639
        %v3256 = vpack.c.b16 %v2648, %v2640
        %v3257 = vpack.c.b16 %v2649, %v2641
        %v3258 = vpack.c.b16 %v2650, %v2642
        %v3259 = vpack.c.b16 %v2651, %v2643
        %v3260 = vpack.c.b16 %v2660, %v2652
        %v3261 = vpack.c.b16 %v2661, %v2653
        %v3262 = vpack.c.b16 %v2662, %v2654
        %v3263 = vpack.c.b16 %v2663, %v2655
        %v3264 = vpack.c.b16 %v2664, %v2656
        %v3265 = vpack.c.b16 %v2665, %v2657
        %v3266 = vpack.c.b16 %v2666, %v2658
        %v3267 = vpack.c.b16 %v2667, %v2659
        %v3268 = vpack.c.b16 %v2676, %v2668
        %v3269 = vpack.c.b16 %v2677, %v2669
        %v3270 = vpack.c.b16 %v2678, %v2670
        %v3271 = vpack.c.b16 %v2679, %v2671
        %v3272 = vpack.c.b16 %v2680, %v2672
        %v3273 = vpack.c.b16 %v2681, %v2673
        %v3274 = vpack.c.b16 %v2682, %v2674
        %v3275 = vpack.c.b16 %v2683, %v2675
        %v3276 = vpack.c.b16 %v2692, %v2684
        %v3277 = vpack.c.b16 %v2693, %v2685
        %v3278 = vpack.c.b16 %v2694, %v2686
        %v3279 = vpack.c.b16 %v2695, %v2687
        %v3280 = vpack.c.b16 %v2696, %v2688
        %v3281 = vpack.c.b16 %v2697, %v2689
        %v3282 = vpack.c.b16 %v2698, %v2690
        %v3283 = vpack.c.b16 %v2699, %v2691
        %v3284 = vpack.c.b16 %v2708, %v2700
        %v3285 = vpack.c.b16 %v2709, %v2701
        %v3286 = vpack.c.b16 %v2710, %v2702
        %v3287 = vpack.c.b16 %v2711, %v2703
        %v3288 = vpack.c.b16 %v2712, %v2704
        %v3289 = vpack.c.b16 %v2713, %v2705
        %v3290 = vpack.c.b16 %v2714, %v2706
        %v3291 = vpack.c.b16 %v2715, %v2707
        %v3292 = vpack.c.b16 %v2724, %v2716
        %v3293 = vpack.c.b16 %v2725, %v2717
        %v3294 = vpack.c.b16 %v2726, %v2718
        %v3295 = vpack.c.b16 %v2727, %v2719
        %v3296 = vpack.c.b16 %v2728, %v2720
        %v3297 = vpack.c.b16 %v2729, %v2721
        %v3298 = vpack.c.b16 %v2730, %v2722
        %v3299 = vpack.c.b16 %v2731, %v2723
        %v3300 = vpack.c.b16 %v2740, %v2732
        %v3301 = vpack.c.b16 %v2741, %v2733
        %v3302 = vpack.c.b16 %v2742, %v2734
        %v3303 = vpack.c.b16 %v2743, %v2735
        %v3304 = vpack.c.b16 %v2744, %v2736
        %v3305 = vpack.c.b16 %v2745, %v2737
        %v3306 = vpack.c.b16 %v2746, %v2738
        %v3307 = vpack.c.b16 %v2747, %v2739
        %v3308 = vpack.c.b16 %v2756, %v2748
        %v3309 = vpack.c.b16 %v2757, %v2749
        %v3310 = vpack.c.b16 %v2758, %v2750
        %v3311 = vpack.c.b16 %v2759, %v2751
        %v3312 = vpack.c.b16 %v2760, %v2752
        %v3313 = vpack.c.b16 %v2761, %v2753
        %v3314 = vpack.c.b16 %v2762, %v2754
        %v3315 = vpack.c.b16 %v2763, %v2755
        %v3316 = vpack.c.b16 %v2772, %v2764
        %v3317 = vpack.c.b16 %v2773, %v2765
        %v3318 = vpack.c.b16 %v2774, %v2766
        %v3319 = vpack.c.b16 %v2775, %v2767
        %v3320 = vpack.c.b16 %v2776, %v2768
        %v3321 = vpack.c.b16 %v2777, %v2769
        %v3322 = vpack.c.b16 %v2778, %v2770
        %v3323 = vpack.c.b16 %v2779, %v2771
        %v3324 = vpack.c.b16 %v2788, %v2780
        %v3325 = vpack.c.b16 %v2789, %v2781
        %v3326 = vpack.c.b16 %v2790, %v2782
        %v3327 = vpack.c.b16 %v2791, %v2783
        %v3328 = vpack.c.b16 %v2792, %v2784
        %v3329 = vpack.c.b16 %v2793, %v2785
        %v3330 = vpack.c.b16 %v2794, %v2786
        %v3331 = vpack.c.b16 %v2795, %v2787
        %v3332 = vpack.c.b16 %v2804, %v2796
        %v3333 = vpack.c.b16 %v2805, %v2797
        %v3334 = vpack.c.b16 %v2806, %v2798
        %v3335 = vpack.c.b16 %v2807, %v2799
        %v3336 = vpack.c.b16 %v2808, %v2800
        %v3337 = vpack.c.b16 %v2809, %v2801
        %v3338 = vpack.c.b16 %v2810, %v2802
        %v3339 = vpack.c.b16 %v2811, %v2803
        %v3340 = vpack.c.b16 %v2820, %v2812
        %v3341 = vpack.c.b16 %v2821, %v2813
        %v3342 = vpack.c.b16 %v2822, %v2814
        %v3343 = vpack.c.b16 %v2823, %v2815
        %v3344 = vpack.c.b16 %v2824, %v2816
        %v3345 = vpack.c.b16 %v2825, %v2817
        %v3346 = vpack.c.b16 %v2826, %v2818
        %v3347 = vpack.c.b16 %v2827, %v2819
        %v3348 = vpack.c.b16 %v2836, %v2828
        %v3349 = vpack.c.b16 %v2837, %v2829
        %v3350 = vpack.c.b16 %v2838, %v2830
        %v3351 = vpack.c.b16 %v2839, %v2831
        %v3352 = vpack.c.b16 %v2840, %v2832
        %v3353 = vpack.c.b16 %v2841, %v2833
        %v3354 = vpack.c.b16 %v2842, %v2834
        %v3355 = vpack.c.b16 %v2843, %v2835
        %3868 = vmatprep.subr.bf16.mxu0 %v2845
        %3869 = vmatpush1.bf16.msra.mxu0 %v2844
        %3870 = vmatprep.subr.bf16.mxu0 %v2853
        %3871 = vmatpush1.bf16.msra.mxu0 %v2852
        %3872 = vmatprep.subr.bf16.mxu0 %v2861
        %3873 = vmatpush1.bf16.msra.mxu0 %v2860
        %3874 = vmatprep.subr.bf16.mxu0 %v2869
        %3875 = vmatpush1.bf16.msra.mxu0 %v2868
        %3876 = vmatprep.subr.bf16.mxu0 %v2877
        %3877 = vmatpush1.bf16.msra.mxu0 %v2876
        %3878 = vmatprep.subr.bf16.mxu0 %v2885
        %3879 = vmatpush1.bf16.msra.mxu0 %v2884
        %3880 = vmatprep.subr.bf16.mxu0 %v2893
        %3881 = vmatpush1.bf16.msra.mxu0 %v2892
        %3882 = vmatprep.subr.bf16.mxu0 %v2901
        %3883 = vmatpush1.bf16.msra.mxu0 %v2900
        %3884 = vmatprep.subr.bf16.mxu0 %v2909
        %3885 = vmatpush1.bf16.msra.mxu0 %v2908
        %3886 = vmatprep.subr.bf16.mxu0 %v2917
        %3887 = vmatpush1.bf16.msra.mxu0 %v2916
        %3888 = vmatprep.subr.bf16.mxu0 %v2925
        %3889 = vmatpush1.bf16.msra.mxu0 %v2924
        %3890 = vmatprep.subr.bf16.mxu0 %v2933
        %3891 = vmatpush1.bf16.msra.mxu0 %v2932
        %3892 = vmatprep.subr.bf16.mxu0 %v2941
        %3893 = vmatpush1.bf16.msra.mxu0 %v2940
        %3894 = vmatprep.subr.bf16.mxu0 %v2949
        %3895 = vmatpush1.bf16.msra.mxu0 %v2948
        %3896 = vmatprep.subr.bf16.mxu0 %v2957
        %3897 = vmatpush1.bf16.msra.mxu0 %v2956
        %3898 = vmatprep.subr.bf16.mxu0 %v2965
        %3899 = vmatpush1.bf16.msra.mxu0 %v2964
        %3900 = vmatprep.mubr.bf16.mxu0 %v1293
        %3901 = vmatmul.mubr.bf16.gmra.mrb[0].mxu0 %v1292
        %v3902 = vpop.f32.mrb[0].mxu0
        %v3903 = vadd.f32 %v1243, %v3902
        %v3904 = vpop.f32.mrb[0].mxu0
        %v3905 = vadd.f32 %v1247, %v3904
        %v3906 = vpop.f32.mrb[0].mxu0
        %v3907 = vpop.f32.mrb[0].mxu0
        %3908 = vdwg.mxu0
        %3909 = vmatprep.subr.bf16.mxu0 %v2973
        %3910 = vmatpush1.bf16.msra.mxu0 %v2972
        %3911 = vmatprep.subr.bf16.mxu0 %v2981
        %3912 = vmatpush1.bf16.msra.mxu0 %v2980
        %3913 = vmatprep.subr.bf16.mxu0 %v2989
        %3914 = vmatpush1.bf16.msra.mxu0 %v2988
        %3915 = vmatprep.subr.bf16.mxu0 %v2997
        %3916 = vmatpush1.bf16.msra.mxu0 %v2996
        %3917 = vmatprep.subr.bf16.mxu0 %v3005
        %3918 = vmatpush1.bf16.msra.mxu0 %v3004
        %3919 = vmatprep.subr.bf16.mxu0 %v3013
        %3920 = vmatpush1.bf16.msra.mxu0 %v3012
        %3921 = vmatprep.subr.bf16.mxu0 %v3021
        %3922 = vmatpush1.bf16.msra.mxu0 %v3020
        %3923 = vmatprep.subr.bf16.mxu0 %v3029
        %3924 = vmatpush1.bf16.msra.mxu0 %v3028
        %3925 = vmatprep.subr.bf16.mxu0 %v3037
        %3926 = vmatpush1.bf16.msra.mxu0 %v3036
        %3927 = vmatprep.subr.bf16.mxu0 %v3045
        %3928 = vmatpush1.bf16.msra.mxu0 %v3044
        %3929 = vmatprep.subr.bf16.mxu0 %v3053
        %3930 = vmatpush1.bf16.msra.mxu0 %v3052
        %3931 = vmatprep.subr.bf16.mxu0 %v3061
        %3932 = vmatpush1.bf16.msra.mxu0 %v3060
        %3933 = vmatprep.subr.bf16.mxu0 %v3069
        %3934 = vmatpush1.bf16.msra.mxu0 %v3068
        %3935 = vmatprep.subr.bf16.mxu0 %v3077
        %3936 = vmatpush1.bf16.msra.mxu0 %v3076
        %3937 = vmatprep.subr.bf16.mxu0 %v3085
        %3938 = vmatpush1.bf16.msra.mxu0 %v3084
        %3939 = vmatprep.subr.bf16.mxu0 %v3093
        %3940 = vmatpush1.bf16.msra.mxu0 %v3092
        %3941 = vmatprep.mubr.bf16.mxu0 %v1295
        %3942 = vmatmul.mubr.bf16.gmra.mrb[0].mxu0 %v1294
        %v3943 = vpop.f32.mrb[0].mxu0
        %v3944 = vadd.f32 %v3903, %v3943
        %v3945 = vpop.f32.mrb[0].mxu0
        %v3946 = vadd.f32 %v3905, %v3945
        %v3947 = vpop.f32.mrb[0].mxu0
        %v3948 = vpop.f32.mrb[0].mxu0
        %3949 = vdwg.mxu0
        %3950 = vmatprep.subr.bf16.mxu0 %v3101
        %3951 = vmatpush1.bf16.msra.mxu0 %v3100
        %3952 = vmatprep.subr.bf16.mxu0 %v3109
        %3953 = vmatpush1.bf16.msra.mxu0 %v3108
        %3954 = vmatprep.subr.bf16.mxu0 %v3117
        %3955 = vmatpush1.bf16.msra.mxu0 %v3116
        %3956 = vmatprep.subr.bf16.mxu0 %v3125
        %3957 = vmatpush1.bf16.msra.mxu0 %v3124
        %3958 = vmatprep.subr.bf16.mxu0 %v3133
        %3959 = vmatpush1.bf16.msra.mxu0 %v3132
        %3960 = vmatprep.subr.bf16.mxu0 %v3141
        %3961 = vmatpush1.bf16.msra.mxu0 %v3140
        %3962 = vmatprep.subr.bf16.mxu0 %v3149
        %3963 = vmatpush1.bf16.msra.mxu0 %v3148
        %3964 = vmatprep.subr.bf16.mxu0 %v3157
        %3965 = vmatpush1.bf16.msra.mxu0 %v3156
        %3966 = vmatprep.subr.bf16.mxu0 %v3165
        %3967 = vmatpush1.bf16.msra.mxu0 %v3164
        %3968 = vmatprep.subr.bf16.mxu0 %v3173
        %3969 = vmatpush1.bf16.msra.mxu0 %v3172
        %3970 = vmatprep.subr.bf16.mxu0 %v3181
        %3971 = vmatpush1.bf16.msra.mxu0 %v3180
        %3972 = vmatprep.subr.bf16.mxu0 %v3189
        %3973 = vmatpush1.bf16.msra.mxu0 %v3188
        %3974 = vmatprep.subr.bf16.mxu0 %v3197
        %3975 = vmatpush1.bf16.msra.mxu0 %v3196
        %3976 = vmatprep.subr.bf16.mxu0 %v3205
        %3977 = vmatpush1.bf16.msra.mxu0 %v3204
        %3978 = vmatprep.subr.bf16.mxu0 %v3213
        %3979 = vmatpush1.bf16.msra.mxu0 %v3212
        %3980 = vmatprep.subr.bf16.mxu0 %v3221
        %3981 = vmatpush1.bf16.msra.mxu0 %v3220
        %3982 = vmatprep.mubr.bf16.mxu0 %v1297
        %3983 = vmatmul.mubr.bf16.gmra.mrb[0].mxu0 %v1296
        %v3984 = vpop.f32.mrb[0].mxu0
        %v3985 = vadd.f32 %v3944, %v3984
        %v3986 = vpop.f32.mrb[0].mxu0
        %v3987 = vadd.f32 %v3946, %v3986
        %v3988 = vpop.f32.mrb[0].mxu0
        %v3989 = vpop.f32.mrb[0].mxu0
        %3990 = vdwg.mxu0
        %3991 = vmatprep.subr.bf16.mxu0 %v3229
        %3992 = vmatpush1.bf16.msra.mxu0 %v3228
        %3993 = vmatprep.subr.bf16.mxu0 %v3237
        %3994 = vmatpush1.bf16.msra.mxu0 %v3236
        %3995 = vmatprep.subr.bf16.mxu0 %v3245
        %3996 = vmatpush1.bf16.msra.mxu0 %v3244
        %3997 = vmatprep.subr.bf16.mxu0 %v3253
        %3998 = vmatpush1.bf16.msra.mxu0 %v3252
        %3999 = vmatprep.subr.bf16.mxu0 %v3261
        %4000 = vmatpush1.bf16.msra.mxu0 %v3260
        %4001 = vmatprep.subr.bf16.mxu0 %v3269
        %4002 = vmatpush1.bf16.msra.mxu0 %v3268
        %4003 = vmatprep.subr.bf16.mxu0 %v3277
        %4004 = vmatpush1.bf16.msra.mxu0 %v3276
        %4005 = vmatprep.subr.bf16.mxu0 %v3285
        %4006 = vmatpush1.bf16.msra.mxu0 %v3284
        %4007 = vmatprep.subr.bf16.mxu0 %v3293
        %4008 = vmatpush1.bf16.msra.mxu0 %v3292
        %4009 = vmatprep.subr.bf16.mxu0 %v3301
        %4010 = vmatpush1.bf16.msra.mxu0 %v3300
        %4011 = vmatprep.subr.bf16.mxu0 %v3309
        %4012 = vmatpush1.bf16.msra.mxu0 %v3308
        %4013 = vmatprep.subr.bf16.mxu0 %v3317
        %4014 = vmatpush1.bf16.msra.mxu0 %v3316
        %4015 = vmatprep.subr.bf16.mxu0 %v3325
        %4016 = vmatpush1.bf16.msra.mxu0 %v3324
        %4017 = vmatprep.subr.bf16.mxu0 %v3333
        %4018 = vmatpush1.bf16.msra.mxu0 %v3332
        %4019 = vmatprep.subr.bf16.mxu0 %v3341
        %4020 = vmatpush1.bf16.msra.mxu0 %v3340
        %4021 = vmatprep.subr.bf16.mxu0 %v3349
        %4022 = vmatpush1.bf16.msra.mxu0 %v3348
        %4023 = vmatprep.mubr.bf16.mxu0 %v1299
        %4024 = vmatmul.mubr.bf16.gmra.mrb[0].mxu0 %v1298
        %v4025 = vpop.f32.mrb[0].mxu0
        %v4026 = vadd.f32 %v3985, %v4025
        %v4027 = vpop.f32.mrb[0].mxu0
        %v4028 = vadd.f32 %v3987, %v4027
        %v4029 = vpop.f32.mrb[0].mxu0
        %v4030 = vpop.f32.mrb[0].mxu0
        %4031 = vdwg.mxu0
        %4032 = vmatprep.subr.bf16.mxu0 %v2847
        %4033 = vmatpush1.bf16.msra.mxu0 %v2846
        %4034 = vmatprep.subr.bf16.mxu0 %v2855
        %4035 = vmatpush1.bf16.msra.mxu0 %v2854
        %4036 = vmatprep.subr.bf16.mxu0 %v2863
        %4037 = vmatpush1.bf16.msra.mxu0 %v2862
        %4038 = vmatprep.subr.bf16.mxu0 %v2871
        %4039 = vmatpush1.bf16.msra.mxu0 %v2870
        %4040 = vmatprep.subr.bf16.mxu0 %v2879
        %4041 = vmatpush1.bf16.msra.mxu0 %v2878
        %4042 = vmatprep.subr.bf16.mxu0 %v2887
        %4043 = vmatpush1.bf16.msra.mxu0 %v2886
        %4044 = vmatprep.subr.bf16.mxu0 %v2895
        %4045 = vmatpush1.bf16.msra.mxu0 %v2894
        %4046 = vmatprep.subr.bf16.mxu0 %v2903
        %4047 = vmatpush1.bf16.msra.mxu0 %v2902
        %4048 = vmatprep.subr.bf16.mxu0 %v2911
        %4049 = vmatpush1.bf16.msra.mxu0 %v2910
        %4050 = vmatprep.subr.bf16.mxu0 %v2919
        %4051 = vmatpush1.bf16.msra.mxu0 %v2918
        %4052 = vmatprep.subr.bf16.mxu0 %v2927
        %4053 = vmatpush1.bf16.msra.mxu0 %v2926
        %4054 = vmatprep.subr.bf16.mxu0 %v2935
        %4055 = vmatpush1.bf16.msra.mxu0 %v2934
        %4056 = vmatprep.subr.bf16.mxu0 %v2943
        %4057 = vmatpush1.bf16.msra.mxu0 %v2942
        %4058 = vmatprep.subr.bf16.mxu0 %v2951
        %4059 = vmatpush1.bf16.msra.mxu0 %v2950
        %4060 = vmatprep.subr.bf16.mxu0 %v2959
        %4061 = vmatpush1.bf16.msra.mxu0 %v2958
        %4062 = vmatprep.subr.bf16.mxu0 %v2967
        %4063 = vmatpush1.bf16.msra.mxu0 %v2966
        %4064 = vmatprep.mubr.bf16.mxu0 %v1293
        %4065 = vmatmul.mubr.bf16.gmra.mrb[0].mxu0 %v1292
        %v4066 = vpop.f32.mrb[0].mxu0
        %v4067 = vadd.f32 %v1251, %v4066
        %v4068 = vpop.f32.mrb[0].mxu0
        %v4069 = vadd.f32 %v1255, %v4068
        %v4070 = vpop.f32.mrb[0].mxu0
        %v4071 = vpop.f32.mrb[0].mxu0
        %4072 = vdwg.mxu0
        %4073 = vmatprep.subr.bf16.mxu0 %v2975
        %4074 = vmatpush1.bf16.msra.mxu0 %v2974
        %4075 = vmatprep.subr.bf16.mxu0 %v2983
        %4076 = vmatpush1.bf16.msra.mxu0 %v2982
        %4077 = vmatprep.subr.bf16.mxu0 %v2991
        %4078 = vmatpush1.bf16.msra.mxu0 %v2990
        %4079 = vmatprep.subr.bf16.mxu0 %v2999
        %4080 = vmatpush1.bf16.msra.mxu0 %v2998
        %4081 = vmatprep.subr.bf16.mxu0 %v3007
        %4082 = vmatpush1.bf16.msra.mxu0 %v3006
        %4083 = vmatprep.subr.bf16.mxu0 %v3015
        %4084 = vmatpush1.bf16.msra.mxu0 %v3014
        %4085 = vmatprep.subr.bf16.mxu0 %v3023
        %4086 = vmatpush1.bf16.msra.mxu0 %v3022
        %4087 = vmatprep.subr.bf16.mxu0 %v3031
        %4088 = vmatpush1.bf16.msra.mxu0 %v3030
        %4089 = vmatprep.subr.bf16.mxu0 %v3039
        %4090 = vmatpush1.bf16.msra.mxu0 %v3038
        %4091 = vmatprep.subr.bf16.mxu0 %v3047
        %4092 = vmatpush1.bf16.msra.mxu0 %v3046
        %4093 = vmatprep.subr.bf16.mxu0 %v3055
        %4094 = vmatpush1.bf16.msra.mxu0 %v3054
        %4095 = vmatprep.subr.bf16.mxu0 %v3063
        %4096 = vmatpush1.bf16.msra.mxu0 %v3062
        %4097 = vmatprep.subr.bf16.mxu0 %v3071
        %4098 = vmatpush1.bf16.msra.mxu0 %v3070
        %4099 = vmatprep.subr.bf16.mxu0 %v3079
        %4100 = vmatpush1.bf16.msra.mxu0 %v3078
        %4101 = vmatprep.subr.bf16.mxu0 %v3087
        %4102 = vmatpush1.bf16.msra.mxu0 %v3086
        %4103 = vmatprep.subr.bf16.mxu0 %v3095
        %4104 = vmatpush1.bf16.msra.mxu0 %v3094
        %4105 = vmatprep.mubr.bf16.mxu0 %v1295
        %4106 = vmatmul.mubr.bf16.gmra.mrb[0].mxu0 %v1294
        %v4107 = vpop.f32.mrb[0].mxu0
        %v4108 = vadd.f32 %v4067, %v4107
        %v4109 = vpop.f32.mrb[0].mxu0
        %v4110 = vadd.f32 %v4069, %v4109
        %v4111 = vpop.f32.mrb[0].mxu0
        %v4112 = vpop.f32.mrb[0].mxu0
        %4113 = vdwg.mxu0
        %4114 = vmatprep.subr.bf16.mxu0 %v3103
        %4115 = vmatpush1.bf16.msra.mxu0 %v3102
        %4116 = vmatprep.subr.bf16.mxu0 %v3111
        %4117 = vmatpush1.bf16.msra.mxu0 %v3110
        %4118 = vmatprep.subr.bf16.mxu0 %v3119
        %4119 = vmatpush1.bf16.msra.mxu0 %v3118
        %4120 = vmatprep.subr.bf16.mxu0 %v3127
        %4121 = vmatpush1.bf16.msra.mxu0 %v3126
        %4122 = vmatprep.subr.bf16.mxu0 %v3135
        %4123 = vmatpush1.bf16.msra.mxu0 %v3134
        %4124 = vmatprep.subr.bf16.mxu0 %v3143
        %4125 = vmatpush1.bf16.msra.mxu0 %v3142
        %4126 = vmatprep.subr.bf16.mxu0 %v3151
        %4127 = vmatpush1.bf16.msra.mxu0 %v3150
        %4128 = vmatprep.subr.bf16.mxu0 %v3159
        %4129 = vmatpush1.bf16.msra.mxu0 %v3158
        %4130 = vmatprep.subr.bf16.mxu0 %v3167
        %4131 = vmatpush1.bf16.msra.mxu0 %v3166
        %4132 = vmatprep.subr.bf16.mxu0 %v3175
        %4133 = vmatpush1.bf16.msra.mxu0 %v3174
        %4134 = vmatprep.subr.bf16.mxu0 %v3183
        %4135 = vmatpush1.bf16.msra.mxu0 %v3182
        %4136 = vmatprep.subr.bf16.mxu0 %v3191
        %4137 = vmatpush1.bf16.msra.mxu0 %v3190
        %4138 = vmatprep.subr.bf16.mxu0 %v3199
        %4139 = vmatpush1.bf16.msra.mxu0 %v3198
        %4140 = vmatprep.subr.bf16.mxu0 %v3207
        %4141 = vmatpush1.bf16.msra.mxu0 %v3206
        %4142 = vmatprep.subr.bf16.mxu0 %v3215
        %4143 = vmatpush1.bf16.msra.mxu0 %v3214
        %4144 = vmatprep.subr.bf16.mxu0 %v3223
        %4145 = vmatpush1.bf16.msra.mxu0 %v3222
        %4146 = vmatprep.mubr.bf16.mxu0 %v1297
        %4147 = vmatmul.mubr.bf16.gmra.mrb[0].mxu0 %v1296
        %v4148 = vpop.f32.mrb[0].mxu0
        %v4149 = vadd.f32 %v4108, %v4148
        %v4150 = vpop.f32.mrb[0].mxu0
        %v4151 = vadd.f32 %v4110, %v4150
        %v4152 = vpop.f32.mrb[0].mxu0
        %v4153 = vpop.f32.mrb[0].mxu0
        %4154 = vdwg.mxu0
        %4155 = vmatprep.subr.bf16.mxu0 %v3231
        %4156 = vmatpush1.bf16.msra.mxu0 %v3230
        %4157 = vmatprep.subr.bf16.mxu0 %v3239
        %4158 = vmatpush1.bf16.msra.mxu0 %v3238
        %4159 = vmatprep.subr.bf16.mxu0 %v3247
        %4160 = vmatpush1.bf16.msra.mxu0 %v3246
        %4161 = vmatprep.subr.bf16.mxu0 %v3255
        %4162 = vmatpush1.bf16.msra.mxu0 %v3254
        %4163 = vmatprep.subr.bf16.mxu0 %v3263
        %4164 = vmatpush1.bf16.msra.mxu0 %v3262
        %4165 = vmatprep.subr.bf16.mxu0 %v3271
        %4166 = vmatpush1.bf16.msra.mxu0 %v3270
        %4167 = vmatprep.subr.bf16.mxu0 %v3279
        %4168 = vmatpush1.bf16.msra.mxu0 %v3278
        %4169 = vmatprep.subr.bf16.mxu0 %v3287
        %4170 = vmatpush1.bf16.msra.mxu0 %v3286
        %4171 = vmatprep.subr.bf16.mxu0 %v3295
        %4172 = vmatpush1.bf16.msra.mxu0 %v3294
        %4173 = vmatprep.subr.bf16.mxu0 %v3303
        %4174 = vmatpush1.bf16.msra.mxu0 %v3302
        %4175 = vmatprep.subr.bf16.mxu0 %v3311
        %4176 = vmatpush1.bf16.msra.mxu0 %v3310
        %4177 = vmatprep.subr.bf16.mxu0 %v3319
        %4178 = vmatpush1.bf16.msra.mxu0 %v3318
        %4179 = vmatprep.subr.bf16.mxu0 %v3327
        %4180 = vmatpush1.bf16.msra.mxu0 %v3326
        %4181 = vmatprep.subr.bf16.mxu0 %v3335
        %4182 = vmatpush1.bf16.msra.mxu0 %v3334
        %4183 = vmatprep.subr.bf16.mxu0 %v3343
        %4184 = vmatpush1.bf16.msra.mxu0 %v3342
        %4185 = vmatprep.subr.bf16.mxu0 %v3351
        %4186 = vmatpush1.bf16.msra.mxu0 %v3350
        %4187 = vmatprep.mubr.bf16.mxu0 %v1299
        %4188 = vmatmul.mubr.bf16.gmra.mrb[0].mxu0 %v1298
        %v4189 = vpop.f32.mrb[0].mxu0
        %v4190 = vadd.f32 %v4149, %v4189
        %v4191 = vpop.f32.mrb[0].mxu0
        %v4192 = vadd.f32 %v4151, %v4191
        %v4193 = vpop.f32.mrb[0].mxu0
        %v4194 = vpop.f32.mrb[0].mxu0
        %4195 = vdwg.mxu0
        %4196 = vmatprep.subr.bf16.mxu0 %v2849
        %4197 = vmatpush1.bf16.msra.mxu0 %v2848
        %4198 = vmatprep.subr.bf16.mxu0 %v2857
        %4199 = vmatpush1.bf16.msra.mxu0 %v2856
        %4200 = vmatprep.subr.bf16.mxu0 %v2865
        %4201 = vmatpush1.bf16.msra.mxu0 %v2864
        %4202 = vmatprep.subr.bf16.mxu0 %v2873
        %4203 = vmatpush1.bf16.msra.mxu0 %v2872
        %4204 = vmatprep.subr.bf16.mxu0 %v2881
        %4205 = vmatpush1.bf16.msra.mxu0 %v2880
        %4206 = vmatprep.subr.bf16.mxu0 %v2889
        %4207 = vmatpush1.bf16.msra.mxu0 %v2888
        %4208 = vmatprep.subr.bf16.mxu0 %v2897
        %4209 = vmatpush1.bf16.msra.mxu0 %v2896
        %4210 = vmatprep.subr.bf16.mxu0 %v2905
        %4211 = vmatpush1.bf16.msra.mxu0 %v2904
        %4212 = vmatprep.subr.bf16.mxu0 %v2913
        %4213 = vmatpush1.bf16.msra.mxu0 %v2912
        %4214 = vmatprep.subr.bf16.mxu0 %v2921
        %4215 = vmatpush1.bf16.msra.mxu0 %v2920
        %4216 = vmatprep.subr.bf16.mxu0 %v2929
        %4217 = vmatpush1.bf16.msra.mxu0 %v2928
        %4218 = vmatprep.subr.bf16.mxu0 %v2937
        %4219 = vmatpush1.bf16.msra.mxu0 %v2936
        %4220 = vmatprep.subr.bf16.mxu0 %v2945
        %4221 = vmatpush1.bf16.msra.mxu0 %v2944
        %4222 = vmatprep.subr.bf16.mxu0 %v2953
        %4223 = vmatpush1.bf16.msra.mxu0 %v2952
        %4224 = vmatprep.subr.bf16.mxu0 %v2961
        %4225 = vmatpush1.bf16.msra.mxu0 %v2960
        %4226 = vmatprep.subr.bf16.mxu0 %v2969
        %4227 = vmatpush1.bf16.msra.mxu0 %v2968
        %4228 = vmatprep.mubr.bf16.mxu0 %v1293
        %4229 = vmatmul.mubr.bf16.gmra.mrb[0].mxu0 %v1292
        %v4230 = vpop.f32.mrb[0].mxu0
        %v4231 = vadd.f32 %v1259, %v4230
        %v4232 = vpop.f32.mrb[0].mxu0
        %v4233 = vadd.f32 %v1263, %v4232
        %v4234 = vpop.f32.mrb[0].mxu0
        %v4235 = vpop.f32.mrb[0].mxu0
        %4236 = vdwg.mxu0
        %4237 = vmatprep.subr.bf16.mxu0 %v2977
        %4238 = vmatpush1.bf16.msra.mxu0 %v2976
        %4239 = vmatprep.subr.bf16.mxu0 %v2985
        %4240 = vmatpush1.bf16.msra.mxu0 %v2984
        %4241 = vmatprep.subr.bf16.mxu0 %v2993
        %4242 = vmatpush1.bf16.msra.mxu0 %v2992
        %4243 = vmatprep.subr.bf16.mxu0 %v3001
        %4244 = vmatpush1.bf16.msra.mxu0 %v3000
        %4245 = vmatprep.subr.bf16.mxu0 %v3009
        %4246 = vmatpush1.bf16.msra.mxu0 %v3008
        %4247 = vmatprep.subr.bf16.mxu0 %v3017
        %4248 = vmatpush1.bf16.msra.mxu0 %v3016
        %4249 = vmatprep.subr.bf16.mxu0 %v3025
        %4250 = vmatpush1.bf16.msra.mxu0 %v3024
        %4251 = vmatprep.subr.bf16.mxu0 %v3033
        %4252 = vmatpush1.bf16.msra.mxu0 %v3032
        %4253 = vmatprep.subr.bf16.mxu0 %v3041
        %4254 = vmatpush1.bf16.msra.mxu0 %v3040
        %4255 = vmatprep.subr.bf16.mxu0 %v3049
        %4256 = vmatpush1.bf16.msra.mxu0 %v3048
        %4257 = vmatprep.subr.bf16.mxu0 %v3057
        %4258 = vmatpush1.bf16.msra.mxu0 %v3056
        %4259 = vmatprep.subr.bf16.mxu0 %v3065
        %4260 = vmatpush1.bf16.msra.mxu0 %v3064
        %4261 = vmatprep.subr.bf16.mxu0 %v3073
        %4262 = vmatpush1.bf16.msra.mxu0 %v3072
        %4263 = vmatprep.subr.bf16.mxu0 %v3081
        %4264 = vmatpush1.bf16.msra.mxu0 %v3080
        %4265 = vmatprep.subr.bf16.mxu0 %v3089
        %4266 = vmatpush1.bf16.msra.mxu0 %v3088
        %4267 = vmatprep.subr.bf16.mxu0 %v3097
        %4268 = vmatpush1.bf16.msra.mxu0 %v3096
        %4269 = vmatprep.mubr.bf16.mxu0 %v1295
        %4270 = vmatmul.mubr.bf16.gmra.mrb[0].mxu0 %v1294
        %v4271 = vpop.f32.mrb[0].mxu0
        %v4272 = vadd.f32 %v4231, %v4271
        %v4273 = vpop.f32.mrb[0].mxu0
        %v4274 = vadd.f32 %v4233, %v4273
        %v4275 = vpop.f32.mrb[0].mxu0
        %v4276 = vpop.f32.mrb[0].mxu0
        %4277 = vdwg.mxu0
        %4278 = vmatprep.subr.bf16.mxu0 %v3105
        %4279 = vmatpush1.bf16.msra.mxu0 %v3104
        %4280 = vmatprep.subr.bf16.mxu0 %v3113
        %4281 = vmatpush1.bf16.msra.mxu0 %v3112
        %4282 = vmatprep.subr.bf16.mxu0 %v3121
        %4283 = vmatpush1.bf16.msra.mxu0 %v3120
        %4284 = vmatprep.subr.bf16.mxu0 %v3129
        %4285 = vmatpush1.bf16.msra.mxu0 %v3128
        %4286 = vmatprep.subr.bf16.mxu0 %v3137
        %4287 = vmatpush1.bf16.msra.mxu0 %v3136
        %4288 = vmatprep.subr.bf16.mxu0 %v3145
        %4289 = vmatpush1.bf16.msra.mxu0 %v3144
        %4290 = vmatprep.subr.bf16.mxu0 %v3153
        %4291 = vmatpush1.bf16.msra.mxu0 %v3152
        %4292 = vmatprep.subr.bf16.mxu0 %v3161
        %4293 = vmatpush1.bf16.msra.mxu0 %v3160
        %4294 = vmatprep.subr.bf16.mxu0 %v3169
        %4295 = vmatpush1.bf16.msra.mxu0 %v3168
        %4296 = vmatprep.subr.bf16.mxu0 %v3177
        %4297 = vmatpush1.bf16.msra.mxu0 %v3176
        %4298 = vmatprep.subr.bf16.mxu0 %v3185
        %4299 = vmatpush1.bf16.msra.mxu0 %v3184
        %4300 = vmatprep.subr.bf16.mxu0 %v3193
        %4301 = vmatpush1.bf16.msra.mxu0 %v3192
        %4302 = vmatprep.subr.bf16.mxu0 %v3201
        %4303 = vmatpush1.bf16.msra.mxu0 %v3200
        %4304 = vmatprep.subr.bf16.mxu0 %v3209
        %4305 = vmatpush1.bf16.msra.mxu0 %v3208
        %4306 = vmatprep.subr.bf16.mxu0 %v3217
        %4307 = vmatpush1.bf16.msra.mxu0 %v3216
        %4308 = vmatprep.subr.bf16.mxu0 %v3225
        %4309 = vmatpush1.bf16.msra.mxu0 %v3224
        %4310 = vmatprep.mubr.bf16.mxu0 %v1297
        %4311 = vmatmul.mubr.bf16.gmra.mrb[0].mxu0 %v1296
        %v4312 = vpop.f32.mrb[0].mxu0
        %v4313 = vadd.f32 %v4272, %v4312
        %v4314 = vpop.f32.mrb[0].mxu0
        %v4315 = vadd.f32 %v4274, %v4314
        %v4316 = vpop.f32.mrb[0].mxu0
        %v4317 = vpop.f32.mrb[0].mxu0
        %4318 = vdwg.mxu0
        %4319 = vmatprep.subr.bf16.mxu0 %v3233
        %4320 = vmatpush1.bf16.msra.mxu0 %v3232
        %4321 = vmatprep.subr.bf16.mxu0 %v3241
        %4322 = vmatpush1.bf16.msra.mxu0 %v3240
        %4323 = vmatprep.subr.bf16.mxu0 %v3249
        %4324 = vmatpush1.bf16.msra.mxu0 %v3248
        %4325 = vmatprep.subr.bf16.mxu0 %v3257
        %4326 = vmatpush1.bf16.msra.mxu0 %v3256
        %4327 = vmatprep.subr.bf16.mxu0 %v3265
        %4328 = vmatpush1.bf16.msra.mxu0 %v3264
        %4329 = vmatprep.subr.bf16.mxu0 %v3273
        %4330 = vmatpush1.bf16.msra.mxu0 %v3272
        %4331 = vmatprep.subr.bf16.mxu0 %v3281
        %4332 = vmatpush1.bf16.msra.mxu0 %v3280
        %4333 = vmatprep.subr.bf16.mxu0 %v3289
        %4334 = vmatpush1.bf16.msra.mxu0 %v3288
        %4335 = vmatprep.subr.bf16.mxu0 %v3297
        %4336 = vmatpush1.bf16.msra.mxu0 %v3296
        %4337 = vmatprep.subr.bf16.mxu0 %v3305
        %4338 = vmatpush1.bf16.msra.mxu0 %v3304
        %4339 = vmatprep.subr.bf16.mxu0 %v3313
        %4340 = vmatpush1.bf16.msra.mxu0 %v3312
        %4341 = vmatprep.subr.bf16.mxu0 %v3321
        %4342 = vmatpush1.bf16.msra.mxu0 %v3320
        %4343 = vmatprep.subr.bf16.mxu0 %v3329
        %4344 = vmatpush1.bf16.msra.mxu0 %v3328
        %4345 = vmatprep.subr.bf16.mxu0 %v3337
        %4346 = vmatpush1.bf16.msra.mxu0 %v3336
        %4347 = vmatprep.subr.bf16.mxu0 %v3345
        %4348 = vmatpush1.bf16.msra.mxu0 %v3344
        %4349 = vmatprep.subr.bf16.mxu0 %v3353
        %4350 = vmatpush1.bf16.msra.mxu0 %v3352
        %4351 = vmatprep.mubr.bf16.mxu0 %v1299
        %4352 = vmatmul.mubr.bf16.gmra.mrb[0].mxu0 %v1298
        %v4353 = vpop.f32.mrb[0].mxu0
        %v4354 = vadd.f32 %v4313, %v4353
        %v4355 = vpop.f32.mrb[0].mxu0
        %v4356 = vadd.f32 %v4315, %v4355
        %v4357 = vpop.f32.mrb[0].mxu0
        %v4358 = vpop.f32.mrb[0].mxu0
        %4359 = vdwg.mxu0
        %4360 = vmatprep.subr.bf16.mxu0 %v2851
        %4361 = vmatpush1.bf16.msra.mxu0 %v2850
        %4362 = vmatprep.subr.bf16.mxu0 %v2859
        %4363 = vmatpush1.bf16.msra.mxu0 %v2858
        %4364 = vmatprep.subr.bf16.mxu0 %v2867
        %4365 = vmatpush1.bf16.msra.mxu0 %v2866
        %4366 = vmatprep.subr.bf16.mxu0 %v2875
        %4367 = vmatpush1.bf16.msra.mxu0 %v2874
        %4368 = vmatprep.subr.bf16.mxu0 %v2883
        %4369 = vmatpush1.bf16.msra.mxu0 %v2882
        %4370 = vmatprep.subr.bf16.mxu0 %v2891
        %4371 = vmatpush1.bf16.msra.mxu0 %v2890
        %4372 = vmatprep.subr.bf16.mxu0 %v2899
        %4373 = vmatpush1.bf16.msra.mxu0 %v2898
        %4374 = vmatprep.subr.bf16.mxu0 %v2907
        %4375 = vmatpush1.bf16.msra.mxu0 %v2906
        %4376 = vmatprep.subr.bf16.mxu0 %v2915
        %4377 = vmatpush1.bf16.msra.mxu0 %v2914
        %4378 = vmatprep.subr.bf16.mxu0 %v2923
        %4379 = vmatpush1.bf16.msra.mxu0 %v2922
        %4380 = vmatprep.subr.bf16.mxu0 %v2931
        %4381 = vmatpush1.bf16.msra.mxu0 %v2930
        %4382 = vmatprep.subr.bf16.mxu0 %v2939
        %4383 = vmatpush1.bf16.msra.mxu0 %v2938
        %4384 = vmatprep.subr.bf16.mxu0 %v2947
        %4385 = vmatpush1.bf16.msra.mxu0 %v2946
        %4386 = vmatprep.subr.bf16.mxu0 %v2955
        %4387 = vmatpush1.bf16.msra.mxu0 %v2954
        %4388 = vmatprep.subr.bf16.mxu0 %v2963
        %4389 = vmatpush1.bf16.msra.mxu0 %v2962
        %4390 = vmatprep.subr.bf16.mxu0 %v2971
        %4391 = vmatpush1.bf16.msra.mxu0 %v2970
        %4392 = vmatprep.mubr.bf16.mxu0 %v1293
        %4393 = vmatmul.mubr.bf16.gmra.mrb[0].mxu0 %v1292
        %v4394 = vpop.f32.mrb[0].mxu0
        %v4395 = vadd.f32 %v1267, %v4394
        %v4396 = vpop.f32.mrb[0].mxu0
        %v4397 = vadd.f32 %v1271, %v4396
        %v4398 = vpop.f32.mrb[0].mxu0
        %v4399 = vpop.f32.mrb[0].mxu0
        %4400 = vdwg.mxu0
        %4401 = vmatprep.subr.bf16.mxu0 %v2979
        %4402 = vmatpush1.bf16.msra.mxu0 %v2978
        %4403 = vmatprep.subr.bf16.mxu0 %v2987
        %4404 = vmatpush1.bf16.msra.mxu0 %v2986
        %4405 = vmatprep.subr.bf16.mxu0 %v2995
        %4406 = vmatpush1.bf16.msra.mxu0 %v2994
        %4407 = vmatprep.subr.bf16.mxu0 %v3003
        %4408 = vmatpush1.bf16.msra.mxu0 %v3002
        %4409 = vmatprep.subr.bf16.mxu0 %v3011
        %4410 = vmatpush1.bf16.msra.mxu0 %v3010
        %4411 = vmatprep.subr.bf16.mxu0 %v3019
        %4412 = vmatpush1.bf16.msra.mxu0 %v3018
        %4413 = vmatprep.subr.bf16.mxu0 %v3027
        %4414 = vmatpush1.bf16.msra.mxu0 %v3026
        %4415 = vmatprep.subr.bf16.mxu0 %v3035
        %4416 = vmatpush1.bf16.msra.mxu0 %v3034
        %4417 = vmatprep.subr.bf16.mxu0 %v3043
        %4418 = vmatpush1.bf16.msra.mxu0 %v3042
        %4419 = vmatprep.subr.bf16.mxu0 %v3051
        %4420 = vmatpush1.bf16.msra.mxu0 %v3050
        %4421 = vmatprep.subr.bf16.mxu0 %v3059
        %4422 = vmatpush1.bf16.msra.mxu0 %v3058
        %4423 = vmatprep.subr.bf16.mxu0 %v3067
        %4424 = vmatpush1.bf16.msra.mxu0 %v3066
        %4425 = vmatprep.subr.bf16.mxu0 %v3075
        %4426 = vmatpush1.bf16.msra.mxu0 %v3074
        %4427 = vmatprep.subr.bf16.mxu0 %v3083
        %4428 = vmatpush1.bf16.msra.mxu0 %v3082
        %4429 = vmatprep.subr.bf16.mxu0 %v3091
        %4430 = vmatpush1.bf16.msra.mxu0 %v3090
        %4431 = vmatprep.subr.bf16.mxu0 %v3099
        %4432 = vmatpush1.bf16.msra.mxu0 %v3098
        %4433 = vmatprep.mubr.bf16.mxu0 %v1295
        %4434 = vmatmul.mubr.bf16.gmra.mrb[0].mxu0 %v1294
        %v4435 = vpop.f32.mrb[0].mxu0
        %v4436 = vadd.f32 %v4395, %v4435
        %v4437 = vpop.f32.mrb[0].mxu0
        %v4438 = vadd.f32 %v4397, %v4437
        %v4439 = vpop.f32.mrb[0].mxu0
        %v4440 = vpop.f32.mrb[0].mxu0
        %4441 = vdwg.mxu0
        %4442 = vmatprep.subr.bf16.mxu0 %v3107
        %4443 = vmatpush1.bf16.msra.mxu0 %v3106
        %4444 = vmatprep.subr.bf16.mxu0 %v3115
        %4445 = vmatpush1.bf16.msra.mxu0 %v3114
        %4446 = vmatprep.subr.bf16.mxu0 %v3123
        %4447 = vmatpush1.bf16.msra.mxu0 %v3122
        %4448 = vmatprep.subr.bf16.mxu0 %v3131
        %4449 = vmatpush1.bf16.msra.mxu0 %v3130
        %4450 = vmatprep.subr.bf16.mxu0 %v3139
        %4451 = vmatpush1.bf16.msra.mxu0 %v3138
        %4452 = vmatprep.subr.bf16.mxu0 %v3147
        %4453 = vmatpush1.bf16.msra.mxu0 %v3146
        %4454 = vmatprep.subr.bf16.mxu0 %v3155
        %4455 = vmatpush1.bf16.msra.mxu0 %v3154
        %4456 = vmatprep.subr.bf16.mxu0 %v3163
        %4457 = vmatpush1.bf16.msra.mxu0 %v3162
        %4458 = vmatprep.subr.bf16.mxu0 %v3171
        %4459 = vmatpush1.bf16.msra.mxu0 %v3170
        %4460 = vmatprep.subr.bf16.mxu0 %v3179
        %4461 = vmatpush1.bf16.msra.mxu0 %v3178
        %4462 = vmatprep.subr.bf16.mxu0 %v3187
        %4463 = vmatpush1.bf16.msra.mxu0 %v3186
        %4464 = vmatprep.subr.bf16.mxu0 %v3195
        %4465 = vmatpush1.bf16.msra.mxu0 %v3194
        %4466 = vmatprep.subr.bf16.mxu0 %v3203
        %4467 = vmatpush1.bf16.msra.mxu0 %v3202
        %4468 = vmatprep.subr.bf16.mxu0 %v3211
        %4469 = vmatpush1.bf16.msra.mxu0 %v3210
        %4470 = vmatprep.subr.bf16.mxu0 %v3219
        %4471 = vmatpush1.bf16.msra.mxu0 %v3218
        %4472 = vmatprep.subr.bf16.mxu0 %v3227
        %4473 = vmatpush1.bf16.msra.mxu0 %v3226
        %4474 = vmatprep.mubr.bf16.mxu0 %v1297
        %4475 = vmatmul.mubr.bf16.gmra.mrb[0].mxu0 %v1296
        %v4476 = vpop.f32.mrb[0].mxu0
        %v4477 = vadd.f32 %v4436, %v4476
        %v4478 = vpop.f32.mrb[0].mxu0
        %v4479 = vadd.f32 %v4438, %v4478
        %v4480 = vpop.f32.mrb[0].mxu0
        %v4481 = vpop.f32.mrb[0].mxu0
        %4482 = vdwg.mxu0
        %4483 = vmatprep.subr.bf16.mxu0 %v3235
        %4484 = vmatpush1.bf16.msra.mxu0 %v3234
        %4485 = vmatprep.subr.bf16.mxu0 %v3243
        %4486 = vmatpush1.bf16.msra.mxu0 %v3242
        %4487 = vmatprep.subr.bf16.mxu0 %v3251
        %4488 = vmatpush1.bf16.msra.mxu0 %v3250
        %4489 = vmatprep.subr.bf16.mxu0 %v3259
        %4490 = vmatpush1.bf16.msra.mxu0 %v3258
        %4491 = vmatprep.subr.bf16.mxu0 %v3267
        %4492 = vmatpush1.bf16.msra.mxu0 %v3266
        %4493 = vmatprep.subr.bf16.mxu0 %v3275
        %4494 = vmatpush1.bf16.msra.mxu0 %v3274
        %4495 = vmatprep.subr.bf16.mxu0 %v3283
        %4496 = vmatpush1.bf16.msra.mxu0 %v3282
        %4497 = vmatprep.subr.bf16.mxu0 %v3291
        %4498 = vmatpush1.bf16.msra.mxu0 %v3290
        %4499 = vmatprep.subr.bf16.mxu0 %v3299
        %4500 = vmatpush1.bf16.msra.mxu0 %v3298
        %4501 = vmatprep.subr.bf16.mxu0 %v3307
        %4502 = vmatpush1.bf16.msra.mxu0 %v3306
        %4503 = vmatprep.subr.bf16.mxu0 %v3315
        %4504 = vmatpush1.bf16.msra.mxu0 %v3314
        %4505 = vmatprep.subr.bf16.mxu0 %v3323
        %4506 = vmatpush1.bf16.msra.mxu0 %v3322
        %4507 = vmatprep.subr.bf16.mxu0 %v3331
        %4508 = vmatpush1.bf16.msra.mxu0 %v3330
        %4509 = vmatprep.subr.bf16.mxu0 %v3339
        %4510 = vmatpush1.bf16.msra.mxu0 %v3338
        %4511 = vmatprep.subr.bf16.mxu0 %v3347
        %4512 = vmatpush1.bf16.msra.mxu0 %v3346
        %4513 = vmatprep.subr.bf16.mxu0 %v3355
        %4514 = vmatpush1.bf16.msra.mxu0 %v3354
        %4515 = vmatprep.mubr.bf16.mxu0 %v1299
        %4516 = vmatmul.mubr.bf16.gmra.mrb[0].mxu0 %v1298
        %v4517 = vpop.f32.mrb[0].mxu0
        %v4518 = vadd.f32 %v4477, %v4517
        %v4519 = vpop.f32.mrb[0].mxu0
        %v4520 = vadd.f32 %v4479, %v4519
        %v4521 = vpop.f32.mrb[0].mxu0
        %v4522 = vpop.f32.mrb[0].mxu0
        %4523 = vdwg.mxu0
        %v4524 = vmax.f32 %v4026, 0.0
        %v4525 = vmax.f32 %v4028, 0.0
        %v4526 = vmax.f32 %v4190, 0.0
        %v4527 = vmax.f32 %v4192, 0.0
        %v4528 = vmax.f32 %v4354, 0.0
        %v4529 = vmax.f32 %v4356, 0.0
        %v4530 = vmax.f32 %v4518, 0.0
        %v4531 = vmax.f32 %v4520, 0.0
        %v4532 = vpack.c.bf16 %v4524, %v4524
        %v4533 = vpack.c.bf16 %v4525, %v4525
        %v4534 = vpack.c.bf16 %v4526, %v4526
        %v4535 = vpack.c.bf16 %v4527, %v4527
        %v4536 = vpack.c.bf16 %v4528, %v4528
        %v4537 = vpack.c.bf16 %v4529, %v4529
        %v4538 = vpack.c.bf16 %v4530, %v4530
        %v4539 = vpack.c.bf16 %v4531, %v4531
        %v4540 = vld [vmem:[%s556] sm:$0xff]
        %v4541 = vld [vmem:[%s556 + $0x8] sm:$0xff]
        %v4542 = vld [vmem:[%s556 + $0x10] sm:$0xff]
        %v4543 = vld [vmem:[%s556 + $0x18] sm:$0xff]
        %v4544 = vld [vmem:[%s556 + $0x20] sm:$0xff]
        %v4545 = vld [vmem:[%s556 + $0x28] sm:$0xff]
        %v4546 = vld [vmem:[%s556 + $0x30] sm:$0xff]
        %v4547 = vld [vmem:[%s556 + $0x38] sm:$0xff]
        %v4548 = vld [vmem:[%s556 + $0x40] sm:$0xff]
        %v4549 = vld [vmem:[%s556 + $0x48] sm:$0xff]
        %v4550 = vld [vmem:[%s556 + $0x50] sm:$0xff]
        %v4551 = vld [vmem:[%s556 + $0x58] sm:$0xff]
        %v4552 = vld [vmem:[%s556 + $0x60] sm:$0xff]
        %v4553 = vld [vmem:[%s556 + $0x68] sm:$0xff]
        %v4554 = vld [vmem:[%s556 + $0x70] sm:$0xff]
        %v4555 = vld [vmem:[%s556 + $0x78] sm:$0xff]
        %v4556 = vld [vmem:[%s556 + $0x80] sm:$0xff]
        %v4557 = vld [vmem:[%s556 + $0x88] sm:$0xff]
        %v4558 = vld [vmem:[%s556 + $0x90] sm:$0xff]
        %v4559 = vld [vmem:[%s556 + $0x98] sm:$0xff]
        %v4560 = vld [vmem:[%s556 + $0xa0] sm:$0xff]
        %v4561 = vld [vmem:[%s556 + $0xa8] sm:$0xff]
        %v4562 = vld [vmem:[%s556 + $0xb0] sm:$0xff]
        %v4563 = vld [vmem:[%s556 + $0xb8] sm:$0xff]
        %v4564 = vld [vmem:[%s556 + $0xc0] sm:$0xff]
        %v4565 = vld [vmem:[%s556 + $0xc8] sm:$0xff]
        %v4566 = vld [vmem:[%s556 + $0xd0] sm:$0xff]
        %v4567 = vld [vmem:[%s556 + $0xd8] sm:$0xff]
        %v4568 = vld [vmem:[%s556 + $0xe0] sm:$0xff]
        %v4569 = vld [vmem:[%s556 + $0xe8] sm:$0xff]
        %v4570 = vld [vmem:[%s556 + $0xf0] sm:$0xff]
        %v4571 = vld [vmem:[%s556 + $0xf8] sm:$0xff]
        %v4572 = vld [vmem:[%s556 + $0x100] sm:$0xff]
        %v4573 = vld [vmem:[%s556 + $0x108] sm:$0xff]
        %v4574 = vld [vmem:[%s556 + $0x110] sm:$0xff]
        %v4575 = vld [vmem:[%s556 + $0x118] sm:$0xff]
        %v4576 = vld [vmem:[%s556 + $0x120] sm:$0xff]
        %v4577 = vld [vmem:[%s556 + $0x128] sm:$0xff]
        %v4578 = vld [vmem:[%s556 + $0x130] sm:$0xff]
        %v4579 = vld [vmem:[%s556 + $0x138] sm:$0xff]
        %v4580 = vld [vmem:[%s556 + $0x140] sm:$0xff]
        %v4581 = vld [vmem:[%s556 + $0x148] sm:$0xff]
        %v4582 = vld [vmem:[%s556 + $0x150] sm:$0xff]
        %v4583 = vld [vmem:[%s556 + $0x158] sm:$0xff]
        %v4584 = vld [vmem:[%s556 + $0x160] sm:$0xff]
        %v4585 = vld [vmem:[%s556 + $0x168] sm:$0xff]
        %v4586 = vld [vmem:[%s556 + $0x170] sm:$0xff]
        %v4587 = vld [vmem:[%s556 + $0x178] sm:$0xff]
        %v4588 = vld [vmem:[%s556 + $0x180] sm:$0xff]
        %v4589 = vld [vmem:[%s556 + $0x188] sm:$0xff]
        %v4590 = vld [vmem:[%s556 + $0x190] sm:$0xff]
        %v4591 = vld [vmem:[%s556 + $0x198] sm:$0xff]
        %v4592 = vld [vmem:[%s556 + $0x1a0] sm:$0xff]
        %v4593 = vld [vmem:[%s556 + $0x1a8] sm:$0xff]
        %v4594 = vld [vmem:[%s556 + $0x1b0] sm:$0xff]
        %v4595 = vld [vmem:[%s556 + $0x1b8] sm:$0xff]
        %v4596 = vld [vmem:[%s556 + $0x1c0] sm:$0xff]
        %v4597 = vld [vmem:[%s556 + $0x1c8] sm:$0xff]
        %v4598 = vld [vmem:[%s556 + $0x1d0] sm:$0xff]
        %v4599 = vld [vmem:[%s556 + $0x1d8] sm:$0xff]
        %v4600 = vld [vmem:[%s556 + $0x1e0] sm:$0xff]
        %v4601 = vld [vmem:[%s556 + $0x1e8] sm:$0xff]
        %v4602 = vld [vmem:[%s556 + $0x1f0] sm:$0xff]
        %v4603 = vld [vmem:[%s556 + $0x1f8] sm:$0xff]
        %v4604 = vld [vmem:[%s556 + $0x200] sm:$0xff]
        %v4605 = vld [vmem:[%s556 + $0x208] sm:$0xff]
        %v4606 = vld [vmem:[%s556 + $0x210] sm:$0xff]
        %v4607 = vld [vmem:[%s556 + $0x218] sm:$0xff]
        %v4608 = vld [vmem:[%s556 + $0x220] sm:$0xff]
        %v4609 = vld [vmem:[%s556 + $0x228] sm:$0xff]
        %v4610 = vld [vmem:[%s556 + $0x230] sm:$0xff]
        %v4611 = vld [vmem:[%s556 + $0x238] sm:$0xff]
        %v4612 = vld [vmem:[%s556 + $0x240] sm:$0xff]
        %v4613 = vld [vmem:[%s556 + $0x248] sm:$0xff]
        %v4614 = vld [vmem:[%s556 + $0x250] sm:$0xff]
        %v4615 = vld [vmem:[%s556 + $0x258] sm:$0xff]
        %v4616 = vld [vmem:[%s556 + $0x260] sm:$0xff]
        %v4617 = vld [vmem:[%s556 + $0x268] sm:$0xff]
        %v4618 = vld [vmem:[%s556 + $0x270] sm:$0xff]
        %v4619 = vld [vmem:[%s556 + $0x278] sm:$0xff]
        %v4620 = vld [vmem:[%s556 + $0x280] sm:$0xff]
        %v4621 = vld [vmem:[%s556 + $0x288] sm:$0xff]
        %v4622 = vld [vmem:[%s556 + $0x290] sm:$0xff]
        %v4623 = vld [vmem:[%s556 + $0x298] sm:$0xff]
        %v4624 = vld [vmem:[%s556 + $0x2a0] sm:$0xff]
        %v4625 = vld [vmem:[%s556 + $0x2a8] sm:$0xff]
        %v4626 = vld [vmem:[%s556 + $0x2b0] sm:$0xff]
        %v4627 = vld [vmem:[%s556 + $0x2b8] sm:$0xff]
        %v4628 = vld [vmem:[%s556 + $0x2c0] sm:$0xff]
        %v4629 = vld [vmem:[%s556 + $0x2c8] sm:$0xff]
        %v4630 = vld [vmem:[%s556 + $0x2d0] sm:$0xff]
        %v4631 = vld [vmem:[%s556 + $0x2d8] sm:$0xff]
        %v4632 = vld [vmem:[%s556 + $0x2e0] sm:$0xff]
        %v4633 = vld [vmem:[%s556 + $0x2e8] sm:$0xff]
        %v4634 = vld [vmem:[%s556 + $0x2f0] sm:$0xff]
        %v4635 = vld [vmem:[%s556 + $0x2f8] sm:$0xff]
        %v4636 = vld [vmem:[%s556 + $0x300] sm:$0xff]
        %v4637 = vld [vmem:[%s556 + $0x308] sm:$0xff]
        %v4638 = vld [vmem:[%s556 + $0x310] sm:$0xff]
        %v4639 = vld [vmem:[%s556 + $0x318] sm:$0xff]
        %v4640 = vld [vmem:[%s556 + $0x320] sm:$0xff]
        %v4641 = vld [vmem:[%s556 + $0x328] sm:$0xff]
        %v4642 = vld [vmem:[%s556 + $0x330] sm:$0xff]
        %v4643 = vld [vmem:[%s556 + $0x338] sm:$0xff]
        %v4644 = vld [vmem:[%s556 + $0x340] sm:$0xff]
        %v4645 = vld [vmem:[%s556 + $0x348] sm:$0xff]
        %v4646 = vld [vmem:[%s556 + $0x350] sm:$0xff]
        %v4647 = vld [vmem:[%s556 + $0x358] sm:$0xff]
        %v4648 = vld [vmem:[%s556 + $0x360] sm:$0xff]
        %v4649 = vld [vmem:[%s556 + $0x368] sm:$0xff]
        %v4650 = vld [vmem:[%s556 + $0x370] sm:$0xff]
        %v4651 = vld [vmem:[%s556 + $0x378] sm:$0xff]
        %v4652 = vld [vmem:[%s556 + $0x380] sm:$0xff]
        %v4653 = vld [vmem:[%s556 + $0x388] sm:$0xff]
        %v4654 = vld [vmem:[%s556 + $0x390] sm:$0xff]
        %v4655 = vld [vmem:[%s556 + $0x398] sm:$0xff]
        %v4656 = vld [vmem:[%s556 + $0x3a0] sm:$0xff]
        %v4657 = vld [vmem:[%s556 + $0x3a8] sm:$0xff]
        %v4658 = vld [vmem:[%s556 + $0x3b0] sm:$0xff]
        %v4659 = vld [vmem:[%s556 + $0x3b8] sm:$0xff]
        %v4660 = vld [vmem:[%s556 + $0x3c0] sm:$0xff]
        %v4661 = vld [vmem:[%s556 + $0x3c8] sm:$0xff]
        %v4662 = vld [vmem:[%s556 + $0x3d0] sm:$0xff]
        %v4663 = vld [vmem:[%s556 + $0x3d8] sm:$0xff]
        %v4664 = vld [vmem:[%s556 + $0x3e0] sm:$0xff]
        %v4665 = vld [vmem:[%s556 + $0x3e8] sm:$0xff]
        %v4666 = vld [vmem:[%s556 + $0x3f0] sm:$0xff]
        %v4667 = vld [vmem:[%s556 + $0x3f8] sm:$0xff]
        %v4668 = vld [vmem:[%s565] sm:$0x3]
        %v4670 = vlaneseq
        %v4671 = vshrl.u32 %v4670, 7
        %v4672 = vsub.s32 0, %v4671
        %v4673 = vrot.slane %v4668, %v4672
        %v4674 = vlaneseq
        %v4675 = vshrl.u32 %v4674, 7
        %v4676 = vsub.s32 1, %v4675
        %v4677 = vrot.slane %v4668, %v4676
        %v4808 = vunpack.c.l.b16 %v4540
        %v4809 = vunpack.c.h.b16 %v4540
        %v4810 = vunpack.c.l.b16 %v4541
        %v4811 = vunpack.c.h.b16 %v4541
        %v4812 = vunpack.c.l.b16 %v4542
        %v4813 = vunpack.c.h.b16 %v4542
        %v4814 = vunpack.c.l.b16 %v4543
        %v4815 = vunpack.c.h.b16 %v4543
        %v4816 = vunpack.c.l.b16 %v4544
        %v4817 = vunpack.c.h.b16 %v4544
        %v4818 = vunpack.c.l.b16 %v4545
        %v4819 = vunpack.c.h.b16 %v4545
        %v4820 = vunpack.c.l.b16 %v4546
        %v4821 = vunpack.c.h.b16 %v4546
        %v4822 = vunpack.c.l.b16 %v4547
        %v4823 = vunpack.c.h.b16 %v4547
        %v4824 = vunpack.c.l.b16 %v4548
        %v4825 = vunpack.c.h.b16 %v4548
        %v4826 = vunpack.c.l.b16 %v4549
        %v4827 = vunpack.c.h.b16 %v4549
        %v4828 = vunpack.c.l.b16 %v4550
        %v4829 = vunpack.c.h.b16 %v4550
        %v4830 = vunpack.c.l.b16 %v4551
        %v4831 = vunpack.c.h.b16 %v4551
        %v4832 = vunpack.c.l.b16 %v4552
        %v4833 = vunpack.c.h.b16 %v4552
        %v4834 = vunpack.c.l.b16 %v4553
        %v4835 = vunpack.c.h.b16 %v4553
        %v4836 = vunpack.c.l.b16 %v4554
        %v4837 = vunpack.c.h.b16 %v4554
        %v4838 = vunpack.c.l.b16 %v4555
        %v4839 = vunpack.c.h.b16 %v4555
        %v4840 = vunpack.c.l.b16 %v4556
        %v4841 = vunpack.c.h.b16 %v4556
        %v4842 = vunpack.c.l.b16 %v4557
        %v4843 = vunpack.c.h.b16 %v4557
        %v4844 = vunpack.c.l.b16 %v4558
        %v4845 = vunpack.c.h.b16 %v4558
        %v4846 = vunpack.c.l.b16 %v4559
        %v4847 = vunpack.c.h.b16 %v4559
        %v4848 = vunpack.c.l.b16 %v4560
        %v4849 = vunpack.c.h.b16 %v4560
        %v4850 = vunpack.c.l.b16 %v4561
        %v4851 = vunpack.c.h.b16 %v4561
        %v4852 = vunpack.c.l.b16 %v4562
        %v4853 = vunpack.c.h.b16 %v4562
        %v4854 = vunpack.c.l.b16 %v4563
        %v4855 = vunpack.c.h.b16 %v4563
        %v4856 = vunpack.c.l.b16 %v4564
        %v4857 = vunpack.c.h.b16 %v4564
        %v4858 = vunpack.c.l.b16 %v4565
        %v4859 = vunpack.c.h.b16 %v4565
        %v4860 = vunpack.c.l.b16 %v4566
        %v4861 = vunpack.c.h.b16 %v4566
        %v4862 = vunpack.c.l.b16 %v4567
        %v4863 = vunpack.c.h.b16 %v4567
        %v4864 = vunpack.c.l.b16 %v4568
        %v4865 = vunpack.c.h.b16 %v4568
        %v4866 = vunpack.c.l.b16 %v4569
        %v4867 = vunpack.c.h.b16 %v4569
        %v4868 = vunpack.c.l.b16 %v4570
        %v4869 = vunpack.c.h.b16 %v4570
        %v4870 = vunpack.c.l.b16 %v4571
        %v4871 = vunpack.c.h.b16 %v4571
        %v4872 = vunpack.c.l.b16 %v4572
        %v4873 = vunpack.c.h.b16 %v4572
        %v4874 = vunpack.c.l.b16 %v4573
        %v4875 = vunpack.c.h.b16 %v4573
        %v4876 = vunpack.c.l.b16 %v4574
        %v4877 = vunpack.c.h.b16 %v4574
        %v4878 = vunpack.c.l.b16 %v4575
        %v4879 = vunpack.c.h.b16 %v4575
        %v4880 = vunpack.c.l.b16 %v4576
        %v4881 = vunpack.c.h.b16 %v4576
        %v4882 = vunpack.c.l.b16 %v4577
        %v4883 = vunpack.c.h.b16 %v4577
        %v4884 = vunpack.c.l.b16 %v4578
        %v4885 = vunpack.c.h.b16 %v4578
        %v4886 = vunpack.c.l.b16 %v4579
        %v4887 = vunpack.c.h.b16 %v4579
        %v4888 = vunpack.c.l.b16 %v4580
        %v4889 = vunpack.c.h.b16 %v4580
        %v4890 = vunpack.c.l.b16 %v4581
        %v4891 = vunpack.c.h.b16 %v4581
        %v4892 = vunpack.c.l.b16 %v4582
        %v4893 = vunpack.c.h.b16 %v4582
        %v4894 = vunpack.c.l.b16 %v4583
        %v4895 = vunpack.c.h.b16 %v4583
        %v4896 = vunpack.c.l.b16 %v4584
        %v4897 = vunpack.c.h.b16 %v4584
        %v4898 = vunpack.c.l.b16 %v4585
        %v4899 = vunpack.c.h.b16 %v4585
        %v4900 = vunpack.c.l.b16 %v4586
        %v4901 = vunpack.c.h.b16 %v4586
        %v4902 = vunpack.c.l.b16 %v4587
        %v4903 = vunpack.c.h.b16 %v4587
        %v4904 = vunpack.c.l.b16 %v4588
        %v4905 = vunpack.c.h.b16 %v4588
        %v4906 = vunpack.c.l.b16 %v4589
        %v4907 = vunpack.c.h.b16 %v4589
        %v4908 = vunpack.c.l.b16 %v4590
        %v4909 = vunpack.c.h.b16 %v4590
        %v4910 = vunpack.c.l.b16 %v4591
        %v4911 = vunpack.c.h.b16 %v4591
        %v4912 = vunpack.c.l.b16 %v4592
        %v4913 = vunpack.c.h.b16 %v4592
        %v4914 = vunpack.c.l.b16 %v4593
        %v4915 = vunpack.c.h.b16 %v4593
        %v4916 = vunpack.c.l.b16 %v4594
        %v4917 = vunpack.c.h.b16 %v4594
        %v4918 = vunpack.c.l.b16 %v4595
        %v4919 = vunpack.c.h.b16 %v4595
        %v4920 = vunpack.c.l.b16 %v4596
        %v4921 = vunpack.c.h.b16 %v4596
        %v4922 = vunpack.c.l.b16 %v4597
        %v4923 = vunpack.c.h.b16 %v4597
        %v4924 = vunpack.c.l.b16 %v4598
        %v4925 = vunpack.c.h.b16 %v4598
        %v4926 = vunpack.c.l.b16 %v4599
        %v4927 = vunpack.c.h.b16 %v4599
        %v4928 = vunpack.c.l.b16 %v4600
        %v4929 = vunpack.c.h.b16 %v4600
        %v4930 = vunpack.c.l.b16 %v4601
        %v4931 = vunpack.c.h.b16 %v4601
        %v4932 = vunpack.c.l.b16 %v4602
        %v4933 = vunpack.c.h.b16 %v4602
        %v4934 = vunpack.c.l.b16 %v4603
        %v4935 = vunpack.c.h.b16 %v4603
        %v4936 = vunpack.c.l.b16 %v4604
        %v4937 = vunpack.c.h.b16 %v4604
        %v4938 = vunpack.c.l.b16 %v4605
        %v4939 = vunpack.c.h.b16 %v4605
        %v4940 = vunpack.c.l.b16 %v4606
        %v4941 = vunpack.c.h.b16 %v4606
        %v4942 = vunpack.c.l.b16 %v4607
        %v4943 = vunpack.c.h.b16 %v4607
        %v4944 = vunpack.c.l.b16 %v4608
        %v4945 = vunpack.c.h.b16 %v4608
        %v4946 = vunpack.c.l.b16 %v4609
        %v4947 = vunpack.c.h.b16 %v4609
        %v4948 = vunpack.c.l.b16 %v4610
        %v4949 = vunpack.c.h.b16 %v4610
        %v4950 = vunpack.c.l.b16 %v4611
        %v4951 = vunpack.c.h.b16 %v4611
        %v4952 = vunpack.c.l.b16 %v4612
        %v4953 = vunpack.c.h.b16 %v4612
        %v4954 = vunpack.c.l.b16 %v4613
        %v4955 = vunpack.c.h.b16 %v4613
        %v4956 = vunpack.c.l.b16 %v4614
        %v4957 = vunpack.c.h.b16 %v4614
        %v4958 = vunpack.c.l.b16 %v4615
        %v4959 = vunpack.c.h.b16 %v4615
        %v4960 = vunpack.c.l.b16 %v4616
        %v4961 = vunpack.c.h.b16 %v4616
        %v4962 = vunpack.c.l.b16 %v4617
        %v4963 = vunpack.c.h.b16 %v4617
        %v4964 = vunpack.c.l.b16 %v4618
        %v4965 = vunpack.c.h.b16 %v4618
        %v4966 = vunpack.c.l.b16 %v4619
        %v4967 = vunpack.c.h.b16 %v4619
        %v4968 = vunpack.c.l.b16 %v4620
        %v4969 = vunpack.c.h.b16 %v4620
        %v4970 = vunpack.c.l.b16 %v4621
        %v4971 = vunpack.c.h.b16 %v4621
        %v4972 = vunpack.c.l.b16 %v4622
        %v4973 = vunpack.c.h.b16 %v4622
        %v4974 = vunpack.c.l.b16 %v4623
        %v4975 = vunpack.c.h.b16 %v4623
        %v4976 = vunpack.c.l.b16 %v4624
        %v4977 = vunpack.c.h.b16 %v4624
        %v4978 = vunpack.c.l.b16 %v4625
        %v4979 = vunpack.c.h.b16 %v4625
        %v4980 = vunpack.c.l.b16 %v4626
        %v4981 = vunpack.c.h.b16 %v4626
        %v4982 = vunpack.c.l.b16 %v4627
        %v4983 = vunpack.c.h.b16 %v4627
        %v4984 = vunpack.c.l.b16 %v4628
        %v4985 = vunpack.c.h.b16 %v4628
        %v4986 = vunpack.c.l.b16 %v4629
        %v4987 = vunpack.c.h.b16 %v4629
        %v4988 = vunpack.c.l.b16 %v4630
        %v4989 = vunpack.c.h.b16 %v4630
        %v4990 = vunpack.c.l.b16 %v4631
        %v4991 = vunpack.c.h.b16 %v4631
        %v4992 = vunpack.c.l.b16 %v4632
        %v4993 = vunpack.c.h.b16 %v4632
        %v4994 = vunpack.c.l.b16 %v4633
        %v4995 = vunpack.c.h.b16 %v4633
        %v4996 = vunpack.c.l.b16 %v4634
        %v4997 = vunpack.c.h.b16 %v4634
        %v4998 = vunpack.c.l.b16 %v4635
        %v4999 = vunpack.c.h.b16 %v4635
        %v5000 = vunpack.c.l.b16 %v4636
        %v5001 = vunpack.c.h.b16 %v4636
        %v5002 = vunpack.c.l.b16 %v4637
        %v5003 = vunpack.c.h.b16 %v4637
        %v5004 = vunpack.c.l.b16 %v4638
        %v5005 = vunpack.c.h.b16 %v4638
        %v5006 = vunpack.c.l.b16 %v4639
        %v5007 = vunpack.c.h.b16 %v4639
        %v5008 = vunpack.c.l.b16 %v4640
        %v5009 = vunpack.c.h.b16 %v4640
        %v5010 = vunpack.c.l.b16 %v4641
        %v5011 = vunpack.c.h.b16 %v4641
        %v5012 = vunpack.c.l.b16 %v4642
        %v5013 = vunpack.c.h.b16 %v4642
        %v5014 = vunpack.c.l.b16 %v4643
        %v5015 = vunpack.c.h.b16 %v4643
        %v5016 = vunpack.c.l.b16 %v4644
        %v5017 = vunpack.c.h.b16 %v4644
        %v5018 = vunpack.c.l.b16 %v4645
        %v5019 = vunpack.c.h.b16 %v4645
        %v5020 = vunpack.c.l.b16 %v4646
        %v5021 = vunpack.c.h.b16 %v4646
        %v5022 = vunpack.c.l.b16 %v4647
        %v5023 = vunpack.c.h.b16 %v4647
        %v5024 = vunpack.c.l.b16 %v4648
        %v5025 = vunpack.c.h.b16 %v4648
        %v5026 = vunpack.c.l.b16 %v4649
        %v5027 = vunpack.c.h.b16 %v4649
        %v5028 = vunpack.c.l.b16 %v4650
        %v5029 = vunpack.c.h.b16 %v4650
        %v5030 = vunpack.c.l.b16 %v4651
        %v5031 = vunpack.c.h.b16 %v4651
        %v5032 = vunpack.c.l.b16 %v4652
        %v5033 = vunpack.c.h.b16 %v4652
        %v5034 = vunpack.c.l.b16 %v4653
        %v5035 = vunpack.c.h.b16 %v4653
        %v5036 = vunpack.c.l.b16 %v4654
        %v5037 = vunpack.c.h.b16 %v4654
        %v5038 = vunpack.c.l.b16 %v4655
        %v5039 = vunpack.c.h.b16 %v4655
        %v5040 = vunpack.c.l.b16 %v4656
        %v5041 = vunpack.c.h.b16 %v4656
        %v5042 = vunpack.c.l.b16 %v4657
        %v5043 = vunpack.c.h.b16 %v4657
        %v5044 = vunpack.c.l.b16 %v4658
        %v5045 = vunpack.c.h.b16 %v4658
        %v5046 = vunpack.c.l.b16 %v4659
        %v5047 = vunpack.c.h.b16 %v4659
        %v5048 = vunpack.c.l.b16 %v4660
        %v5049 = vunpack.c.h.b16 %v4660
        %v5050 = vunpack.c.l.b16 %v4661
        %v5051 = vunpack.c.h.b16 %v4661
        %v5052 = vunpack.c.l.b16 %v4662
        %v5053 = vunpack.c.h.b16 %v4662
        %v5054 = vunpack.c.l.b16 %v4663
        %v5055 = vunpack.c.h.b16 %v4663
        %v5056 = vunpack.c.l.b16 %v4664
        %v5057 = vunpack.c.h.b16 %v4664
        %v5058 = vunpack.c.l.b16 %v4665
        %v5059 = vunpack.c.h.b16 %v4665
        %v5060 = vunpack.c.l.b16 %v4666
        %v5061 = vunpack.c.h.b16 %v4666
        %v5062 = vunpack.c.l.b16 %v4667
        %v5063 = vunpack.c.h.b16 %v4667
        %v5064 = vpack.c.b16 %v4810, %v4808
        %v5065 = vpack.c.b16 %v4811, %v4809
        %v5066 = vpack.c.b16 %v4814, %v4812
        %v5067 = vpack.c.b16 %v4815, %v4813
        %v5068 = vpack.c.b16 %v4818, %v4816
        %v5069 = vpack.c.b16 %v4819, %v4817
        %v5070 = vpack.c.b16 %v4822, %v4820
        %v5071 = vpack.c.b16 %v4823, %v4821
        %v5072 = vpack.c.b16 %v4826, %v4824
        %v5073 = vpack.c.b16 %v4827, %v4825
        %v5074 = vpack.c.b16 %v4830, %v4828
        %v5075 = vpack.c.b16 %v4831, %v4829
        %v5076 = vpack.c.b16 %v4834, %v4832
        %v5077 = vpack.c.b16 %v4835, %v4833
        %v5078 = vpack.c.b16 %v4838, %v4836
        %v5079 = vpack.c.b16 %v4839, %v4837
        %v5080 = vpack.c.b16 %v4842, %v4840
        %v5081 = vpack.c.b16 %v4843, %v4841
        %v5082 = vpack.c.b16 %v4846, %v4844
        %v5083 = vpack.c.b16 %v4847, %v4845
        %v5084 = vpack.c.b16 %v4850, %v4848
        %v5085 = vpack.c.b16 %v4851, %v4849
        %v5086 = vpack.c.b16 %v4854, %v4852
        %v5087 = vpack.c.b16 %v4855, %v4853
        %v5088 = vpack.c.b16 %v4858, %v4856
        %v5089 = vpack.c.b16 %v4859, %v4857
        %v5090 = vpack.c.b16 %v4862, %v4860
        %v5091 = vpack.c.b16 %v4863, %v4861
        %v5092 = vpack.c.b16 %v4866, %v4864
        %v5093 = vpack.c.b16 %v4867, %v4865
        %v5094 = vpack.c.b16 %v4870, %v4868
        %v5095 = vpack.c.b16 %v4871, %v4869
        %v5096 = vpack.c.b16 %v4874, %v4872
        %v5097 = vpack.c.b16 %v4875, %v4873
        %v5098 = vpack.c.b16 %v4878, %v4876
        %v5099 = vpack.c.b16 %v4879, %v4877
        %v5100 = vpack.c.b16 %v4882, %v4880
        %v5101 = vpack.c.b16 %v4883, %v4881
        %v5102 = vpack.c.b16 %v4886, %v4884
        %v5103 = vpack.c.b16 %v4887, %v4885
        %v5104 = vpack.c.b16 %v4890, %v4888
        %v5105 = vpack.c.b16 %v4891, %v4889
        %v5106 = vpack.c.b16 %v4894, %v4892
        %v5107 = vpack.c.b16 %v4895, %v4893
        %v5108 = vpack.c.b16 %v4898, %v4896
        %v5109 = vpack.c.b16 %v4899, %v4897
        %v5110 = vpack.c.b16 %v4902, %v4900
        %v5111 = vpack.c.b16 %v4903, %v4901
        %v5112 = vpack.c.b16 %v4906, %v4904
        %v5113 = vpack.c.b16 %v4907, %v4905
        %v5114 = vpack.c.b16 %v4910, %v4908
        %v5115 = vpack.c.b16 %v4911, %v4909
        %v5116 = vpack.c.b16 %v4914, %v4912
        %v5117 = vpack.c.b16 %v4915, %v4913
        %v5118 = vpack.c.b16 %v4918, %v4916
        %v5119 = vpack.c.b16 %v4919, %v4917
        %v5120 = vpack.c.b16 %v4922, %v4920
        %v5121 = vpack.c.b16 %v4923, %v4921
        %v5122 = vpack.c.b16 %v4926, %v4924
        %v5123 = vpack.c.b16 %v4927, %v4925
        %v5124 = vpack.c.b16 %v4930, %v4928
        %v5125 = vpack.c.b16 %v4931, %v4929
        %v5126 = vpack.c.b16 %v4934, %v4932
        %v5127 = vpack.c.b16 %v4935, %v4933
        %v5128 = vpack.c.b16 %v4938, %v4936
        %v5129 = vpack.c.b16 %v4939, %v4937
        %v5130 = vpack.c.b16 %v4942, %v4940
        %v5131 = vpack.c.b16 %v4943, %v4941
        %v5132 = vpack.c.b16 %v4946, %v4944
        %v5133 = vpack.c.b16 %v4947, %v4945
        %v5134 = vpack.c.b16 %v4950, %v4948
        %v5135 = vpack.c.b16 %v4951, %v4949
        %v5136 = vpack.c.b16 %v4954, %v4952
        %v5137 = vpack.c.b16 %v4955, %v4953
        %v5138 = vpack.c.b16 %v4958, %v4956
        %v5139 = vpack.c.b16 %v4959, %v4957
        %v5140 = vpack.c.b16 %v4962, %v4960
        %v5141 = vpack.c.b16 %v4963, %v4961
        %v5142 = vpack.c.b16 %v4966, %v4964
        %v5143 = vpack.c.b16 %v4967, %v4965
        %v5144 = vpack.c.b16 %v4970, %v4968
        %v5145 = vpack.c.b16 %v4971, %v4969
        %v5146 = vpack.c.b16 %v4974, %v4972
        %v5147 = vpack.c.b16 %v4975, %v4973
        %v5148 = vpack.c.b16 %v4978, %v4976
        %v5149 = vpack.c.b16 %v4979, %v4977
        %v5150 = vpack.c.b16 %v4982, %v4980
        %v5151 = vpack.c.b16 %v4983, %v4981
        %v5152 = vpack.c.b16 %v4986, %v4984
        %v5153 = vpack.c.b16 %v4987, %v4985
        %v5154 = vpack.c.b16 %v4990, %v4988
        %v5155 = vpack.c.b16 %v4991, %v4989
        %v5156 = vpack.c.b16 %v4994, %v4992
        %v5157 = vpack.c.b16 %v4995, %v4993
        %v5158 = vpack.c.b16 %v4998, %v4996
        %v5159 = vpack.c.b16 %v4999, %v4997
        %v5160 = vpack.c.b16 %v5002, %v5000
        %v5161 = vpack.c.b16 %v5003, %v5001
        %v5162 = vpack.c.b16 %v5006, %v5004
        %v5163 = vpack.c.b16 %v5007, %v5005
        %v5164 = vpack.c.b16 %v5010, %v5008
        %v5165 = vpack.c.b16 %v5011, %v5009
        %v5166 = vpack.c.b16 %v5014, %v5012
        %v5167 = vpack.c.b16 %v5015, %v5013
        %v5168 = vpack.c.b16 %v5018, %v5016
        %v5169 = vpack.c.b16 %v5019, %v5017
        %v5170 = vpack.c.b16 %v5022, %v5020
        %v5171 = vpack.c.b16 %v5023, %v5021
        %v5172 = vpack.c.b16 %v5026, %v5024
        %v5173 = vpack.c.b16 %v5027, %v5025
        %v5174 = vpack.c.b16 %v5030, %v5028
        %v5175 = vpack.c.b16 %v5031, %v5029
        %v5176 = vpack.c.b16 %v5034, %v5032
        %v5177 = vpack.c.b16 %v5035, %v5033
        %v5178 = vpack.c.b16 %v5038, %v5036
        %v5179 = vpack.c.b16 %v5039, %v5037
        %v5180 = vpack.c.b16 %v5042, %v5040
        %v5181 = vpack.c.b16 %v5043, %v5041
        %v5182 = vpack.c.b16 %v5046, %v5044
        %v5183 = vpack.c.b16 %v5047, %v5045
        %v5184 = vpack.c.b16 %v5050, %v5048
        %v5185 = vpack.c.b16 %v5051, %v5049
        %v5186 = vpack.c.b16 %v5054, %v5052
        %v5187 = vpack.c.b16 %v5055, %v5053
        %v5188 = vpack.c.b16 %v5058, %v5056
        %v5189 = vpack.c.b16 %v5059, %v5057
        %v5190 = vpack.c.b16 %v5062, %v5060
        %v5191 = vpack.c.b16 %v5063, %v5061
        %5320 = vmatprep.subr.bf16.mxu0 %v5065
        %5321 = vmatpush1.bf16.msra.mxu0 %v5064
        %5322 = vmatprep.subr.bf16.mxu0 %v5067
        %5323 = vmatpush1.bf16.msra.mxu0 %v5066
        %5324 = vmatprep.subr.bf16.mxu0 %v5069
        %5325 = vmatpush1.bf16.msra.mxu0 %v5068
        %5326 = vmatprep.subr.bf16.mxu0 %v5071
        %5327 = vmatpush1.bf16.msra.mxu0 %v5070
        %5328 = vmatprep.subr.bf16.mxu0 %v5073
        %5329 = vmatpush1.bf16.msra.mxu0 %v5072
        %5330 = vmatprep.subr.bf16.mxu0 %v5075
        %5331 = vmatpush1.bf16.msra.mxu0 %v5074
        %5332 = vmatprep.subr.bf16.mxu0 %v5077
        %5333 = vmatpush1.bf16.msra.mxu0 %v5076
        %5334 = vmatprep.subr.bf16.mxu0 %v5079
        %5335 = vmatpush1.bf16.msra.mxu0 %v5078
        %5336 = vmatprep.subr.bf16.mxu0 %v5081
        %5337 = vmatpush1.bf16.msra.mxu0 %v5080
        %5338 = vmatprep.subr.bf16.mxu0 %v5083
        %5339 = vmatpush1.bf16.msra.mxu0 %v5082
        %5340 = vmatprep.subr.bf16.mxu0 %v5085
        %5341 = vmatpush1.bf16.msra.mxu0 %v5084
        %5342 = vmatprep.subr.bf16.mxu0 %v5087
        %5343 = vmatpush1.bf16.msra.mxu0 %v5086
        %5344 = vmatprep.subr.bf16.mxu0 %v5089
        %5345 = vmatpush1.bf16.msra.mxu0 %v5088
        %5346 = vmatprep.subr.bf16.mxu0 %v5091
        %5347 = vmatpush1.bf16.msra.mxu0 %v5090
        %5348 = vmatprep.subr.bf16.mxu0 %v5093
        %5349 = vmatpush1.bf16.msra.mxu0 %v5092
        %5350 = vmatprep.subr.bf16.mxu0 %v5095
        %5351 = vmatpush1.bf16.msra.mxu0 %v5094
        %5352 = vmatprep.mubr.bf16.mxu0 %v4533
        %5353 = vmatmul.mubr.bf16.gmra.mrb[0].mxu0 %v4532
        %v5354 = vpop.f32.mrb[0].mxu0
        %v5355 = vadd.f32 %v4673, %v5354
        %v5356 = vpop.f32.mrb[0].mxu0
        %v5357 = vadd.f32 %v4677, %v5356
        %v5358 = vpop.f32.mrb[0].mxu0
        %v5359 = vpop.f32.mrb[0].mxu0
        %5360 = vdwg.mxu0
        %5361 = vmatprep.subr.bf16.mxu0 %v5097
        %5362 = vmatpush1.bf16.msra.mxu0 %v5096
        %5363 = vmatprep.subr.bf16.mxu0 %v5099
        %5364 = vmatpush1.bf16.msra.mxu0 %v5098
        %5365 = vmatprep.subr.bf16.mxu0 %v5101
        %5366 = vmatpush1.bf16.msra.mxu0 %v5100
        %5367 = vmatprep.subr.bf16.mxu0 %v5103
        %5368 = vmatpush1.bf16.msra.mxu0 %v5102
        %5369 = vmatprep.subr.bf16.mxu0 %v5105
        %5370 = vmatpush1.bf16.msra.mxu0 %v5104
        %5371 = vmatprep.subr.bf16.mxu0 %v5107
        %5372 = vmatpush1.bf16.msra.mxu0 %v5106
        %5373 = vmatprep.subr.bf16.mxu0 %v5109
        %5374 = vmatpush1.bf16.msra.mxu0 %v5108
        %5375 = vmatprep.subr.bf16.mxu0 %v5111
        %5376 = vmatpush1.bf16.msra.mxu0 %v5110
        %5377 = vmatprep.subr.bf16.mxu0 %v5113
        %5378 = vmatpush1.bf16.msra.mxu0 %v5112
        %5379 = vmatprep.subr.bf16.mxu0 %v5115
        %5380 = vmatpush1.bf16.msra.mxu0 %v5114
        %5381 = vmatprep.subr.bf16.mxu0 %v5117
        %5382 = vmatpush1.bf16.msra.mxu0 %v5116
        %5383 = vmatprep.subr.bf16.mxu0 %v5119
        %5384 = vmatpush1.bf16.msra.mxu0 %v5118
        %5385 = vmatprep.subr.bf16.mxu0 %v5121
        %5386 = vmatpush1.bf16.msra.mxu0 %v5120
        %5387 = vmatprep.subr.bf16.mxu0 %v5123
        %5388 = vmatpush1.bf16.msra.mxu0 %v5122
        %5389 = vmatprep.subr.bf16.mxu0 %v5125
        %5390 = vmatpush1.bf16.msra.mxu0 %v5124
        %5391 = vmatprep.subr.bf16.mxu0 %v5127
        %5392 = vmatpush1.bf16.msra.mxu0 %v5126
        %5393 = vmatprep.mubr.bf16.mxu0 %v4535
        %5394 = vmatmul.mubr.bf16.gmra.mrb[0].mxu0 %v4534
        %v5395 = vpop.f32.mrb[0].mxu0
        %v5396 = vadd.f32 %v5355, %v5395
        %v5397 = vpop.f32.mrb[0].mxu0
        %v5398 = vadd.f32 %v5357, %v5397
        %v5399 = vpop.f32.mrb[0].mxu0
        %v5400 = vpop.f32.mrb[0].mxu0
        %5401 = vdwg.mxu0
        %5402 = vmatprep.subr.bf16.mxu0 %v5129
        %5403 = vmatpush1.bf16.msra.mxu0 %v5128
        %5404 = vmatprep.subr.bf16.mxu0 %v5131
        %5405 = vmatpush1.bf16.msra.mxu0 %v5130
        %5406 = vmatprep.subr.bf16.mxu0 %v5133
        %5407 = vmatpush1.bf16.msra.mxu0 %v5132
        %5408 = vmatprep.subr.bf16.mxu0 %v5135
        %5409 = vmatpush1.bf16.msra.mxu0 %v5134
        %5410 = vmatprep.subr.bf16.mxu0 %v5137
        %5411 = vmatpush1.bf16.msra.mxu0 %v5136
        %5412 = vmatprep.subr.bf16.mxu0 %v5139
        %5413 = vmatpush1.bf16.msra.mxu0 %v5138
        %5414 = vmatprep.subr.bf16.mxu0 %v5141
        %5415 = vmatpush1.bf16.msra.mxu0 %v5140
        %5416 = vmatprep.subr.bf16.mxu0 %v5143
        %5417 = vmatpush1.bf16.msra.mxu0 %v5142
        %5418 = vmatprep.subr.bf16.mxu0 %v5145
        %5419 = vmatpush1.bf16.msra.mxu0 %v5144
        %5420 = vmatprep.subr.bf16.mxu0 %v5147
        %5421 = vmatpush1.bf16.msra.mxu0 %v5146
        %5422 = vmatprep.subr.bf16.mxu0 %v5149
        %5423 = vmatpush1.bf16.msra.mxu0 %v5148
        %5424 = vmatprep.subr.bf16.mxu0 %v5151
        %5425 = vmatpush1.bf16.msra.mxu0 %v5150
        %5426 = vmatprep.subr.bf16.mxu0 %v5153
        %5427 = vmatpush1.bf16.msra.mxu0 %v5152
        %5428 = vmatprep.subr.bf16.mxu0 %v5155
        %5429 = vmatpush1.bf16.msra.mxu0 %v5154
        %5430 = vmatprep.subr.bf16.mxu0 %v5157
        %5431 = vmatpush1.bf16.msra.mxu0 %v5156
        %5432 = vmatprep.subr.bf16.mxu0 %v5159
        %5433 = vmatpush1.bf16.msra.mxu0 %v5158
        %5434 = vmatprep.mubr.bf16.mxu0 %v4537
        %5435 = vmatmul.mubr.bf16.gmra.mrb[0].mxu0 %v4536
        %v5436 = vpop.f32.mrb[0].mxu0
        %v5437 = vadd.f32 %v5396, %v5436
        %v5438 = vpop.f32.mrb[0].mxu0
        %v5439 = vadd.f32 %v5398, %v5438
        %v5440 = vpop.f32.mrb[0].mxu0
        %v5441 = vpop.f32.mrb[0].mxu0
        %5442 = vdwg.mxu0
        %5443 = vmatprep.subr.bf16.mxu0 %v5161
        %5444 = vmatpush1.bf16.msra.mxu0 %v5160
        %5445 = vmatprep.subr.bf16.mxu0 %v5163
        %5446 = vmatpush1.bf16.msra.mxu0 %v5162
        %5447 = vmatprep.subr.bf16.mxu0 %v5165
        %5448 = vmatpush1.bf16.msra.mxu0 %v5164
        %5449 = vmatprep.subr.bf16.mxu0 %v5167
        %5450 = vmatpush1.bf16.msra.mxu0 %v5166
        %5451 = vmatprep.subr.bf16.mxu0 %v5169
        %5452 = vmatpush1.bf16.msra.mxu0 %v5168
        %5453 = vmatprep.subr.bf16.mxu0 %v5171
        %5454 = vmatpush1.bf16.msra.mxu0 %v5170
        %5455 = vmatprep.subr.bf16.mxu0 %v5173
        %5456 = vmatpush1.bf16.msra.mxu0 %v5172
        %5457 = vmatprep.subr.bf16.mxu0 %v5175
        %5458 = vmatpush1.bf16.msra.mxu0 %v5174
        %5459 = vmatprep.subr.bf16.mxu0 %v5177
        %5460 = vmatpush1.bf16.msra.mxu0 %v5176
        %5461 = vmatprep.subr.bf16.mxu0 %v5179
        %5462 = vmatpush1.bf16.msra.mxu0 %v5178
        %5463 = vmatprep.subr.bf16.mxu0 %v5181
        %5464 = vmatpush1.bf16.msra.mxu0 %v5180
        %5465 = vmatprep.subr.bf16.mxu0 %v5183
        %5466 = vmatpush1.bf16.msra.mxu0 %v5182
        %5467 = vmatprep.subr.bf16.mxu0 %v5185
        %5468 = vmatpush1.bf16.msra.mxu0 %v5184
        %5469 = vmatprep.subr.bf16.mxu0 %v5187
        %5470 = vmatpush1.bf16.msra.mxu0 %v5186
        %5471 = vmatprep.subr.bf16.mxu0 %v5189
        %5472 = vmatpush1.bf16.msra.mxu0 %v5188
        %5473 = vmatprep.subr.bf16.mxu0 %v5191
        %5474 = vmatpush1.bf16.msra.mxu0 %v5190
        %5475 = vmatprep.mubr.bf16.mxu0 %v4539
        %5476 = vmatmul.mubr.bf16.gmra.mrb[0].mxu0 %v4538
        %v5477 = vpop.f32.mrb[0].mxu0
        %v5478 = vadd.f32 %v5437, %v5477
        %v5479 = vpop.f32.mrb[0].mxu0
        %v5480 = vadd.f32 %v5439, %v5479
        %v5481 = vpop.f32.mrb[0].mxu0
        %v5482 = vpop.f32.mrb[0].mxu0
        %5483 = vdwg.mxu0
        %5484 = vst [vmem:[%s712] sm:$0xff] %v5478
        %5485 = vst [vmem:[%s712 + $0x8] sm:$0xff] %v5480
        %v5486 = vpack.c.bf16 %v5478, %v5478
        %v5487 = vpack.c.bf16 %v5480, %v5480
        %v5488 = vld [vmem:[%s574] sm:$0xff]
        %v5489 = vld [vmem:[%s574 + $0x8] sm:$0xff]
        %v5490 = vld [vmem:[%s574 + $0x10] sm:$0xff]
        %v5491 = vld [vmem:[%s574 + $0x18] sm:$0xff]
        %v5492 = vld [vmem:[%s574 + $0x20] sm:$0xff]
        %v5493 = vld [vmem:[%s574 + $0x28] sm:$0xff]
        %v5494 = vld [vmem:[%s574 + $0x30] sm:$0xff]
        %v5495 = vld [vmem:[%s574 + $0x38] sm:$0xff]
        %v5496 = vld [vmem:[%s574 + $0x40] sm:$0xff]
        %v5497 = vld [vmem:[%s574 + $0x48] sm:$0xff]
        %v5498 = vld [vmem:[%s574 + $0x50] sm:$0xff]
        %v5499 = vld [vmem:[%s574 + $0x58] sm:$0xff]
        %v5500 = vld [vmem:[%s574 + $0x60] sm:$0xff]
        %v5501 = vld [vmem:[%s574 + $0x68] sm:$0xff]
        %v5502 = vld [vmem:[%s574 + $0x70] sm:$0xff]
        %v5503 = vld [vmem:[%s574 + $0x78] sm:$0xff]
        %v5504 = vld [vmem:[%s574 + $0x80] sm:$0xff]
        %v5505 = vld [vmem:[%s574 + $0x88] sm:$0xff]
        %v5506 = vld [vmem:[%s574 + $0x90] sm:$0xff]
        %v5507 = vld [vmem:[%s574 + $0x98] sm:$0xff]
        %v5508 = vld [vmem:[%s574 + $0xa0] sm:$0xff]
        %v5509 = vld [vmem:[%s574 + $0xa8] sm:$0xff]
        %v5510 = vld [vmem:[%s574 + $0xb0] sm:$0xff]
        %v5511 = vld [vmem:[%s574 + $0xb8] sm:$0xff]
        %v5512 = vld [vmem:[%s574 + $0xc0] sm:$0xff]
        %v5513 = vld [vmem:[%s574 + $0xc8] sm:$0xff]
        %v5514 = vld [vmem:[%s574 + $0xd0] sm:$0xff]
        %v5515 = vld [vmem:[%s574 + $0xd8] sm:$0xff]
        %v5516 = vld [vmem:[%s574 + $0xe0] sm:$0xff]
        %v5517 = vld [vmem:[%s574 + $0xe8] sm:$0xff]
        %v5518 = vld [vmem:[%s574 + $0xf0] sm:$0xff]
        %v5519 = vld [vmem:[%s574 + $0xf8] sm:$0xff]
        %v5520 = vld [vmem:[%s574 + $0x100] sm:$0xff]
        %v5521 = vld [vmem:[%s574 + $0x108] sm:$0xff]
        %v5522 = vld [vmem:[%s574 + $0x110] sm:$0xff]
        %v5523 = vld [vmem:[%s574 + $0x118] sm:$0xff]
        %v5524 = vld [vmem:[%s574 + $0x120] sm:$0xff]
        %v5525 = vld [vmem:[%s574 + $0x128] sm:$0xff]
        %v5526 = vld [vmem:[%s574 + $0x130] sm:$0xff]
        %v5527 = vld [vmem:[%s574 + $0x138] sm:$0xff]
        %v5528 = vld [vmem:[%s574 + $0x140] sm:$0xff]
        %v5529 = vld [vmem:[%s574 + $0x148] sm:$0xff]
        %v5530 = vld [vmem:[%s574 + $0x150] sm:$0xff]
        %v5531 = vld [vmem:[%s574 + $0x158] sm:$0xff]
        %v5532 = vld [vmem:[%s574 + $0x160] sm:$0xff]
        %v5533 = vld [vmem:[%s574 + $0x168] sm:$0xff]
        %v5534 = vld [vmem:[%s574 + $0x170] sm:$0xff]
        %v5535 = vld [vmem:[%s574 + $0x178] sm:$0xff]
        %v5536 = vld [vmem:[%s574 + $0x180] sm:$0xff]
        %v5537 = vld [vmem:[%s574 + $0x188] sm:$0xff]
        %v5538 = vld [vmem:[%s574 + $0x190] sm:$0xff]
        %v5539 = vld [vmem:[%s574 + $0x198] sm:$0xff]
        %v5540 = vld [vmem:[%s574 + $0x1a0] sm:$0xff]
        %v5541 = vld [vmem:[%s574 + $0x1a8] sm:$0xff]
        %v5542 = vld [vmem:[%s574 + $0x1b0] sm:$0xff]
        %v5543 = vld [vmem:[%s574 + $0x1b8] sm:$0xff]
        %v5544 = vld [vmem:[%s574 + $0x1c0] sm:$0xff]
        %v5545 = vld [vmem:[%s574 + $0x1c8] sm:$0xff]
        %v5546 = vld [vmem:[%s574 + $0x1d0] sm:$0xff]
        %v5547 = vld [vmem:[%s574 + $0x1d8] sm:$0xff]
        %v5548 = vld [vmem:[%s574 + $0x1e0] sm:$0xff]
        %v5549 = vld [vmem:[%s574 + $0x1e8] sm:$0xff]
        %v5550 = vld [vmem:[%s574 + $0x1f0] sm:$0xff]
        %v5551 = vld [vmem:[%s574 + $0x1f8] sm:$0xff]
        %v5552 = vld [vmem:[%s574 + $0x200] sm:$0xff]
        %v5553 = vld [vmem:[%s574 + $0x208] sm:$0xff]
        %v5554 = vld [vmem:[%s574 + $0x210] sm:$0xff]
        %v5555 = vld [vmem:[%s574 + $0x218] sm:$0xff]
        %v5556 = vld [vmem:[%s574 + $0x220] sm:$0xff]
        %v5557 = vld [vmem:[%s574 + $0x228] sm:$0xff]
        %v5558 = vld [vmem:[%s574 + $0x230] sm:$0xff]
        %v5559 = vld [vmem:[%s574 + $0x238] sm:$0xff]
        %v5560 = vld [vmem:[%s574 + $0x240] sm:$0xff]
        %v5561 = vld [vmem:[%s574 + $0x248] sm:$0xff]
        %v5562 = vld [vmem:[%s574 + $0x250] sm:$0xff]
        %v5563 = vld [vmem:[%s574 + $0x258] sm:$0xff]
        %v5564 = vld [vmem:[%s574 + $0x260] sm:$0xff]
        %v5565 = vld [vmem:[%s574 + $0x268] sm:$0xff]
        %v5566 = vld [vmem:[%s574 + $0x270] sm:$0xff]
        %v5567 = vld [vmem:[%s574 + $0x278] sm:$0xff]
        %v5568 = vld [vmem:[%s574 + $0x280] sm:$0xff]
        %v5569 = vld [vmem:[%s574 + $0x288] sm:$0xff]
        %v5570 = vld [vmem:[%s574 + $0x290] sm:$0xff]
        %v5571 = vld [vmem:[%s574 + $0x298] sm:$0xff]
        %v5572 = vld [vmem:[%s574 + $0x2a0] sm:$0xff]
        %v5573 = vld [vmem:[%s574 + $0x2a8] sm:$0xff]
        %v5574 = vld [vmem:[%s574 + $0x2b0] sm:$0xff]
        %v5575 = vld [vmem:[%s574 + $0x2b8] sm:$0xff]
        %v5576 = vld [vmem:[%s574 + $0x2c0] sm:$0xff]
        %v5577 = vld [vmem:[%s574 + $0x2c8] sm:$0xff]
        %v5578 = vld [vmem:[%s574 + $0x2d0] sm:$0xff]
        %v5579 = vld [vmem:[%s574 + $0x2d8] sm:$0xff]
        %v5580 = vld [vmem:[%s574 + $0x2e0] sm:$0xff]
        %v5581 = vld [vmem:[%s574 + $0x2e8] sm:$0xff]
        %v5582 = vld [vmem:[%s574 + $0x2f0] sm:$0xff]
        %v5583 = vld [vmem:[%s574 + $0x2f8] sm:$0xff]
        %v5584 = vld [vmem:[%s574 + $0x300] sm:$0xff]
        %v5585 = vld [vmem:[%s574 + $0x308] sm:$0xff]
        %v5586 = vld [vmem:[%s574 + $0x310] sm:$0xff]
        %v5587 = vld [vmem:[%s574 + $0x318] sm:$0xff]
        %v5588 = vld [vmem:[%s574 + $0x320] sm:$0xff]
        %v5589 = vld [vmem:[%s574 + $0x328] sm:$0xff]
        %v5590 = vld [vmem:[%s574 + $0x330] sm:$0xff]
        %v5591 = vld [vmem:[%s574 + $0x338] sm:$0xff]
        %v5592 = vld [vmem:[%s574 + $0x340] sm:$0xff]
        %v5593 = vld [vmem:[%s574 + $0x348] sm:$0xff]
        %v5594 = vld [vmem:[%s574 + $0x350] sm:$0xff]
        %v5595 = vld [vmem:[%s574 + $0x358] sm:$0xff]
        %v5596 = vld [vmem:[%s574 + $0x360] sm:$0xff]
        %v5597 = vld [vmem:[%s574 + $0x368] sm:$0xff]
        %v5598 = vld [vmem:[%s574 + $0x370] sm:$0xff]
        %v5599 = vld [vmem:[%s574 + $0x378] sm:$0xff]
        %v5600 = vld [vmem:[%s574 + $0x380] sm:$0xff]
        %v5601 = vld [vmem:[%s574 + $0x388] sm:$0xff]
        %v5602 = vld [vmem:[%s574 + $0x390] sm:$0xff]
        %v5603 = vld [vmem:[%s574 + $0x398] sm:$0xff]
        %v5604 = vld [vmem:[%s574 + $0x3a0] sm:$0xff]
        %v5605 = vld [vmem:[%s574 + $0x3a8] sm:$0xff]
        %v5606 = vld [vmem:[%s574 + $0x3b0] sm:$0xff]
        %v5607 = vld [vmem:[%s574 + $0x3b8] sm:$0xff]
        %v5608 = vld [vmem:[%s574 + $0x3c0] sm:$0xff]
        %v5609 = vld [vmem:[%s574 + $0x3c8] sm:$0xff]
        %v5610 = vld [vmem:[%s574 + $0x3d0] sm:$0xff]
        %v5611 = vld [vmem:[%s574 + $0x3d8] sm:$0xff]
        %v5612 = vld [vmem:[%s574 + $0x3e0] sm:$0xff]
        %v5613 = vld [vmem:[%s574 + $0x3e8] sm:$0xff]
        %v5614 = vld [vmem:[%s574 + $0x3f0] sm:$0xff]
        %v5615 = vld [vmem:[%s574 + $0x3f8] sm:$0xff]
        %v5616 = vld [vmem:[%s583] sm:$0xff]
        %v5618 = vlaneseq
        %v5619 = vshrl.u32 %v5618, 7
        %v5620 = vsub.s32 0, %v5619
        %v5621 = vrot.slane %v5616, %v5620
        %v5622 = vlaneseq
        %v5623 = vshrl.u32 %v5622, 7
        %v5624 = vsub.s32 1, %v5623
        %v5625 = vrot.slane %v5616, %v5624
        %v5626 = vlaneseq
        %v5627 = vshrl.u32 %v5626, 7
        %v5628 = vsub.s32 2, %v5627
        %v5629 = vrot.slane %v5616, %v5628
        %v5630 = vlaneseq
        %v5631 = vshrl.u32 %v5630, 7
        %v5632 = vsub.s32 3, %v5631
        %v5633 = vrot.slane %v5616, %v5632
        %v5634 = vlaneseq
        %v5635 = vshrl.u32 %v5634, 7
        %v5636 = vsub.s32 4, %v5635
        %v5637 = vrot.slane %v5616, %v5636
        %v5638 = vlaneseq
        %v5639 = vshrl.u32 %v5638, 7
        %v5640 = vsub.s32 5, %v5639
        %v5641 = vrot.slane %v5616, %v5640
        %v5642 = vlaneseq
        %v5643 = vshrl.u32 %v5642, 7
        %v5644 = vsub.s32 6, %v5643
        %v5645 = vrot.slane %v5616, %v5644
        %v5646 = vlaneseq
        %v5647 = vshrl.u32 %v5646, 7
        %v5648 = vsub.s32 7, %v5647
        %v5649 = vrot.slane %v5616, %v5648
        %v5786 = vunpack.c.l.b16 %v5488
        %v5787 = vunpack.c.h.b16 %v5488
        %v5788 = vunpack.c.l.b16 %v5489
        %v5789 = vunpack.c.h.b16 %v5489
        %v5790 = vunpack.c.l.b16 %v5490
        %v5791 = vunpack.c.h.b16 %v5490
        %v5792 = vunpack.c.l.b16 %v5491
        %v5793 = vunpack.c.h.b16 %v5491
        %v5794 = vunpack.c.l.b16 %v5492
        %v5795 = vunpack.c.h.b16 %v5492
        %v5796 = vunpack.c.l.b16 %v5493
        %v5797 = vunpack.c.h.b16 %v5493
        %v5798 = vunpack.c.l.b16 %v5494
        %v5799 = vunpack.c.h.b16 %v5494
        %v5800 = vunpack.c.l.b16 %v5495
        %v5801 = vunpack.c.h.b16 %v5495
        %v5802 = vunpack.c.l.b16 %v5496
        %v5803 = vunpack.c.h.b16 %v5496
        %v5804 = vunpack.c.l.b16 %v5497
        %v5805 = vunpack.c.h.b16 %v5497
        %v5806 = vunpack.c.l.b16 %v5498
        %v5807 = vunpack.c.h.b16 %v5498
        %v5808 = vunpack.c.l.b16 %v5499
        %v5809 = vunpack.c.h.b16 %v5499
        %v5810 = vunpack.c.l.b16 %v5500
        %v5811 = vunpack.c.h.b16 %v5500
        %v5812 = vunpack.c.l.b16 %v5501
        %v5813 = vunpack.c.h.b16 %v5501
        %v5814 = vunpack.c.l.b16 %v5502
        %v5815 = vunpack.c.h.b16 %v5502
        %v5816 = vunpack.c.l.b16 %v5503
        %v5817 = vunpack.c.h.b16 %v5503
        %v5818 = vunpack.c.l.b16 %v5504
        %v5819 = vunpack.c.h.b16 %v5504
        %v5820 = vunpack.c.l.b16 %v5505
        %v5821 = vunpack.c.h.b16 %v5505
        %v5822 = vunpack.c.l.b16 %v5506
        %v5823 = vunpack.c.h.b16 %v5506
        %v5824 = vunpack.c.l.b16 %v5507
        %v5825 = vunpack.c.h.b16 %v5507
        %v5826 = vunpack.c.l.b16 %v5508
        %v5827 = vunpack.c.h.b16 %v5508
        %v5828 = vunpack.c.l.b16 %v5509
        %v5829 = vunpack.c.h.b16 %v5509
        %v5830 = vunpack.c.l.b16 %v5510
        %v5831 = vunpack.c.h.b16 %v5510
        %v5832 = vunpack.c.l.b16 %v5511
        %v5833 = vunpack.c.h.b16 %v5511
        %v5834 = vunpack.c.l.b16 %v5512
        %v5835 = vunpack.c.h.b16 %v5512
        %v5836 = vunpack.c.l.b16 %v5513
        %v5837 = vunpack.c.h.b16 %v5513
        %v5838 = vunpack.c.l.b16 %v5514
        %v5839 = vunpack.c.h.b16 %v5514
        %v5840 = vunpack.c.l.b16 %v5515
        %v5841 = vunpack.c.h.b16 %v5515
        %v5842 = vunpack.c.l.b16 %v5516
        %v5843 = vunpack.c.h.b16 %v5516
        %v5844 = vunpack.c.l.b16 %v5517
        %v5845 = vunpack.c.h.b16 %v5517
        %v5846 = vunpack.c.l.b16 %v5518
        %v5847 = vunpack.c.h.b16 %v5518
        %v5848 = vunpack.c.l.b16 %v5519
        %v5849 = vunpack.c.h.b16 %v5519
        %v5850 = vunpack.c.l.b16 %v5520
        %v5851 = vunpack.c.h.b16 %v5520
        %v5852 = vunpack.c.l.b16 %v5521
        %v5853 = vunpack.c.h.b16 %v5521
        %v5854 = vunpack.c.l.b16 %v5522
        %v5855 = vunpack.c.h.b16 %v5522
        %v5856 = vunpack.c.l.b16 %v5523
        %v5857 = vunpack.c.h.b16 %v5523
        %v5858 = vunpack.c.l.b16 %v5524
        %v5859 = vunpack.c.h.b16 %v5524
        %v5860 = vunpack.c.l.b16 %v5525
        %v5861 = vunpack.c.h.b16 %v5525
        %v5862 = vunpack.c.l.b16 %v5526
        %v5863 = vunpack.c.h.b16 %v5526
        %v5864 = vunpack.c.l.b16 %v5527
        %v5865 = vunpack.c.h.b16 %v5527
        %v5866 = vunpack.c.l.b16 %v5528
        %v5867 = vunpack.c.h.b16 %v5528
        %v5868 = vunpack.c.l.b16 %v5529
        %v5869 = vunpack.c.h.b16 %v5529
        %v5870 = vunpack.c.l.b16 %v5530
        %v5871 = vunpack.c.h.b16 %v5530
        %v5872 = vunpack.c.l.b16 %v5531
        %v5873 = vunpack.c.h.b16 %v5531
        %v5874 = vunpack.c.l.b16 %v5532
        %v5875 = vunpack.c.h.b16 %v5532
        %v5876 = vunpack.c.l.b16 %v5533
        %v5877 = vunpack.c.h.b16 %v5533
        %v5878 = vunpack.c.l.b16 %v5534
        %v5879 = vunpack.c.h.b16 %v5534
        %v5880 = vunpack.c.l.b16 %v5535
        %v5881 = vunpack.c.h.b16 %v5535
        %v5882 = vunpack.c.l.b16 %v5536
        %v5883 = vunpack.c.h.b16 %v5536
        %v5884 = vunpack.c.l.b16 %v5537
        %v5885 = vunpack.c.h.b16 %v5537
        %v5886 = vunpack.c.l.b16 %v5538
        %v5887 = vunpack.c.h.b16 %v5538
        %v5888 = vunpack.c.l.b16 %v5539
        %v5889 = vunpack.c.h.b16 %v5539
        %v5890 = vunpack.c.l.b16 %v5540
        %v5891 = vunpack.c.h.b16 %v5540
        %v5892 = vunpack.c.l.b16 %v5541
        %v5893 = vunpack.c.h.b16 %v5541
        %v5894 = vunpack.c.l.b16 %v5542
        %v5895 = vunpack.c.h.b16 %v5542
        %v5896 = vunpack.c.l.b16 %v5543
        %v5897 = vunpack.c.h.b16 %v5543
        %v5898 = vunpack.c.l.b16 %v5544
        %v5899 = vunpack.c.h.b16 %v5544
        %v5900 = vunpack.c.l.b16 %v5545
        %v5901 = vunpack.c.h.b16 %v5545
        %v5902 = vunpack.c.l.b16 %v5546
        %v5903 = vunpack.c.h.b16 %v5546
        %v5904 = vunpack.c.l.b16 %v5547
        %v5905 = vunpack.c.h.b16 %v5547
        %v5906 = vunpack.c.l.b16 %v5548
        %v5907 = vunpack.c.h.b16 %v5548
        %v5908 = vunpack.c.l.b16 %v5549
        %v5909 = vunpack.c.h.b16 %v5549
        %v5910 = vunpack.c.l.b16 %v5550
        %v5911 = vunpack.c.h.b16 %v5550
        %v5912 = vunpack.c.l.b16 %v5551
        %v5913 = vunpack.c.h.b16 %v5551
        %v5914 = vunpack.c.l.b16 %v5552
        %v5915 = vunpack.c.h.b16 %v5552
        %v5916 = vunpack.c.l.b16 %v5553
        %v5917 = vunpack.c.h.b16 %v5553
        %v5918 = vunpack.c.l.b16 %v5554
        %v5919 = vunpack.c.h.b16 %v5554
        %v5920 = vunpack.c.l.b16 %v5555
        %v5921 = vunpack.c.h.b16 %v5555
        %v5922 = vunpack.c.l.b16 %v5556
        %v5923 = vunpack.c.h.b16 %v5556
        %v5924 = vunpack.c.l.b16 %v5557
        %v5925 = vunpack.c.h.b16 %v5557
        %v5926 = vunpack.c.l.b16 %v5558
        %v5927 = vunpack.c.h.b16 %v5558
        %v5928 = vunpack.c.l.b16 %v5559
        %v5929 = vunpack.c.h.b16 %v5559
        %v5930 = vunpack.c.l.b16 %v5560
        %v5931 = vunpack.c.h.b16 %v5560
        %v5932 = vunpack.c.l.b16 %v5561
        %v5933 = vunpack.c.h.b16 %v5561
        %v5934 = vunpack.c.l.b16 %v5562
        %v5935 = vunpack.c.h.b16 %v5562
        %v5936 = vunpack.c.l.b16 %v5563
        %v5937 = vunpack.c.h.b16 %v5563
        %v5938 = vunpack.c.l.b16 %v5564
        %v5939 = vunpack.c.h.b16 %v5564
        %v5940 = vunpack.c.l.b16 %v5565
        %v5941 = vunpack.c.h.b16 %v5565
        %v5942 = vunpack.c.l.b16 %v5566
        %v5943 = vunpack.c.h.b16 %v5566
        %v5944 = vunpack.c.l.b16 %v5567
        %v5945 = vunpack.c.h.b16 %v5567
        %v5946 = vunpack.c.l.b16 %v5568
        %v5947 = vunpack.c.h.b16 %v5568
        %v5948 = vunpack.c.l.b16 %v5569
        %v5949 = vunpack.c.h.b16 %v5569
        %v5950 = vunpack.c.l.b16 %v5570
        %v5951 = vunpack.c.h.b16 %v5570
        %v5952 = vunpack.c.l.b16 %v5571
        %v5953 = vunpack.c.h.b16 %v5571
        %v5954 = vunpack.c.l.b16 %v5572
        %v5955 = vunpack.c.h.b16 %v5572
        %v5956 = vunpack.c.l.b16 %v5573
        %v5957 = vunpack.c.h.b16 %v5573
        %v5958 = vunpack.c.l.b16 %v5574
        %v5959 = vunpack.c.h.b16 %v5574
        %v5960 = vunpack.c.l.b16 %v5575
        %v5961 = vunpack.c.h.b16 %v5575
        %v5962 = vunpack.c.l.b16 %v5576
        %v5963 = vunpack.c.h.b16 %v5576
        %v5964 = vunpack.c.l.b16 %v5577
        %v5965 = vunpack.c.h.b16 %v5577
        %v5966 = vunpack.c.l.b16 %v5578
        %v5967 = vunpack.c.h.b16 %v5578
        %v5968 = vunpack.c.l.b16 %v5579
        %v5969 = vunpack.c.h.b16 %v5579
        %v5970 = vunpack.c.l.b16 %v5580
        %v5971 = vunpack.c.h.b16 %v5580
        %v5972 = vunpack.c.l.b16 %v5581
        %v5973 = vunpack.c.h.b16 %v5581
        %v5974 = vunpack.c.l.b16 %v5582
        %v5975 = vunpack.c.h.b16 %v5582
        %v5976 = vunpack.c.l.b16 %v5583
        %v5977 = vunpack.c.h.b16 %v5583
        %v5978 = vunpack.c.l.b16 %v5584
        %v5979 = vunpack.c.h.b16 %v5584
        %v5980 = vunpack.c.l.b16 %v5585
        %v5981 = vunpack.c.h.b16 %v5585
        %v5982 = vunpack.c.l.b16 %v5586
        %v5983 = vunpack.c.h.b16 %v5586
        %v5984 = vunpack.c.l.b16 %v5587
        %v5985 = vunpack.c.h.b16 %v5587
        %v5986 = vunpack.c.l.b16 %v5588
        %v5987 = vunpack.c.h.b16 %v5588
        %v5988 = vunpack.c.l.b16 %v5589
        %v5989 = vunpack.c.h.b16 %v5589
        %v5990 = vunpack.c.l.b16 %v5590
        %v5991 = vunpack.c.h.b16 %v5590
        %v5992 = vunpack.c.l.b16 %v5591
        %v5993 = vunpack.c.h.b16 %v5591
        %v5994 = vunpack.c.l.b16 %v5592
        %v5995 = vunpack.c.h.b16 %v5592
        %v5996 = vunpack.c.l.b16 %v5593
        %v5997 = vunpack.c.h.b16 %v5593
        %v5998 = vunpack.c.l.b16 %v5594
        %v5999 = vunpack.c.h.b16 %v5594
        %v6000 = vunpack.c.l.b16 %v5595
        %v6001 = vunpack.c.h.b16 %v5595
        %v6002 = vunpack.c.l.b16 %v5596
        %v6003 = vunpack.c.h.b16 %v5596
        %v6004 = vunpack.c.l.b16 %v5597
        %v6005 = vunpack.c.h.b16 %v5597
        %v6006 = vunpack.c.l.b16 %v5598
        %v6007 = vunpack.c.h.b16 %v5598
        %v6008 = vunpack.c.l.b16 %v5599
        %v6009 = vunpack.c.h.b16 %v5599
        %v6010 = vunpack.c.l.b16 %v5600
        %v6011 = vunpack.c.h.b16 %v5600
        %v6012 = vunpack.c.l.b16 %v5601
        %v6013 = vunpack.c.h.b16 %v5601
        %v6014 = vunpack.c.l.b16 %v5602
        %v6015 = vunpack.c.h.b16 %v5602
        %v6016 = vunpack.c.l.b16 %v5603
        %v6017 = vunpack.c.h.b16 %v5603
        %v6018 = vunpack.c.l.b16 %v5604
        %v6019 = vunpack.c.h.b16 %v5604
        %v6020 = vunpack.c.l.b16 %v5605
        %v6021 = vunpack.c.h.b16 %v5605
        %v6022 = vunpack.c.l.b16 %v5606
        %v6023 = vunpack.c.h.b16 %v5606
        %v6024 = vunpack.c.l.b16 %v5607
        %v6025 = vunpack.c.h.b16 %v5607
        %v6026 = vunpack.c.l.b16 %v5608
        %v6027 = vunpack.c.h.b16 %v5608
        %v6028 = vunpack.c.l.b16 %v5609
        %v6029 = vunpack.c.h.b16 %v5609
        %v6030 = vunpack.c.l.b16 %v5610
        %v6031 = vunpack.c.h.b16 %v5610
        %v6032 = vunpack.c.l.b16 %v5611
        %v6033 = vunpack.c.h.b16 %v5611
        %v6034 = vunpack.c.l.b16 %v5612
        %v6035 = vunpack.c.h.b16 %v5612
        %v6036 = vunpack.c.l.b16 %v5613
        %v6037 = vunpack.c.h.b16 %v5613
        %v6038 = vunpack.c.l.b16 %v5614
        %v6039 = vunpack.c.h.b16 %v5614
        %v6040 = vunpack.c.l.b16 %v5615
        %v6041 = vunpack.c.h.b16 %v5615
        %v6042 = vpack.c.b16 %v5794, %v5786
        %v6043 = vpack.c.b16 %v5795, %v5787
        %v6044 = vpack.c.b16 %v5796, %v5788
        %v6045 = vpack.c.b16 %v5797, %v5789
        %v6046 = vpack.c.b16 %v5798, %v5790
        %v6047 = vpack.c.b16 %v5799, %v5791
        %v6048 = vpack.c.b16 %v5800, %v5792
        %v6049 = vpack.c.b16 %v5801, %v5793
        %v6050 = vpack.c.b16 %v5810, %v5802
        %v6051 = vpack.c.b16 %v5811, %v5803
        %v6052 = vpack.c.b16 %v5812, %v5804
        %v6053 = vpack.c.b16 %v5813, %v5805
        %v6054 = vpack.c.b16 %v5814, %v5806
        %v6055 = vpack.c.b16 %v5815, %v5807
        %v6056 = vpack.c.b16 %v5816, %v5808
        %v6057 = vpack.c.b16 %v5817, %v5809
        %v6058 = vpack.c.b16 %v5826, %v5818
        %v6059 = vpack.c.b16 %v5827, %v5819
        %v6060 = vpack.c.b16 %v5828, %v5820
        %v6061 = vpack.c.b16 %v5829, %v5821
        %v6062 = vpack.c.b16 %v5830, %v5822
        %v6063 = vpack.c.b16 %v5831, %v5823
        %v6064 = vpack.c.b16 %v5832, %v5824
        %v6065 = vpack.c.b16 %v5833, %v5825
        %v6066 = vpack.c.b16 %v5842, %v5834
        %v6067 = vpack.c.b16 %v5843, %v5835
        %v6068 = vpack.c.b16 %v5844, %v5836
        %v6069 = vpack.c.b16 %v5845, %v5837
        %v6070 = vpack.c.b16 %v5846, %v5838
        %v6071 = vpack.c.b16 %v5847, %v5839
        %v6072 = vpack.c.b16 %v5848, %v5840
        %v6073 = vpack.c.b16 %v5849, %v5841
        %v6074 = vpack.c.b16 %v5858, %v5850
        %v6075 = vpack.c.b16 %v5859, %v5851
        %v6076 = vpack.c.b16 %v5860, %v5852
        %v6077 = vpack.c.b16 %v5861, %v5853
        %v6078 = vpack.c.b16 %v5862, %v5854
        %v6079 = vpack.c.b16 %v5863, %v5855
        %v6080 = vpack.c.b16 %v5864, %v5856
        %v6081 = vpack.c.b16 %v5865, %v5857
        %v6082 = vpack.c.b16 %v5874, %v5866
        %v6083 = vpack.c.b16 %v5875, %v5867
        %v6084 = vpack.c.b16 %v5876, %v5868
        %v6085 = vpack.c.b16 %v5877, %v5869
        %v6086 = vpack.c.b16 %v5878, %v5870
        %v6087 = vpack.c.b16 %v5879, %v5871
        %v6088 = vpack.c.b16 %v5880, %v5872
        %v6089 = vpack.c.b16 %v5881, %v5873
        %v6090 = vpack.c.b16 %v5890, %v5882
        %v6091 = vpack.c.b16 %v5891, %v5883
        %v6092 = vpack.c.b16 %v5892, %v5884
        %v6093 = vpack.c.b16 %v5893, %v5885
        %v6094 = vpack.c.b16 %v5894, %v5886
        %v6095 = vpack.c.b16 %v5895, %v5887
        %v6096 = vpack.c.b16 %v5896, %v5888
        %v6097 = vpack.c.b16 %v5897, %v5889
        %v6098 = vpack.c.b16 %v5906, %v5898
        %v6099 = vpack.c.b16 %v5907, %v5899
        %v6100 = vpack.c.b16 %v5908, %v5900
        %v6101 = vpack.c.b16 %v5909, %v5901
        %v6102 = vpack.c.b16 %v5910, %v5902
        %v6103 = vpack.c.b16 %v5911, %v5903
        %v6104 = vpack.c.b16 %v5912, %v5904
        %v6105 = vpack.c.b16 %v5913, %v5905
        %v6106 = vpack.c.b16 %v5922, %v5914
        %v6107 = vpack.c.b16 %v5923, %v5915
        %v6108 = vpack.c.b16 %v5924, %v5916
        %v6109 = vpack.c.b16 %v5925, %v5917
        %v6110 = vpack.c.b16 %v5926, %v5918
        %v6111 = vpack.c.b16 %v5927, %v5919
        %v6112 = vpack.c.b16 %v5928, %v5920
        %v6113 = vpack.c.b16 %v5929, %v5921
        %v6114 = vpack.c.b16 %v5938, %v5930
        %v6115 = vpack.c.b16 %v5939, %v5931
        %v6116 = vpack.c.b16 %v5940, %v5932
        %v6117 = vpack.c.b16 %v5941, %v5933
        %v6118 = vpack.c.b16 %v5942, %v5934
        %v6119 = vpack.c.b16 %v5943, %v5935
        %v6120 = vpack.c.b16 %v5944, %v5936
        %v6121 = vpack.c.b16 %v5945, %v5937
        %v6122 = vpack.c.b16 %v5954, %v5946
        %v6123 = vpack.c.b16 %v5955, %v5947
        %v6124 = vpack.c.b16 %v5956, %v5948
        %v6125 = vpack.c.b16 %v5957, %v5949
        %v6126 = vpack.c.b16 %v5958, %v5950
        %v6127 = vpack.c.b16 %v5959, %v5951
        %v6128 = vpack.c.b16 %v5960, %v5952
        %v6129 = vpack.c.b16 %v5961, %v5953
        %v6130 = vpack.c.b16 %v5970, %v5962
        %v6131 = vpack.c.b16 %v5971, %v5963
        %v6132 = vpack.c.b16 %v5972, %v5964
        %v6133 = vpack.c.b16 %v5973, %v5965
        %v6134 = vpack.c.b16 %v5974, %v5966
        %v6135 = vpack.c.b16 %v5975, %v5967
        %v6136 = vpack.c.b16 %v5976, %v5968
        %v6137 = vpack.c.b16 %v5977, %v5969
        %v6138 = vpack.c.b16 %v5986, %v5978
        %v6139 = vpack.c.b16 %v5987, %v5979
        %v6140 = vpack.c.b16 %v5988, %v5980
        %v6141 = vpack.c.b16 %v5989, %v5981
        %v6142 = vpack.c.b16 %v5990, %v5982
        %v6143 = vpack.c.b16 %v5991, %v5983
        %v6144 = vpack.c.b16 %v5992, %v5984
        %v6145 = vpack.c.b16 %v5993, %v5985
        %v6146 = vpack.c.b16 %v6002, %v5994
        %v6147 = vpack.c.b16 %v6003, %v5995
        %v6148 = vpack.c.b16 %v6004, %v5996
        %v6149 = vpack.c.b16 %v6005, %v5997
        %v6150 = vpack.c.b16 %v6006, %v5998
        %v6151 = vpack.c.b16 %v6007, %v5999
        %v6152 = vpack.c.b16 %v6008, %v6000
        %v6153 = vpack.c.b16 %v6009, %v6001
        %v6154 = vpack.c.b16 %v6018, %v6010
        %v6155 = vpack.c.b16 %v6019, %v6011
        %v6156 = vpack.c.b16 %v6020, %v6012
        %v6157 = vpack.c.b16 %v6021, %v6013
        %v6158 = vpack.c.b16 %v6022, %v6014
        %v6159 = vpack.c.b16 %v6023, %v6015
        %v6160 = vpack.c.b16 %v6024, %v6016
        %v6161 = vpack.c.b16 %v6025, %v6017
        %v6162 = vpack.c.b16 %v6034, %v6026
        %v6163 = vpack.c.b16 %v6035, %v6027
        %v6164 = vpack.c.b16 %v6036, %v6028
        %v6165 = vpack.c.b16 %v6037, %v6029
        %v6166 = vpack.c.b16 %v6038, %v6030
        %v6167 = vpack.c.b16 %v6039, %v6031
        %v6168 = vpack.c.b16 %v6040, %v6032
        %v6169 = vpack.c.b16 %v6041, %v6033
        %6298 = vmatprep.subr.bf16.mxu0 %v6043
        %6299 = vmatpush1.bf16.msra.mxu0 %v6042
        %6300 = vmatprep.subr.bf16.mxu0 %v6051
        %6301 = vmatpush1.bf16.msra.mxu0 %v6050
        %6302 = vmatprep.subr.bf16.mxu0 %v6059
        %6303 = vmatpush1.bf16.msra.mxu0 %v6058
        %6304 = vmatprep.subr.bf16.mxu0 %v6067
        %6305 = vmatpush1.bf16.msra.mxu0 %v6066
        %6306 = vmatprep.subr.bf16.mxu0 %v6075
        %6307 = vmatpush1.bf16.msra.mxu0 %v6074
        %6308 = vmatprep.subr.bf16.mxu0 %v6083
        %6309 = vmatpush1.bf16.msra.mxu0 %v6082
        %6310 = vmatprep.subr.bf16.mxu0 %v6091
        %6311 = vmatpush1.bf16.msra.mxu0 %v6090
        %6312 = vmatprep.subr.bf16.mxu0 %v6099
        %6313 = vmatpush1.bf16.msra.mxu0 %v6098
        %6314 = vmatprep.subr.bf16.mxu0 %v6107
        %6315 = vmatpush1.bf16.msra.mxu0 %v6106
        %6316 = vmatprep.subr.bf16.mxu0 %v6115
        %6317 = vmatpush1.bf16.msra.mxu0 %v6114
        %6318 = vmatprep.subr.bf16.mxu0 %v6123
        %6319 = vmatpush1.bf16.msra.mxu0 %v6122
        %6320 = vmatprep.subr.bf16.mxu0 %v6131
        %6321 = vmatpush1.bf16.msra.mxu0 %v6130
        %6322 = vmatprep.subr.bf16.mxu0 %v6139
        %6323 = vmatpush1.bf16.msra.mxu0 %v6138
        %6324 = vmatprep.subr.bf16.mxu0 %v6147
        %6325 = vmatpush1.bf16.msra.mxu0 %v6146
        %6326 = vmatprep.subr.bf16.mxu0 %v6155
        %6327 = vmatpush1.bf16.msra.mxu0 %v6154
        %6328 = vmatprep.subr.bf16.mxu0 %v6163
        %6329 = vmatpush1.bf16.msra.mxu0 %v6162
        %6330 = vmatprep.mubr.bf16.mxu0 %v5487
        %6331 = vmatmul.mubr.bf16.gmra.mrb[0].mxu0 %v5486
        %v6332 = vpop.f32.mrb[0].mxu0
        %v6333 = vadd.f32 %v5621, %v6332
        %v6334 = vpop.f32.mrb[0].mxu0
        %v6335 = vadd.f32 %v5625, %v6334
        %v6336 = vpop.f32.mrb[0].mxu0
        %v6337 = vpop.f32.mrb[0].mxu0
        %6338 = vdwg.mxu0
        %6339 = vmatprep.subr.bf16.mxu0 %v6045
        %6340 = vmatpush1.bf16.msra.mxu0 %v6044
        %6341 = vmatprep.subr.bf16.mxu0 %v6053
        %6342 = vmatpush1.bf16.msra.mxu0 %v6052
        %6343 = vmatprep.subr.bf16.mxu0 %v6061
        %6344 = vmatpush1.bf16.msra.mxu0 %v6060
        %6345 = vmatprep.subr.bf16.mxu0 %v6069
        %6346 = vmatpush1.bf16.msra.mxu0 %v6068
        %6347 = vmatprep.subr.bf16.mxu0 %v6077
        %6348 = vmatpush1.bf16.msra.mxu0 %v6076
        %6349 = vmatprep.subr.bf16.mxu0 %v6085
        %6350 = vmatpush1.bf16.msra.mxu0 %v6084
        %6351 = vmatprep.subr.bf16.mxu0 %v6093
        %6352 = vmatpush1.bf16.msra.mxu0 %v6092
        %6353 = vmatprep.subr.bf16.mxu0 %v6101
        %6354 = vmatpush1.bf16.msra.mxu0 %v6100
        %6355 = vmatprep.subr.bf16.mxu0 %v6109
        %6356 = vmatpush1.bf16.msra.mxu0 %v6108
        %6357 = vmatprep.subr.bf16.mxu0 %v6117
        %6358 = vmatpush1.bf16.msra.mxu0 %v6116
        %6359 = vmatprep.subr.bf16.mxu0 %v6125
        %6360 = vmatpush1.bf16.msra.mxu0 %v6124
        %6361 = vmatprep.subr.bf16.mxu0 %v6133
        %6362 = vmatpush1.bf16.msra.mxu0 %v6132
        %6363 = vmatprep.subr.bf16.mxu0 %v6141
        %6364 = vmatpush1.bf16.msra.mxu0 %v6140
        %6365 = vmatprep.subr.bf16.mxu0 %v6149
        %6366 = vmatpush1.bf16.msra.mxu0 %v6148
        %6367 = vmatprep.subr.bf16.mxu0 %v6157
        %6368 = vmatpush1.bf16.msra.mxu0 %v6156
        %6369 = vmatprep.subr.bf16.mxu0 %v6165
        %6370 = vmatpush1.bf16.msra.mxu0 %v6164
        %6371 = vmatprep.mubr.bf16.mxu0 %v5487
        %6372 = vmatmul.mubr.bf16.gmra.mrb[0].mxu0 %v5486
        %v6373 = vpop.f32.mrb[0].mxu0
        %v6374 = vadd.f32 %v5629, %v6373
        %v6375 = vpop.f32.mrb[0].mxu0
        %v6376 = vadd.f32 %v5633, %v6375
        %v6377 = vpop.f32.mrb[0].mxu0
        %v6378 = vpop.f32.mrb[0].mxu0
        %6379 = vdwg.mxu0
        %6380 = vmatprep.subr.bf16.mxu0 %v6047
        %6381 = vmatpush1.bf16.msra.mxu0 %v6046
        %6382 = vmatprep.subr.bf16.mxu0 %v6055
        %6383 = vmatpush1.bf16.msra.mxu0 %v6054
        %6384 = vmatprep.subr.bf16.mxu0 %v6063
        %6385 = vmatpush1.bf16.msra.mxu0 %v6062
        %6386 = vmatprep.subr.bf16.mxu0 %v6071
        %6387 = vmatpush1.bf16.msra.mxu0 %v6070
        %6388 = vmatprep.subr.bf16.mxu0 %v6079
        %6389 = vmatpush1.bf16.msra.mxu0 %v6078
        %6390 = vmatprep.subr.bf16.mxu0 %v6087
        %6391 = vmatpush1.bf16.msra.mxu0 %v6086
        %6392 = vmatprep.subr.bf16.mxu0 %v6095
        %6393 = vmatpush1.bf16.msra.mxu0 %v6094
        %6394 = vmatprep.subr.bf16.mxu0 %v6103
        %6395 = vmatpush1.bf16.msra.mxu0 %v6102
        %6396 = vmatprep.subr.bf16.mxu0 %v6111
        %6397 = vmatpush1.bf16.msra.mxu0 %v6110
        %6398 = vmatprep.subr.bf16.mxu0 %v6119
        %6399 = vmatpush1.bf16.msra.mxu0 %v6118
        %6400 = vmatprep.subr.bf16.mxu0 %v6127
        %6401 = vmatpush1.bf16.msra.mxu0 %v6126
        %6402 = vmatprep.subr.bf16.mxu0 %v6135
        %6403 = vmatpush1.bf16.msra.mxu0 %v6134
        %6404 = vmatprep.subr.bf16.mxu0 %v6143
        %6405 = vmatpush1.bf16.msra.mxu0 %v6142
        %6406 = vmatprep.subr.bf16.mxu0 %v6151
        %6407 = vmatpush1.bf16.msra.mxu0 %v6150
        %6408 = vmatprep.subr.bf16.mxu0 %v6159
        %6409 = vmatpush1.bf16.msra.mxu0 %v6158
        %6410 = vmatprep.subr.bf16.mxu0 %v6167
        %6411 = vmatpush1.bf16.msra.mxu0 %v6166
        %6412 = vmatprep.mubr.bf16.mxu0 %v5487
        %6413 = vmatmul.mubr.bf16.gmra.mrb[0].mxu0 %v5486
        %v6414 = vpop.f32.mrb[0].mxu0
        %v6415 = vadd.f32 %v5637, %v6414
        %v6416 = vpop.f32.mrb[0].mxu0
        %v6417 = vadd.f32 %v5641, %v6416
        %v6418 = vpop.f32.mrb[0].mxu0
        %v6419 = vpop.f32.mrb[0].mxu0
        %6420 = vdwg.mxu0
        %6421 = vmatprep.subr.bf16.mxu0 %v6049
        %6422 = vmatpush1.bf16.msra.mxu0 %v6048
        %6423 = vmatprep.subr.bf16.mxu0 %v6057
        %6424 = vmatpush1.bf16.msra.mxu0 %v6056
        %6425 = vmatprep.subr.bf16.mxu0 %v6065
        %6426 = vmatpush1.bf16.msra.mxu0 %v6064
        %6427 = vmatprep.subr.bf16.mxu0 %v6073
        %6428 = vmatpush1.bf16.msra.mxu0 %v6072
        %6429 = vmatprep.subr.bf16.mxu0 %v6081
        %6430 = vmatpush1.bf16.msra.mxu0 %v6080
        %6431 = vmatprep.subr.bf16.mxu0 %v6089
        %6432 = vmatpush1.bf16.msra.mxu0 %v6088
        %6433 = vmatprep.subr.bf16.mxu0 %v6097
        %6434 = vmatpush1.bf16.msra.mxu0 %v6096
        %6435 = vmatprep.subr.bf16.mxu0 %v6105
        %6436 = vmatpush1.bf16.msra.mxu0 %v6104
        %6437 = vmatprep.subr.bf16.mxu0 %v6113
        %6438 = vmatpush1.bf16.msra.mxu0 %v6112
        %6439 = vmatprep.subr.bf16.mxu0 %v6121
        %6440 = vmatpush1.bf16.msra.mxu0 %v6120
        %6441 = vmatprep.subr.bf16.mxu0 %v6129
        %6442 = vmatpush1.bf16.msra.mxu0 %v6128
        %6443 = vmatprep.subr.bf16.mxu0 %v6137
        %6444 = vmatpush1.bf16.msra.mxu0 %v6136
        %6445 = vmatprep.subr.bf16.mxu0 %v6145
        %6446 = vmatpush1.bf16.msra.mxu0 %v6144
        %6447 = vmatprep.subr.bf16.mxu0 %v6153
        %6448 = vmatpush1.bf16.msra.mxu0 %v6152
        %6449 = vmatprep.subr.bf16.mxu0 %v6161
        %6450 = vmatpush1.bf16.msra.mxu0 %v6160
        %6451 = vmatprep.subr.bf16.mxu0 %v6169
        %6452 = vmatpush1.bf16.msra.mxu0 %v6168
        %6453 = vmatprep.mubr.bf16.mxu0 %v5487
        %6454 = vmatmul.mubr.bf16.gmra.mrb[0].mxu0 %v5486
        %v6455 = vpop.f32.mrb[0].mxu0
        %v6456 = vadd.f32 %v5645, %v6455
        %v6457 = vpop.f32.mrb[0].mxu0
        %v6458 = vadd.f32 %v5649, %v6457
        %v6459 = vpop.f32.mrb[0].mxu0
        %v6460 = vpop.f32.mrb[0].mxu0
        %6461 = vdwg.mxu0
        %v6462 = vmax.f32 %v6333, 0.0
        %v6463 = vmax.f32 %v6335, 0.0
        %v6464 = vmax.f32 %v6374, 0.0
        %v6465 = vmax.f32 %v6376, 0.0
        %v6466 = vmax.f32 %v6415, 0.0
        %v6467 = vmax.f32 %v6417, 0.0
        %v6468 = vmax.f32 %v6456, 0.0
        %v6469 = vmax.f32 %v6458, 0.0
        %v6470 = vpack.c.bf16 %v6462, %v6462
        %v6471 = vpack.c.bf16 %v6463, %v6463
        %v6472 = vpack.c.bf16 %v6464, %v6464
        %v6473 = vpack.c.bf16 %v6465, %v6465
        %v6474 = vpack.c.bf16 %v6466, %v6466
        %v6475 = vpack.c.bf16 %v6467, %v6467
        %v6476 = vpack.c.bf16 %v6468, %v6468
        %v6477 = vpack.c.bf16 %v6469, %v6469
        %v6478 = vld [vmem:[%s592] sm:$0xff]
        %v6479 = vld [vmem:[%s592 + $0x8] sm:$0xff]
        %v6480 = vld [vmem:[%s592 + $0x10] sm:$0xff]
        %v6481 = vld [vmem:[%s592 + $0x18] sm:$0xff]
        %v6482 = vld [vmem:[%s592 + $0x20] sm:$0xff]
        %v6483 = vld [vmem:[%s592 + $0x28] sm:$0xff]
        %v6484 = vld [vmem:[%s592 + $0x30] sm:$0xff]
        %v6485 = vld [vmem:[%s592 + $0x38] sm:$0xff]
        %v6486 = vld [vmem:[%s592 + $0x40] sm:$0xff]
        %v6487 = vld [vmem:[%s592 + $0x48] sm:$0xff]
        %v6488 = vld [vmem:[%s592 + $0x50] sm:$0xff]
        %v6489 = vld [vmem:[%s592 + $0x58] sm:$0xff]
        %v6490 = vld [vmem:[%s592 + $0x60] sm:$0xff]
        %v6491 = vld [vmem:[%s592 + $0x68] sm:$0xff]
        %v6492 = vld [vmem:[%s592 + $0x70] sm:$0xff]
        %v6493 = vld [vmem:[%s592 + $0x78] sm:$0xff]
        %v6494 = vld [vmem:[%s592 + $0x80] sm:$0xff]
        %v6495 = vld [vmem:[%s592 + $0x88] sm:$0xff]
        %v6496 = vld [vmem:[%s592 + $0x90] sm:$0xff]
        %v6497 = vld [vmem:[%s592 + $0x98] sm:$0xff]
        %v6498 = vld [vmem:[%s592 + $0xa0] sm:$0xff]
        %v6499 = vld [vmem:[%s592 + $0xa8] sm:$0xff]
        %v6500 = vld [vmem:[%s592 + $0xb0] sm:$0xff]
        %v6501 = vld [vmem:[%s592 + $0xb8] sm:$0xff]
        %v6502 = vld [vmem:[%s592 + $0xc0] sm:$0xff]
        %v6503 = vld [vmem:[%s592 + $0xc8] sm:$0xff]
        %v6504 = vld [vmem:[%s592 + $0xd0] sm:$0xff]
        %v6505 = vld [vmem:[%s592 + $0xd8] sm:$0xff]
        %v6506 = vld [vmem:[%s592 + $0xe0] sm:$0xff]
        %v6507 = vld [vmem:[%s592 + $0xe8] sm:$0xff]
        %v6508 = vld [vmem:[%s592 + $0xf0] sm:$0xff]
        %v6509 = vld [vmem:[%s592 + $0xf8] sm:$0xff]
        %v6510 = vld [vmem:[%s592 + $0x100] sm:$0xff]
        %v6511 = vld [vmem:[%s592 + $0x108] sm:$0xff]
        %v6512 = vld [vmem:[%s592 + $0x110] sm:$0xff]
        %v6513 = vld [vmem:[%s592 + $0x118] sm:$0xff]
        %v6514 = vld [vmem:[%s592 + $0x120] sm:$0xff]
        %v6515 = vld [vmem:[%s592 + $0x128] sm:$0xff]
        %v6516 = vld [vmem:[%s592 + $0x130] sm:$0xff]
        %v6517 = vld [vmem:[%s592 + $0x138] sm:$0xff]
        %v6518 = vld [vmem:[%s592 + $0x140] sm:$0xff]
        %v6519 = vld [vmem:[%s592 + $0x148] sm:$0xff]
        %v6520 = vld [vmem:[%s592 + $0x150] sm:$0xff]
        %v6521 = vld [vmem:[%s592 + $0x158] sm:$0xff]
        %v6522 = vld [vmem:[%s592 + $0x160] sm:$0xff]
        %v6523 = vld [vmem:[%s592 + $0x168] sm:$0xff]
        %v6524 = vld [vmem:[%s592 + $0x170] sm:$0xff]
        %v6525 = vld [vmem:[%s592 + $0x178] sm:$0xff]
        %v6526 = vld [vmem:[%s592 + $0x180] sm:$0xff]
        %v6527 = vld [vmem:[%s592 + $0x188] sm:$0xff]
        %v6528 = vld [vmem:[%s592 + $0x190] sm:$0xff]
        %v6529 = vld [vmem:[%s592 + $0x198] sm:$0xff]
        %v6530 = vld [vmem:[%s592 + $0x1a0] sm:$0xff]
        %v6531 = vld [vmem:[%s592 + $0x1a8] sm:$0xff]
        %v6532 = vld [vmem:[%s592 + $0x1b0] sm:$0xff]
        %v6533 = vld [vmem:[%s592 + $0x1b8] sm:$0xff]
        %v6534 = vld [vmem:[%s592 + $0x1c0] sm:$0xff]
        %v6535 = vld [vmem:[%s592 + $0x1c8] sm:$0xff]
        %v6536 = vld [vmem:[%s592 + $0x1d0] sm:$0xff]
        %v6537 = vld [vmem:[%s592 + $0x1d8] sm:$0xff]
        %v6538 = vld [vmem:[%s592 + $0x1e0] sm:$0xff]
        %v6539 = vld [vmem:[%s592 + $0x1e8] sm:$0xff]
        %v6540 = vld [vmem:[%s592 + $0x1f0] sm:$0xff]
        %v6541 = vld [vmem:[%s592 + $0x1f8] sm:$0xff]
        %v6542 = vld [vmem:[%s592 + $0x200] sm:$0xff]
        %v6543 = vld [vmem:[%s592 + $0x208] sm:$0xff]
        %v6544 = vld [vmem:[%s592 + $0x210] sm:$0xff]
        %v6545 = vld [vmem:[%s592 + $0x218] sm:$0xff]
        %v6546 = vld [vmem:[%s592 + $0x220] sm:$0xff]
        %v6547 = vld [vmem:[%s592 + $0x228] sm:$0xff]
        %v6548 = vld [vmem:[%s592 + $0x230] sm:$0xff]
        %v6549 = vld [vmem:[%s592 + $0x238] sm:$0xff]
        %v6550 = vld [vmem:[%s592 + $0x240] sm:$0xff]
        %v6551 = vld [vmem:[%s592 + $0x248] sm:$0xff]
        %v6552 = vld [vmem:[%s592 + $0x250] sm:$0xff]
        %v6553 = vld [vmem:[%s592 + $0x258] sm:$0xff]
        %v6554 = vld [vmem:[%s592 + $0x260] sm:$0xff]
        %v6555 = vld [vmem:[%s592 + $0x268] sm:$0xff]
        %v6556 = vld [vmem:[%s592 + $0x270] sm:$0xff]
        %v6557 = vld [vmem:[%s592 + $0x278] sm:$0xff]
        %v6558 = vld [vmem:[%s592 + $0x280] sm:$0xff]
        %v6559 = vld [vmem:[%s592 + $0x288] sm:$0xff]
        %v6560 = vld [vmem:[%s592 + $0x290] sm:$0xff]
        %v6561 = vld [vmem:[%s592 + $0x298] sm:$0xff]
        %v6562 = vld [vmem:[%s592 + $0x2a0] sm:$0xff]
        %v6563 = vld [vmem:[%s592 + $0x2a8] sm:$0xff]
        %v6564 = vld [vmem:[%s592 + $0x2b0] sm:$0xff]
        %v6565 = vld [vmem:[%s592 + $0x2b8] sm:$0xff]
        %v6566 = vld [vmem:[%s592 + $0x2c0] sm:$0xff]
        %v6567 = vld [vmem:[%s592 + $0x2c8] sm:$0xff]
        %v6568 = vld [vmem:[%s592 + $0x2d0] sm:$0xff]
        %v6569 = vld [vmem:[%s592 + $0x2d8] sm:$0xff]
        %v6570 = vld [vmem:[%s592 + $0x2e0] sm:$0xff]
        %v6571 = vld [vmem:[%s592 + $0x2e8] sm:$0xff]
        %v6572 = vld [vmem:[%s592 + $0x2f0] sm:$0xff]
        %v6573 = vld [vmem:[%s592 + $0x2f8] sm:$0xff]
        %v6574 = vld [vmem:[%s592 + $0x300] sm:$0xff]
        %v6575 = vld [vmem:[%s592 + $0x308] sm:$0xff]
        %v6576 = vld [vmem:[%s592 + $0x310] sm:$0xff]
        %v6577 = vld [vmem:[%s592 + $0x318] sm:$0xff]
        %v6578 = vld [vmem:[%s592 + $0x320] sm:$0xff]
        %v6579 = vld [vmem:[%s592 + $0x328] sm:$0xff]
        %v6580 = vld [vmem:[%s592 + $0x330] sm:$0xff]
        %v6581 = vld [vmem:[%s592 + $0x338] sm:$0xff]
        %v6582 = vld [vmem:[%s592 + $0x340] sm:$0xff]
        %v6583 = vld [vmem:[%s592 + $0x348] sm:$0xff]
        %v6584 = vld [vmem:[%s592 + $0x350] sm:$0xff]
        %v6585 = vld [vmem:[%s592 + $0x358] sm:$0xff]
        %v6586 = vld [vmem:[%s592 + $0x360] sm:$0xff]
        %v6587 = vld [vmem:[%s592 + $0x368] sm:$0xff]
        %v6588 = vld [vmem:[%s592 + $0x370] sm:$0xff]
        %v6589 = vld [vmem:[%s592 + $0x378] sm:$0xff]
        %v6590 = vld [vmem:[%s592 + $0x380] sm:$0xff]
        %v6591 = vld [vmem:[%s592 + $0x388] sm:$0xff]
        %v6592 = vld [vmem:[%s592 + $0x390] sm:$0xff]
        %v6593 = vld [vmem:[%s592 + $0x398] sm:$0xff]
        %v6594 = vld [vmem:[%s592 + $0x3a0] sm:$0xff]
        %v6595 = vld [vmem:[%s592 + $0x3a8] sm:$0xff]
        %v6596 = vld [vmem:[%s592 + $0x3b0] sm:$0xff]
        %v6597 = vld [vmem:[%s592 + $0x3b8] sm:$0xff]
        %v6598 = vld [vmem:[%s592 + $0x3c0] sm:$0xff]
        %v6599 = vld [vmem:[%s592 + $0x3c8] sm:$0xff]
        %v6600 = vld [vmem:[%s592 + $0x3d0] sm:$0xff]
        %v6601 = vld [vmem:[%s592 + $0x3d8] sm:$0xff]
        %v6602 = vld [vmem:[%s592 + $0x3e0] sm:$0xff]
        %v6603 = vld [vmem:[%s592 + $0x3e8] sm:$0xff]
        %v6604 = vld [vmem:[%s592 + $0x3f0] sm:$0xff]
        %v6605 = vld [vmem:[%s592 + $0x3f8] sm:$0xff]
        %v6606 = vld [vmem:[%s592 + $0x400] sm:$0xff]
        %v6607 = vld [vmem:[%s592 + $0x408] sm:$0xff]
        %v6608 = vld [vmem:[%s592 + $0x410] sm:$0xff]
        %v6609 = vld [vmem:[%s592 + $0x418] sm:$0xff]
        %v6610 = vld [vmem:[%s592 + $0x420] sm:$0xff]
        %v6611 = vld [vmem:[%s592 + $0x428] sm:$0xff]
        %v6612 = vld [vmem:[%s592 + $0x430] sm:$0xff]
        %v6613 = vld [vmem:[%s592 + $0x438] sm:$0xff]
        %v6614 = vld [vmem:[%s592 + $0x440] sm:$0xff]
        %v6615 = vld [vmem:[%s592 + $0x448] sm:$0xff]
        %v6616 = vld [vmem:[%s592 + $0x450] sm:$0xff]
        %v6617 = vld [vmem:[%s592 + $0x458] sm:$0xff]
        %v6618 = vld [vmem:[%s592 + $0x460] sm:$0xff]
        %v6619 = vld [vmem:[%s592 + $0x468] sm:$0xff]
        %v6620 = vld [vmem:[%s592 + $0x470] sm:$0xff]
        %v6621 = vld [vmem:[%s592 + $0x478] sm:$0xff]
        %v6622 = vld [vmem:[%s592 + $0x480] sm:$0xff]
        %v6623 = vld [vmem:[%s592 + $0x488] sm:$0xff]
        %v6624 = vld [vmem:[%s592 + $0x490] sm:$0xff]
        %v6625 = vld [vmem:[%s592 + $0x498] sm:$0xff]
        %v6626 = vld [vmem:[%s592 + $0x4a0] sm:$0xff]
        %v6627 = vld [vmem:[%s592 + $0x4a8] sm:$0xff]
        %v6628 = vld [vmem:[%s592 + $0x4b0] sm:$0xff]
        %v6629 = vld [vmem:[%s592 + $0x4b8] sm:$0xff]
        %v6630 = vld [vmem:[%s592 + $0x4c0] sm:$0xff]
        %v6631 = vld [vmem:[%s592 + $0x4c8] sm:$0xff]
        %v6632 = vld [vmem:[%s592 + $0x4d0] sm:$0xff]
        %v6633 = vld [vmem:[%s592 + $0x4d8] sm:$0xff]
        %v6634 = vld [vmem:[%s592 + $0x4e0] sm:$0xff]
        %v6635 = vld [vmem:[%s592 + $0x4e8] sm:$0xff]
        %v6636 = vld [vmem:[%s592 + $0x4f0] sm:$0xff]
        %v6637 = vld [vmem:[%s592 + $0x4f8] sm:$0xff]
        %v6638 = vld [vmem:[%s592 + $0x500] sm:$0xff]
        %v6639 = vld [vmem:[%s592 + $0x508] sm:$0xff]
        %v6640 = vld [vmem:[%s592 + $0x510] sm:$0xff]
        %v6641 = vld [vmem:[%s592 + $0x518] sm:$0xff]
        %v6642 = vld [vmem:[%s592 + $0x520] sm:$0xff]
        %v6643 = vld [vmem:[%s592 + $0x528] sm:$0xff]
        %v6644 = vld [vmem:[%s592 + $0x530] sm:$0xff]
        %v6645 = vld [vmem:[%s592 + $0x538] sm:$0xff]
        %v6646 = vld [vmem:[%s592 + $0x540] sm:$0xff]
        %v6647 = vld [vmem:[%s592 + $0x548] sm:$0xff]
        %v6648 = vld [vmem:[%s592 + $0x550] sm:$0xff]
        %v6649 = vld [vmem:[%s592 + $0x558] sm:$0xff]
        %v6650 = vld [vmem:[%s592 + $0x560] sm:$0xff]
        %v6651 = vld [vmem:[%s592 + $0x568] sm:$0xff]
        %v6652 = vld [vmem:[%s592 + $0x570] sm:$0xff]
        %v6653 = vld [vmem:[%s592 + $0x578] sm:$0xff]
        %v6654 = vld [vmem:[%s592 + $0x580] sm:$0xff]
        %v6655 = vld [vmem:[%s592 + $0x588] sm:$0xff]
        %v6656 = vld [vmem:[%s592 + $0x590] sm:$0xff]
        %v6657 = vld [vmem:[%s592 + $0x598] sm:$0xff]
        %v6658 = vld [vmem:[%s592 + $0x5a0] sm:$0xff]
        %v6659 = vld [vmem:[%s592 + $0x5a8] sm:$0xff]
        %v6660 = vld [vmem:[%s592 + $0x5b0] sm:$0xff]
        %v6661 = vld [vmem:[%s592 + $0x5b8] sm:$0xff]
        %v6662 = vld [vmem:[%s592 + $0x5c0] sm:$0xff]
        %v6663 = vld [vmem:[%s592 + $0x5c8] sm:$0xff]
        %v6664 = vld [vmem:[%s592 + $0x5d0] sm:$0xff]
        %v6665 = vld [vmem:[%s592 + $0x5d8] sm:$0xff]
        %v6666 = vld [vmem:[%s592 + $0x5e0] sm:$0xff]
        %v6667 = vld [vmem:[%s592 + $0x5e8] sm:$0xff]
        %v6668 = vld [vmem:[%s592 + $0x5f0] sm:$0xff]
        %v6669 = vld [vmem:[%s592 + $0x5f8] sm:$0xff]
        %v6670 = vld [vmem:[%s592 + $0x600] sm:$0xff]
        %v6671 = vld [vmem:[%s592 + $0x608] sm:$0xff]
        %v6672 = vld [vmem:[%s592 + $0x610] sm:$0xff]
        %v6673 = vld [vmem:[%s592 + $0x618] sm:$0xff]
        %v6674 = vld [vmem:[%s592 + $0x620] sm:$0xff]
        %v6675 = vld [vmem:[%s592 + $0x628] sm:$0xff]
        %v6676 = vld [vmem:[%s592 + $0x630] sm:$0xff]
        %v6677 = vld [vmem:[%s592 + $0x638] sm:$0xff]
        %v6678 = vld [vmem:[%s592 + $0x640] sm:$0xff]
        %v6679 = vld [vmem:[%s592 + $0x648] sm:$0xff]
        %v6680 = vld [vmem:[%s592 + $0x650] sm:$0xff]
        %v6681 = vld [vmem:[%s592 + $0x658] sm:$0xff]
        %v6682 = vld [vmem:[%s592 + $0x660] sm:$0xff]
        %v6683 = vld [vmem:[%s592 + $0x668] sm:$0xff]
        %v6684 = vld [vmem:[%s592 + $0x670] sm:$0xff]
        %v6685 = vld [vmem:[%s592 + $0x678] sm:$0xff]
        %v6686 = vld [vmem:[%s592 + $0x680] sm:$0xff]
        %v6687 = vld [vmem:[%s592 + $0x688] sm:$0xff]
        %v6688 = vld [vmem:[%s592 + $0x690] sm:$0xff]
        %v6689 = vld [vmem:[%s592 + $0x698] sm:$0xff]
        %v6690 = vld [vmem:[%s592 + $0x6a0] sm:$0xff]
        %v6691 = vld [vmem:[%s592 + $0x6a8] sm:$0xff]
        %v6692 = vld [vmem:[%s592 + $0x6b0] sm:$0xff]
        %v6693 = vld [vmem:[%s592 + $0x6b8] sm:$0xff]
        %v6694 = vld [vmem:[%s592 + $0x6c0] sm:$0xff]
        %v6695 = vld [vmem:[%s592 + $0x6c8] sm:$0xff]
        %v6696 = vld [vmem:[%s592 + $0x6d0] sm:$0xff]
        %v6697 = vld [vmem:[%s592 + $0x6d8] sm:$0xff]
        %v6698 = vld [vmem:[%s592 + $0x6e0] sm:$0xff]
        %v6699 = vld [vmem:[%s592 + $0x6e8] sm:$0xff]
        %v6700 = vld [vmem:[%s592 + $0x6f0] sm:$0xff]
        %v6701 = vld [vmem:[%s592 + $0x6f8] sm:$0xff]
        %v6702 = vld [vmem:[%s592 + $0x700] sm:$0xff]
        %v6703 = vld [vmem:[%s592 + $0x708] sm:$0xff]
        %v6704 = vld [vmem:[%s592 + $0x710] sm:$0xff]
        %v6705 = vld [vmem:[%s592 + $0x718] sm:$0xff]
        %v6706 = vld [vmem:[%s592 + $0x720] sm:$0xff]
        %v6707 = vld [vmem:[%s592 + $0x728] sm:$0xff]
        %v6708 = vld [vmem:[%s592 + $0x730] sm:$0xff]
        %v6709 = vld [vmem:[%s592 + $0x738] sm:$0xff]
        %v6710 = vld [vmem:[%s592 + $0x740] sm:$0xff]
        %v6711 = vld [vmem:[%s592 + $0x748] sm:$0xff]
        %v6712 = vld [vmem:[%s592 + $0x750] sm:$0xff]
        %v6713 = vld [vmem:[%s592 + $0x758] sm:$0xff]
        %v6714 = vld [vmem:[%s592 + $0x760] sm:$0xff]
        %v6715 = vld [vmem:[%s592 + $0x768] sm:$0xff]
        %v6716 = vld [vmem:[%s592 + $0x770] sm:$0xff]
        %v6717 = vld [vmem:[%s592 + $0x778] sm:$0xff]
        %v6718 = vld [vmem:[%s592 + $0x780] sm:$0xff]
        %v6719 = vld [vmem:[%s592 + $0x788] sm:$0xff]
        %v6720 = vld [vmem:[%s592 + $0x790] sm:$0xff]
        %v6721 = vld [vmem:[%s592 + $0x798] sm:$0xff]
        %v6722 = vld [vmem:[%s592 + $0x7a0] sm:$0xff]
        %v6723 = vld [vmem:[%s592 + $0x7a8] sm:$0xff]
        %v6724 = vld [vmem:[%s592 + $0x7b0] sm:$0xff]
        %v6725 = vld [vmem:[%s592 + $0x7b8] sm:$0xff]
        %v6726 = vld [vmem:[%s592 + $0x7c0] sm:$0xff]
        %v6727 = vld [vmem:[%s592 + $0x7c8] sm:$0xff]
        %v6728 = vld [vmem:[%s592 + $0x7d0] sm:$0xff]
        %v6729 = vld [vmem:[%s592 + $0x7d8] sm:$0xff]
        %v6730 = vld [vmem:[%s592 + $0x7e0] sm:$0xff]
        %v6731 = vld [vmem:[%s592 + $0x7e8] sm:$0xff]
        %v6732 = vld [vmem:[%s592 + $0x7f0] sm:$0xff]
        %v6733 = vld [vmem:[%s592 + $0x7f8] sm:$0xff]
        %v6734 = vld [vmem:[%s592 + $0x800] sm:$0xff]
        %v6735 = vld [vmem:[%s592 + $0x808] sm:$0xff]
        %v6736 = vld [vmem:[%s592 + $0x810] sm:$0xff]
        %v6737 = vld [vmem:[%s592 + $0x818] sm:$0xff]
        %v6738 = vld [vmem:[%s592 + $0x820] sm:$0xff]
        %v6739 = vld [vmem:[%s592 + $0x828] sm:$0xff]
        %v6740 = vld [vmem:[%s592 + $0x830] sm:$0xff]
        %v6741 = vld [vmem:[%s592 + $0x838] sm:$0xff]
        %v6742 = vld [vmem:[%s592 + $0x840] sm:$0xff]
        %v6743 = vld [vmem:[%s592 + $0x848] sm:$0xff]
        %v6744 = vld [vmem:[%s592 + $0x850] sm:$0xff]
        %v6745 = vld [vmem:[%s592 + $0x858] sm:$0xff]
        %v6746 = vld [vmem:[%s592 + $0x860] sm:$0xff]
        %v6747 = vld [vmem:[%s592 + $0x868] sm:$0xff]
        %v6748 = vld [vmem:[%s592 + $0x870] sm:$0xff]
        %v6749 = vld [vmem:[%s592 + $0x878] sm:$0xff]
        %v6750 = vld [vmem:[%s592 + $0x880] sm:$0xff]
        %v6751 = vld [vmem:[%s592 + $0x888] sm:$0xff]
        %v6752 = vld [vmem:[%s592 + $0x890] sm:$0xff]
        %v6753 = vld [vmem:[%s592 + $0x898] sm:$0xff]
        %v6754 = vld [vmem:[%s592 + $0x8a0] sm:$0xff]
        %v6755 = vld [vmem:[%s592 + $0x8a8] sm:$0xff]
        %v6756 = vld [vmem:[%s592 + $0x8b0] sm:$0xff]
        %v6757 = vld [vmem:[%s592 + $0x8b8] sm:$0xff]
        %v6758 = vld [vmem:[%s592 + $0x8c0] sm:$0xff]
        %v6759 = vld [vmem:[%s592 + $0x8c8] sm:$0xff]
        %v6760 = vld [vmem:[%s592 + $0x8d0] sm:$0xff]
        %v6761 = vld [vmem:[%s592 + $0x8d8] sm:$0xff]
        %v6762 = vld [vmem:[%s592 + $0x8e0] sm:$0xff]
        %v6763 = vld [vmem:[%s592 + $0x8e8] sm:$0xff]
        %v6764 = vld [vmem:[%s592 + $0x8f0] sm:$0xff]
        %v6765 = vld [vmem:[%s592 + $0x8f8] sm:$0xff]
        %v6766 = vld [vmem:[%s592 + $0x900] sm:$0xff]
        %v6767 = vld [vmem:[%s592 + $0x908] sm:$0xff]
        %v6768 = vld [vmem:[%s592 + $0x910] sm:$0xff]
        %v6769 = vld [vmem:[%s592 + $0x918] sm:$0xff]
        %v6770 = vld [vmem:[%s592 + $0x920] sm:$0xff]
        %v6771 = vld [vmem:[%s592 + $0x928] sm:$0xff]
        %v6772 = vld [vmem:[%s592 + $0x930] sm:$0xff]
        %v6773 = vld [vmem:[%s592 + $0x938] sm:$0xff]
        %v6774 = vld [vmem:[%s592 + $0x940] sm:$0xff]
        %v6775 = vld [vmem:[%s592 + $0x948] sm:$0xff]
        %v6776 = vld [vmem:[%s592 + $0x950] sm:$0xff]
        %v6777 = vld [vmem:[%s592 + $0x958] sm:$0xff]
        %v6778 = vld [vmem:[%s592 + $0x960] sm:$0xff]
        %v6779 = vld [vmem:[%s592 + $0x968] sm:$0xff]
        %v6780 = vld [vmem:[%s592 + $0x970] sm:$0xff]
        %v6781 = vld [vmem:[%s592 + $0x978] sm:$0xff]
        %v6782 = vld [vmem:[%s592 + $0x980] sm:$0xff]
        %v6783 = vld [vmem:[%s592 + $0x988] sm:$0xff]
        %v6784 = vld [vmem:[%s592 + $0x990] sm:$0xff]
        %v6785 = vld [vmem:[%s592 + $0x998] sm:$0xff]
        %v6786 = vld [vmem:[%s592 + $0x9a0] sm:$0xff]
        %v6787 = vld [vmem:[%s592 + $0x9a8] sm:$0xff]
        %v6788 = vld [vmem:[%s592 + $0x9b0] sm:$0xff]
        %v6789 = vld [vmem:[%s592 + $0x9b8] sm:$0xff]
        %v6790 = vld [vmem:[%s592 + $0x9c0] sm:$0xff]
        %v6791 = vld [vmem:[%s592 + $0x9c8] sm:$0xff]
        %v6792 = vld [vmem:[%s592 + $0x9d0] sm:$0xff]
        %v6793 = vld [vmem:[%s592 + $0x9d8] sm:$0xff]
        %v6794 = vld [vmem:[%s592 + $0x9e0] sm:$0xff]
        %v6795 = vld [vmem:[%s592 + $0x9e8] sm:$0xff]
        %v6796 = vld [vmem:[%s592 + $0x9f0] sm:$0xff]
        %v6797 = vld [vmem:[%s592 + $0x9f8] sm:$0xff]
        %v6798 = vld [vmem:[%s592 + $0xa00] sm:$0xff]
        %v6799 = vld [vmem:[%s592 + $0xa08] sm:$0xff]
        %v6800 = vld [vmem:[%s592 + $0xa10] sm:$0xff]
        %v6801 = vld [vmem:[%s592 + $0xa18] sm:$0xff]
        %v6802 = vld [vmem:[%s592 + $0xa20] sm:$0xff]
        %v6803 = vld [vmem:[%s592 + $0xa28] sm:$0xff]
        %v6804 = vld [vmem:[%s592 + $0xa30] sm:$0xff]
        %v6805 = vld [vmem:[%s592 + $0xa38] sm:$0xff]
        %v6806 = vld [vmem:[%s592 + $0xa40] sm:$0xff]
        %v6807 = vld [vmem:[%s592 + $0xa48] sm:$0xff]
        %v6808 = vld [vmem:[%s592 + $0xa50] sm:$0xff]
        %v6809 = vld [vmem:[%s592 + $0xa58] sm:$0xff]
        %v6810 = vld [vmem:[%s592 + $0xa60] sm:$0xff]
        %v6811 = vld [vmem:[%s592 + $0xa68] sm:$0xff]
        %v6812 = vld [vmem:[%s592 + $0xa70] sm:$0xff]
        %v6813 = vld [vmem:[%s592 + $0xa78] sm:$0xff]
        %v6814 = vld [vmem:[%s592 + $0xa80] sm:$0xff]
        %v6815 = vld [vmem:[%s592 + $0xa88] sm:$0xff]
        %v6816 = vld [vmem:[%s592 + $0xa90] sm:$0xff]
        %v6817 = vld [vmem:[%s592 + $0xa98] sm:$0xff]
        %v6818 = vld [vmem:[%s592 + $0xaa0] sm:$0xff]
        %v6819 = vld [vmem:[%s592 + $0xaa8] sm:$0xff]
        %v6820 = vld [vmem:[%s592 + $0xab0] sm:$0xff]
        %v6821 = vld [vmem:[%s592 + $0xab8] sm:$0xff]
        %v6822 = vld [vmem:[%s592 + $0xac0] sm:$0xff]
        %v6823 = vld [vmem:[%s592 + $0xac8] sm:$0xff]
        %v6824 = vld [vmem:[%s592 + $0xad0] sm:$0xff]
        %v6825 = vld [vmem:[%s592 + $0xad8] sm:$0xff]
        %v6826 = vld [vmem:[%s592 + $0xae0] sm:$0xff]
        %v6827 = vld [vmem:[%s592 + $0xae8] sm:$0xff]
        %v6828 = vld [vmem:[%s592 + $0xaf0] sm:$0xff]
        %v6829 = vld [vmem:[%s592 + $0xaf8] sm:$0xff]
        %v6830 = vld [vmem:[%s592 + $0xb00] sm:$0xff]
        %v6831 = vld [vmem:[%s592 + $0xb08] sm:$0xff]
        %v6832 = vld [vmem:[%s592 + $0xb10] sm:$0xff]
        %v6833 = vld [vmem:[%s592 + $0xb18] sm:$0xff]
        %v6834 = vld [vmem:[%s592 + $0xb20] sm:$0xff]
        %v6835 = vld [vmem:[%s592 + $0xb28] sm:$0xff]
        %v6836 = vld [vmem:[%s592 + $0xb30] sm:$0xff]
        %v6837 = vld [vmem:[%s592 + $0xb38] sm:$0xff]
        %v6838 = vld [vmem:[%s592 + $0xb40] sm:$0xff]
        %v6839 = vld [vmem:[%s592 + $0xb48] sm:$0xff]
        %v6840 = vld [vmem:[%s592 + $0xb50] sm:$0xff]
        %v6841 = vld [vmem:[%s592 + $0xb58] sm:$0xff]
        %v6842 = vld [vmem:[%s592 + $0xb60] sm:$0xff]
        %v6843 = vld [vmem:[%s592 + $0xb68] sm:$0xff]
        %v6844 = vld [vmem:[%s592 + $0xb70] sm:$0xff]
        %v6845 = vld [vmem:[%s592 + $0xb78] sm:$0xff]
        %v6846 = vld [vmem:[%s592 + $0xb80] sm:$0xff]
        %v6847 = vld [vmem:[%s592 + $0xb88] sm:$0xff]
        %v6848 = vld [vmem:[%s592 + $0xb90] sm:$0xff]
        %v6849 = vld [vmem:[%s592 + $0xb98] sm:$0xff]
        %v6850 = vld [vmem:[%s592 + $0xba0] sm:$0xff]
        %v6851 = vld [vmem:[%s592 + $0xba8] sm:$0xff]
        %v6852 = vld [vmem:[%s592 + $0xbb0] sm:$0xff]
        %v6853 = vld [vmem:[%s592 + $0xbb8] sm:$0xff]
        %v6854 = vld [vmem:[%s592 + $0xbc0] sm:$0xff]
        %v6855 = vld [vmem:[%s592 + $0xbc8] sm:$0xff]
        %v6856 = vld [vmem:[%s592 + $0xbd0] sm:$0xff]
        %v6857 = vld [vmem:[%s592 + $0xbd8] sm:$0xff]
        %v6858 = vld [vmem:[%s592 + $0xbe0] sm:$0xff]
        %v6859 = vld [vmem:[%s592 + $0xbe8] sm:$0xff]
        %v6860 = vld [vmem:[%s592 + $0xbf0] sm:$0xff]
        %v6861 = vld [vmem:[%s592 + $0xbf8] sm:$0xff]
        %v6862 = vld [vmem:[%s592 + $0xc00] sm:$0xff]
        %v6863 = vld [vmem:[%s592 + $0xc08] sm:$0xff]
        %v6864 = vld [vmem:[%s592 + $0xc10] sm:$0xff]
        %v6865 = vld [vmem:[%s592 + $0xc18] sm:$0xff]
        %v6866 = vld [vmem:[%s592 + $0xc20] sm:$0xff]
        %v6867 = vld [vmem:[%s592 + $0xc28] sm:$0xff]
        %v6868 = vld [vmem:[%s592 + $0xc30] sm:$0xff]
        %v6869 = vld [vmem:[%s592 + $0xc38] sm:$0xff]
        %v6870 = vld [vmem:[%s592 + $0xc40] sm:$0xff]
        %v6871 = vld [vmem:[%s592 + $0xc48] sm:$0xff]
        %v6872 = vld [vmem:[%s592 + $0xc50] sm:$0xff]
        %v6873 = vld [vmem:[%s592 + $0xc58] sm:$0xff]
        %v6874 = vld [vmem:[%s592 + $0xc60] sm:$0xff]
        %v6875 = vld [vmem:[%s592 + $0xc68] sm:$0xff]
        %v6876 = vld [vmem:[%s592 + $0xc70] sm:$0xff]
        %v6877 = vld [vmem:[%s592 + $0xc78] sm:$0xff]
        %v6878 = vld [vmem:[%s592 + $0xc80] sm:$0xff]
        %v6879 = vld [vmem:[%s592 + $0xc88] sm:$0xff]
        %v6880 = vld [vmem:[%s592 + $0xc90] sm:$0xff]
        %v6881 = vld [vmem:[%s592 + $0xc98] sm:$0xff]
        %v6882 = vld [vmem:[%s592 + $0xca0] sm:$0xff]
        %v6883 = vld [vmem:[%s592 + $0xca8] sm:$0xff]
        %v6884 = vld [vmem:[%s592 + $0xcb0] sm:$0xff]
        %v6885 = vld [vmem:[%s592 + $0xcb8] sm:$0xff]
        %v6886 = vld [vmem:[%s592 + $0xcc0] sm:$0xff]
        %v6887 = vld [vmem:[%s592 + $0xcc8] sm:$0xff]
        %v6888 = vld [vmem:[%s592 + $0xcd0] sm:$0xff]
        %v6889 = vld [vmem:[%s592 + $0xcd8] sm:$0xff]
        %v6890 = vld [vmem:[%s592 + $0xce0] sm:$0xff]
        %v6891 = vld [vmem:[%s592 + $0xce8] sm:$0xff]
        %v6892 = vld [vmem:[%s592 + $0xcf0] sm:$0xff]
        %v6893 = vld [vmem:[%s592 + $0xcf8] sm:$0xff]
        %v6894 = vld [vmem:[%s592 + $0xd00] sm:$0xff]
        %v6895 = vld [vmem:[%s592 + $0xd08] sm:$0xff]
        %v6896 = vld [vmem:[%s592 + $0xd10] sm:$0xff]
        %v6897 = vld [vmem:[%s592 + $0xd18] sm:$0xff]
        %v6898 = vld [vmem:[%s592 + $0xd20] sm:$0xff]
        %v6899 = vld [vmem:[%s592 + $0xd28] sm:$0xff]
        %v6900 = vld [vmem:[%s592 + $0xd30] sm:$0xff]
        %v6901 = vld [vmem:[%s592 + $0xd38] sm:$0xff]
        %v6902 = vld [vmem:[%s592 + $0xd40] sm:$0xff]
        %v6903 = vld [vmem:[%s592 + $0xd48] sm:$0xff]
        %v6904 = vld [vmem:[%s592 + $0xd50] sm:$0xff]
        %v6905 = vld [vmem:[%s592 + $0xd58] sm:$0xff]
        %v6906 = vld [vmem:[%s592 + $0xd60] sm:$0xff]
        %v6907 = vld [vmem:[%s592 + $0xd68] sm:$0xff]
        %v6908 = vld [vmem:[%s592 + $0xd70] sm:$0xff]
        %v6909 = vld [vmem:[%s592 + $0xd78] sm:$0xff]
        %v6910 = vld [vmem:[%s592 + $0xd80] sm:$0xff]
        %v6911 = vld [vmem:[%s592 + $0xd88] sm:$0xff]
        %v6912 = vld [vmem:[%s592 + $0xd90] sm:$0xff]
        %v6913 = vld [vmem:[%s592 + $0xd98] sm:$0xff]
        %v6914 = vld [vmem:[%s592 + $0xda0] sm:$0xff]
        %v6915 = vld [vmem:[%s592 + $0xda8] sm:$0xff]
        %v6916 = vld [vmem:[%s592 + $0xdb0] sm:$0xff]
        %v6917 = vld [vmem:[%s592 + $0xdb8] sm:$0xff]
        %v6918 = vld [vmem:[%s592 + $0xdc0] sm:$0xff]
        %v6919 = vld [vmem:[%s592 + $0xdc8] sm:$0xff]
        %v6920 = vld [vmem:[%s592 + $0xdd0] sm:$0xff]
        %v6921 = vld [vmem:[%s592 + $0xdd8] sm:$0xff]
        %v6922 = vld [vmem:[%s592 + $0xde0] sm:$0xff]
        %v6923 = vld [vmem:[%s592 + $0xde8] sm:$0xff]
        %v6924 = vld [vmem:[%s592 + $0xdf0] sm:$0xff]
        %v6925 = vld [vmem:[%s592 + $0xdf8] sm:$0xff]
        %v6926 = vld [vmem:[%s592 + $0xe00] sm:$0xff]
        %v6927 = vld [vmem:[%s592 + $0xe08] sm:$0xff]
        %v6928 = vld [vmem:[%s592 + $0xe10] sm:$0xff]
        %v6929 = vld [vmem:[%s592 + $0xe18] sm:$0xff]
        %v6930 = vld [vmem:[%s592 + $0xe20] sm:$0xff]
        %v6931 = vld [vmem:[%s592 + $0xe28] sm:$0xff]
        %v6932 = vld [vmem:[%s592 + $0xe30] sm:$0xff]
        %v6933 = vld [vmem:[%s592 + $0xe38] sm:$0xff]
        %v6934 = vld [vmem:[%s592 + $0xe40] sm:$0xff]
        %v6935 = vld [vmem:[%s592 + $0xe48] sm:$0xff]
        %v6936 = vld [vmem:[%s592 + $0xe50] sm:$0xff]
        %v6937 = vld [vmem:[%s592 + $0xe58] sm:$0xff]
        %v6938 = vld [vmem:[%s592 + $0xe60] sm:$0xff]
        %v6939 = vld [vmem:[%s592 + $0xe68] sm:$0xff]
        %v6940 = vld [vmem:[%s592 + $0xe70] sm:$0xff]
        %v6941 = vld [vmem:[%s592 + $0xe78] sm:$0xff]
        %v6942 = vld [vmem:[%s592 + $0xe80] sm:$0xff]
        %v6943 = vld [vmem:[%s592 + $0xe88] sm:$0xff]
        %v6944 = vld [vmem:[%s592 + $0xe90] sm:$0xff]
        %v6945 = vld [vmem:[%s592 + $0xe98] sm:$0xff]
        %v6946 = vld [vmem:[%s592 + $0xea0] sm:$0xff]
        %v6947 = vld [vmem:[%s592 + $0xea8] sm:$0xff]
        %v6948 = vld [vmem:[%s592 + $0xeb0] sm:$0xff]
        %v6949 = vld [vmem:[%s592 + $0xeb8] sm:$0xff]
        %v6950 = vld [vmem:[%s592 + $0xec0] sm:$0xff]
        %v6951 = vld [vmem:[%s592 + $0xec8] sm:$0xff]
        %v6952 = vld [vmem:[%s592 + $0xed0] sm:$0xff]
        %v6953 = vld [vmem:[%s592 + $0xed8] sm:$0xff]
        %v6954 = vld [vmem:[%s592 + $0xee0] sm:$0xff]
        %v6955 = vld [vmem:[%s592 + $0xee8] sm:$0xff]
        %v6956 = vld [vmem:[%s592 + $0xef0] sm:$0xff]
        %v6957 = vld [vmem:[%s592 + $0xef8] sm:$0xff]
        %v6958 = vld [vmem:[%s592 + $0xf00] sm:$0xff]
        %v6959 = vld [vmem:[%s592 + $0xf08] sm:$0xff]
        %v6960 = vld [vmem:[%s592 + $0xf10] sm:$0xff]
        %v6961 = vld [vmem:[%s592 + $0xf18] sm:$0xff]
        %v6962 = vld [vmem:[%s592 + $0xf20] sm:$0xff]
        %v6963 = vld [vmem:[%s592 + $0xf28] sm:$0xff]
        %v6964 = vld [vmem:[%s592 + $0xf30] sm:$0xff]
        %v6965 = vld [vmem:[%s592 + $0xf38] sm:$0xff]
        %v6966 = vld [vmem:[%s592 + $0xf40] sm:$0xff]
        %v6967 = vld [vmem:[%s592 + $0xf48] sm:$0xff]
        %v6968 = vld [vmem:[%s592 + $0xf50] sm:$0xff]
        %v6969 = vld [vmem:[%s592 + $0xf58] sm:$0xff]
        %v6970 = vld [vmem:[%s592 + $0xf60] sm:$0xff]
        %v6971 = vld [vmem:[%s592 + $0xf68] sm:$0xff]
        %v6972 = vld [vmem:[%s592 + $0xf70] sm:$0xff]
        %v6973 = vld [vmem:[%s592 + $0xf78] sm:$0xff]
        %v6974 = vld [vmem:[%s592 + $0xf80] sm:$0xff]
        %v6975 = vld [vmem:[%s592 + $0xf88] sm:$0xff]
        %v6976 = vld [vmem:[%s592 + $0xf90] sm:$0xff]
        %v6977 = vld [vmem:[%s592 + $0xf98] sm:$0xff]
        %v6978 = vld [vmem:[%s592 + $0xfa0] sm:$0xff]
        %v6979 = vld [vmem:[%s592 + $0xfa8] sm:$0xff]
        %v6980 = vld [vmem:[%s592 + $0xfb0] sm:$0xff]
        %v6981 = vld [vmem:[%s592 + $0xfb8] sm:$0xff]
        %v6982 = vld [vmem:[%s592 + $0xfc0] sm:$0xff]
        %v6983 = vld [vmem:[%s592 + $0xfc8] sm:$0xff]
        %v6984 = vld [vmem:[%s592 + $0xfd0] sm:$0xff]
        %v6985 = vld [vmem:[%s592 + $0xfd8] sm:$0xff]
        %v6986 = vld [vmem:[%s592 + $0xfe0] sm:$0xff]
        %v6987 = vld [vmem:[%s592 + $0xfe8] sm:$0xff]
        %v6988 = vld [vmem:[%s592 + $0xff0] sm:$0xff]
        %v6989 = vld [vmem:[%s592 + $0xff8] sm:$0xff]
        %v6990 = vld [vmem:[%s601] sm:$0xff]
        %v6992 = vlaneseq
        %v6993 = vshrl.u32 %v6992, 7
        %v6994 = vsub.s32 0, %v6993
        %v6995 = vrot.slane %v6990, %v6994
        %v6996 = vlaneseq
        %v6997 = vshrl.u32 %v6996, 7
        %v6998 = vsub.s32 1, %v6997
        %v6999 = vrot.slane %v6990, %v6998
        %v7000 = vlaneseq
        %v7001 = vshrl.u32 %v7000, 7
        %v7002 = vsub.s32 2, %v7001
        %v7003 = vrot.slane %v6990, %v7002
        %v7004 = vlaneseq
        %v7005 = vshrl.u32 %v7004, 7
        %v7006 = vsub.s32 3, %v7005
        %v7007 = vrot.slane %v6990, %v7006
        %v7008 = vlaneseq
        %v7009 = vshrl.u32 %v7008, 7
        %v7010 = vsub.s32 4, %v7009
        %v7011 = vrot.slane %v6990, %v7010
        %v7012 = vlaneseq
        %v7013 = vshrl.u32 %v7012, 7
        %v7014 = vsub.s32 5, %v7013
        %v7015 = vrot.slane %v6990, %v7014
        %v7016 = vlaneseq
        %v7017 = vshrl.u32 %v7016, 7
        %v7018 = vsub.s32 6, %v7017
        %v7019 = vrot.slane %v6990, %v7018
        %v7020 = vlaneseq
        %v7021 = vshrl.u32 %v7020, 7
        %v7022 = vsub.s32 7, %v7021
        %v7023 = vrot.slane %v6990, %v7022
        %v7544 = vunpack.c.l.b16 %v6478
        %v7545 = vunpack.c.h.b16 %v6478
        %v7546 = vunpack.c.l.b16 %v6479
        %v7547 = vunpack.c.h.b16 %v6479
        %v7548 = vunpack.c.l.b16 %v6480
        %v7549 = vunpack.c.h.b16 %v6480
        %v7550 = vunpack.c.l.b16 %v6481
        %v7551 = vunpack.c.h.b16 %v6481
        %v7552 = vunpack.c.l.b16 %v6482
        %v7553 = vunpack.c.h.b16 %v6482
        %v7554 = vunpack.c.l.b16 %v6483
        %v7555 = vunpack.c.h.b16 %v6483
        %v7556 = vunpack.c.l.b16 %v6484
        %v7557 = vunpack.c.h.b16 %v6484
        %v7558 = vunpack.c.l.b16 %v6485
        %v7559 = vunpack.c.h.b16 %v6485
        %v7560 = vunpack.c.l.b16 %v6486
        %v7561 = vunpack.c.h.b16 %v6486
        %v7562 = vunpack.c.l.b16 %v6487
        %v7563 = vunpack.c.h.b16 %v6487
        %v7564 = vunpack.c.l.b16 %v6488
        %v7565 = vunpack.c.h.b16 %v6488
        %v7566 = vunpack.c.l.b16 %v6489
        %v7567 = vunpack.c.h.b16 %v6489
        %v7568 = vunpack.c.l.b16 %v6490
        %v7569 = vunpack.c.h.b16 %v6490
        %v7570 = vunpack.c.l.b16 %v6491
        %v7571 = vunpack.c.h.b16 %v6491
        %v7572 = vunpack.c.l.b16 %v6492
        %v7573 = vunpack.c.h.b16 %v6492
        %v7574 = vunpack.c.l.b16 %v6493
        %v7575 = vunpack.c.h.b16 %v6493
        %v7576 = vunpack.c.l.b16 %v6494
        %v7577 = vunpack.c.h.b16 %v6494
        %v7578 = vunpack.c.l.b16 %v6495
        %v7579 = vunpack.c.h.b16 %v6495
        %v7580 = vunpack.c.l.b16 %v6496
        %v7581 = vunpack.c.h.b16 %v6496
        %v7582 = vunpack.c.l.b16 %v6497
        %v7583 = vunpack.c.h.b16 %v6497
        %v7584 = vunpack.c.l.b16 %v6498
        %v7585 = vunpack.c.h.b16 %v6498
        %v7586 = vunpack.c.l.b16 %v6499
        %v7587 = vunpack.c.h.b16 %v6499
        %v7588 = vunpack.c.l.b16 %v6500
        %v7589 = vunpack.c.h.b16 %v6500
        %v7590 = vunpack.c.l.b16 %v6501
        %v7591 = vunpack.c.h.b16 %v6501
        %v7592 = vunpack.c.l.b16 %v6502
        %v7593 = vunpack.c.h.b16 %v6502
        %v7594 = vunpack.c.l.b16 %v6503
        %v7595 = vunpack.c.h.b16 %v6503
        %v7596 = vunpack.c.l.b16 %v6504
        %v7597 = vunpack.c.h.b16 %v6504
        %v7598 = vunpack.c.l.b16 %v6505
        %v7599 = vunpack.c.h.b16 %v6505
        %v7600 = vunpack.c.l.b16 %v6506
        %v7601 = vunpack.c.h.b16 %v6506
        %v7602 = vunpack.c.l.b16 %v6507
        %v7603 = vunpack.c.h.b16 %v6507
        %v7604 = vunpack.c.l.b16 %v6508
        %v7605 = vunpack.c.h.b16 %v6508
        %v7606 = vunpack.c.l.b16 %v6509
        %v7607 = vunpack.c.h.b16 %v6509
        %v7608 = vunpack.c.l.b16 %v6510
        %v7609 = vunpack.c.h.b16 %v6510
        %v7610 = vunpack.c.l.b16 %v6511
        %v7611 = vunpack.c.h.b16 %v6511
        %v7612 = vunpack.c.l.b16 %v6512
        %v7613 = vunpack.c.h.b16 %v6512
        %v7614 = vunpack.c.l.b16 %v6513
        %v7615 = vunpack.c.h.b16 %v6513
        %v7616 = vunpack.c.l.b16 %v6514
        %v7617 = vunpack.c.h.b16 %v6514
        %v7618 = vunpack.c.l.b16 %v6515
        %v7619 = vunpack.c.h.b16 %v6515
        %v7620 = vunpack.c.l.b16 %v6516
        %v7621 = vunpack.c.h.b16 %v6516
        %v7622 = vunpack.c.l.b16 %v6517
        %v7623 = vunpack.c.h.b16 %v6517
        %v7624 = vunpack.c.l.b16 %v6518
        %v7625 = vunpack.c.h.b16 %v6518
        %v7626 = vunpack.c.l.b16 %v6519
        %v7627 = vunpack.c.h.b16 %v6519
        %v7628 = vunpack.c.l.b16 %v6520
        %v7629 = vunpack.c.h.b16 %v6520
        %v7630 = vunpack.c.l.b16 %v6521
        %v7631 = vunpack.c.h.b16 %v6521
        %v7632 = vunpack.c.l.b16 %v6522
        %v7633 = vunpack.c.h.b16 %v6522
        %v7634 = vunpack.c.l.b16 %v6523
        %v7635 = vunpack.c.h.b16 %v6523
        %v7636 = vunpack.c.l.b16 %v6524
        %v7637 = vunpack.c.h.b16 %v6524
        %v7638 = vunpack.c.l.b16 %v6525
        %v7639 = vunpack.c.h.b16 %v6525
        %v7640 = vunpack.c.l.b16 %v6526
        %v7641 = vunpack.c.h.b16 %v6526
        %v7642 = vunpack.c.l.b16 %v6527
        %v7643 = vunpack.c.h.b16 %v6527
        %v7644 = vunpack.c.l.b16 %v6528
        %v7645 = vunpack.c.h.b16 %v6528
        %v7646 = vunpack.c.l.b16 %v6529
        %v7647 = vunpack.c.h.b16 %v6529
        %v7648 = vunpack.c.l.b16 %v6530
        %v7649 = vunpack.c.h.b16 %v6530
        %v7650 = vunpack.c.l.b16 %v6531
        %v7651 = vunpack.c.h.b16 %v6531
        %v7652 = vunpack.c.l.b16 %v6532
        %v7653 = vunpack.c.h.b16 %v6532
        %v7654 = vunpack.c.l.b16 %v6533
        %v7655 = vunpack.c.h.b16 %v6533
        %v7656 = vunpack.c.l.b16 %v6534
        %v7657 = vunpack.c.h.b16 %v6534
        %v7658 = vunpack.c.l.b16 %v6535
        %v7659 = vunpack.c.h.b16 %v6535
        %v7660 = vunpack.c.l.b16 %v6536
        %v7661 = vunpack.c.h.b16 %v6536
        %v7662 = vunpack.c.l.b16 %v6537
        %v7663 = vunpack.c.h.b16 %v6537
        %v7664 = vunpack.c.l.b16 %v6538
        %v7665 = vunpack.c.h.b16 %v6538
        %v7666 = vunpack.c.l.b16 %v6539
        %v7667 = vunpack.c.h.b16 %v6539
        %v7668 = vunpack.c.l.b16 %v6540
        %v7669 = vunpack.c.h.b16 %v6540
        %v7670 = vunpack.c.l.b16 %v6541
        %v7671 = vunpack.c.h.b16 %v6541
        %v7672 = vunpack.c.l.b16 %v6542
        %v7673 = vunpack.c.h.b16 %v6542
        %v7674 = vunpack.c.l.b16 %v6543
        %v7675 = vunpack.c.h.b16 %v6543
        %v7676 = vunpack.c.l.b16 %v6544
        %v7677 = vunpack.c.h.b16 %v6544
        %v7678 = vunpack.c.l.b16 %v6545
        %v7679 = vunpack.c.h.b16 %v6545
        %v7680 = vunpack.c.l.b16 %v6546
        %v7681 = vunpack.c.h.b16 %v6546
        %v7682 = vunpack.c.l.b16 %v6547
        %v7683 = vunpack.c.h.b16 %v6547
        %v7684 = vunpack.c.l.b16 %v6548
        %v7685 = vunpack.c.h.b16 %v6548
        %v7686 = vunpack.c.l.b16 %v6549
        %v7687 = vunpack.c.h.b16 %v6549
        %v7688 = vunpack.c.l.b16 %v6550
        %v7689 = vunpack.c.h.b16 %v6550
        %v7690 = vunpack.c.l.b16 %v6551
        %v7691 = vunpack.c.h.b16 %v6551
        %v7692 = vunpack.c.l.b16 %v6552
        %v7693 = vunpack.c.h.b16 %v6552
        %v7694 = vunpack.c.l.b16 %v6553
        %v7695 = vunpack.c.h.b16 %v6553
        %v7696 = vunpack.c.l.b16 %v6554
        %v7697 = vunpack.c.h.b16 %v6554
        %v7698 = vunpack.c.l.b16 %v6555
        %v7699 = vunpack.c.h.b16 %v6555
        %v7700 = vunpack.c.l.b16 %v6556
        %v7701 = vunpack.c.h.b16 %v6556
        %v7702 = vunpack.c.l.b16 %v6557
        %v7703 = vunpack.c.h.b16 %v6557
        %v7704 = vunpack.c.l.b16 %v6558
        %v7705 = vunpack.c.h.b16 %v6558
        %v7706 = vunpack.c.l.b16 %v6559
        %v7707 = vunpack.c.h.b16 %v6559
        %v7708 = vunpack.c.l.b16 %v6560
        %v7709 = vunpack.c.h.b16 %v6560
        %v7710 = vunpack.c.l.b16 %v6561
        %v7711 = vunpack.c.h.b16 %v6561
        %v7712 = vunpack.c.l.b16 %v6562
        %v7713 = vunpack.c.h.b16 %v6562
        %v7714 = vunpack.c.l.b16 %v6563
        %v7715 = vunpack.c.h.b16 %v6563
        %v7716 = vunpack.c.l.b16 %v6564
        %v7717 = vunpack.c.h.b16 %v6564
        %v7718 = vunpack.c.l.b16 %v6565
        %v7719 = vunpack.c.h.b16 %v6565
        %v7720 = vunpack.c.l.b16 %v6566
        %v7721 = vunpack.c.h.b16 %v6566
        %v7722 = vunpack.c.l.b16 %v6567
        %v7723 = vunpack.c.h.b16 %v6567
        %v7724 = vunpack.c.l.b16 %v6568
        %v7725 = vunpack.c.h.b16 %v6568
        %v7726 = vunpack.c.l.b16 %v6569
        %v7727 = vunpack.c.h.b16 %v6569
        %v7728 = vunpack.c.l.b16 %v6570
        %v7729 = vunpack.c.h.b16 %v6570
        %v7730 = vunpack.c.l.b16 %v6571
        %v7731 = vunpack.c.h.b16 %v6571
        %v7732 = vunpack.c.l.b16 %v6572
        %v7733 = vunpack.c.h.b16 %v6572
        %v7734 = vunpack.c.l.b16 %v6573
        %v7735 = vunpack.c.h.b16 %v6573
        %v7736 = vunpack.c.l.b16 %v6574
        %v7737 = vunpack.c.h.b16 %v6574
        %v7738 = vunpack.c.l.b16 %v6575
        %v7739 = vunpack.c.h.b16 %v6575
        %v7740 = vunpack.c.l.b16 %v6576
        %v7741 = vunpack.c.h.b16 %v6576
        %v7742 = vunpack.c.l.b16 %v6577
        %v7743 = vunpack.c.h.b16 %v6577
        %v7744 = vunpack.c.l.b16 %v6578
        %v7745 = vunpack.c.h.b16 %v6578
        %v7746 = vunpack.c.l.b16 %v6579
        %v7747 = vunpack.c.h.b16 %v6579
        %v7748 = vunpack.c.l.b16 %v6580
        %v7749 = vunpack.c.h.b16 %v6580
        %v7750 = vunpack.c.l.b16 %v6581
        %v7751 = vunpack.c.h.b16 %v6581
        %v7752 = vunpack.c.l.b16 %v6582
        %v7753 = vunpack.c.h.b16 %v6582
        %v7754 = vunpack.c.l.b16 %v6583
        %v7755 = vunpack.c.h.b16 %v6583
        %v7756 = vunpack.c.l.b16 %v6584
        %v7757 = vunpack.c.h.b16 %v6584
        %v7758 = vunpack.c.l.b16 %v6585
        %v7759 = vunpack.c.h.b16 %v6585
        %v7760 = vunpack.c.l.b16 %v6586
        %v7761 = vunpack.c.h.b16 %v6586
        %v7762 = vunpack.c.l.b16 %v6587
        %v7763 = vunpack.c.h.b16 %v6587
        %v7764 = vunpack.c.l.b16 %v6588
        %v7765 = vunpack.c.h.b16 %v6588
        %v7766 = vunpack.c.l.b16 %v6589
        %v7767 = vunpack.c.h.b16 %v6589
        %v7768 = vunpack.c.l.b16 %v6590
        %v7769 = vunpack.c.h.b16 %v6590
        %v7770 = vunpack.c.l.b16 %v6591
        %v7771 = vunpack.c.h.b16 %v6591
        %v7772 = vunpack.c.l.b16 %v6592
        %v7773 = vunpack.c.h.b16 %v6592
        %v7774 = vunpack.c.l.b16 %v6593
        %v7775 = vunpack.c.h.b16 %v6593
        %v7776 = vunpack.c.l.b16 %v6594
        %v7777 = vunpack.c.h.b16 %v6594
        %v7778 = vunpack.c.l.b16 %v6595
        %v7779 = vunpack.c.h.b16 %v6595
        %v7780 = vunpack.c.l.b16 %v6596
        %v7781 = vunpack.c.h.b16 %v6596
        %v7782 = vunpack.c.l.b16 %v6597
        %v7783 = vunpack.c.h.b16 %v6597
        %v7784 = vunpack.c.l.b16 %v6598
        %v7785 = vunpack.c.h.b16 %v6598
        %v7786 = vunpack.c.l.b16 %v6599
        %v7787 = vunpack.c.h.b16 %v6599
        %v7788 = vunpack.c.l.b16 %v6600
        %v7789 = vunpack.c.h.b16 %v6600
        %v7790 = vunpack.c.l.b16 %v6601
        %v7791 = vunpack.c.h.b16 %v6601
        %v7792 = vunpack.c.l.b16 %v6602
        %v7793 = vunpack.c.h.b16 %v6602
        %v7794 = vunpack.c.l.b16 %v6603
        %v7795 = vunpack.c.h.b16 %v6603
        %v7796 = vunpack.c.l.b16 %v6604
        %v7797 = vunpack.c.h.b16 %v6604
        %v7798 = vunpack.c.l.b16 %v6605
        %v7799 = vunpack.c.h.b16 %v6605
        %v7800 = vunpack.c.l.b16 %v6606
        %v7801 = vunpack.c.h.b16 %v6606
        %v7802 = vunpack.c.l.b16 %v6607
        %v7803 = vunpack.c.h.b16 %v6607
        %v7804 = vunpack.c.l.b16 %v6608
        %v7805 = vunpack.c.h.b16 %v6608
        %v7806 = vunpack.c.l.b16 %v6609
        %v7807 = vunpack.c.h.b16 %v6609
        %v7808 = vunpack.c.l.b16 %v6610
        %v7809 = vunpack.c.h.b16 %v6610
        %v7810 = vunpack.c.l.b16 %v6611
        %v7811 = vunpack.c.h.b16 %v6611
        %v7812 = vunpack.c.l.b16 %v6612
        %v7813 = vunpack.c.h.b16 %v6612
        %v7814 = vunpack.c.l.b16 %v6613
        %v7815 = vunpack.c.h.b16 %v6613
        %v7816 = vunpack.c.l.b16 %v6614
        %v7817 = vunpack.c.h.b16 %v6614
        %v7818 = vunpack.c.l.b16 %v6615
        %v7819 = vunpack.c.h.b16 %v6615
        %v7820 = vunpack.c.l.b16 %v6616
        %v7821 = vunpack.c.h.b16 %v6616
        %v7822 = vunpack.c.l.b16 %v6617
        %v7823 = vunpack.c.h.b16 %v6617
        %v7824 = vunpack.c.l.b16 %v6618
        %v7825 = vunpack.c.h.b16 %v6618
        %v7826 = vunpack.c.l.b16 %v6619
        %v7827 = vunpack.c.h.b16 %v6619
        %v7828 = vunpack.c.l.b16 %v6620
        %v7829 = vunpack.c.h.b16 %v6620
        %v7830 = vunpack.c.l.b16 %v6621
        %v7831 = vunpack.c.h.b16 %v6621
        %v7832 = vunpack.c.l.b16 %v6622
        %v7833 = vunpack.c.h.b16 %v6622
        %v7834 = vunpack.c.l.b16 %v6623
        %v7835 = vunpack.c.h.b16 %v6623
        %v7836 = vunpack.c.l.b16 %v6624
        %v7837 = vunpack.c.h.b16 %v6624
        %v7838 = vunpack.c.l.b16 %v6625
        %v7839 = vunpack.c.h.b16 %v6625
        %v7840 = vunpack.c.l.b16 %v6626
        %v7841 = vunpack.c.h.b16 %v6626
        %v7842 = vunpack.c.l.b16 %v6627
        %v7843 = vunpack.c.h.b16 %v6627
        %v7844 = vunpack.c.l.b16 %v6628
        %v7845 = vunpack.c.h.b16 %v6628
        %v7846 = vunpack.c.l.b16 %v6629
        %v7847 = vunpack.c.h.b16 %v6629
        %v7848 = vunpack.c.l.b16 %v6630
        %v7849 = vunpack.c.h.b16 %v6630
        %v7850 = vunpack.c.l.b16 %v6631
        %v7851 = vunpack.c.h.b16 %v6631
        %v7852 = vunpack.c.l.b16 %v6632
        %v7853 = vunpack.c.h.b16 %v6632
        %v7854 = vunpack.c.l.b16 %v6633
        %v7855 = vunpack.c.h.b16 %v6633
        %v7856 = vunpack.c.l.b16 %v6634
        %v7857 = vunpack.c.h.b16 %v6634
        %v7858 = vunpack.c.l.b16 %v6635
        %v7859 = vunpack.c.h.b16 %v6635
        %v7860 = vunpack.c.l.b16 %v6636
        %v7861 = vunpack.c.h.b16 %v6636
        %v7862 = vunpack.c.l.b16 %v6637
        %v7863 = vunpack.c.h.b16 %v6637
        %v7864 = vunpack.c.l.b16 %v6638
        %v7865 = vunpack.c.h.b16 %v6638
        %v7866 = vunpack.c.l.b16 %v6639
        %v7867 = vunpack.c.h.b16 %v6639
        %v7868 = vunpack.c.l.b16 %v6640
        %v7869 = vunpack.c.h.b16 %v6640
        %v7870 = vunpack.c.l.b16 %v6641
        %v7871 = vunpack.c.h.b16 %v6641
        %v7872 = vunpack.c.l.b16 %v6642
        %v7873 = vunpack.c.h.b16 %v6642
        %v7874 = vunpack.c.l.b16 %v6643
        %v7875 = vunpack.c.h.b16 %v6643
        %v7876 = vunpack.c.l.b16 %v6644
        %v7877 = vunpack.c.h.b16 %v6644
        %v7878 = vunpack.c.l.b16 %v6645
        %v7879 = vunpack.c.h.b16 %v6645
        %v7880 = vunpack.c.l.b16 %v6646
        %v7881 = vunpack.c.h.b16 %v6646
        %v7882 = vunpack.c.l.b16 %v6647
        %v7883 = vunpack.c.h.b16 %v6647
        %v7884 = vunpack.c.l.b16 %v6648
        %v7885 = vunpack.c.h.b16 %v6648
        %v7886 = vunpack.c.l.b16 %v6649
        %v7887 = vunpack.c.h.b16 %v6649
        %v7888 = vunpack.c.l.b16 %v6650
        %v7889 = vunpack.c.h.b16 %v6650
        %v7890 = vunpack.c.l.b16 %v6651
        %v7891 = vunpack.c.h.b16 %v6651
        %v7892 = vunpack.c.l.b16 %v6652
        %v7893 = vunpack.c.h.b16 %v6652
        %v7894 = vunpack.c.l.b16 %v6653
        %v7895 = vunpack.c.h.b16 %v6653
        %v7896 = vunpack.c.l.b16 %v6654
        %v7897 = vunpack.c.h.b16 %v6654
        %v7898 = vunpack.c.l.b16 %v6655
        %v7899 = vunpack.c.h.b16 %v6655
        %v7900 = vunpack.c.l.b16 %v6656
        %v7901 = vunpack.c.h.b16 %v6656
        %v7902 = vunpack.c.l.b16 %v6657
        %v7903 = vunpack.c.h.b16 %v6657
        %v7904 = vunpack.c.l.b16 %v6658
        %v7905 = vunpack.c.h.b16 %v6658
        %v7906 = vunpack.c.l.b16 %v6659
        %v7907 = vunpack.c.h.b16 %v6659
        %v7908 = vunpack.c.l.b16 %v6660
        %v7909 = vunpack.c.h.b16 %v6660
        %v7910 = vunpack.c.l.b16 %v6661
        %v7911 = vunpack.c.h.b16 %v6661
        %v7912 = vunpack.c.l.b16 %v6662
        %v7913 = vunpack.c.h.b16 %v6662
        %v7914 = vunpack.c.l.b16 %v6663
        %v7915 = vunpack.c.h.b16 %v6663
        %v7916 = vunpack.c.l.b16 %v6664
        %v7917 = vunpack.c.h.b16 %v6664
        %v7918 = vunpack.c.l.b16 %v6665
        %v7919 = vunpack.c.h.b16 %v6665
        %v7920 = vunpack.c.l.b16 %v6666
        %v7921 = vunpack.c.h.b16 %v6666
        %v7922 = vunpack.c.l.b16 %v6667
        %v7923 = vunpack.c.h.b16 %v6667
        %v7924 = vunpack.c.l.b16 %v6668
        %v7925 = vunpack.c.h.b16 %v6668
        %v7926 = vunpack.c.l.b16 %v6669
        %v7927 = vunpack.c.h.b16 %v6669
        %v7928 = vunpack.c.l.b16 %v6670
        %v7929 = vunpack.c.h.b16 %v6670
        %v7930 = vunpack.c.l.b16 %v6671
        %v7931 = vunpack.c.h.b16 %v6671
        %v7932 = vunpack.c.l.b16 %v6672
        %v7933 = vunpack.c.h.b16 %v6672
        %v7934 = vunpack.c.l.b16 %v6673
        %v7935 = vunpack.c.h.b16 %v6673
        %v7936 = vunpack.c.l.b16 %v6674
        %v7937 = vunpack.c.h.b16 %v6674
        %v7938 = vunpack.c.l.b16 %v6675
        %v7939 = vunpack.c.h.b16 %v6675
        %v7940 = vunpack.c.l.b16 %v6676
        %v7941 = vunpack.c.h.b16 %v6676
        %v7942 = vunpack.c.l.b16 %v6677
        %v7943 = vunpack.c.h.b16 %v6677
        %v7944 = vunpack.c.l.b16 %v6678
        %v7945 = vunpack.c.h.b16 %v6678
        %v7946 = vunpack.c.l.b16 %v6679
        %v7947 = vunpack.c.h.b16 %v6679
        %v7948 = vunpack.c.l.b16 %v6680
        %v7949 = vunpack.c.h.b16 %v6680
        %v7950 = vunpack.c.l.b16 %v6681
        %v7951 = vunpack.c.h.b16 %v6681
        %v7952 = vunpack.c.l.b16 %v6682
        %v7953 = vunpack.c.h.b16 %v6682
        %v7954 = vunpack.c.l.b16 %v6683
        %v7955 = vunpack.c.h.b16 %v6683
        %v7956 = vunpack.c.l.b16 %v6684
        %v7957 = vunpack.c.h.b16 %v6684
        %v7958 = vunpack.c.l.b16 %v6685
        %v7959 = vunpack.c.h.b16 %v6685
        %v7960 = vunpack.c.l.b16 %v6686
        %v7961 = vunpack.c.h.b16 %v6686
        %v7962 = vunpack.c.l.b16 %v6687
        %v7963 = vunpack.c.h.b16 %v6687
        %v7964 = vunpack.c.l.b16 %v6688
        %v7965 = vunpack.c.h.b16 %v6688
        %v7966 = vunpack.c.l.b16 %v6689
        %v7967 = vunpack.c.h.b16 %v6689
        %v7968 = vunpack.c.l.b16 %v6690
        %v7969 = vunpack.c.h.b16 %v6690
        %v7970 = vunpack.c.l.b16 %v6691
        %v7971 = vunpack.c.h.b16 %v6691
        %v7972 = vunpack.c.l.b16 %v6692
        %v7973 = vunpack.c.h.b16 %v6692
        %v7974 = vunpack.c.l.b16 %v6693
        %v7975 = vunpack.c.h.b16 %v6693
        %v7976 = vunpack.c.l.b16 %v6694
        %v7977 = vunpack.c.h.b16 %v6694
        %v7978 = vunpack.c.l.b16 %v6695
        %v7979 = vunpack.c.h.b16 %v6695
        %v7980 = vunpack.c.l.b16 %v6696
        %v7981 = vunpack.c.h.b16 %v6696
        %v7982 = vunpack.c.l.b16 %v6697
        %v7983 = vunpack.c.h.b16 %v6697
        %v7984 = vunpack.c.l.b16 %v6698
        %v7985 = vunpack.c.h.b16 %v6698
        %v7986 = vunpack.c.l.b16 %v6699
        %v7987 = vunpack.c.h.b16 %v6699
        %v7988 = vunpack.c.l.b16 %v6700
        %v7989 = vunpack.c.h.b16 %v6700
        %v7990 = vunpack.c.l.b16 %v6701
        %v7991 = vunpack.c.h.b16 %v6701
        %v7992 = vunpack.c.l.b16 %v6702
        %v7993 = vunpack.c.h.b16 %v6702
        %v7994 = vunpack.c.l.b16 %v6703
        %v7995 = vunpack.c.h.b16 %v6703
        %v7996 = vunpack.c.l.b16 %v6704
        %v7997 = vunpack.c.h.b16 %v6704
        %v7998 = vunpack.c.l.b16 %v6705
        %v7999 = vunpack.c.h.b16 %v6705
        %v8000 = vunpack.c.l.b16 %v6706
        %v8001 = vunpack.c.h.b16 %v6706
        %v8002 = vunpack.c.l.b16 %v6707
        %v8003 = vunpack.c.h.b16 %v6707
        %v8004 = vunpack.c.l.b16 %v6708
        %v8005 = vunpack.c.h.b16 %v6708
        %v8006 = vunpack.c.l.b16 %v6709
        %v8007 = vunpack.c.h.b16 %v6709
        %v8008 = vunpack.c.l.b16 %v6710
        %v8009 = vunpack.c.h.b16 %v6710
        %v8010 = vunpack.c.l.b16 %v6711
        %v8011 = vunpack.c.h.b16 %v6711
        %v8012 = vunpack.c.l.b16 %v6712
        %v8013 = vunpack.c.h.b16 %v6712
        %v8014 = vunpack.c.l.b16 %v6713
        %v8015 = vunpack.c.h.b16 %v6713
        %v8016 = vunpack.c.l.b16 %v6714
        %v8017 = vunpack.c.h.b16 %v6714
        %v8018 = vunpack.c.l.b16 %v6715
        %v8019 = vunpack.c.h.b16 %v6715
        %v8020 = vunpack.c.l.b16 %v6716
        %v8021 = vunpack.c.h.b16 %v6716
        %v8022 = vunpack.c.l.b16 %v6717
        %v8023 = vunpack.c.h.b16 %v6717
        %v8024 = vunpack.c.l.b16 %v6718
        %v8025 = vunpack.c.h.b16 %v6718
        %v8026 = vunpack.c.l.b16 %v6719
        %v8027 = vunpack.c.h.b16 %v6719
        %v8028 = vunpack.c.l.b16 %v6720
        %v8029 = vunpack.c.h.b16 %v6720
        %v8030 = vunpack.c.l.b16 %v6721
        %v8031 = vunpack.c.h.b16 %v6721
        %v8032 = vunpack.c.l.b16 %v6722
        %v8033 = vunpack.c.h.b16 %v6722
        %v8034 = vunpack.c.l.b16 %v6723
        %v8035 = vunpack.c.h.b16 %v6723
        %v8036 = vunpack.c.l.b16 %v6724
        %v8037 = vunpack.c.h.b16 %v6724
        %v8038 = vunpack.c.l.b16 %v6725
        %v8039 = vunpack.c.h.b16 %v6725
        %v8040 = vunpack.c.l.b16 %v6726
        %v8041 = vunpack.c.h.b16 %v6726
        %v8042 = vunpack.c.l.b16 %v6727
        %v8043 = vunpack.c.h.b16 %v6727
        %v8044 = vunpack.c.l.b16 %v6728
        %v8045 = vunpack.c.h.b16 %v6728
        %v8046 = vunpack.c.l.b16 %v6729
        %v8047 = vunpack.c.h.b16 %v6729
        %v8048 = vunpack.c.l.b16 %v6730
        %v8049 = vunpack.c.h.b16 %v6730
        %v8050 = vunpack.c.l.b16 %v6731
        %v8051 = vunpack.c.h.b16 %v6731
        %v8052 = vunpack.c.l.b16 %v6732
        %v8053 = vunpack.c.h.b16 %v6732
        %v8054 = vunpack.c.l.b16 %v6733
        %v8055 = vunpack.c.h.b16 %v6733
        %v8056 = vunpack.c.l.b16 %v6734
        %v8057 = vunpack.c.h.b16 %v6734
        %v8058 = vunpack.c.l.b16 %v6735
        %v8059 = vunpack.c.h.b16 %v6735
        %v8060 = vunpack.c.l.b16 %v6736
        %v8061 = vunpack.c.h.b16 %v6736
        %v8062 = vunpack.c.l.b16 %v6737
        %v8063 = vunpack.c.h.b16 %v6737
        %v8064 = vunpack.c.l.b16 %v6738
        %v8065 = vunpack.c.h.b16 %v6738
        %v8066 = vunpack.c.l.b16 %v6739
        %v8067 = vunpack.c.h.b16 %v6739
        %v8068 = vunpack.c.l.b16 %v6740
        %v8069 = vunpack.c.h.b16 %v6740
        %v8070 = vunpack.c.l.b16 %v6741
        %v8071 = vunpack.c.h.b16 %v6741
        %v8072 = vunpack.c.l.b16 %v6742
        %v8073 = vunpack.c.h.b16 %v6742
        %v8074 = vunpack.c.l.b16 %v6743
        %v8075 = vunpack.c.h.b16 %v6743
        %v8076 = vunpack.c.l.b16 %v6744
        %v8077 = vunpack.c.h.b16 %v6744
        %v8078 = vunpack.c.l.b16 %v6745
        %v8079 = vunpack.c.h.b16 %v6745
        %v8080 = vunpack.c.l.b16 %v6746
        %v8081 = vunpack.c.h.b16 %v6746
        %v8082 = vunpack.c.l.b16 %v6747
        %v8083 = vunpack.c.h.b16 %v6747
        %v8084 = vunpack.c.l.b16 %v6748
        %v8085 = vunpack.c.h.b16 %v6748
        %v8086 = vunpack.c.l.b16 %v6749
        %v8087 = vunpack.c.h.b16 %v6749
        %v8088 = vunpack.c.l.b16 %v6750
        %v8089 = vunpack.c.h.b16 %v6750
        %v8090 = vunpack.c.l.b16 %v6751
        %v8091 = vunpack.c.h.b16 %v6751
        %v8092 = vunpack.c.l.b16 %v6752
        %v8093 = vunpack.c.h.b16 %v6752
        %v8094 = vunpack.c.l.b16 %v6753
        %v8095 = vunpack.c.h.b16 %v6753
        %v8096 = vunpack.c.l.b16 %v6754
        %v8097 = vunpack.c.h.b16 %v6754
        %v8098 = vunpack.c.l.b16 %v6755
        %v8099 = vunpack.c.h.b16 %v6755
        %v8100 = vunpack.c.l.b16 %v6756
        %v8101 = vunpack.c.h.b16 %v6756
        %v8102 = vunpack.c.l.b16 %v6757
        %v8103 = vunpack.c.h.b16 %v6757
        %v8104 = vunpack.c.l.b16 %v6758
        %v8105 = vunpack.c.h.b16 %v6758
        %v8106 = vunpack.c.l.b16 %v6759
        %v8107 = vunpack.c.h.b16 %v6759
        %v8108 = vunpack.c.l.b16 %v6760
        %v8109 = vunpack.c.h.b16 %v6760
        %v8110 = vunpack.c.l.b16 %v6761
        %v8111 = vunpack.c.h.b16 %v6761
        %v8112 = vunpack.c.l.b16 %v6762
        %v8113 = vunpack.c.h.b16 %v6762
        %v8114 = vunpack.c.l.b16 %v6763
        %v8115 = vunpack.c.h.b16 %v6763
        %v8116 = vunpack.c.l.b16 %v6764
        %v8117 = vunpack.c.h.b16 %v6764
        %v8118 = vunpack.c.l.b16 %v6765
        %v8119 = vunpack.c.h.b16 %v6765
        %v8120 = vunpack.c.l.b16 %v6766
        %v8121 = vunpack.c.h.b16 %v6766
        %v8122 = vunpack.c.l.b16 %v6767
        %v8123 = vunpack.c.h.b16 %v6767
        %v8124 = vunpack.c.l.b16 %v6768
        %v8125 = vunpack.c.h.b16 %v6768
        %v8126 = vunpack.c.l.b16 %v6769
        %v8127 = vunpack.c.h.b16 %v6769
        %v8128 = vunpack.c.l.b16 %v6770
        %v8129 = vunpack.c.h.b16 %v6770
        %v8130 = vunpack.c.l.b16 %v6771
        %v8131 = vunpack.c.h.b16 %v6771
        %v8132 = vunpack.c.l.b16 %v6772
        %v8133 = vunpack.c.h.b16 %v6772
        %v8134 = vunpack.c.l.b16 %v6773
        %v8135 = vunpack.c.h.b16 %v6773
        %v8136 = vunpack.c.l.b16 %v6774
        %v8137 = vunpack.c.h.b16 %v6774
        %v8138 = vunpack.c.l.b16 %v6775
        %v8139 = vunpack.c.h.b16 %v6775
        %v8140 = vunpack.c.l.b16 %v6776
        %v8141 = vunpack.c.h.b16 %v6776
        %v8142 = vunpack.c.l.b16 %v6777
        %v8143 = vunpack.c.h.b16 %v6777
        %v8144 = vunpack.c.l.b16 %v6778
        %v8145 = vunpack.c.h.b16 %v6778
        %v8146 = vunpack.c.l.b16 %v6779
        %v8147 = vunpack.c.h.b16 %v6779
        %v8148 = vunpack.c.l.b16 %v6780
        %v8149 = vunpack.c.h.b16 %v6780
        %v8150 = vunpack.c.l.b16 %v6781
        %v8151 = vunpack.c.h.b16 %v6781
        %v8152 = vunpack.c.l.b16 %v6782
        %v8153 = vunpack.c.h.b16 %v6782
        %v8154 = vunpack.c.l.b16 %v6783
        %v8155 = vunpack.c.h.b16 %v6783
        %v8156 = vunpack.c.l.b16 %v6784
        %v8157 = vunpack.c.h.b16 %v6784
        %v8158 = vunpack.c.l.b16 %v6785
        %v8159 = vunpack.c.h.b16 %v6785
        %v8160 = vunpack.c.l.b16 %v6786
        %v8161 = vunpack.c.h.b16 %v6786
        %v8162 = vunpack.c.l.b16 %v6787
        %v8163 = vunpack.c.h.b16 %v6787
        %v8164 = vunpack.c.l.b16 %v6788
        %v8165 = vunpack.c.h.b16 %v6788
        %v8166 = vunpack.c.l.b16 %v6789
        %v8167 = vunpack.c.h.b16 %v6789
        %v8168 = vunpack.c.l.b16 %v6790
        %v8169 = vunpack.c.h.b16 %v6790
        %v8170 = vunpack.c.l.b16 %v6791
        %v8171 = vunpack.c.h.b16 %v6791
        %v8172 = vunpack.c.l.b16 %v6792
        %v8173 = vunpack.c.h.b16 %v6792
        %v8174 = vunpack.c.l.b16 %v6793
        %v8175 = vunpack.c.h.b16 %v6793
        %v8176 = vunpack.c.l.b16 %v6794
        %v8177 = vunpack.c.h.b16 %v6794
        %v8178 = vunpack.c.l.b16 %v6795
        %v8179 = vunpack.c.h.b16 %v6795
        %v8180 = vunpack.c.l.b16 %v6796
        %v8181 = vunpack.c.h.b16 %v6796
        %v8182 = vunpack.c.l.b16 %v6797
        %v8183 = vunpack.c.h.b16 %v6797
        %v8184 = vunpack.c.l.b16 %v6798
        %v8185 = vunpack.c.h.b16 %v6798
        %v8186 = vunpack.c.l.b16 %v6799
        %v8187 = vunpack.c.h.b16 %v6799
        %v8188 = vunpack.c.l.b16 %v6800
        %v8189 = vunpack.c.h.b16 %v6800
        %v8190 = vunpack.c.l.b16 %v6801
        %v8191 = vunpack.c.h.b16 %v6801
        %v8192 = vunpack.c.l.b16 %v6802
        %v8193 = vunpack.c.h.b16 %v6802
        %v8194 = vunpack.c.l.b16 %v6803
        %v8195 = vunpack.c.h.b16 %v6803
        %v8196 = vunpack.c.l.b16 %v6804
        %v8197 = vunpack.c.h.b16 %v6804
        %v8198 = vunpack.c.l.b16 %v6805
        %v8199 = vunpack.c.h.b16 %v6805
        %v8200 = vunpack.c.l.b16 %v6806
        %v8201 = vunpack.c.h.b16 %v6806
        %v8202 = vunpack.c.l.b16 %v6807
        %v8203 = vunpack.c.h.b16 %v6807
        %v8204 = vunpack.c.l.b16 %v6808
        %v8205 = vunpack.c.h.b16 %v6808
        %v8206 = vunpack.c.l.b16 %v6809
        %v8207 = vunpack.c.h.b16 %v6809
        %v8208 = vunpack.c.l.b16 %v6810
        %v8209 = vunpack.c.h.b16 %v6810
        %v8210 = vunpack.c.l.b16 %v6811
        %v8211 = vunpack.c.h.b16 %v6811
        %v8212 = vunpack.c.l.b16 %v6812
        %v8213 = vunpack.c.h.b16 %v6812
        %v8214 = vunpack.c.l.b16 %v6813
        %v8215 = vunpack.c.h.b16 %v6813
        %v8216 = vunpack.c.l.b16 %v6814
        %v8217 = vunpack.c.h.b16 %v6814
        %v8218 = vunpack.c.l.b16 %v6815
        %v8219 = vunpack.c.h.b16 %v6815
        %v8220 = vunpack.c.l.b16 %v6816
        %v8221 = vunpack.c.h.b16 %v6816
        %v8222 = vunpack.c.l.b16 %v6817
        %v8223 = vunpack.c.h.b16 %v6817
        %v8224 = vunpack.c.l.b16 %v6818
        %v8225 = vunpack.c.h.b16 %v6818
        %v8226 = vunpack.c.l.b16 %v6819
        %v8227 = vunpack.c.h.b16 %v6819
        %v8228 = vunpack.c.l.b16 %v6820
        %v8229 = vunpack.c.h.b16 %v6820
        %v8230 = vunpack.c.l.b16 %v6821
        %v8231 = vunpack.c.h.b16 %v6821
        %v8232 = vunpack.c.l.b16 %v6822
        %v8233 = vunpack.c.h.b16 %v6822
        %v8234 = vunpack.c.l.b16 %v6823
        %v8235 = vunpack.c.h.b16 %v6823
        %v8236 = vunpack.c.l.b16 %v6824
        %v8237 = vunpack.c.h.b16 %v6824
        %v8238 = vunpack.c.l.b16 %v6825
        %v8239 = vunpack.c.h.b16 %v6825
        %v8240 = vunpack.c.l.b16 %v6826
        %v8241 = vunpack.c.h.b16 %v6826
        %v8242 = vunpack.c.l.b16 %v6827
        %v8243 = vunpack.c.h.b16 %v6827
        %v8244 = vunpack.c.l.b16 %v6828
        %v8245 = vunpack.c.h.b16 %v6828
        %v8246 = vunpack.c.l.b16 %v6829
        %v8247 = vunpack.c.h.b16 %v6829
        %v8248 = vunpack.c.l.b16 %v6830
        %v8249 = vunpack.c.h.b16 %v6830
        %v8250 = vunpack.c.l.b16 %v6831
        %v8251 = vunpack.c.h.b16 %v6831
        %v8252 = vunpack.c.l.b16 %v6832
        %v8253 = vunpack.c.h.b16 %v6832
        %v8254 = vunpack.c.l.b16 %v6833
        %v8255 = vunpack.c.h.b16 %v6833
        %v8256 = vunpack.c.l.b16 %v6834
        %v8257 = vunpack.c.h.b16 %v6834
        %v8258 = vunpack.c.l.b16 %v6835
        %v8259 = vunpack.c.h.b16 %v6835
        %v8260 = vunpack.c.l.b16 %v6836
        %v8261 = vunpack.c.h.b16 %v6836
        %v8262 = vunpack.c.l.b16 %v6837
        %v8263 = vunpack.c.h.b16 %v6837
        %v8264 = vunpack.c.l.b16 %v6838
        %v8265 = vunpack.c.h.b16 %v6838
        %v8266 = vunpack.c.l.b16 %v6839
        %v8267 = vunpack.c.h.b16 %v6839
        %v8268 = vunpack.c.l.b16 %v6840
        %v8269 = vunpack.c.h.b16 %v6840
        %v8270 = vunpack.c.l.b16 %v6841
        %v8271 = vunpack.c.h.b16 %v6841
        %v8272 = vunpack.c.l.b16 %v6842
        %v8273 = vunpack.c.h.b16 %v6842
        %v8274 = vunpack.c.l.b16 %v6843
        %v8275 = vunpack.c.h.b16 %v6843
        %v8276 = vunpack.c.l.b16 %v6844
        %v8277 = vunpack.c.h.b16 %v6844
        %v8278 = vunpack.c.l.b16 %v6845
        %v8279 = vunpack.c.h.b16 %v6845
        %v8280 = vunpack.c.l.b16 %v6846
        %v8281 = vunpack.c.h.b16 %v6846
        %v8282 = vunpack.c.l.b16 %v6847
        %v8283 = vunpack.c.h.b16 %v6847
        %v8284 = vunpack.c.l.b16 %v6848
        %v8285 = vunpack.c.h.b16 %v6848
        %v8286 = vunpack.c.l.b16 %v6849
        %v8287 = vunpack.c.h.b16 %v6849
        %v8288 = vunpack.c.l.b16 %v6850
        %v8289 = vunpack.c.h.b16 %v6850
        %v8290 = vunpack.c.l.b16 %v6851
        %v8291 = vunpack.c.h.b16 %v6851
        %v8292 = vunpack.c.l.b16 %v6852
        %v8293 = vunpack.c.h.b16 %v6852
        %v8294 = vunpack.c.l.b16 %v6853
        %v8295 = vunpack.c.h.b16 %v6853
        %v8296 = vunpack.c.l.b16 %v6854
        %v8297 = vunpack.c.h.b16 %v6854
        %v8298 = vunpack.c.l.b16 %v6855
        %v8299 = vunpack.c.h.b16 %v6855
        %v8300 = vunpack.c.l.b16 %v6856
        %v8301 = vunpack.c.h.b16 %v6856
        %v8302 = vunpack.c.l.b16 %v6857
        %v8303 = vunpack.c.h.b16 %v6857
        %v8304 = vunpack.c.l.b16 %v6858
        %v8305 = vunpack.c.h.b16 %v6858
        %v8306 = vunpack.c.l.b16 %v6859
        %v8307 = vunpack.c.h.b16 %v6859
        %v8308 = vunpack.c.l.b16 %v6860
        %v8309 = vunpack.c.h.b16 %v6860
        %v8310 = vunpack.c.l.b16 %v6861
        %v8311 = vunpack.c.h.b16 %v6861
        %v8312 = vunpack.c.l.b16 %v6862
        %v8313 = vunpack.c.h.b16 %v6862
        %v8314 = vunpack.c.l.b16 %v6863
        %v8315 = vunpack.c.h.b16 %v6863
        %v8316 = vunpack.c.l.b16 %v6864
        %v8317 = vunpack.c.h.b16 %v6864
        %v8318 = vunpack.c.l.b16 %v6865
        %v8319 = vunpack.c.h.b16 %v6865
        %v8320 = vunpack.c.l.b16 %v6866
        %v8321 = vunpack.c.h.b16 %v6866
        %v8322 = vunpack.c.l.b16 %v6867
        %v8323 = vunpack.c.h.b16 %v6867
        %v8324 = vunpack.c.l.b16 %v6868
        %v8325 = vunpack.c.h.b16 %v6868
        %v8326 = vunpack.c.l.b16 %v6869
        %v8327 = vunpack.c.h.b16 %v6869
        %v8328 = vunpack.c.l.b16 %v6870
        %v8329 = vunpack.c.h.b16 %v6870
        %v8330 = vunpack.c.l.b16 %v6871
        %v8331 = vunpack.c.h.b16 %v6871
        %v8332 = vunpack.c.l.b16 %v6872
        %v8333 = vunpack.c.h.b16 %v6872
        %v8334 = vunpack.c.l.b16 %v6873
        %v8335 = vunpack.c.h.b16 %v6873
        %v8336 = vunpack.c.l.b16 %v6874
        %v8337 = vunpack.c.h.b16 %v6874
        %v8338 = vunpack.c.l.b16 %v6875
        %v8339 = vunpack.c.h.b16 %v6875
        %v8340 = vunpack.c.l.b16 %v6876
        %v8341 = vunpack.c.h.b16 %v6876
        %v8342 = vunpack.c.l.b16 %v6877
        %v8343 = vunpack.c.h.b16 %v6877
        %v8344 = vunpack.c.l.b16 %v6878
        %v8345 = vunpack.c.h.b16 %v6878
        %v8346 = vunpack.c.l.b16 %v6879
        %v8347 = vunpack.c.h.b16 %v6879
        %v8348 = vunpack.c.l.b16 %v6880
        %v8349 = vunpack.c.h.b16 %v6880
        %v8350 = vunpack.c.l.b16 %v6881
        %v8351 = vunpack.c.h.b16 %v6881
        %v8352 = vunpack.c.l.b16 %v6882
        %v8353 = vunpack.c.h.b16 %v6882
        %v8354 = vunpack.c.l.b16 %v6883
        %v8355 = vunpack.c.h.b16 %v6883
        %v8356 = vunpack.c.l.b16 %v6884
        %v8357 = vunpack.c.h.b16 %v6884
        %v8358 = vunpack.c.l.b16 %v6885
        %v8359 = vunpack.c.h.b16 %v6885
        %v8360 = vunpack.c.l.b16 %v6886
        %v8361 = vunpack.c.h.b16 %v6886
        %v8362 = vunpack.c.l.b16 %v6887
        %v8363 = vunpack.c.h.b16 %v6887
        %v8364 = vunpack.c.l.b16 %v6888
        %v8365 = vunpack.c.h.b16 %v6888
        %v8366 = vunpack.c.l.b16 %v6889
        %v8367 = vunpack.c.h.b16 %v6889
        %v8368 = vunpack.c.l.b16 %v6890
        %v8369 = vunpack.c.h.b16 %v6890
        %v8370 = vunpack.c.l.b16 %v6891
        %v8371 = vunpack.c.h.b16 %v6891
        %v8372 = vunpack.c.l.b16 %v6892
        %v8373 = vunpack.c.h.b16 %v6892
        %v8374 = vunpack.c.l.b16 %v6893
        %v8375 = vunpack.c.h.b16 %v6893
        %v8376 = vunpack.c.l.b16 %v6894
        %v8377 = vunpack.c.h.b16 %v6894
        %v8378 = vunpack.c.l.b16 %v6895
        %v8379 = vunpack.c.h.b16 %v6895
        %v8380 = vunpack.c.l.b16 %v6896
        %v8381 = vunpack.c.h.b16 %v6896
        %v8382 = vunpack.c.l.b16 %v6897
        %v8383 = vunpack.c.h.b16 %v6897
        %v8384 = vunpack.c.l.b16 %v6898
        %v8385 = vunpack.c.h.b16 %v6898
        %v8386 = vunpack.c.l.b16 %v6899
        %v8387 = vunpack.c.h.b16 %v6899
        %v8388 = vunpack.c.l.b16 %v6900
        %v8389 = vunpack.c.h.b16 %v6900
        %v8390 = vunpack.c.l.b16 %v6901
        %v8391 = vunpack.c.h.b16 %v6901
        %v8392 = vunpack.c.l.b16 %v6902
        %v8393 = vunpack.c.h.b16 %v6902
        %v8394 = vunpack.c.l.b16 %v6903
        %v8395 = vunpack.c.h.b16 %v6903
        %v8396 = vunpack.c.l.b16 %v6904
        %v8397 = vunpack.c.h.b16 %v6904
        %v8398 = vunpack.c.l.b16 %v6905
        %v8399 = vunpack.c.h.b16 %v6905
        %v8400 = vunpack.c.l.b16 %v6906
        %v8401 = vunpack.c.h.b16 %v6906
        %v8402 = vunpack.c.l.b16 %v6907
        %v8403 = vunpack.c.h.b16 %v6907
        %v8404 = vunpack.c.l.b16 %v6908
        %v8405 = vunpack.c.h.b16 %v6908
        %v8406 = vunpack.c.l.b16 %v6909
        %v8407 = vunpack.c.h.b16 %v6909
        %v8408 = vunpack.c.l.b16 %v6910
        %v8409 = vunpack.c.h.b16 %v6910
        %v8410 = vunpack.c.l.b16 %v6911
        %v8411 = vunpack.c.h.b16 %v6911
        %v8412 = vunpack.c.l.b16 %v6912
        %v8413 = vunpack.c.h.b16 %v6912
        %v8414 = vunpack.c.l.b16 %v6913
        %v8415 = vunpack.c.h.b16 %v6913
        %v8416 = vunpack.c.l.b16 %v6914
        %v8417 = vunpack.c.h.b16 %v6914
        %v8418 = vunpack.c.l.b16 %v6915
        %v8419 = vunpack.c.h.b16 %v6915
        %v8420 = vunpack.c.l.b16 %v6916
        %v8421 = vunpack.c.h.b16 %v6916
        %v8422 = vunpack.c.l.b16 %v6917
        %v8423 = vunpack.c.h.b16 %v6917
        %v8424 = vunpack.c.l.b16 %v6918
        %v8425 = vunpack.c.h.b16 %v6918
        %v8426 = vunpack.c.l.b16 %v6919
        %v8427 = vunpack.c.h.b16 %v6919
        %v8428 = vunpack.c.l.b16 %v6920
        %v8429 = vunpack.c.h.b16 %v6920
        %v8430 = vunpack.c.l.b16 %v6921
        %v8431 = vunpack.c.h.b16 %v6921
        %v8432 = vunpack.c.l.b16 %v6922
        %v8433 = vunpack.c.h.b16 %v6922
        %v8434 = vunpack.c.l.b16 %v6923
        %v8435 = vunpack.c.h.b16 %v6923
        %v8436 = vunpack.c.l.b16 %v6924
        %v8437 = vunpack.c.h.b16 %v6924
        %v8438 = vunpack.c.l.b16 %v6925
        %v8439 = vunpack.c.h.b16 %v6925
        %v8440 = vunpack.c.l.b16 %v6926
        %v8441 = vunpack.c.h.b16 %v6926
        %v8442 = vunpack.c.l.b16 %v6927
        %v8443 = vunpack.c.h.b16 %v6927
        %v8444 = vunpack.c.l.b16 %v6928
        %v8445 = vunpack.c.h.b16 %v6928
        %v8446 = vunpack.c.l.b16 %v6929
        %v8447 = vunpack.c.h.b16 %v6929
        %v8448 = vunpack.c.l.b16 %v6930
        %v8449 = vunpack.c.h.b16 %v6930
        %v8450 = vunpack.c.l.b16 %v6931
        %v8451 = vunpack.c.h.b16 %v6931
        %v8452 = vunpack.c.l.b16 %v6932
        %v8453 = vunpack.c.h.b16 %v6932
        %v8454 = vunpack.c.l.b16 %v6933
        %v8455 = vunpack.c.h.b16 %v6933
        %v8456 = vunpack.c.l.b16 %v6934
        %v8457 = vunpack.c.h.b16 %v6934
        %v8458 = vunpack.c.l.b16 %v6935
        %v8459 = vunpack.c.h.b16 %v6935
        %v8460 = vunpack.c.l.b16 %v6936
        %v8461 = vunpack.c.h.b16 %v6936
        %v8462 = vunpack.c.l.b16 %v6937
        %v8463 = vunpack.c.h.b16 %v6937
        %v8464 = vunpack.c.l.b16 %v6938
        %v8465 = vunpack.c.h.b16 %v6938
        %v8466 = vunpack.c.l.b16 %v6939
        %v8467 = vunpack.c.h.b16 %v6939
        %v8468 = vunpack.c.l.b16 %v6940
        %v8469 = vunpack.c.h.b16 %v6940
        %v8470 = vunpack.c.l.b16 %v6941
        %v8471 = vunpack.c.h.b16 %v6941
        %v8472 = vunpack.c.l.b16 %v6942
        %v8473 = vunpack.c.h.b16 %v6942
        %v8474 = vunpack.c.l.b16 %v6943
        %v8475 = vunpack.c.h.b16 %v6943
        %v8476 = vunpack.c.l.b16 %v6944
        %v8477 = vunpack.c.h.b16 %v6944
        %v8478 = vunpack.c.l.b16 %v6945
        %v8479 = vunpack.c.h.b16 %v6945
        %v8480 = vunpack.c.l.b16 %v6946
        %v8481 = vunpack.c.h.b16 %v6946
        %v8482 = vunpack.c.l.b16 %v6947
        %v8483 = vunpack.c.h.b16 %v6947
        %v8484 = vunpack.c.l.b16 %v6948
        %v8485 = vunpack.c.h.b16 %v6948
        %v8486 = vunpack.c.l.b16 %v6949
        %v8487 = vunpack.c.h.b16 %v6949
        %v8488 = vunpack.c.l.b16 %v6950
        %v8489 = vunpack.c.h.b16 %v6950
        %v8490 = vunpack.c.l.b16 %v6951
        %v8491 = vunpack.c.h.b16 %v6951
        %v8492 = vunpack.c.l.b16 %v6952
        %v8493 = vunpack.c.h.b16 %v6952
        %v8494 = vunpack.c.l.b16 %v6953
        %v8495 = vunpack.c.h.b16 %v6953
        %v8496 = vunpack.c.l.b16 %v6954
        %v8497 = vunpack.c.h.b16 %v6954
        %v8498 = vunpack.c.l.b16 %v6955
        %v8499 = vunpack.c.h.b16 %v6955
        %v8500 = vunpack.c.l.b16 %v6956
        %v8501 = vunpack.c.h.b16 %v6956
        %v8502 = vunpack.c.l.b16 %v6957
        %v8503 = vunpack.c.h.b16 %v6957
        %v8504 = vunpack.c.l.b16 %v6958
        %v8505 = vunpack.c.h.b16 %v6958
        %v8506 = vunpack.c.l.b16 %v6959
        %v8507 = vunpack.c.h.b16 %v6959
        %v8508 = vunpack.c.l.b16 %v6960
        %v8509 = vunpack.c.h.b16 %v6960
        %v8510 = vunpack.c.l.b16 %v6961
        %v8511 = vunpack.c.h.b16 %v6961
        %v8512 = vunpack.c.l.b16 %v6962
        %v8513 = vunpack.c.h.b16 %v6962
        %v8514 = vunpack.c.l.b16 %v6963
        %v8515 = vunpack.c.h.b16 %v6963
        %v8516 = vunpack.c.l.b16 %v6964
        %v8517 = vunpack.c.h.b16 %v6964
        %v8518 = vunpack.c.l.b16 %v6965
        %v8519 = vunpack.c.h.b16 %v6965
        %v8520 = vunpack.c.l.b16 %v6966
        %v8521 = vunpack.c.h.b16 %v6966
        %v8522 = vunpack.c.l.b16 %v6967
        %v8523 = vunpack.c.h.b16 %v6967
        %v8524 = vunpack.c.l.b16 %v6968
        %v8525 = vunpack.c.h.b16 %v6968
        %v8526 = vunpack.c.l.b16 %v6969
        %v8527 = vunpack.c.h.b16 %v6969
        %v8528 = vunpack.c.l.b16 %v6970
        %v8529 = vunpack.c.h.b16 %v6970
        %v8530 = vunpack.c.l.b16 %v6971
        %v8531 = vunpack.c.h.b16 %v6971
        %v8532 = vunpack.c.l.b16 %v6972
        %v8533 = vunpack.c.h.b16 %v6972
        %v8534 = vunpack.c.l.b16 %v6973
        %v8535 = vunpack.c.h.b16 %v6973
        %v8536 = vunpack.c.l.b16 %v6974
        %v8537 = vunpack.c.h.b16 %v6974
        %v8538 = vunpack.c.l.b16 %v6975
        %v8539 = vunpack.c.h.b16 %v6975
        %v8540 = vunpack.c.l.b16 %v6976
        %v8541 = vunpack.c.h.b16 %v6976
        %v8542 = vunpack.c.l.b16 %v6977
        %v8543 = vunpack.c.h.b16 %v6977
        %v8544 = vunpack.c.l.b16 %v6978
        %v8545 = vunpack.c.h.b16 %v6978
        %v8546 = vunpack.c.l.b16 %v6979
        %v8547 = vunpack.c.h.b16 %v6979
        %v8548 = vunpack.c.l.b16 %v6980
        %v8549 = vunpack.c.h.b16 %v6980
        %v8550 = vunpack.c.l.b16 %v6981
        %v8551 = vunpack.c.h.b16 %v6981
        %v8552 = vunpack.c.l.b16 %v6982
        %v8553 = vunpack.c.h.b16 %v6982
        %v8554 = vunpack.c.l.b16 %v6983
        %v8555 = vunpack.c.h.b16 %v6983
        %v8556 = vunpack.c.l.b16 %v6984
        %v8557 = vunpack.c.h.b16 %v6984
        %v8558 = vunpack.c.l.b16 %v6985
        %v8559 = vunpack.c.h.b16 %v6985
        %v8560 = vunpack.c.l.b16 %v6986
        %v8561 = vunpack.c.h.b16 %v6986
        %v8562 = vunpack.c.l.b16 %v6987
        %v8563 = vunpack.c.h.b16 %v6987
        %v8564 = vunpack.c.l.b16 %v6988
        %v8565 = vunpack.c.h.b16 %v6988
        %v8566 = vunpack.c.l.b16 %v6989
        %v8567 = vunpack.c.h.b16 %v6989
        %v8568 = vpack.c.b16 %v7552, %v7544
        %v8569 = vpack.c.b16 %v7553, %v7545
        %v8570 = vpack.c.b16 %v7554, %v7546
        %v8571 = vpack.c.b16 %v7555, %v7547
        %v8572 = vpack.c.b16 %v7556, %v7548
        %v8573 = vpack.c.b16 %v7557, %v7549
        %v8574 = vpack.c.b16 %v7558, %v7550
        %v8575 = vpack.c.b16 %v7559, %v7551
        %v8576 = vpack.c.b16 %v7568, %v7560
        %v8577 = vpack.c.b16 %v7569, %v7561
        %v8578 = vpack.c.b16 %v7570, %v7562
        %v8579 = vpack.c.b16 %v7571, %v7563
        %v8580 = vpack.c.b16 %v7572, %v7564
        %v8581 = vpack.c.b16 %v7573, %v7565
        %v8582 = vpack.c.b16 %v7574, %v7566
        %v8583 = vpack.c.b16 %v7575, %v7567
        %v8584 = vpack.c.b16 %v7584, %v7576
        %v8585 = vpack.c.b16 %v7585, %v7577
        %v8586 = vpack.c.b16 %v7586, %v7578
        %v8587 = vpack.c.b16 %v7587, %v7579
        %v8588 = vpack.c.b16 %v7588, %v7580
        %v8589 = vpack.c.b16 %v7589, %v7581
        %v8590 = vpack.c.b16 %v7590, %v7582
        %v8591 = vpack.c.b16 %v7591, %v7583
        %v8592 = vpack.c.b16 %v7600, %v7592
        %v8593 = vpack.c.b16 %v7601, %v7593
        %v8594 = vpack.c.b16 %v7602, %v7594
        %v8595 = vpack.c.b16 %v7603, %v7595
        %v8596 = vpack.c.b16 %v7604, %v7596
        %v8597 = vpack.c.b16 %v7605, %v7597
        %v8598 = vpack.c.b16 %v7606, %v7598
        %v8599 = vpack.c.b16 %v7607, %v7599
        %v8600 = vpack.c.b16 %v7616, %v7608
        %v8601 = vpack.c.b16 %v7617, %v7609
        %v8602 = vpack.c.b16 %v7618, %v7610
        %v8603 = vpack.c.b16 %v7619, %v7611
        %v8604 = vpack.c.b16 %v7620, %v7612
        %v8605 = vpack.c.b16 %v7621, %v7613
        %v8606 = vpack.c.b16 %v7622, %v7614
        %v8607 = vpack.c.b16 %v7623, %v7615
        %v8608 = vpack.c.b16 %v7632, %v7624
        %v8609 = vpack.c.b16 %v7633, %v7625
        %v8610 = vpack.c.b16 %v7634, %v7626
        %v8611 = vpack.c.b16 %v7635, %v7627
        %v8612 = vpack.c.b16 %v7636, %v7628
        %v8613 = vpack.c.b16 %v7637, %v7629
        %v8614 = vpack.c.b16 %v7638, %v7630
        %v8615 = vpack.c.b16 %v7639, %v7631
        %v8616 = vpack.c.b16 %v7648, %v7640
        %v8617 = vpack.c.b16 %v7649, %v7641
        %v8618 = vpack.c.b16 %v7650, %v7642
        %v8619 = vpack.c.b16 %v7651, %v7643
        %v8620 = vpack.c.b16 %v7652, %v7644
        %v8621 = vpack.c.b16 %v7653, %v7645
        %v8622 = vpack.c.b16 %v7654, %v7646
        %v8623 = vpack.c.b16 %v7655, %v7647
        %v8624 = vpack.c.b16 %v7664, %v7656
        %v8625 = vpack.c.b16 %v7665, %v7657
        %v8626 = vpack.c.b16 %v7666, %v7658
        %v8627 = vpack.c.b16 %v7667, %v7659
        %v8628 = vpack.c.b16 %v7668, %v7660
        %v8629 = vpack.c.b16 %v7669, %v7661
        %v8630 = vpack.c.b16 %v7670, %v7662
        %v8631 = vpack.c.b16 %v7671, %v7663
        %v8632 = vpack.c.b16 %v7680, %v7672
        %v8633 = vpack.c.b16 %v7681, %v7673
        %v8634 = vpack.c.b16 %v7682, %v7674
        %v8635 = vpack.c.b16 %v7683, %v7675
        %v8636 = vpack.c.b16 %v7684, %v7676
        %v8637 = vpack.c.b16 %v7685, %v7677
        %v8638 = vpack.c.b16 %v7686, %v7678
        %v8639 = vpack.c.b16 %v7687, %v7679
        %v8640 = vpack.c.b16 %v7696, %v7688
        %v8641 = vpack.c.b16 %v7697, %v7689
        %v8642 = vpack.c.b16 %v7698, %v7690
        %v8643 = vpack.c.b16 %v7699, %v7691
        %v8644 = vpack.c.b16 %v7700, %v7692
        %v8645 = vpack.c.b16 %v7701, %v7693
        %v8646 = vpack.c.b16 %v7702, %v7694
        %v8647 = vpack.c.b16 %v7703, %v7695
        %v8648 = vpack.c.b16 %v7712, %v7704
        %v8649 = vpack.c.b16 %v7713, %v7705
        %v8650 = vpack.c.b16 %v7714, %v7706
        %v8651 = vpack.c.b16 %v7715, %v7707
        %v8652 = vpack.c.b16 %v7716, %v7708
        %v8653 = vpack.c.b16 %v7717, %v7709
        %v8654 = vpack.c.b16 %v7718, %v7710
        %v8655 = vpack.c.b16 %v7719, %v7711
        %v8656 = vpack.c.b16 %v7728, %v7720
        %v8657 = vpack.c.b16 %v7729, %v7721
        %v8658 = vpack.c.b16 %v7730, %v7722
        %v8659 = vpack.c.b16 %v7731, %v7723
        %v8660 = vpack.c.b16 %v7732, %v7724
        %v8661 = vpack.c.b16 %v7733, %v7725
        %v8662 = vpack.c.b16 %v7734, %v7726
        %v8663 = vpack.c.b16 %v7735, %v7727
        %v8664 = vpack.c.b16 %v7744, %v7736
        %v8665 = vpack.c.b16 %v7745, %v7737
        %v8666 = vpack.c.b16 %v7746, %v7738
        %v8667 = vpack.c.b16 %v7747, %v7739
        %v8668 = vpack.c.b16 %v7748, %v7740
        %v8669 = vpack.c.b16 %v7749, %v7741
        %v8670 = vpack.c.b16 %v7750, %v7742
        %v8671 = vpack.c.b16 %v7751, %v7743
        %v8672 = vpack.c.b16 %v7760, %v7752
        %v8673 = vpack.c.b16 %v7761, %v7753
        %v8674 = vpack.c.b16 %v7762, %v7754
        %v8675 = vpack.c.b16 %v7763, %v7755
        %v8676 = vpack.c.b16 %v7764, %v7756
        %v8677 = vpack.c.b16 %v7765, %v7757
        %v8678 = vpack.c.b16 %v7766, %v7758
        %v8679 = vpack.c.b16 %v7767, %v7759
        %v8680 = vpack.c.b16 %v7776, %v7768
        %v8681 = vpack.c.b16 %v7777, %v7769
        %v8682 = vpack.c.b16 %v7778, %v7770
        %v8683 = vpack.c.b16 %v7779, %v7771
        %v8684 = vpack.c.b16 %v7780, %v7772
        %v8685 = vpack.c.b16 %v7781, %v7773
        %v8686 = vpack.c.b16 %v7782, %v7774
        %v8687 = vpack.c.b16 %v7783, %v7775
        %v8688 = vpack.c.b16 %v7792, %v7784
        %v8689 = vpack.c.b16 %v7793, %v7785
        %v8690 = vpack.c.b16 %v7794, %v7786
        %v8691 = vpack.c.b16 %v7795, %v7787
        %v8692 = vpack.c.b16 %v7796, %v7788
        %v8693 = vpack.c.b16 %v7797, %v7789
        %v8694 = vpack.c.b16 %v7798, %v7790
        %v8695 = vpack.c.b16 %v7799, %v7791
        %v8696 = vpack.c.b16 %v7808, %v7800
        %v8697 = vpack.c.b16 %v7809, %v7801
        %v8698 = vpack.c.b16 %v7810, %v7802
        %v8699 = vpack.c.b16 %v7811, %v7803
        %v8700 = vpack.c.b16 %v7812, %v7804
        %v8701 = vpack.c.b16 %v7813, %v7805
        %v8702 = vpack.c.b16 %v7814, %v7806
        %v8703 = vpack.c.b16 %v7815, %v7807
        %v8704 = vpack.c.b16 %v7824, %v7816
        %v8705 = vpack.c.b16 %v7825, %v7817
        %v8706 = vpack.c.b16 %v7826, %v7818
        %v8707 = vpack.c.b16 %v7827, %v7819
        %v8708 = vpack.c.b16 %v7828, %v7820
        %v8709 = vpack.c.b16 %v7829, %v7821
        %v8710 = vpack.c.b16 %v7830, %v7822
        %v8711 = vpack.c.b16 %v7831, %v7823
        %v8712 = vpack.c.b16 %v7840, %v7832
        %v8713 = vpack.c.b16 %v7841, %v7833
        %v8714 = vpack.c.b16 %v7842, %v7834
        %v8715 = vpack.c.b16 %v7843, %v7835
        %v8716 = vpack.c.b16 %v7844, %v7836
        %v8717 = vpack.c.b16 %v7845, %v7837
        %v8718 = vpack.c.b16 %v7846, %v7838
        %v8719 = vpack.c.b16 %v7847, %v7839
        %v8720 = vpack.c.b16 %v7856, %v7848
        %v8721 = vpack.c.b16 %v7857, %v7849
        %v8722 = vpack.c.b16 %v7858, %v7850
        %v8723 = vpack.c.b16 %v7859, %v7851
        %v8724 = vpack.c.b16 %v7860, %v7852
        %v8725 = vpack.c.b16 %v7861, %v7853
        %v8726 = vpack.c.b16 %v7862, %v7854
        %v8727 = vpack.c.b16 %v7863, %v7855
        %v8728 = vpack.c.b16 %v7872, %v7864
        %v8729 = vpack.c.b16 %v7873, %v7865
        %v8730 = vpack.c.b16 %v7874, %v7866
        %v8731 = vpack.c.b16 %v7875, %v7867
        %v8732 = vpack.c.b16 %v7876, %v7868
        %v8733 = vpack.c.b16 %v7877, %v7869
        %v8734 = vpack.c.b16 %v7878, %v7870
        %v8735 = vpack.c.b16 %v7879, %v7871
        %v8736 = vpack.c.b16 %v7888, %v7880
        %v8737 = vpack.c.b16 %v7889, %v7881
        %v8738 = vpack.c.b16 %v7890, %v7882
        %v8739 = vpack.c.b16 %v7891, %v7883
        %v8740 = vpack.c.b16 %v7892, %v7884
        %v8741 = vpack.c.b16 %v7893, %v7885
        %v8742 = vpack.c.b16 %v7894, %v7886
        %v8743 = vpack.c.b16 %v7895, %v7887
        %v8744 = vpack.c.b16 %v7904, %v7896
        %v8745 = vpack.c.b16 %v7905, %v7897
        %v8746 = vpack.c.b16 %v7906, %v7898
        %v8747 = vpack.c.b16 %v7907, %v7899
        %v8748 = vpack.c.b16 %v7908, %v7900
        %v8749 = vpack.c.b16 %v7909, %v7901
        %v8750 = vpack.c.b16 %v7910, %v7902
        %v8751 = vpack.c.b16 %v7911, %v7903
        %v8752 = vpack.c.b16 %v7920, %v7912
        %v8753 = vpack.c.b16 %v7921, %v7913
        %v8754 = vpack.c.b16 %v7922, %v7914
        %v8755 = vpack.c.b16 %v7923, %v7915
        %v8756 = vpack.c.b16 %v7924, %v7916
        %v8757 = vpack.c.b16 %v7925, %v7917
        %v8758 = vpack.c.b16 %v7926, %v7918
        %v8759 = vpack.c.b16 %v7927, %v7919
        %v8760 = vpack.c.b16 %v7936, %v7928
        %v8761 = vpack.c.b16 %v7937, %v7929
        %v8762 = vpack.c.b16 %v7938, %v7930
        %v8763 = vpack.c.b16 %v7939, %v7931
        %v8764 = vpack.c.b16 %v7940, %v7932
        %v8765 = vpack.c.b16 %v7941, %v7933
        %v8766 = vpack.c.b16 %v7942, %v7934
        %v8767 = vpack.c.b16 %v7943, %v7935
        %v8768 = vpack.c.b16 %v7952, %v7944
        %v8769 = vpack.c.b16 %v7953, %v7945
        %v8770 = vpack.c.b16 %v7954, %v7946
        %v8771 = vpack.c.b16 %v7955, %v7947
        %v8772 = vpack.c.b16 %v7956, %v7948
        %v8773 = vpack.c.b16 %v7957, %v7949
        %v8774 = vpack.c.b16 %v7958, %v7950
        %v8775 = vpack.c.b16 %v7959, %v7951
        %v8776 = vpack.c.b16 %v7968, %v7960
        %v8777 = vpack.c.b16 %v7969, %v7961
        %v8778 = vpack.c.b16 %v7970, %v7962
        %v8779 = vpack.c.b16 %v7971, %v7963
        %v8780 = vpack.c.b16 %v7972, %v7964
        %v8781 = vpack.c.b16 %v7973, %v7965
        %v8782 = vpack.c.b16 %v7974, %v7966
        %v8783 = vpack.c.b16 %v7975, %v7967
        %v8784 = vpack.c.b16 %v7984, %v7976
        %v8785 = vpack.c.b16 %v7985, %v7977
        %v8786 = vpack.c.b16 %v7986, %v7978
        %v8787 = vpack.c.b16 %v7987, %v7979
        %v8788 = vpack.c.b16 %v7988, %v7980
        %v8789 = vpack.c.b16 %v7989, %v7981
        %v8790 = vpack.c.b16 %v7990, %v7982
        %v8791 = vpack.c.b16 %v7991, %v7983
        %v8792 = vpack.c.b16 %v8000, %v7992
        %v8793 = vpack.c.b16 %v8001, %v7993
        %v8794 = vpack.c.b16 %v8002, %v7994
        %v8795 = vpack.c.b16 %v8003, %v7995
        %v8796 = vpack.c.b16 %v8004, %v7996
        %v8797 = vpack.c.b16 %v8005, %v7997
        %v8798 = vpack.c.b16 %v8006, %v7998
        %v8799 = vpack.c.b16 %v8007, %v7999
        %v8800 = vpack.c.b16 %v8016, %v8008
        %v8801 = vpack.c.b16 %v8017, %v8009
        %v8802 = vpack.c.b16 %v8018, %v8010
        %v8803 = vpack.c.b16 %v8019, %v8011
        %v8804 = vpack.c.b16 %v8020, %v8012
        %v8805 = vpack.c.b16 %v8021, %v8013
        %v8806 = vpack.c.b16 %v8022, %v8014
        %v8807 = vpack.c.b16 %v8023, %v8015
        %v8808 = vpack.c.b16 %v8032, %v8024
        %v8809 = vpack.c.b16 %v8033, %v8025
        %v8810 = vpack.c.b16 %v8034, %v8026
        %v8811 = vpack.c.b16 %v8035, %v8027
        %v8812 = vpack.c.b16 %v8036, %v8028
        %v8813 = vpack.c.b16 %v8037, %v8029
        %v8814 = vpack.c.b16 %v8038, %v8030
        %v8815 = vpack.c.b16 %v8039, %v8031
        %v8816 = vpack.c.b16 %v8048, %v8040
        %v8817 = vpack.c.b16 %v8049, %v8041
        %v8818 = vpack.c.b16 %v8050, %v8042
        %v8819 = vpack.c.b16 %v8051, %v8043
        %v8820 = vpack.c.b16 %v8052, %v8044
        %v8821 = vpack.c.b16 %v8053, %v8045
        %v8822 = vpack.c.b16 %v8054, %v8046
        %v8823 = vpack.c.b16 %v8055, %v8047
        %v8824 = vpack.c.b16 %v8064, %v8056
        %v8825 = vpack.c.b16 %v8065, %v8057
        %v8826 = vpack.c.b16 %v8066, %v8058
        %v8827 = vpack.c.b16 %v8067, %v8059
        %v8828 = vpack.c.b16 %v8068, %v8060
        %v8829 = vpack.c.b16 %v8069, %v8061
        %v8830 = vpack.c.b16 %v8070, %v8062
        %v8831 = vpack.c.b16 %v8071, %v8063
        %v8832 = vpack.c.b16 %v8080, %v8072
        %v8833 = vpack.c.b16 %v8081, %v8073
        %v8834 = vpack.c.b16 %v8082, %v8074
        %v8835 = vpack.c.b16 %v8083, %v8075
        %v8836 = vpack.c.b16 %v8084, %v8076
        %v8837 = vpack.c.b16 %v8085, %v8077
        %v8838 = vpack.c.b16 %v8086, %v8078
        %v8839 = vpack.c.b16 %v8087, %v8079
        %v8840 = vpack.c.b16 %v8096, %v8088
        %v8841 = vpack.c.b16 %v8097, %v8089
        %v8842 = vpack.c.b16 %v8098, %v8090
        %v8843 = vpack.c.b16 %v8099, %v8091
        %v8844 = vpack.c.b16 %v8100, %v8092
        %v8845 = vpack.c.b16 %v8101, %v8093
        %v8846 = vpack.c.b16 %v8102, %v8094
        %v8847 = vpack.c.b16 %v8103, %v8095
        %v8848 = vpack.c.b16 %v8112, %v8104
        %v8849 = vpack.c.b16 %v8113, %v8105
        %v8850 = vpack.c.b16 %v8114, %v8106
        %v8851 = vpack.c.b16 %v8115, %v8107
        %v8852 = vpack.c.b16 %v8116, %v8108
        %v8853 = vpack.c.b16 %v8117, %v8109
        %v8854 = vpack.c.b16 %v8118, %v8110
        %v8855 = vpack.c.b16 %v8119, %v8111
        %v8856 = vpack.c.b16 %v8128, %v8120
        %v8857 = vpack.c.b16 %v8129, %v8121
        %v8858 = vpack.c.b16 %v8130, %v8122
        %v8859 = vpack.c.b16 %v8131, %v8123
        %v8860 = vpack.c.b16 %v8132, %v8124
        %v8861 = vpack.c.b16 %v8133, %v8125
        %v8862 = vpack.c.b16 %v8134, %v8126
        %v8863 = vpack.c.b16 %v8135, %v8127
        %v8864 = vpack.c.b16 %v8144, %v8136
        %v8865 = vpack.c.b16 %v8145, %v8137
        %v8866 = vpack.c.b16 %v8146, %v8138
        %v8867 = vpack.c.b16 %v8147, %v8139
        %v8868 = vpack.c.b16 %v8148, %v8140
        %v8869 = vpack.c.b16 %v8149, %v8141
        %v8870 = vpack.c.b16 %v8150, %v8142
        %v8871 = vpack.c.b16 %v8151, %v8143
        %v8872 = vpack.c.b16 %v8160, %v8152
        %v8873 = vpack.c.b16 %v8161, %v8153
        %v8874 = vpack.c.b16 %v8162, %v8154
        %v8875 = vpack.c.b16 %v8163, %v8155
        %v8876 = vpack.c.b16 %v8164, %v8156
        %v8877 = vpack.c.b16 %v8165, %v8157
        %v8878 = vpack.c.b16 %v8166, %v8158
        %v8879 = vpack.c.b16 %v8167, %v8159
        %v8880 = vpack.c.b16 %v8176, %v8168
        %v8881 = vpack.c.b16 %v8177, %v8169
        %v8882 = vpack.c.b16 %v8178, %v8170
        %v8883 = vpack.c.b16 %v8179, %v8171
        %v8884 = vpack.c.b16 %v8180, %v8172
        %v8885 = vpack.c.b16 %v8181, %v8173
        %v8886 = vpack.c.b16 %v8182, %v8174
        %v8887 = vpack.c.b16 %v8183, %v8175
        %v8888 = vpack.c.b16 %v8192, %v8184
        %v8889 = vpack.c.b16 %v8193, %v8185
        %v8890 = vpack.c.b16 %v8194, %v8186
        %v8891 = vpack.c.b16 %v8195, %v8187
        %v8892 = vpack.c.b16 %v8196, %v8188
        %v8893 = vpack.c.b16 %v8197, %v8189
        %v8894 = vpack.c.b16 %v8198, %v8190
        %v8895 = vpack.c.b16 %v8199, %v8191
        %v8896 = vpack.c.b16 %v8208, %v8200
        %v8897 = vpack.c.b16 %v8209, %v8201
        %v8898 = vpack.c.b16 %v8210, %v8202
        %v8899 = vpack.c.b16 %v8211, %v8203
        %v8900 = vpack.c.b16 %v8212, %v8204
        %v8901 = vpack.c.b16 %v8213, %v8205
        %v8902 = vpack.c.b16 %v8214, %v8206
        %v8903 = vpack.c.b16 %v8215, %v8207
        %v8904 = vpack.c.b16 %v8224, %v8216
        %v8905 = vpack.c.b16 %v8225, %v8217
        %v8906 = vpack.c.b16 %v8226, %v8218
        %v8907 = vpack.c.b16 %v8227, %v8219
        %v8908 = vpack.c.b16 %v8228, %v8220
        %v8909 = vpack.c.b16 %v8229, %v8221
        %v8910 = vpack.c.b16 %v8230, %v8222
        %v8911 = vpack.c.b16 %v8231, %v8223
        %v8912 = vpack.c.b16 %v8240, %v8232
        %v8913 = vpack.c.b16 %v8241, %v8233
        %v8914 = vpack.c.b16 %v8242, %v8234
        %v8915 = vpack.c.b16 %v8243, %v8235
        %v8916 = vpack.c.b16 %v8244, %v8236
        %v8917 = vpack.c.b16 %v8245, %v8237
        %v8918 = vpack.c.b16 %v8246, %v8238
        %v8919 = vpack.c.b16 %v8247, %v8239
        %v8920 = vpack.c.b16 %v8256, %v8248
        %v8921 = vpack.c.b16 %v8257, %v8249
        %v8922 = vpack.c.b16 %v8258, %v8250
        %v8923 = vpack.c.b16 %v8259, %v8251
        %v8924 = vpack.c.b16 %v8260, %v8252
        %v8925 = vpack.c.b16 %v8261, %v8253
        %v8926 = vpack.c.b16 %v8262, %v8254
        %v8927 = vpack.c.b16 %v8263, %v8255
        %v8928 = vpack.c.b16 %v8272, %v8264
        %v8929 = vpack.c.b16 %v8273, %v8265
        %v8930 = vpack.c.b16 %v8274, %v8266
        %v8931 = vpack.c.b16 %v8275, %v8267
        %v8932 = vpack.c.b16 %v8276, %v8268
        %v8933 = vpack.c.b16 %v8277, %v8269
        %v8934 = vpack.c.b16 %v8278, %v8270
        %v8935 = vpack.c.b16 %v8279, %v8271
        %v8936 = vpack.c.b16 %v8288, %v8280
        %v8937 = vpack.c.b16 %v8289, %v8281
        %v8938 = vpack.c.b16 %v8290, %v8282
        %v8939 = vpack.c.b16 %v8291, %v8283
        %v8940 = vpack.c.b16 %v8292, %v8284
        %v8941 = vpack.c.b16 %v8293, %v8285
        %v8942 = vpack.c.b16 %v8294, %v8286
        %v8943 = vpack.c.b16 %v8295, %v8287
        %v8944 = vpack.c.b16 %v8304, %v8296
        %v8945 = vpack.c.b16 %v8305, %v8297
        %v8946 = vpack.c.b16 %v8306, %v8298
        %v8947 = vpack.c.b16 %v8307, %v8299
        %v8948 = vpack.c.b16 %v8308, %v8300
        %v8949 = vpack.c.b16 %v8309, %v8301
        %v8950 = vpack.c.b16 %v8310, %v8302
        %v8951 = vpack.c.b16 %v8311, %v8303
        %v8952 = vpack.c.b16 %v8320, %v8312
        %v8953 = vpack.c.b16 %v8321, %v8313
        %v8954 = vpack.c.b16 %v8322, %v8314
        %v8955 = vpack.c.b16 %v8323, %v8315
        %v8956 = vpack.c.b16 %v8324, %v8316
        %v8957 = vpack.c.b16 %v8325, %v8317
        %v8958 = vpack.c.b16 %v8326, %v8318
        %v8959 = vpack.c.b16 %v8327, %v8319
        %v8960 = vpack.c.b16 %v8336, %v8328
        %v8961 = vpack.c.b16 %v8337, %v8329
        %v8962 = vpack.c.b16 %v8338, %v8330
        %v8963 = vpack.c.b16 %v8339, %v8331
        %v8964 = vpack.c.b16 %v8340, %v8332
        %v8965 = vpack.c.b16 %v8341, %v8333
        %v8966 = vpack.c.b16 %v8342, %v8334
        %v8967 = vpack.c.b16 %v8343, %v8335
        %v8968 = vpack.c.b16 %v8352, %v8344
        %v8969 = vpack.c.b16 %v8353, %v8345
        %v8970 = vpack.c.b16 %v8354, %v8346
        %v8971 = vpack.c.b16 %v8355, %v8347
        %v8972 = vpack.c.b16 %v8356, %v8348
        %v8973 = vpack.c.b16 %v8357, %v8349
        %v8974 = vpack.c.b16 %v8358, %v8350
        %v8975 = vpack.c.b16 %v8359, %v8351
        %v8976 = vpack.c.b16 %v8368, %v8360
        %v8977 = vpack.c.b16 %v8369, %v8361
        %v8978 = vpack.c.b16 %v8370, %v8362
        %v8979 = vpack.c.b16 %v8371, %v8363
        %v8980 = vpack.c.b16 %v8372, %v8364
        %v8981 = vpack.c.b16 %v8373, %v8365
        %v8982 = vpack.c.b16 %v8374, %v8366
        %v8983 = vpack.c.b16 %v8375, %v8367
        %v8984 = vpack.c.b16 %v8384, %v8376
        %v8985 = vpack.c.b16 %v8385, %v8377
        %v8986 = vpack.c.b16 %v8386, %v8378
        %v8987 = vpack.c.b16 %v8387, %v8379
        %v8988 = vpack.c.b16 %v8388, %v8380
        %v8989 = vpack.c.b16 %v8389, %v8381
        %v8990 = vpack.c.b16 %v8390, %v8382
        %v8991 = vpack.c.b16 %v8391, %v8383
        %v8992 = vpack.c.b16 %v8400, %v8392
        %v8993 = vpack.c.b16 %v8401, %v8393
        %v8994 = vpack.c.b16 %v8402, %v8394
        %v8995 = vpack.c.b16 %v8403, %v8395
        %v8996 = vpack.c.b16 %v8404, %v8396
        %v8997 = vpack.c.b16 %v8405, %v8397
        %v8998 = vpack.c.b16 %v8406, %v8398
        %v8999 = vpack.c.b16 %v8407, %v8399
        %v9000 = vpack.c.b16 %v8416, %v8408
        %v9001 = vpack.c.b16 %v8417, %v8409
        %v9002 = vpack.c.b16 %v8418, %v8410
        %v9003 = vpack.c.b16 %v8419, %v8411
        %v9004 = vpack.c.b16 %v8420, %v8412
        %v9005 = vpack.c.b16 %v8421, %v8413
        %v9006 = vpack.c.b16 %v8422, %v8414
        %v9007 = vpack.c.b16 %v8423, %v8415
        %v9008 = vpack.c.b16 %v8432, %v8424
        %v9009 = vpack.c.b16 %v8433, %v8425
        %v9010 = vpack.c.b16 %v8434, %v8426
        %v9011 = vpack.c.b16 %v8435, %v8427
        %v9012 = vpack.c.b16 %v8436, %v8428
        %v9013 = vpack.c.b16 %v8437, %v8429
        %v9014 = vpack.c.b16 %v8438, %v8430
        %v9015 = vpack.c.b16 %v8439, %v8431
        %v9016 = vpack.c.b16 %v8448, %v8440
        %v9017 = vpack.c.b16 %v8449, %v8441
        %v9018 = vpack.c.b16 %v8450, %v8442
        %v9019 = vpack.c.b16 %v8451, %v8443
        %v9020 = vpack.c.b16 %v8452, %v8444
        %v9021 = vpack.c.b16 %v8453, %v8445
        %v9022 = vpack.c.b16 %v8454, %v8446
        %v9023 = vpack.c.b16 %v8455, %v8447
        %v9024 = vpack.c.b16 %v8464, %v8456
        %v9025 = vpack.c.b16 %v8465, %v8457
        %v9026 = vpack.c.b16 %v8466, %v8458
        %v9027 = vpack.c.b16 %v8467, %v8459
        %v9028 = vpack.c.b16 %v8468, %v8460
        %v9029 = vpack.c.b16 %v8469, %v8461
        %v9030 = vpack.c.b16 %v8470, %v8462
        %v9031 = vpack.c.b16 %v8471, %v8463
        %v9032 = vpack.c.b16 %v8480, %v8472
        %v9033 = vpack.c.b16 %v8481, %v8473
        %v9034 = vpack.c.b16 %v8482, %v8474
        %v9035 = vpack.c.b16 %v8483, %v8475
        %v9036 = vpack.c.b16 %v8484, %v8476
        %v9037 = vpack.c.b16 %v8485, %v8477
        %v9038 = vpack.c.b16 %v8486, %v8478
        %v9039 = vpack.c.b16 %v8487, %v8479
        %v9040 = vpack.c.b16 %v8496, %v8488
        %v9041 = vpack.c.b16 %v8497, %v8489
        %v9042 = vpack.c.b16 %v8498, %v8490
        %v9043 = vpack.c.b16 %v8499, %v8491
        %v9044 = vpack.c.b16 %v8500, %v8492
        %v9045 = vpack.c.b16 %v8501, %v8493
        %v9046 = vpack.c.b16 %v8502, %v8494
        %v9047 = vpack.c.b16 %v8503, %v8495
        %v9048 = vpack.c.b16 %v8512, %v8504
        %v9049 = vpack.c.b16 %v8513, %v8505
        %v9050 = vpack.c.b16 %v8514, %v8506
        %v9051 = vpack.c.b16 %v8515, %v8507
        %v9052 = vpack.c.b16 %v8516, %v8508
        %v9053 = vpack.c.b16 %v8517, %v8509
        %v9054 = vpack.c.b16 %v8518, %v8510
        %v9055 = vpack.c.b16 %v8519, %v8511
        %v9056 = vpack.c.b16 %v8528, %v8520
        %v9057 = vpack.c.b16 %v8529, %v8521
        %v9058 = vpack.c.b16 %v8530, %v8522
        %v9059 = vpack.c.b16 %v8531, %v8523
        %v9060 = vpack.c.b16 %v8532, %v8524
        %v9061 = vpack.c.b16 %v8533, %v8525
        %v9062 = vpack.c.b16 %v8534, %v8526
        %v9063 = vpack.c.b16 %v8535, %v8527
        %v9064 = vpack.c.b16 %v8544, %v8536
        %v9065 = vpack.c.b16 %v8545, %v8537
        %v9066 = vpack.c.b16 %v8546, %v8538
        %v9067 = vpack.c.b16 %v8547, %v8539
        %v9068 = vpack.c.b16 %v8548, %v8540
        %v9069 = vpack.c.b16 %v8549, %v8541
        %v9070 = vpack.c.b16 %v8550, %v8542
        %v9071 = vpack.c.b16 %v8551, %v8543
        %v9072 = vpack.c.b16 %v8560, %v8552
        %v9073 = vpack.c.b16 %v8561, %v8553
        %v9074 = vpack.c.b16 %v8562, %v8554
        %v9075 = vpack.c.b16 %v8563, %v8555
        %v9076 = vpack.c.b16 %v8564, %v8556
        %v9077 = vpack.c.b16 %v8565, %v8557
        %v9078 = vpack.c.b16 %v8566, %v8558
        %v9079 = vpack.c.b16 %v8567, %v8559
        %9592 = vmatprep.subr.bf16.mxu0 %v8569
        %9593 = vmatpush1.bf16.msra.mxu0 %v8568
        %9594 = vmatprep.subr.bf16.mxu0 %v8577
        %9595 = vmatpush1.bf16.msra.mxu0 %v8576
        %9596 = vmatprep.subr.bf16.mxu0 %v8585
        %9597 = vmatpush1.bf16.msra.mxu0 %v8584
        %9598 = vmatprep.subr.bf16.mxu0 %v8593
        %9599 = vmatpush1.bf16.msra.mxu0 %v8592
        %9600 = vmatprep.subr.bf16.mxu0 %v8601
        %9601 = vmatpush1.bf16.msra.mxu0 %v8600
        %9602 = vmatprep.subr.bf16.mxu0 %v8609
        %9603 = vmatpush1.bf16.msra.mxu0 %v8608
        %9604 = vmatprep.subr.bf16.mxu0 %v8617
        %9605 = vmatpush1.bf16.msra.mxu0 %v8616
        %9606 = vmatprep.subr.bf16.mxu0 %v8625
        %9607 = vmatpush1.bf16.msra.mxu0 %v8624
        %9608 = vmatprep.subr.bf16.mxu0 %v8633
        %9609 = vmatpush1.bf16.msra.mxu0 %v8632
        %9610 = vmatprep.subr.bf16.mxu0 %v8641
        %9611 = vmatpush1.bf16.msra.mxu0 %v8640
        %9612 = vmatprep.subr.bf16.mxu0 %v8649
        %9613 = vmatpush1.bf16.msra.mxu0 %v8648
        %9614 = vmatprep.subr.bf16.mxu0 %v8657
        %9615 = vmatpush1.bf16.msra.mxu0 %v8656
        %9616 = vmatprep.subr.bf16.mxu0 %v8665
        %9617 = vmatpush1.bf16.msra.mxu0 %v8664
        %9618 = vmatprep.subr.bf16.mxu0 %v8673
        %9619 = vmatpush1.bf16.msra.mxu0 %v8672
        %9620 = vmatprep.subr.bf16.mxu0 %v8681
        %9621 = vmatpush1.bf16.msra.mxu0 %v8680
        %9622 = vmatprep.subr.bf16.mxu0 %v8689
        %9623 = vmatpush1.bf16.msra.mxu0 %v8688
        %9624 = vmatprep.mubr.bf16.mxu0 %v6471
        %9625 = vmatmul.mubr.bf16.gmra.mrb[0].mxu0 %v6470
        %v9626 = vpop.f32.mrb[0].mxu0
        %v9627 = vadd.f32 %v6995, %v9626
        %v9628 = vpop.f32.mrb[0].mxu0
        %v9629 = vadd.f32 %v6999, %v9628
        %v9630 = vpop.f32.mrb[0].mxu0
        %v9631 = vpop.f32.mrb[0].mxu0
        %9632 = vdwg.mxu0
        %9633 = vmatprep.subr.bf16.mxu0 %v8697
        %9634 = vmatpush1.bf16.msra.mxu0 %v8696
        %9635 = vmatprep.subr.bf16.mxu0 %v8705
        %9636 = vmatpush1.bf16.msra.mxu0 %v8704
        %9637 = vmatprep.subr.bf16.mxu0 %v8713
        %9638 = vmatpush1.bf16.msra.mxu0 %v8712
        %9639 = vmatprep.subr.bf16.mxu0 %v8721
        %9640 = vmatpush1.bf16.msra.mxu0 %v8720
        %9641 = vmatprep.subr.bf16.mxu0 %v8729
        %9642 = vmatpush1.bf16.msra.mxu0 %v8728
        %9643 = vmatprep.subr.bf16.mxu0 %v8737
        %9644 = vmatpush1.bf16.msra.mxu0 %v8736
        %9645 = vmatprep.subr.bf16.mxu0 %v8745
        %9646 = vmatpush1.bf16.msra.mxu0 %v8744
        %9647 = vmatprep.subr.bf16.mxu0 %v8753
        %9648 = vmatpush1.bf16.msra.mxu0 %v8752
        %9649 = vmatprep.subr.bf16.mxu0 %v8761
        %9650 = vmatpush1.bf16.msra.mxu0 %v8760
        %9651 = vmatprep.subr.bf16.mxu0 %v8769
        %9652 = vmatpush1.bf16.msra.mxu0 %v8768
        %9653 = vmatprep.subr.bf16.mxu0 %v8777
        %9654 = vmatpush1.bf16.msra.mxu0 %v8776
        %9655 = vmatprep.subr.bf16.mxu0 %v8785
        %9656 = vmatpush1.bf16.msra.mxu0 %v8784
        %9657 = vmatprep.subr.bf16.mxu0 %v8793
        %9658 = vmatpush1.bf16.msra.mxu0 %v8792
        %9659 = vmatprep.subr.bf16.mxu0 %v8801
        %9660 = vmatpush1.bf16.msra.mxu0 %v8800
        %9661 = vmatprep.subr.bf16.mxu0 %v8809
        %9662 = vmatpush1.bf16.msra.mxu0 %v8808
        %9663 = vmatprep.subr.bf16.mxu0 %v8817
        %9664 = vmatpush1.bf16.msra.mxu0 %v8816
        %9665 = vmatprep.mubr.bf16.mxu0 %v6473
        %9666 = vmatmul.mubr.bf16.gmra.mrb[0].mxu0 %v6472
        %v9667 = vpop.f32.mrb[0].mxu0
        %v9668 = vadd.f32 %v9627, %v9667
        %v9669 = vpop.f32.mrb[0].mxu0
        %v9670 = vadd.f32 %v9629, %v9669
        %v9671 = vpop.f32.mrb[0].mxu0
        %v9672 = vpop.f32.mrb[0].mxu0
        %9673 = vdwg.mxu0
        %9674 = vmatprep.subr.bf16.mxu0 %v8825
        %9675 = vmatpush1.bf16.msra.mxu0 %v8824
        %9676 = vmatprep.subr.bf16.mxu0 %v8833
        %9677 = vmatpush1.bf16.msra.mxu0 %v8832
        %9678 = vmatprep.subr.bf16.mxu0 %v8841
        %9679 = vmatpush1.bf16.msra.mxu0 %v8840
        %9680 = vmatprep.subr.bf16.mxu0 %v8849
        %9681 = vmatpush1.bf16.msra.mxu0 %v8848
        %9682 = vmatprep.subr.bf16.mxu0 %v8857
        %9683 = vmatpush1.bf16.msra.mxu0 %v8856
        %9684 = vmatprep.subr.bf16.mxu0 %v8865
        %9685 = vmatpush1.bf16.msra.mxu0 %v8864
        %9686 = vmatprep.subr.bf16.mxu0 %v8873
        %9687 = vmatpush1.bf16.msra.mxu0 %v8872
        %9688 = vmatprep.subr.bf16.mxu0 %v8881
        %9689 = vmatpush1.bf16.msra.mxu0 %v8880
        %9690 = vmatprep.subr.bf16.mxu0 %v8889
        %9691 = vmatpush1.bf16.msra.mxu0 %v8888
        %9692 = vmatprep.subr.bf16.mxu0 %v8897
        %9693 = vmatpush1.bf16.msra.mxu0 %v8896
        %9694 = vmatprep.subr.bf16.mxu0 %v8905
        %9695 = vmatpush1.bf16.msra.mxu0 %v8904
        %9696 = vmatprep.subr.bf16.mxu0 %v8913
        %9697 = vmatpush1.bf16.msra.mxu0 %v8912
        %9698 = vmatprep.subr.bf16.mxu0 %v8921
        %9699 = vmatpush1.bf16.msra.mxu0 %v8920
        %9700 = vmatprep.subr.bf16.mxu0 %v8929
        %9701 = vmatpush1.bf16.msra.mxu0 %v8928
        %9702 = vmatprep.subr.bf16.mxu0 %v8937
        %9703 = vmatpush1.bf16.msra.mxu0 %v8936
        %9704 = vmatprep.subr.bf16.mxu0 %v8945
        %9705 = vmatpush1.bf16.msra.mxu0 %v8944
        %9706 = vmatprep.mubr.bf16.mxu0 %v6475
        %9707 = vmatmul.mubr.bf16.gmra.mrb[0].mxu0 %v6474
        %v9708 = vpop.f32.mrb[0].mxu0
        %v9709 = vadd.f32 %v9668, %v9708
        %v9710 = vpop.f32.mrb[0].mxu0
        %v9711 = vadd.f32 %v9670, %v9710
        %v9712 = vpop.f32.mrb[0].mxu0
        %v9713 = vpop.f32.mrb[0].mxu0
        %9714 = vdwg.mxu0
        %9715 = vmatprep.subr.bf16.mxu0 %v8953
        %9716 = vmatpush1.bf16.msra.mxu0 %v8952
        %9717 = vmatprep.subr.bf16.mxu0 %v8961
        %9718 = vmatpush1.bf16.msra.mxu0 %v8960
        %9719 = vmatprep.subr.bf16.mxu0 %v8969
        %9720 = vmatpush1.bf16.msra.mxu0 %v8968
        %9721 = vmatprep.subr.bf16.mxu0 %v8977
        %9722 = vmatpush1.bf16.msra.mxu0 %v8976
        %9723 = vmatprep.subr.bf16.mxu0 %v8985
        %9724 = vmatpush1.bf16.msra.mxu0 %v8984
        %9725 = vmatprep.subr.bf16.mxu0 %v8993
        %9726 = vmatpush1.bf16.msra.mxu0 %v8992
        %9727 = vmatprep.subr.bf16.mxu0 %v9001
        %9728 = vmatpush1.bf16.msra.mxu0 %v9000
        %9729 = vmatprep.subr.bf16.mxu0 %v9009
        %9730 = vmatpush1.bf16.msra.mxu0 %v9008
        %9731 = vmatprep.subr.bf16.mxu0 %v9017
        %9732 = vmatpush1.bf16.msra.mxu0 %v9016
        %9733 = vmatprep.subr.bf16.mxu0 %v9025
        %9734 = vmatpush1.bf16.msra.mxu0 %v9024
        %9735 = vmatprep.subr.bf16.mxu0 %v9033
        %9736 = vmatpush1.bf16.msra.mxu0 %v9032
        %9737 = vmatprep.subr.bf16.mxu0 %v9041
        %9738 = vmatpush1.bf16.msra.mxu0 %v9040
        %9739 = vmatprep.subr.bf16.mxu0 %v9049
        %9740 = vmatpush1.bf16.msra.mxu0 %v9048
        %9741 = vmatprep.subr.bf16.mxu0 %v9057
        %9742 = vmatpush1.bf16.msra.mxu0 %v9056
        %9743 = vmatprep.subr.bf16.mxu0 %v9065
        %9744 = vmatpush1.bf16.msra.mxu0 %v9064
        %9745 = vmatprep.subr.bf16.mxu0 %v9073
        %9746 = vmatpush1.bf16.msra.mxu0 %v9072
        %9747 = vmatprep.mubr.bf16.mxu0 %v6477
        %9748 = vmatmul.mubr.bf16.gmra.mrb[0].mxu0 %v6476
        %v9749 = vpop.f32.mrb[0].mxu0
        %v9750 = vadd.f32 %v9709, %v9749
        %v9751 = vpop.f32.mrb[0].mxu0
        %v9752 = vadd.f32 %v9711, %v9751
        %v9753 = vpop.f32.mrb[0].mxu0
        %v9754 = vpop.f32.mrb[0].mxu0
        %9755 = vdwg.mxu0
        %9756 = vmatprep.subr.bf16.mxu0 %v8571
        %9757 = vmatpush1.bf16.msra.mxu0 %v8570
        %9758 = vmatprep.subr.bf16.mxu0 %v8579
        %9759 = vmatpush1.bf16.msra.mxu0 %v8578
        %9760 = vmatprep.subr.bf16.mxu0 %v8587
        %9761 = vmatpush1.bf16.msra.mxu0 %v8586
        %9762 = vmatprep.subr.bf16.mxu0 %v8595
        %9763 = vmatpush1.bf16.msra.mxu0 %v8594
        %9764 = vmatprep.subr.bf16.mxu0 %v8603
        %9765 = vmatpush1.bf16.msra.mxu0 %v8602
        %9766 = vmatprep.subr.bf16.mxu0 %v8611
        %9767 = vmatpush1.bf16.msra.mxu0 %v8610
        %9768 = vmatprep.subr.bf16.mxu0 %v8619
        %9769 = vmatpush1.bf16.msra.mxu0 %v8618
        %9770 = vmatprep.subr.bf16.mxu0 %v8627
        %9771 = vmatpush1.bf16.msra.mxu0 %v8626
        %9772 = vmatprep.subr.bf16.mxu0 %v8635
        %9773 = vmatpush1.bf16.msra.mxu0 %v8634
        %9774 = vmatprep.subr.bf16.mxu0 %v8643
        %9775 = vmatpush1.bf16.msra.mxu0 %v8642
        %9776 = vmatprep.subr.bf16.mxu0 %v8651
        %9777 = vmatpush1.bf16.msra.mxu0 %v8650
        %9778 = vmatprep.subr.bf16.mxu0 %v8659
        %9779 = vmatpush1.bf16.msra.mxu0 %v8658
        %9780 = vmatprep.subr.bf16.mxu0 %v8667
        %9781 = vmatpush1.bf16.msra.mxu0 %v8666
        %9782 = vmatprep.subr.bf16.mxu0 %v8675
        %9783 = vmatpush1.bf16.msra.mxu0 %v8674
        %9784 = vmatprep.subr.bf16.mxu0 %v8683
        %9785 = vmatpush1.bf16.msra.mxu0 %v8682
        %9786 = vmatprep.subr.bf16.mxu0 %v8691
        %9787 = vmatpush1.bf16.msra.mxu0 %v8690
        %9788 = vmatprep.mubr.bf16.mxu0 %v6471
        %9789 = vmatmul.mubr.bf16.gmra.mrb[0].mxu0 %v6470
        %v9790 = vpop.f32.mrb[0].mxu0
        %v9791 = vadd.f32 %v7003, %v9790
        %v9792 = vpop.f32.mrb[0].mxu0
        %v9793 = vadd.f32 %v7007, %v9792
        %v9794 = vpop.f32.mrb[0].mxu0
        %v9795 = vpop.f32.mrb[0].mxu0
        %9796 = vdwg.mxu0
        %9797 = vmatprep.subr.bf16.mxu0 %v8699
        %9798 = vmatpush1.bf16.msra.mxu0 %v8698
        %9799 = vmatprep.subr.bf16.mxu0 %v8707
        %9800 = vmatpush1.bf16.msra.mxu0 %v8706
        %9801 = vmatprep.subr.bf16.mxu0 %v8715
        %9802 = vmatpush1.bf16.msra.mxu0 %v8714
        %9803 = vmatprep.subr.bf16.mxu0 %v8723
        %9804 = vmatpush1.bf16.msra.mxu0 %v8722
        %9805 = vmatprep.subr.bf16.mxu0 %v8731
        %9806 = vmatpush1.bf16.msra.mxu0 %v8730
        %9807 = vmatprep.subr.bf16.mxu0 %v8739
        %9808 = vmatpush1.bf16.msra.mxu0 %v8738
        %9809 = vmatprep.subr.bf16.mxu0 %v8747
        %9810 = vmatpush1.bf16.msra.mxu0 %v8746
        %9811 = vmatprep.subr.bf16.mxu0 %v8755
        %9812 = vmatpush1.bf16.msra.mxu0 %v8754
        %9813 = vmatprep.subr.bf16.mxu0 %v8763
        %9814 = vmatpush1.bf16.msra.mxu0 %v8762
        %9815 = vmatprep.subr.bf16.mxu0 %v8771
        %9816 = vmatpush1.bf16.msra.mxu0 %v8770
        %9817 = vmatprep.subr.bf16.mxu0 %v8779
        %9818 = vmatpush1.bf16.msra.mxu0 %v8778
        %9819 = vmatprep.subr.bf16.mxu0 %v8787
        %9820 = vmatpush1.bf16.msra.mxu0 %v8786
        %9821 = vmatprep.subr.bf16.mxu0 %v8795
        %9822 = vmatpush1.bf16.msra.mxu0 %v8794
        %9823 = vmatprep.subr.bf16.mxu0 %v8803
        %9824 = vmatpush1.bf16.msra.mxu0 %v8802
        %9825 = vmatprep.subr.bf16.mxu0 %v8811
        %9826 = vmatpush1.bf16.msra.mxu0 %v8810
        %9827 = vmatprep.subr.bf16.mxu0 %v8819
        %9828 = vmatpush1.bf16.msra.mxu0 %v8818
        %9829 = vmatprep.mubr.bf16.mxu0 %v6473
        %9830 = vmatmul.mubr.bf16.gmra.mrb[0].mxu0 %v6472
        %v9831 = vpop.f32.mrb[0].mxu0
        %v9832 = vadd.f32 %v9791, %v9831
        %v9833 = vpop.f32.mrb[0].mxu0
        %v9834 = vadd.f32 %v9793, %v9833
        %v9835 = vpop.f32.mrb[0].mxu0
        %v9836 = vpop.f32.mrb[0].mxu0
        %9837 = vdwg.mxu0
        %9838 = vmatprep.subr.bf16.mxu0 %v8827
        %9839 = vmatpush1.bf16.msra.mxu0 %v8826
        %9840 = vmatprep.subr.bf16.mxu0 %v8835
        %9841 = vmatpush1.bf16.msra.mxu0 %v8834
        %9842 = vmatprep.subr.bf16.mxu0 %v8843
        %9843 = vmatpush1.bf16.msra.mxu0 %v8842
        %9844 = vmatprep.subr.bf16.mxu0 %v8851
        %9845 = vmatpush1.bf16.msra.mxu0 %v8850
        %9846 = vmatprep.subr.bf16.mxu0 %v8859
        %9847 = vmatpush1.bf16.msra.mxu0 %v8858
        %9848 = vmatprep.subr.bf16.mxu0 %v8867
        %9849 = vmatpush1.bf16.msra.mxu0 %v8866
        %9850 = vmatprep.subr.bf16.mxu0 %v8875
        %9851 = vmatpush1.bf16.msra.mxu0 %v8874
        %9852 = vmatprep.subr.bf16.mxu0 %v8883
        %9853 = vmatpush1.bf16.msra.mxu0 %v8882
        %9854 = vmatprep.subr.bf16.mxu0 %v8891
        %9855 = vmatpush1.bf16.msra.mxu0 %v8890
        %9856 = vmatprep.subr.bf16.mxu0 %v8899
        %9857 = vmatpush1.bf16.msra.mxu0 %v8898
        %9858 = vmatprep.subr.bf16.mxu0 %v8907
        %9859 = vmatpush1.bf16.msra.mxu0 %v8906
        %9860 = vmatprep.subr.bf16.mxu0 %v8915
        %9861 = vmatpush1.bf16.msra.mxu0 %v8914
        %9862 = vmatprep.subr.bf16.mxu0 %v8923
        %9863 = vmatpush1.bf16.msra.mxu0 %v8922
        %9864 = vmatprep.subr.bf16.mxu0 %v8931
        %9865 = vmatpush1.bf16.msra.mxu0 %v8930
        %9866 = vmatprep.subr.bf16.mxu0 %v8939
        %9867 = vmatpush1.bf16.msra.mxu0 %v8938
        %9868 = vmatprep.subr.bf16.mxu0 %v8947
        %9869 = vmatpush1.bf16.msra.mxu0 %v8946
        %9870 = vmatprep.mubr.bf16.mxu0 %v6475
        %9871 = vmatmul.mubr.bf16.gmra.mrb[0].mxu0 %v6474
        %v9872 = vpop.f32.mrb[0].mxu0
        %v9873 = vadd.f32 %v9832, %v9872
        %v9874 = vpop.f32.mrb[0].mxu0
        %v9875 = vadd.f32 %v9834, %v9874
        %v9876 = vpop.f32.mrb[0].mxu0
        %v9877 = vpop.f32.mrb[0].mxu0
        %9878 = vdwg.mxu0
        %9879 = vmatprep.subr.bf16.mxu0 %v8955
        %9880 = vmatpush1.bf16.msra.mxu0 %v8954
        %9881 = vmatprep.subr.bf16.mxu0 %v8963
        %9882 = vmatpush1.bf16.msra.mxu0 %v8962
        %9883 = vmatprep.subr.bf16.mxu0 %v8971
        %9884 = vmatpush1.bf16.msra.mxu0 %v8970
        %9885 = vmatprep.subr.bf16.mxu0 %v8979
        %9886 = vmatpush1.bf16.msra.mxu0 %v8978
        %9887 = vmatprep.subr.bf16.mxu0 %v8987
        %9888 = vmatpush1.bf16.msra.mxu0 %v8986
        %9889 = vmatprep.subr.bf16.mxu0 %v8995
        %9890 = vmatpush1.bf16.msra.mxu0 %v8994
        %9891 = vmatprep.subr.bf16.mxu0 %v9003
        %9892 = vmatpush1.bf16.msra.mxu0 %v9002
        %9893 = vmatprep.subr.bf16.mxu0 %v9011
        %9894 = vmatpush1.bf16.msra.mxu0 %v9010
        %9895 = vmatprep.subr.bf16.mxu0 %v9019
        %9896 = vmatpush1.bf16.msra.mxu0 %v9018
        %9897 = vmatprep.subr.bf16.mxu0 %v9027
        %9898 = vmatpush1.bf16.msra.mxu0 %v9026
        %9899 = vmatprep.subr.bf16.mxu0 %v9035
        %9900 = vmatpush1.bf16.msra.mxu0 %v9034
        %9901 = vmatprep.subr.bf16.mxu0 %v9043
        %9902 = vmatpush1.bf16.msra.mxu0 %v9042
        %9903 = vmatprep.subr.bf16.mxu0 %v9051
        %9904 = vmatpush1.bf16.msra.mxu0 %v9050
        %9905 = vmatprep.subr.bf16.mxu0 %v9059
        %9906 = vmatpush1.bf16.msra.mxu0 %v9058
        %9907 = vmatprep.subr.bf16.mxu0 %v9067
        %9908 = vmatpush1.bf16.msra.mxu0 %v9066
        %9909 = vmatprep.subr.bf16.mxu0 %v9075
        %9910 = vmatpush1.bf16.msra.mxu0 %v9074
        %9911 = vmatprep.mubr.bf16.mxu0 %v6477
        %9912 = vmatmul.mubr.bf16.gmra.mrb[0].mxu0 %v6476
        %v9913 = vpop.f32.mrb[0].mxu0
        %v9914 = vadd.f32 %v9873, %v9913
        %v9915 = vpop.f32.mrb[0].mxu0
        %v9916 = vadd.f32 %v9875, %v9915
        %v9917 = vpop.f32.mrb[0].mxu0
        %v9918 = vpop.f32.mrb[0].mxu0
        %9919 = vdwg.mxu0
        %9920 = vmatprep.subr.bf16.mxu0 %v8573
        %9921 = vmatpush1.bf16.msra.mxu0 %v8572
        %9922 = vmatprep.subr.bf16.mxu0 %v8581
        %9923 = vmatpush1.bf16.msra.mxu0 %v8580
        %9924 = vmatprep.subr.bf16.mxu0 %v8589
        %9925 = vmatpush1.bf16.msra.mxu0 %v8588
        %9926 = vmatprep.subr.bf16.mxu0 %v8597
        %9927 = vmatpush1.bf16.msra.mxu0 %v8596
        %9928 = vmatprep.subr.bf16.mxu0 %v8605
        %9929 = vmatpush1.bf16.msra.mxu0 %v8604
        %9930 = vmatprep.subr.bf16.mxu0 %v8613
        %9931 = vmatpush1.bf16.msra.mxu0 %v8612
        %9932 = vmatprep.subr.bf16.mxu0 %v8621
        %9933 = vmatpush1.bf16.msra.mxu0 %v8620
        %9934 = vmatprep.subr.bf16.mxu0 %v8629
        %9935 = vmatpush1.bf16.msra.mxu0 %v8628
        %9936 = vmatprep.subr.bf16.mxu0 %v8637
        %9937 = vmatpush1.bf16.msra.mxu0 %v8636
        %9938 = vmatprep.subr.bf16.mxu0 %v8645
        %9939 = vmatpush1.bf16.msra.mxu0 %v8644
        %9940 = vmatprep.subr.bf16.mxu0 %v8653
        %9941 = vmatpush1.bf16.msra.mxu0 %v8652
        %9942 = vmatprep.subr.bf16.mxu0 %v8661
        %9943 = vmatpush1.bf16.msra.mxu0 %v8660
        %9944 = vmatprep.subr.bf16.mxu0 %v8669
        %9945 = vmatpush1.bf16.msra.mxu0 %v8668
        %9946 = vmatprep.subr.bf16.mxu0 %v8677
        %9947 = vmatpush1.bf16.msra.mxu0 %v8676
        %9948 = vmatprep.subr.bf16.mxu0 %v8685
        %9949 = vmatpush1.bf16.msra.mxu0 %v8684
        %9950 = vmatprep.subr.bf16.mxu0 %v8693
        %9951 = vmatpush1.bf16.msra.mxu0 %v8692
        %9952 = vmatprep.mubr.bf16.mxu0 %v6471
        %9953 = vmatmul.mubr.bf16.gmra.mrb[0].mxu0 %v6470
        %v9954 = vpop.f32.mrb[0].mxu0
        %v9955 = vadd.f32 %v7011, %v9954
        %v9956 = vpop.f32.mrb[0].mxu0
        %v9957 = vadd.f32 %v7015, %v9956
        %v9958 = vpop.f32.mrb[0].mxu0
        %v9959 = vpop.f32.mrb[0].mxu0
        %9960 = vdwg.mxu0
        %9961 = vmatprep.subr.bf16.mxu0 %v8701
        %9962 = vmatpush1.bf16.msra.mxu0 %v8700
        %9963 = vmatprep.subr.bf16.mxu0 %v8709
        %9964 = vmatpush1.bf16.msra.mxu0 %v8708
        %9965 = vmatprep.subr.bf16.mxu0 %v8717
        %9966 = vmatpush1.bf16.msra.mxu0 %v8716
        %9967 = vmatprep.subr.bf16.mxu0 %v8725
        %9968 = vmatpush1.bf16.msra.mxu0 %v8724
        %9969 = vmatprep.subr.bf16.mxu0 %v8733
        %9970 = vmatpush1.bf16.msra.mxu0 %v8732
        %9971 = vmatprep.subr.bf16.mxu0 %v8741
        %9972 = vmatpush1.bf16.msra.mxu0 %v8740
        %9973 = vmatprep.subr.bf16.mxu0 %v8749
        %9974 = vmatpush1.bf16.msra.mxu0 %v8748
        %9975 = vmatprep.subr.bf16.mxu0 %v8757
        %9976 = vmatpush1.bf16.msra.mxu0 %v8756
        %9977 = vmatprep.subr.bf16.mxu0 %v8765
        %9978 = vmatpush1.bf16.msra.mxu0 %v8764
        %9979 = vmatprep.subr.bf16.mxu0 %v8773
        %9980 = vmatpush1.bf16.msra.mxu0 %v8772
        %9981 = vmatprep.subr.bf16.mxu0 %v8781
        %9982 = vmatpush1.bf16.msra.mxu0 %v8780
        %9983 = vmatprep.subr.bf16.mxu0 %v8789
        %9984 = vmatpush1.bf16.msra.mxu0 %v8788
        %9985 = vmatprep.subr.bf16.mxu0 %v8797
        %9986 = vmatpush1.bf16.msra.mxu0 %v8796
        %9987 = vmatprep.subr.bf16.mxu0 %v8805
        %9988 = vmatpush1.bf16.msra.mxu0 %v8804
        %9989 = vmatprep.subr.bf16.mxu0 %v8813
        %9990 = vmatpush1.bf16.msra.mxu0 %v8812
        %9991 = vmatprep.subr.bf16.mxu0 %v8821
        %9992 = vmatpush1.bf16.msra.mxu0 %v8820
        %9993 = vmatprep.mubr.bf16.mxu0 %v6473
        %9994 = vmatmul.mubr.bf16.gmra.mrb[0].mxu0 %v6472
        %v9995 = vpop.f32.mrb[0].mxu0
        %v9996 = vadd.f32 %v9955, %v9995
        %v9997 = vpop.f32.mrb[0].mxu0
        %v9998 = vadd.f32 %v9957, %v9997
        %v9999 = vpop.f32.mrb[0].mxu0
        %v10000 = vpop.f32.mrb[0].mxu0
        %10001 = vdwg.mxu0
        %10002 = vmatprep.subr.bf16.mxu0 %v8829
        %10003 = vmatpush1.bf16.msra.mxu0 %v8828
        %10004 = vmatprep.subr.bf16.mxu0 %v8837
        %10005 = vmatpush1.bf16.msra.mxu0 %v8836
        %10006 = vmatprep.subr.bf16.mxu0 %v8845
        %10007 = vmatpush1.bf16.msra.mxu0 %v8844
        %10008 = vmatprep.subr.bf16.mxu0 %v8853
        %10009 = vmatpush1.bf16.msra.mxu0 %v8852
        %10010 = vmatprep.subr.bf16.mxu0 %v8861
        %10011 = vmatpush1.bf16.msra.mxu0 %v8860
        %10012 = vmatprep.subr.bf16.mxu0 %v8869
        %10013 = vmatpush1.bf16.msra.mxu0 %v8868
        %10014 = vmatprep.subr.bf16.mxu0 %v8877
        %10015 = vmatpush1.bf16.msra.mxu0 %v8876
        %10016 = vmatprep.subr.bf16.mxu0 %v8885
        %10017 = vmatpush1.bf16.msra.mxu0 %v8884
        %10018 = vmatprep.subr.bf16.mxu0 %v8893
        %10019 = vmatpush1.bf16.msra.mxu0 %v8892
        %10020 = vmatprep.subr.bf16.mxu0 %v8901
        %10021 = vmatpush1.bf16.msra.mxu0 %v8900
        %10022 = vmatprep.subr.bf16.mxu0 %v8909
        %10023 = vmatpush1.bf16.msra.mxu0 %v8908
        %10024 = vmatprep.subr.bf16.mxu0 %v8917
        %10025 = vmatpush1.bf16.msra.mxu0 %v8916
        %10026 = vmatprep.subr.bf16.mxu0 %v8925
        %10027 = vmatpush1.bf16.msra.mxu0 %v8924
        %10028 = vmatprep.subr.bf16.mxu0 %v8933
        %10029 = vmatpush1.bf16.msra.mxu0 %v8932
        %10030 = vmatprep.subr.bf16.mxu0 %v8941
        %10031 = vmatpush1.bf16.msra.mxu0 %v8940
        %10032 = vmatprep.subr.bf16.mxu0 %v8949
        %10033 = vmatpush1.bf16.msra.mxu0 %v8948
        %10034 = vmatprep.mubr.bf16.mxu0 %v6475
        %10035 = vmatmul.mubr.bf16.gmra.mrb[0].mxu0 %v6474
        %v10036 = vpop.f32.mrb[0].mxu0
        %v10037 = vadd.f32 %v9996, %v10036
        %v10038 = vpop.f32.mrb[0].mxu0
        %v10039 = vadd.f32 %v9998, %v10038
        %v10040 = vpop.f32.mrb[0].mxu0
        %v10041 = vpop.f32.mrb[0].mxu0
        %10042 = vdwg.mxu0
        %10043 = vmatprep.subr.bf16.mxu0 %v8957
        %10044 = vmatpush1.bf16.msra.mxu0 %v8956
        %10045 = vmatprep.subr.bf16.mxu0 %v8965
        %10046 = vmatpush1.bf16.msra.mxu0 %v8964
        %10047 = vmatprep.subr.bf16.mxu0 %v8973
        %10048 = vmatpush1.bf16.msra.mxu0 %v8972
        %10049 = vmatprep.subr.bf16.mxu0 %v8981
        %10050 = vmatpush1.bf16.msra.mxu0 %v8980
        %10051 = vmatprep.subr.bf16.mxu0 %v8989
        %10052 = vmatpush1.bf16.msra.mxu0 %v8988
        %10053 = vmatprep.subr.bf16.mxu0 %v8997
        %10054 = vmatpush1.bf16.msra.mxu0 %v8996
        %10055 = vmatprep.subr.bf16.mxu0 %v9005
        %10056 = vmatpush1.bf16.msra.mxu0 %v9004
        %10057 = vmatprep.subr.bf16.mxu0 %v9013
        %10058 = vmatpush1.bf16.msra.mxu0 %v9012
        %10059 = vmatprep.subr.bf16.mxu0 %v9021
        %10060 = vmatpush1.bf16.msra.mxu0 %v9020
        %10061 = vmatprep.subr.bf16.mxu0 %v9029
        %10062 = vmatpush1.bf16.msra.mxu0 %v9028
        %10063 = vmatprep.subr.bf16.mxu0 %v9037
        %10064 = vmatpush1.bf16.msra.mxu0 %v9036
        %10065 = vmatprep.subr.bf16.mxu0 %v9045
        %10066 = vmatpush1.bf16.msra.mxu0 %v9044
        %10067 = vmatprep.subr.bf16.mxu0 %v9053
        %10068 = vmatpush1.bf16.msra.mxu0 %v9052
        %10069 = vmatprep.subr.bf16.mxu0 %v9061
        %10070 = vmatpush1.bf16.msra.mxu0 %v9060
        %10071 = vmatprep.subr.bf16.mxu0 %v9069
        %10072 = vmatpush1.bf16.msra.mxu0 %v9068
        %10073 = vmatprep.subr.bf16.mxu0 %v9077
        %10074 = vmatpush1.bf16.msra.mxu0 %v9076
        %10075 = vmatprep.mubr.bf16.mxu0 %v6477
        %10076 = vmatmul.mubr.bf16.gmra.mrb[0].mxu0 %v6476
        %v10077 = vpop.f32.mrb[0].mxu0
        %v10078 = vadd.f32 %v10037, %v10077
        %v10079 = vpop.f32.mrb[0].mxu0
        %v10080 = vadd.f32 %v10039, %v10079
        %v10081 = vpop.f32.mrb[0].mxu0
        %v10082 = vpop.f32.mrb[0].mxu0
        %10083 = vdwg.mxu0
        %10084 = vmatprep.subr.bf16.mxu0 %v8575
        %10085 = vmatpush1.bf16.msra.mxu0 %v8574
        %10086 = vmatprep.subr.bf16.mxu0 %v8583
        %10087 = vmatpush1.bf16.msra.mxu0 %v8582
        %10088 = vmatprep.subr.bf16.mxu0 %v8591
        %10089 = vmatpush1.bf16.msra.mxu0 %v8590
        %10090 = vmatprep.subr.bf16.mxu0 %v8599
        %10091 = vmatpush1.bf16.msra.mxu0 %v8598
        %10092 = vmatprep.subr.bf16.mxu0 %v8607
        %10093 = vmatpush1.bf16.msra.mxu0 %v8606
        %10094 = vmatprep.subr.bf16.mxu0 %v8615
        %10095 = vmatpush1.bf16.msra.mxu0 %v8614
        %10096 = vmatprep.subr.bf16.mxu0 %v8623
        %10097 = vmatpush1.bf16.msra.mxu0 %v8622
        %10098 = vmatprep.subr.bf16.mxu0 %v8631
        %10099 = vmatpush1.bf16.msra.mxu0 %v8630
        %10100 = vmatprep.subr.bf16.mxu0 %v8639
        %10101 = vmatpush1.bf16.msra.mxu0 %v8638
        %10102 = vmatprep.subr.bf16.mxu0 %v8647
        %10103 = vmatpush1.bf16.msra.mxu0 %v8646
        %10104 = vmatprep.subr.bf16.mxu0 %v8655
        %10105 = vmatpush1.bf16.msra.mxu0 %v8654
        %10106 = vmatprep.subr.bf16.mxu0 %v8663
        %10107 = vmatpush1.bf16.msra.mxu0 %v8662
        %10108 = vmatprep.subr.bf16.mxu0 %v8671
        %10109 = vmatpush1.bf16.msra.mxu0 %v8670
        %10110 = vmatprep.subr.bf16.mxu0 %v8679
        %10111 = vmatpush1.bf16.msra.mxu0 %v8678
        %10112 = vmatprep.subr.bf16.mxu0 %v8687
        %10113 = vmatpush1.bf16.msra.mxu0 %v8686
        %10114 = vmatprep.subr.bf16.mxu0 %v8695
        %10115 = vmatpush1.bf16.msra.mxu0 %v8694
        %10116 = vmatprep.mubr.bf16.mxu0 %v6471
        %10117 = vmatmul.mubr.bf16.gmra.mrb[0].mxu0 %v6470
        %v10118 = vpop.f32.mrb[0].mxu0
        %v10119 = vadd.f32 %v7019, %v10118
        %v10120 = vpop.f32.mrb[0].mxu0
        %v10121 = vadd.f32 %v7023, %v10120
        %v10122 = vpop.f32.mrb[0].mxu0
        %v10123 = vpop.f32.mrb[0].mxu0
        %10124 = vdwg.mxu0
        %10125 = vmatprep.subr.bf16.mxu0 %v8703
        %10126 = vmatpush1.bf16.msra.mxu0 %v8702
        %10127 = vmatprep.subr.bf16.mxu0 %v8711
        %10128 = vmatpush1.bf16.msra.mxu0 %v8710
        %10129 = vmatprep.subr.bf16.mxu0 %v8719
        %10130 = vmatpush1.bf16.msra.mxu0 %v8718
        %10131 = vmatprep.subr.bf16.mxu0 %v8727
        %10132 = vmatpush1.bf16.msra.mxu0 %v8726
        %10133 = vmatprep.subr.bf16.mxu0 %v8735
        %10134 = vmatpush1.bf16.msra.mxu0 %v8734
        %10135 = vmatprep.subr.bf16.mxu0 %v8743
        %10136 = vmatpush1.bf16.msra.mxu0 %v8742
        %10137 = vmatprep.subr.bf16.mxu0 %v8751
        %10138 = vmatpush1.bf16.msra.mxu0 %v8750
        %10139 = vmatprep.subr.bf16.mxu0 %v8759
        %10140 = vmatpush1.bf16.msra.mxu0 %v8758
        %10141 = vmatprep.subr.bf16.mxu0 %v8767
        %10142 = vmatpush1.bf16.msra.mxu0 %v8766
        %10143 = vmatprep.subr.bf16.mxu0 %v8775
        %10144 = vmatpush1.bf16.msra.mxu0 %v8774
        %10145 = vmatprep.subr.bf16.mxu0 %v8783
        %10146 = vmatpush1.bf16.msra.mxu0 %v8782
        %10147 = vmatprep.subr.bf16.mxu0 %v8791
        %10148 = vmatpush1.bf16.msra.mxu0 %v8790
        %10149 = vmatprep.subr.bf16.mxu0 %v8799
        %10150 = vmatpush1.bf16.msra.mxu0 %v8798
        %10151 = vmatprep.subr.bf16.mxu0 %v8807
        %10152 = vmatpush1.bf16.msra.mxu0 %v8806
        %10153 = vmatprep.subr.bf16.mxu0 %v8815
        %10154 = vmatpush1.bf16.msra.mxu0 %v8814
        %10155 = vmatprep.subr.bf16.mxu0 %v8823
        %10156 = vmatpush1.bf16.msra.mxu0 %v8822
        %10157 = vmatprep.mubr.bf16.mxu0 %v6473
        %10158 = vmatmul.mubr.bf16.gmra.mrb[0].mxu0 %v6472
        %v10159 = vpop.f32.mrb[0].mxu0
        %v10160 = vadd.f32 %v10119, %v10159
        %v10161 = vpop.f32.mrb[0].mxu0
        %v10162 = vadd.f32 %v10121, %v10161
        %v10163 = vpop.f32.mrb[0].mxu0
        %v10164 = vpop.f32.mrb[0].mxu0
        %10165 = vdwg.mxu0
        %10166 = vmatprep.subr.bf16.mxu0 %v8831
        %10167 = vmatpush1.bf16.msra.mxu0 %v8830
        %10168 = vmatprep.subr.bf16.mxu0 %v8839
        %10169 = vmatpush1.bf16.msra.mxu0 %v8838
        %10170 = vmatprep.subr.bf16.mxu0 %v8847
        %10171 = vmatpush1.bf16.msra.mxu0 %v8846
        %10172 = vmatprep.subr.bf16.mxu0 %v8855
        %10173 = vmatpush1.bf16.msra.mxu0 %v8854
        %10174 = vmatprep.subr.bf16.mxu0 %v8863
        %10175 = vmatpush1.bf16.msra.mxu0 %v8862
        %10176 = vmatprep.subr.bf16.mxu0 %v8871
        %10177 = vmatpush1.bf16.msra.mxu0 %v8870
        %10178 = vmatprep.subr.bf16.mxu0 %v8879
        %10179 = vmatpush1.bf16.msra.mxu0 %v8878
        %10180 = vmatprep.subr.bf16.mxu0 %v8887
        %10181 = vmatpush1.bf16.msra.mxu0 %v8886
        %10182 = vmatprep.subr.bf16.mxu0 %v8895
        %10183 = vmatpush1.bf16.msra.mxu0 %v8894
        %10184 = vmatprep.subr.bf16.mxu0 %v8903
        %10185 = vmatpush1.bf16.msra.mxu0 %v8902
        %10186 = vmatprep.subr.bf16.mxu0 %v8911
        %10187 = vmatpush1.bf16.msra.mxu0 %v8910
        %10188 = vmatprep.subr.bf16.mxu0 %v8919
        %10189 = vmatpush1.bf16.msra.mxu0 %v8918
        %10190 = vmatprep.subr.bf16.mxu0 %v8927
        %10191 = vmatpush1.bf16.msra.mxu0 %v8926
        %10192 = vmatprep.subr.bf16.mxu0 %v8935
        %10193 = vmatpush1.bf16.msra.mxu0 %v8934
        %10194 = vmatprep.subr.bf16.mxu0 %v8943
        %10195 = vmatpush1.bf16.msra.mxu0 %v8942
        %10196 = vmatprep.subr.bf16.mxu0 %v8951
        %10197 = vmatpush1.bf16.msra.mxu0 %v8950
        %10198 = vmatprep.mubr.bf16.mxu0 %v6475
        %10199 = vmatmul.mubr.bf16.gmra.mrb[0].mxu0 %v6474
        %v10200 = vpop.f32.mrb[0].mxu0
        %v10201 = vadd.f32 %v10160, %v10200
        %v10202 = vpop.f32.mrb[0].mxu0
        %v10203 = vadd.f32 %v10162, %v10202
        %v10204 = vpop.f32.mrb[0].mxu0
        %v10205 = vpop.f32.mrb[0].mxu0
        %10206 = vdwg.mxu0
        %10207 = vmatprep.subr.bf16.mxu0 %v8959
        %10208 = vmatpush1.bf16.msra.mxu0 %v8958
        %10209 = vmatprep.subr.bf16.mxu0 %v8967
        %10210 = vmatpush1.bf16.msra.mxu0 %v8966
        %10211 = vmatprep.subr.bf16.mxu0 %v8975
        %10212 = vmatpush1.bf16.msra.mxu0 %v8974
        %10213 = vmatprep.subr.bf16.mxu0 %v8983
        %10214 = vmatpush1.bf16.msra.mxu0 %v8982
        %10215 = vmatprep.subr.bf16.mxu0 %v8991
        %10216 = vmatpush1.bf16.msra.mxu0 %v8990
        %10217 = vmatprep.subr.bf16.mxu0 %v8999
        %10218 = vmatpush1.bf16.msra.mxu0 %v8998
        %10219 = vmatprep.subr.bf16.mxu0 %v9007
        %10220 = vmatpush1.bf16.msra.mxu0 %v9006
        %10221 = vmatprep.subr.bf16.mxu0 %v9015
        %10222 = vmatpush1.bf16.msra.mxu0 %v9014
        %10223 = vmatprep.subr.bf16.mxu0 %v9023
        %10224 = vmatpush1.bf16.msra.mxu0 %v9022
        %10225 = vmatprep.subr.bf16.mxu0 %v9031
        %10226 = vmatpush1.bf16.msra.mxu0 %v9030
        %10227 = vmatprep.subr.bf16.mxu0 %v9039
        %10228 = vmatpush1.bf16.msra.mxu0 %v9038
        %10229 = vmatprep.subr.bf16.mxu0 %v9047
        %10230 = vmatpush1.bf16.msra.mxu0 %v9046
        %10231 = vmatprep.subr.bf16.mxu0 %v9055
        %10232 = vmatpush1.bf16.msra.mxu0 %v9054
        %10233 = vmatprep.subr.bf16.mxu0 %v9063
        %10234 = vmatpush1.bf16.msra.mxu0 %v9062
        %10235 = vmatprep.subr.bf16.mxu0 %v9071
        %10236 = vmatpush1.bf16.msra.mxu0 %v9070
        %10237 = vmatprep.subr.bf16.mxu0 %v9079
        %10238 = vmatpush1.bf16.msra.mxu0 %v9078
        %10239 = vmatprep.mubr.bf16.mxu0 %v6477
        %10240 = vmatmul.mubr.bf16.gmra.mrb[0].mxu0 %v6476
        %v10241 = vpop.f32.mrb[0].mxu0
        %v10242 = vadd.f32 %v10201, %v10241
        %v10243 = vpop.f32.mrb[0].mxu0
        %v10244 = vadd.f32 %v10203, %v10243
        %v10245 = vpop.f32.mrb[0].mxu0
        %v10246 = vpop.f32.mrb[0].mxu0
        %10247 = vdwg.mxu0
        %10248 = vst [vmem:[%s721] sm:$0xff] %v9750
        %10249 = vst [vmem:[%s721 + $0x8] sm:$0xff] %v9752
        %10250 = vst [vmem:[%s721 + $0x10] sm:$0xff] %v9914
        %10251 = vst [vmem:[%s721 + $0x18] sm:$0xff] %v9916
        %10252 = vst [vmem:[%s721 + $0x20] sm:$0xff] %v10078
        %10253 = vst [vmem:[%s721 + $0x28] sm:$0xff] %v10080
        %10254 = vst [vmem:[%s721 + $0x30] sm:$0xff] %v10242
        %10255 = vst [vmem:[%s721 + $0x38] sm:$0xff] %v10244
        %p10256 = scmp.lt.s32.totalorder %s41, 1
        %s10257 = scalar_select %p10256, %s41, 1
        %p10258 = scmp.lt.s32.totalorder %s42, 0
        %s10259 = scalar_select %p10258, %s42, 0
        %s10260 = smul.addr %s10259, 2
        %s10261 = smul.addr %s10257, 2
        %s10262 = sadd.s32 %s10260, %s10261
        %s10263 = smul.addr %s10262, 8
        %s10264 = scalar_lea.vmem %s9, %s10263
        %p10265 = scmp.lt.s32.totalorder %s41, 1
        %s10266 = scalar_select %p10265, %s41, 1
        %p10267 = scmp.lt.s32.totalorder %s42, 0
        %s10268 = scalar_select %p10267, %s42, 0
        %s10269 = smul.addr %s10268, 8
        %s10270 = smul.addr %s10266, 8
        %s10271 = sadd.s32 %s10269, %s10270
        %s10272 = smul.addr %s10271, 8
        %s10273 = scalar_lea.vmem %s10, %s10272
        // Predicated region
        $region89: #{netfc00_forward.1} parent=55 // pred_check
          %p10274 = pneg %p305
        $region90: #{netfc00_forward.1} parent=55 // pred_check_branch
          %10276 = sbr.rel (%p10274) target = $region92
        $region91: #{netfc00_forward.1} parent=55 // pred_region
          _
        $region92: #{netfc00_forward.1} parent=55 // pred_fallthru
          _
        // Predicated region
        $region93: #{netfc00_forward.1} parent=55 // pred_check
          %p10277 = pneg %p333
        $region94: #{netfc00_forward.1} parent=55 // pred_check_branch
          %10279 = sbr.rel (%p10277) target = $region96
        $region95: #{netfc00_forward.1} parent=55 // pred_region
          _
        $region96: #{netfc00_forward.1} parent=55 // pred_fallthru
          _
      $region56: #{netfc00_forward.1} parent=5 // pred_fallthru
        _
      %p10280 = scmp.le.s32.totalorder 2, %s32
      // Predicated region
      $region97: #{netfc00_forward.1} parent=5 // pred_check
        %p10281 = pneg %p10280
      $region98: #{netfc00_forward.1} parent=5 // pred_check_branch
        %10283 = sbr.rel (%p10281) target = $region100
      $region99: #{netfc00_forward.1} parent=5 // pred_region
        %s10284 = ssub.s32 %s32, 2
        // Predicated region
        $region101: #{netfc00_forward.1} parent=99 // pred_check
          %p10285 = pneg %p311
        $region102: #{netfc00_forward.1} parent=99 // pred_check_branch
          %10287 = sbr.rel (%p10285) target = $region104
        $region103: #{netfc00_forward.1} parent=99 // pred_region
          %p10288 = scmp.lt.s32.totalorder %s43, 1
          %s10289 = scalar_select %p10288, %s43, 1
          %p10290 = scmp.lt.s32.totalorder %s44, 0
          %s10291 = scalar_select %p10290, %s44, 0
          %s10292 = smul.addr %s10291, 2
          %s10293 = smul.addr %s10289, 2
          %s10294 = sadd.s32 %s10292, %s10293
          %s10295 = smul.addr %s10294, 8
          %s10296 = scalar_lea.vmem %s9, %s10295
        $region104: #{netfc00_forward.1} parent=99 // pred_fallthru
          _
        // Predicated region
        $region105: #{netfc00_forward.1} parent=99 // pred_check
          %p10297 = pneg %p339
        $region106: #{netfc00_forward.1} parent=99 // pred_check_branch
          %10299 = sbr.rel (%p10297) target = $region108
        $region107: #{netfc00_forward.1} parent=99 // pred_region
          %p10300 = scmp.lt.s32.totalorder %s43, 1
          %s10301 = scalar_select %p10300, %s43, 1
          %p10302 = scmp.lt.s32.totalorder %s44, 0
          %s10303 = scalar_select %p10302, %s44, 0
          %s10304 = smul.addr %s10303, 8
          %s10305 = smul.addr %s10301, 8
          %s10306 = sadd.s32 %s10304, %s10305
          %s10307 = smul.addr %s10306, 8
          %s10308 = scalar_lea.vmem %s10, %s10307
        $region108: #{netfc00_forward.1} parent=99 // pred_fallthru
          _
      $region100: #{netfc00_forward.1} parent=5 // pred_fallthru
        _
    $region6: #{netfc00_forward.1} parent=1 // loop_footer
      %s36 = sadd.s32 1, %s32
    $region7: #{netfc00_forward.1} parent=1 // loop_footer_branch
      %31 = sbr.rel target = $region3
    $region8: #{netfc00_forward.1} parent=1 // loop_exit
      _
    %10309 = vsyncpa [#allocation3], 1
    %s10310 = scalar_lea.sflag [#allocation3], 1
    %10311 = vsyncpa %s10310, 1
    %10312 = vsyncpa [#allocation5], 1
    %s10313 = scalar_lea.sflag [#allocation5], 1
    %10314 = vsyncpa %s10313, 1
    %10315 = vsyncpa [#allocation8], 1
    %s10316 = scalar_lea.sflag [#allocation8], 1
    %10317 = vsyncpa %s10316, 1
    %10318 = vsyncpa [#allocation11], 1
    %s10319 = scalar_lea.sflag [#allocation11], 1
    %10320 = vsyncpa %s10319, 1
    %10321 = vsyncpa [#allocation14], 1
    %s10322 = scalar_lea.sflag [#allocation14], 1
    %10323 = vsyncpa %s10322, 1

</llo_original>
